<compile_context>
chip_gen: v6e
topology: v6e:2x2x1
jax: 0.10.0
libtpu: 0.0.40
codegen_flags: <defaults>
</compile_context>

<pallas_src>
import jax
import jax.numpy as jnp
from jax.experimental import pallas as pl
from jax.experimental.pallas import tpu as pltpu

HP = 128           # padded feature / hidden width
GP = 4 * HP        # padded gate width (i, f, o, g blocks of 128 lanes each)
BP = 8             # padded batch
HIDDEN = 100
IN_FEAT = 25
NUM_LAYERS = 3
BN_EPS = 1e-5
GATE_PERM = (0, 1, 3, 2)   # PyTorch gate order (i,f,g,o) -> packed (i,f,o,g)

_VMEM = pl.BlockSpec(memory_space=pltpu.MemorySpace.VMEM)


# ----------------------------------------------------------------------------
# Fused kernel: 3 LSTM layers (wavefront) + fcRelu2 + GRL + (Rc | dc) heads
# ----------------------------------------------------------------------------
def make_fused_kernel(b_idx, T):
    """b_idx: static batch row selected by `lstm_out[:, -1, :]` (== B-1)."""

    def kernel(x_ref, wih0_ref, whh0_ref, w12_ref, bl_ref, hw_ref, hv_ref,
               lstm_out_ref, gf_ref, head_ref, gx_sc):

        # ---- layer-0 input projection, hoisted over the whole sequence ----
        x_flat = x_ref[...].reshape(T * BP, HP).astype(jnp.bfloat16)
        gx = jnp.dot(x_flat, wih0_ref[...],
                     preferred_element_type=jnp.float32) + bl_ref[0]
        gx_sc[...] = gx.reshape(T, BP, GP)

        def cell(gates, c_prev):
            # packed gate order: [i | f | o | g]
            sig = jax.nn.sigmoid(gates[:, :3 * HP])
            i = sig[:, 0 * HP:1 * HP]
            f = sig[:, 1 * HP:2 * HP]
            o = sig[:, 2 * HP:3 * HP]
            g = jnp.tanh(gates[:, 3 * HP:])
            c_new = f * c_prev + i * g
            h_new = o * jnp.tanh(c_new)
            return h_new, c_new

        z = jnp.zeros((BP, HP), jnp.float32)
        h = [z, z, z]
        c = [z, z, z]

        # Wavefront schedule over (layer, time): wave w runs layer l at
        # t = w - l.  Iterating l from high to low inside a wave preserves
        # "layer l at time t consumes layer l-1's output at time t" (which was
        # produced in the previous wave).  T is small & static -> fully
        # unrolled; h/c stay in vregs.
        # TODO(synk): for large T switch the wave loop to lax.fori_loop with
        #             moderate unroll to bound live ranges.
        for w in range(T + NUM_LAYERS - 1):
            for l in range(NUM_LAYERS - 1, -1, -1):
                t = w - l
                if t < 0 or t >= T:
                    continue
                if l == 0:
                    gates = gx_sc[t] + jnp.dot(
                        h[0].astype(jnp.bfloat16), whh0_ref[...],
                        preferred_element_type=jnp.float32)
                else:
                    # K=256 fused [x_t ; h_{t-1}] @ [Wih ; Whh]
                    inp = jnp.concatenate([h[l - 1], h[l]], axis=1)
                    gates = jnp.dot(inp.astype(jnp.bfloat16), w12_ref[l - 1],
                                    preferred_element_type=jnp.float32) + bl_ref[l]
                h[l], c[l] = cell(gates, c[l])
                if l == NUM_LAYERS - 1:
                    lstm_out_ref[t] = h[l]

        # PyTorch `lstm_out[:, -1, :]` (batch_first=False) selects the last
        # *batch* element -> (T, 100).  Read back after the recurrence so no
        # extra vregs stay live across the unrolled loop.
        lstm_full = lstm_out_ref[...]                               # (T, BP, HP)
        xg = jnp.concatenate(
            [lstm_full[t, b_idx:b_idx + 1, :] for t in range(T)], axis=0)  # (T, HP)

        fb1, g1, be1 = hv_ref[0:1, :], hv_ref[1:2, :], hv_ref[2:3, :]
        fb2, g2, be2 = hv_ref[3:4, :], hv_ref[4:5, :], hv_ref[5:6, :]
        bpk, scale = hv_ref[6:7, :], hv_ref[7:8, :]

        def bn_relu(hmat, gamma, beta):
            mu = jnp.mean(hmat, axis=0, keepdims=True)
            var = jnp.mean(jnp.square(hmat - mu), axis=0, keepdims=True)  # biased (torch BN)
            return jnp.maximum(
                (hmat - mu) * jax.lax.rsqrt(var + BN_EPS) * gamma + beta, 0.0)

        # fcRelu2: Linear(100,64) + BatchNorm1d(64) + ReLU
        h1 = jnp.dot(xg.astype(jnp.bfloat16), hw_ref[0],
                     preferred_element_type=jnp.float32) + fb1
        h1 = bn_relu(h1, g1, be1)
        #          Linear(64,25) + BatchNorm1d(25) + ReLU
        h2 = jnp.dot(h1.astype(jnp.bfloat16), hw_ref[1],
                     preferred_element_type=jnp.float32) + fb2
        h2 = bn_relu(h2, g2, be2)
        gf_ref[...] = h2

        # Fused Rc (column 0) + dc (columns 1..2) head.  GRL forward is
        # gf*alpha; dc(alpha*gf) = alpha*(gf @ Wdc^T) + bdc, i.e. a per-column
        # scale (precomputed on the host) applied before the bias.
        fused = jnp.dot(h2.astype(jnp.bfloat16), hw_ref[2],
                        preferred_element_type=jnp.float32)          # (T, HP)
        head_ref[...] = fused * scale + bpk

    return kernel


# ----------------------------------------------------------------------------
# Deterministic parameter init (PyTorch-style uniform bounds) + packing
# ----------------------------------------------------------------------------
def _uniform(key, shape, bound):
    return jax.random.uniform(key, shape, jnp.float32, -bound, bound)


def init_params(key):
    params = {}

    # LSTM(25, 100, 3)
    bound = HIDDEN ** -0.5
    wih_list, whh_list, b_list = [], [], []
    for layer in range(NUM_LAYERS):
        in_sz = IN_FEAT if layer == 0 else HIDDEN
        key, k1, k2, k3, k4 = jax.random.split(key, 5)
        W_ih = _uniform(k1, (4 * HIDDEN, in_sz), bound)
        W_hh = _uniform(k2, (4 * HIDDEN, HIDDEN), bound)
        b_ih = _uniform(k3, (4 * HIDDEN,), bound)
        b_hh = _uniform(k4, (4 * HIDDEN,), bound)

        wihT = jnp.zeros((HP, GP), jnp.float32)
        whhT = jnp.zeros((HP, GP), jnp.float32)
        b = jnp.zeros((1, GP), jnp.float32)
        for gs in range(4):                      # PyTorch gate order i,f,g,o
            gd = GATE_PERM[gs]                   # packed order       i,f,o,g
            wihT = wihT.at[:in_sz, gd * HP:gd * HP + HIDDEN].set(
                W_ih[gs * HIDDEN:(gs + 1) * HIDDEN, :].T)
            whhT = whhT.at[:HIDDEN, gd * HP:gd * HP + HIDDEN].set(
                W_hh[gs * HIDDEN:(gs + 1) * HIDDEN, :].T)
            b = b.at[0, gd * HP:gd * HP + HIDDEN].set(
                b_ih[gs * HIDDEN:(gs + 1) * HIDDEN]
                + b_hh[gs * HIDDEN:(gs + 1) * HIDDEN])
        wih_list.append(wihT)
        whh_list.append(whhT)
        b_list.append(b)

    params['wih0'] = wih_list[0].astype(jnp.bfloat16)                 # (HP, GP)
    params['whh0'] = whh_list[0].astype(jnp.bfloat16)                 # (HP, GP)
    # layers 1-2: fused [Wih ; Whh] for the K=256 per-step matmul
    params['w12'] = jnp.stack(
        [jnp.concatenate([wih_list[l], whh_list[l]], axis=0) for l in (1, 2)],
        axis=0).astype(jnp.bfloat16)                                  # (2, 2HP, GP)
    params['lstm_b'] = jnp.stack(b_list, axis=0)                      # (3, 1, GP) f32

    def linear_wb(key, out_f, in_f):
        k1, k2 = jax.random.split(key)
        bnd = in_f ** -0.5
        return _uniform(k1, (out_f, in_f), bnd), _uniform(k2, (out_f,), bnd)

    key, kl1, kl2, krc, kdc = jax.random.split(key, 5)
    W1, b1v = linear_wb(kl1, 64, 100)        # Linear(100, 64)
    W2, b2v = linear_wb(kl2, 25, 64)         # Linear(64, 25)
    Wrc, brcv = linear_wb(krc, 1, 25)        # Rc: Linear(25, 1)
    Wdc, bdcv = linear_wb(kdc, 2, 25)        # dc: Linear(25, 2)

    w1 = jnp.zeros((HP, HP), jnp.float32).at[:100, :64].set(W1.T)
    w2 = jnp.zeros((HP, HP), jnp.float32).at[:64, :25].set(W2.T)
    wpk = (jnp.zeros((HP, HP), jnp.float32)
           .at[:25, 0:1].set(Wrc.T)
           .at[:25, 1:3].set(Wdc.T))          # col 0 = Rc, cols 1..2 = dc
    params['head_w'] = jnp.stack([w1, w2, wpk], axis=0).astype(jnp.bfloat16)

    fb1 = jnp.zeros((HP,), jnp.float32).at[:64].set(b1v)
    g1 = jnp.zeros((HP,), jnp.float32).at[:64].set(1.0)    # BN weight=1, bias=0
    be1 = jnp.zeros((HP,), jnp.float32)
    fb2 = jnp.zeros((HP,), jnp.float32).at[:25].set(b2v)
    g2 = jnp.zeros((HP,), jnp.float32).at[:25].set(1.0)
    be2 = jnp.zeros((HP,), jnp.float32)
    bpk = (jnp.zeros((HP,), jnp.float32).at[0:1].set(brcv).at[1:3].set(bdcv))
    params['head_vec'] = jnp.stack([fb1, g1, be1, fb2, g2, be2, bpk], axis=0)  # (7, HP)
    return params


# ----------------------------------------------------------------------------
# Full forward
# ----------------------------------------------------------------------------
def regression2_forward(x, alpha, params):
    # x: (T, B, 25) float32 ; alpha: python/array scalar
    T, B, F = x.shape
    assert F == IN_FEAT and 1 <= B <= BP and T % 8 == 0 and T <= 64

    x_pad = jnp.zeros((T, BP, HP), jnp.float32).at[:, :B, :F].set(
        x.astype(jnp.float32))

    # GRL scale row: 1.0 for the Rc column, alpha for the dc columns.
    col = jax.lax.broadcasted_iota(jnp.int32, (1, HP), 1)
    scale_row = jnp.where(col == 0, jnp.float32(1.0), jnp.float32(alpha))
    head_v = jnp.concatenate([params['head_vec'], scale_row], axis=0)  # (8, HP)

    out_shapes = (jax.ShapeDtypeStruct((T, BP, HP), jnp.float32),  # lstm_out (padded)
                  jax.ShapeDtypeStruct((T, HP), jnp.float32),      # gf_out   (padded)
                  jax.ShapeDtypeStruct((T, HP), jnp.float32))      # [rul|dc] (padded)

    lstm_pad, gf_pad, head_pad = pl.pallas_call(
        make_fused_kernel(B - 1, T),
        out_shape=out_shapes,
        in_specs=[_VMEM] * 7,
        out_specs=(_VMEM, _VMEM, _VMEM),
        scratch_shapes=[pltpu.VMEM((T, BP, GP), jnp.float32)],     # hoisted layer-0 gates
    )(x_pad, params['wih0'], params['whh0'], params['w12'],
      params['lstm_b'], params['head_w'], head_v)

    lstm_out = lstm_pad[:, :B, :HIDDEN]          # (T, B, 100)
    gf_out = gf_pad[:, :IN_FEAT]                 # (T, 25)
    rul = head_pad[:, 0:1]                       # (T, 1)
    domain_class = head_pad[:, 1:3]              # (T, 2)
    return lstm_out, gf_out, rul, domain_class


if __name__ == "__main__":
    key = jax.random.PRNGKey(0)
    key, kx = jax.random.split(key)

    T, B = 8, 4                                  # seq_len=8, batch=4
    x = jax.random.normal(kx, (T, B, IN_FEAT), jnp.float32)
    alpha = 0.5

    params = init_params(key)

    lstm_out, gf_out, rul, domain_class = regression2_forward(x, alpha, params)
    jax.block_until_ready((lstm_out, gf_out, rul, domain_class))

    assert lstm_out.shape == (T, B, 100)
    assert gf_out.shape == (T, 25)
    assert rul.shape == (T, 1)
    assert domain_class.shape == (T, 2)
    print("KERNEL_OK")
</pallas_src>

<mosaic_0001>
module attributes {stable_mosaic.version = 11 : i64} {
  func.func @kernel(%arg0: memref<8x8x128xf32, #tpu.memory_space<vmem>>, %arg1: memref<128x512xbf16, #tpu.memory_space<vmem>>, %arg2: memref<128x512xbf16, #tpu.memory_space<vmem>>, %arg3: memref<2x256x512xbf16, #tpu.memory_space<vmem>>, %arg4: memref<3x1x512xf32, #tpu.memory_space<vmem>>, %arg5: memref<3x128x128xbf16, #tpu.memory_space<vmem>>, %arg6: memref<8x128xf32, #tpu.memory_space<vmem>>, %arg7: memref<8x8x128xf32, #tpu.memory_space<vmem>>, %arg8: memref<8x128xf32, #tpu.memory_space<vmem>>, %arg9: memref<8x128xf32, #tpu.memory_space<vmem>>, %arg10: memref<8x8x512xf32, #tpu.memory_space<vmem>>) attributes {dimension_semantics = [], scalar_prefetch = 0 : i64, scratch_operands = 1 : i64, tpu.core_type = #tpu.core_type<tc>} {
    %c0 = arith.constant 0 : index
    %c0_0 = arith.constant 0 : index
    %c0_1 = arith.constant 0 : index
    %0 = vector.load %arg0[%c0, %c0_0, %c0_1] : memref<8x8x128xf32, #tpu.memory_space<vmem>>, vector<8x8x128xf32>
    %1 = vector.shape_cast %0 : vector<8x8x128xf32> to vector<64x128xf32>
    %2 = arith.truncf %1 : vector<64x128xf32> to vector<64x128xbf16>
    %c0_2 = arith.constant 0 : index
    %c0_3 = arith.constant 0 : index
    %3 = vector.load %arg1[%c0_2, %c0_3] : memref<128x512xbf16, #tpu.memory_space<vmem>>, vector<128x512xbf16>
    %cst = arith.constant dense<0.000000e+00> : vector<64x512xf32>
    %4 = tpu.matmul %2, %3, %cst {dimension_numbers = #tpu.dot_dimension_numbers<[1], [0], [0], [1], [0, 0, 1, 1], [], []>} : vector<64x128xbf16>, vector<128x512xbf16>, vector<64x512xf32> -> vector<64x512xf32>
    %c0_4 = arith.constant 0 : index
    %c0_5 = arith.constant 0 : index
    %c0_6 = arith.constant 0 : index
    %5 = vector.load %arg4[%c0_4, %c0_5, %c0_6] : memref<3x1x512xf32, #tpu.memory_space<vmem>>, vector<1x1x512xf32>
    %6 = vector.shape_cast %5 : vector<1x1x512xf32> to vector<1x512xf32>
    %7 = vector.broadcast %6 : vector<1x512xf32> to vector<64x512xf32>
    %8 = arith.addf %4, %7 : vector<64x512xf32>
    %9 = vector.shape_cast %8 : vector<64x512xf32> to vector<8x8x512xf32>
    %c0_7 = arith.constant 0 : index
    %c0_8 = arith.constant 0 : index
    %c0_9 = arith.constant 0 : index
    %10 = vector.load %arg10[%c0_7, %c0_8, %c0_9] : memref<8x8x512xf32, #tpu.memory_space<vmem>>, vector<8x8x512xf32>
    tpu.vector_store %arg10[%c0_7, %c0_8, %c0_9], %9 {strides = array<i32>} : memref<8x8x512xf32, #tpu.memory_space<vmem>>, vector<8x8x512xf32>,
    %cst_10 = arith.constant 0.000000e+00 : f32
    %11 = vector.broadcast %cst_10 : f32 to vector<8x128xf32>
    %c0_11 = arith.constant 0 : index
    %c0_12 = arith.constant 0 : index
    %c0_13 = arith.constant 0 : index
    %12 = vector.load %arg10[%c0_11, %c0_12, %c0_13] : memref<8x8x512xf32, #tpu.memory_space<vmem>>, vector<1x8x512xf32>
    %13 = vector.shape_cast %12 : vector<1x8x512xf32> to vector<8x512xf32>
    %14 = arith.truncf %11 : vector<8x128xf32> to vector<8x128xbf16>
    %c0_14 = arith.constant 0 : index
    %c0_15 = arith.constant 0 : index
    %15 = vector.load %arg2[%c0_14, %c0_15] : memref<128x512xbf16, #tpu.memory_space<vmem>>, vector<128x512xbf16>
    %cst_16 = arith.constant dense<0.000000e+00> : vector<8x512xf32>
    %16 = tpu.matmul %14, %15, %cst_16 {dimension_numbers = #tpu.dot_dimension_numbers<[1], [0], [0], [1], [0, 0, 1, 1], [], []>} : vector<8x128xbf16>, vector<128x512xbf16>, vector<8x512xf32> -> vector<8x512xf32>
    %17 = arith.addf %13, %16 : vector<8x512xf32>
    %18 = vector.extract_strided_slice %17 {offsets = [0, 0], sizes = [8, 384], strides = [1, 1]} : vector<8x512xf32> to vector<8x384xf32>
    %19 = arith.negf %18 : vector<8x384xf32>
    %20 = math.exp %19 : vector<8x384xf32>
    %cst_17 = arith.constant 1.000000e+00 : f32
    %21 = vector.broadcast %cst_17 : f32 to vector<8x384xf32>
    %22 = arith.addf %21, %20 : vector<8x384xf32>
    %23 = arith.divf %21, %22 : vector<8x384xf32>
    %24 = vector.extract_strided_slice %23 {offsets = [0, 0], sizes = [8, 128], strides = [1, 1]} : vector<8x384xf32> to vector<8x128xf32>
    %25 = vector.extract_strided_slice %23 {offsets = [0, 128], sizes = [8, 128], strides = [1, 1]} : vector<8x384xf32> to vector<8x128xf32>
    %26 = vector.extract_strided_slice %23 {offsets = [0, 256], sizes = [8, 128], strides = [1, 1]} : vector<8x384xf32> to vector<8x128xf32>
    %27 = vector.extract_strided_slice %17 {offsets = [0, 384], sizes = [8, 128], strides = [1, 1]} : vector<8x512xf32> to vector<8x128xf32>
    %28 = math.tanh %27 : vector<8x128xf32>
    %29 = arith.mulf %25, %11 : vector<8x128xf32>
    %30 = arith.mulf %24, %28 : vector<8x128xf32>
    %31 = arith.addf %29, %30 : vector<8x128xf32>
    %32 = math.tanh %31 : vector<8x128xf32>
    %33 = arith.mulf %26, %32 : vector<8x128xf32>
    %34 = tpu.concatenate %33, %11 in 1 : vector<8x128xf32>, vector<8x128xf32> -> vector<8x256xf32>
    %35 = arith.truncf %34 : vector<8x256xf32> to vector<8x256xbf16>
    %c0_18 = arith.constant 0 : index
    %c0_19 = arith.constant 0 : index
    %c0_20 = arith.constant 0 : index
    %36 = vector.load %arg3[%c0_18, %c0_19, %c0_20] : memref<2x256x512xbf16, #tpu.memory_space<vmem>>, vector<1x256x512xbf16>
    %37 = vector.shape_cast %36 : vector<1x256x512xbf16> to vector<256x512xbf16>
    %cst_21 = arith.constant dense<0.000000e+00> : vector<8x512xf32>
    %38 = tpu.matmul %35, %37, %cst_21 {dimension_numbers = #tpu.dot_dimension_numbers<[1], [0], [0], [1], [0, 0, 1, 1], [], []>} : vector<8x256xbf16>, vector<256x512xbf16>, vector<8x512xf32> -> vector<8x512xf32>
    %c1 = arith.constant 1 : index
    %c0_22 = arith.constant 0 : index
    %c0_23 = arith.constant 0 : index
    %39 = vector.load %arg4[%c1, %c0_22, %c0_23] : memref<3x1x512xf32, #tpu.memory_space<vmem>>, vector<1x1x512xf32>
    %40 = vector.shape_cast %39 : vector<1x1x512xf32> to vector<1x512xf32>
    %41 = vector.broadcast %40 : vector<1x512xf32> to vector<8x512xf32>
    %42 = arith.addf %38, %41 : vector<8x512xf32>
    %43 = vector.extract_strided_slice %42 {offsets = [0, 0], sizes = [8, 384], strides = [1, 1]} : vector<8x512xf32> to vector<8x384xf32>
    %44 = arith.negf %43 : vector<8x384xf32>
    %45 = math.exp %44 : vector<8x384xf32>
    %cst_24 = arith.constant 1.000000e+00 : f32
    %46 = vector.broadcast %cst_24 : f32 to vector<8x384xf32>
    %47 = arith.addf %46, %45 : vector<8x384xf32>
    %48 = arith.divf %46, %47 : vector<8x384xf32>
    %49 = vector.extract_strided_slice %48 {offsets = [0, 0], sizes = [8, 128], strides = [1, 1]} : vector<8x384xf32> to vector<8x128xf32>
    %50 = vector.extract_strided_slice %48 {offsets = [0, 128], sizes = [8, 128], strides = [1, 1]} : vector<8x384xf32> to vector<8x128xf32>
    %51 = vector.extract_strided_slice %48 {offsets = [0, 256], sizes = [8, 128], strides = [1, 1]} : vector<8x384xf32> to vector<8x128xf32>
    %52 = vector.extract_strided_slice %42 {offsets = [0, 384], sizes = [8, 128], strides = [1, 1]} : vector<8x512xf32> to vector<8x128xf32>
    %53 = math.tanh %52 : vector<8x128xf32>
    %54 = arith.mulf %50, %11 : vector<8x128xf32>
    %55 = arith.mulf %49, %53 : vector<8x128xf32>
    %56 = arith.addf %54, %55 : vector<8x128xf32>
    %57 = math.tanh %56 : vector<8x128xf32>
    %58 = arith.mulf %51, %57 : vector<8x128xf32>
    %c1_25 = arith.constant 1 : index
    %c0_26 = arith.constant 0 : index
    %c0_27 = arith.constant 0 : index
    %59 = vector.load %arg10[%c1_25, %c0_26, %c0_27] : memref<8x8x512xf32, #tpu.memory_space<vmem>>, vector<1x8x512xf32>
    %60 = vector.shape_cast %59 : vector<1x8x512xf32> to vector<8x512xf32>
    %61 = arith.truncf %33 : vector<8x128xf32> to vector<8x128xbf16>
    %c0_28 = arith.constant 0 : index
    %c0_29 = arith.constant 0 : index
    %62 = vector.load %arg2[%c0_28, %c0_29] : memref<128x512xbf16, #tpu.memory_space<vmem>>, vector<128x512xbf16>
    %cst_30 = arith.constant dense<0.000000e+00> : vector<8x512xf32>
    %63 = tpu.matmul %61, %62, %cst_30 {dimension_numbers = #tpu.dot_dimension_numbers<[1], [0], [0], [1], [0, 0, 1, 1], [], []>} : vector<8x128xbf16>, vector<128x512xbf16>, vector<8x512xf32> -> vector<8x512xf32>
    %64 = arith.addf %60, %63 : vector<8x512xf32>
    %65 = vector.extract_strided_slice %64 {offsets = [0, 0], sizes = [8, 384], strides = [1, 1]} : vector<8x512xf32> to vector<8x384xf32>
    %66 = arith.negf %65 : vector<8x384xf32>
    %67 = math.exp %66 : vector<8x384xf32>
    %cst_31 = arith.constant 1.000000e+00 : f32
    %68 = vector.broadcast %cst_31 : f32 to vector<8x384xf32>
    %69 = arith.addf %68, %67 : vector<8x384xf32>
    %70 = arith.divf %68, %69 : vector<8x384xf32>
    %71 = vector.extract_strided_slice %70 {offsets = [0, 0], sizes = [8, 128], strides = [1, 1]} : vector<8x384xf32> to vector<8x128xf32>
    %72 = vector.extract_strided_slice %70 {offsets = [0, 128], sizes = [8, 128], strides = [1, 1]} : vector<8x384xf32> to vector<8x128xf32>
    %73 = vector.extract_strided_slice %70 {offsets = [0, 256], sizes = [8, 128], strides = [1, 1]} : vector<8x384xf32> to vector<8x128xf32>
    %74 = vector.extract_strided_slice %64 {offsets = [0, 384], sizes = [8, 128], strides = [1, 1]} : vector<8x512xf32> to vector<8x128xf32>
    %75 = math.tanh %74 : vector<8x128xf32>
    %76 = arith.mulf %72, %31 : vector<8x128xf32>
    %77 = arith.mulf %71, %75 : vector<8x128xf32>
    %78 = arith.addf %76, %77 : vector<8x128xf32>
    %79 = math.tanh %78 : vector<8x128xf32>
    %80 = arith.mulf %73, %79 : vector<8x128xf32>
    %81 = tpu.concatenate %58, %11 in 1 : vector<8x128xf32>, vector<8x128xf32> -> vector<8x256xf32>
    %82 = arith.truncf %81 : vector<8x256xf32> to vector<8x256xbf16>
    %c1_32 = arith.constant 1 : index
    %c0_33 = arith.constant 0 : index
    %c0_34 = arith.constant 0 : index
    %83 = vector.load %arg3[%c1_32, %c0_33, %c0_34] : memref<2x256x512xbf16, #tpu.memory_space<vmem>>, vector<1x256x512xbf16>
    %84 = vector.shape_cast %83 : vector<1x256x512xbf16> to vector<256x512xbf16>
    %cst_35 = arith.constant dense<0.000000e+00> : vector<8x512xf32>
    %85 = tpu.matmul %82, %84, %cst_35 {dimension_numbers = #tpu.dot_dimension_numbers<[1], [0], [0], [1], [0, 0, 1, 1], [], []>} : vector<8x256xbf16>, vector<256x512xbf16>, vector<8x512xf32> -> vector<8x512xf32>
    %c2 = arith.constant 2 : index
    %c0_36 = arith.constant 0 : index
    %c0_37 = arith.constant 0 : index
    %86 = vector.load %arg4[%c2, %c0_36, %c0_37] : memref<3x1x512xf32, #tpu.memory_space<vmem>>, vector<1x1x512xf32>
    %87 = vector.shape_cast %86 : vector<1x1x512xf32> to vector<1x512xf32>
    %88 = vector.broadcast %87 : vector<1x512xf32> to vector<8x512xf32>
    %89 = arith.addf %85, %88 : vector<8x512xf32>
    %90 = vector.extract_strided_slice %89 {offsets = [0, 0], sizes = [8, 384], strides = [1, 1]} : vector<8x512xf32> to vector<8x384xf32>
    %91 = arith.negf %90 : vector<8x384xf32>
    %92 = math.exp %91 : vector<8x384xf32>
    %cst_38 = arith.constant 1.000000e+00 : f32
    %93 = vector.broadcast %cst_38 : f32 to vector<8x384xf32>
    %94 = arith.addf %93, %92 : vector<8x384xf32>
    %95 = arith.divf %93, %94 : vector<8x384xf32>
    %96 = vector.extract_strided_slice %95 {offsets = [0, 0], sizes = [8, 128], strides = [1, 1]} : vector<8x384xf32> to vector<8x128xf32>
    %97 = vector.extract_strided_slice %95 {offsets = [0, 128], sizes = [8, 128], strides = [1, 1]} : vector<8x384xf32> to vector<8x128xf32>
    %98 = vector.extract_strided_slice %95 {offsets = [0, 256], sizes = [8, 128], strides = [1, 1]} : vector<8x384xf32> to vector<8x128xf32>
    %99 = vector.extract_strided_slice %89 {offsets = [0, 384], sizes = [8, 128], strides = [1, 1]} : vector<8x512xf32> to vector<8x128xf32>
    %100 = math.tanh %99 : vector<8x128xf32>
    %101 = arith.mulf %97, %11 : vector<8x128xf32>
    %102 = arith.mulf %96, %100 : vector<8x128xf32>
    %103 = arith.addf %101, %102 : vector<8x128xf32>
    %104 = math.tanh %103 : vector<8x128xf32>
    %105 = arith.mulf %98, %104 : vector<8x128xf32>
    %c0_39 = arith.constant 0 : index
    %c0_40 = arith.constant 0 : index
    %c0_41 = arith.constant 0 : index
    %106 = vector.load %arg7[%c0_39, %c0_40, %c0_41] : memref<8x8x128xf32, #tpu.memory_space<vmem>>, vector<1x8x128xf32>
    %107 = vector.shape_cast %106 : vector<1x8x128xf32> to vector<8x128xf32>
    %108 = vector.shape_cast %105 : vector<8x128xf32> to vector<1x8x128xf32>
    tpu.vector_store %arg7[%c0_39, %c0_40, %c0_41], %108 {strides = array<i32>} : memref<8x8x128xf32, #tpu.memory_space<vmem>>, vector<1x8x128xf32>,
    %109 = tpu.concatenate %80, %58 in 1 : vector<8x128xf32>, vector<8x128xf32> -> vector<8x256xf32>
    %110 = arith.truncf %109 : vector<8x256xf32> to vector<8x256xbf16>
    %c0_42 = arith.constant 0 : index
    %c0_43 = arith.constant 0 : index
    %c0_44 = arith.constant 0 : index
    %111 = vector.load %arg3[%c0_42, %c0_43, %c0_44] : memref<2x256x512xbf16, #tpu.memory_space<vmem>>, vector<1x256x512xbf16>
    %112 = vector.shape_cast %111 : vector<1x256x512xbf16> to vector<256x512xbf16>
    %cst_45 = arith.constant dense<0.000000e+00> : vector<8x512xf32>
    %113 = tpu.matmul %110, %112, %cst_45 {dimension_numbers = #tpu.dot_dimension_numbers<[1], [0], [0], [1], [0, 0, 1, 1], [], []>} : vector<8x256xbf16>, vector<256x512xbf16>, vector<8x512xf32> -> vector<8x512xf32>
    %c1_46 = arith.constant 1 : index
    %c0_47 = arith.constant 0 : index
    %c0_48 = arith.constant 0 : index
    %114 = vector.load %arg4[%c1_46, %c0_47, %c0_48] : memref<3x1x512xf32, #tpu.memory_space<vmem>>, vector<1x1x512xf32>
    %115 = vector.shape_cast %114 : vector<1x1x512xf32> to vector<1x512xf32>
    %116 = vector.broadcast %115 : vector<1x512xf32> to vector<8x512xf32>
    %117 = arith.addf %113, %116 : vector<8x512xf32>
    %118 = vector.extract_strided_slice %117 {offsets = [0, 0], sizes = [8, 384], strides = [1, 1]} : vector<8x512xf32> to vector<8x384xf32>
    %119 = arith.negf %118 : vector<8x384xf32>
    %120 = math.exp %119 : vector<8x384xf32>
    %cst_49 = arith.constant 1.000000e+00 : f32
    %121 = vector.broadcast %cst_49 : f32 to vector<8x384xf32>
    %122 = arith.addf %121, %120 : vector<8x384xf32>
    %123 = arith.divf %121, %122 : vector<8x384xf32>
    %124 = vector.extract_strided_slice %123 {offsets = [0, 0], sizes = [8, 128], strides = [1, 1]} : vector<8x384xf32> to vector<8x128xf32>
    %125 = vector.extract_strided_slice %123 {offsets = [0, 128], sizes = [8, 128], strides = [1, 1]} : vector<8x384xf32> to vector<8x128xf32>
    %126 = vector.extract_strided_slice %123 {offsets = [0, 256], sizes = [8, 128], strides = [1, 1]} : vector<8x384xf32> to vector<8x128xf32>
    %127 = vector.extract_strided_slice %117 {offsets = [0, 384], sizes = [8, 128], strides = [1, 1]} : vector<8x512xf32> to vector<8x128xf32>
    %128 = math.tanh %127 : vector<8x128xf32>
    %129 = arith.mulf %125, %56 : vector<8x128xf32>
    %130 = arith.mulf %124, %128 : vector<8x128xf32>
    %131 = arith.addf %129, %130 : vector<8x128xf32>
    %132 = math.tanh %131 : vector<8x128xf32>
    %133 = arith.mulf %126, %132 : vector<8x128xf32>
    %c2_50 = arith.constant 2 : index
    %c0_51 = arith.constant 0 : index
    %c0_52 = arith.constant 0 : index
    %134 = vector.load %arg10[%c2_50, %c0_51, %c0_52] : memref<8x8x512xf32, #tpu.memory_space<vmem>>, vector<1x8x512xf32>
    %135 = vector.shape_cast %134 : vector<1x8x512xf32> to vector<8x512xf32>
    %136 = arith.truncf %80 : vector<8x128xf32> to vector<8x128xbf16>
    %c0_53 = arith.constant 0 : index
    %c0_54 = arith.constant 0 : index
    %137 = vector.load %arg2[%c0_53, %c0_54] : memref<128x512xbf16, #tpu.memory_space<vmem>>, vector<128x512xbf16>
    %cst_55 = arith.constant dense<0.000000e+00> : vector<8x512xf32>
    %138 = tpu.matmul %136, %137, %cst_55 {dimension_numbers = #tpu.dot_dimension_numbers<[1], [0], [0], [1], [0, 0, 1, 1], [], []>} : vector<8x128xbf16>, vector<128x512xbf16>, vector<8x512xf32> -> vector<8x512xf32>
    %139 = arith.addf %135, %138 : vector<8x512xf32>
    %140 = vector.extract_strided_slice %139 {offsets = [0, 0], sizes = [8, 384], strides = [1, 1]} : vector<8x512xf32> to vector<8x384xf32>
    %141 = arith.negf %140 : vector<8x384xf32>
    %142 = math.exp %141 : vector<8x384xf32>
    %cst_56 = arith.constant 1.000000e+00 : f32
    %143 = vector.broadcast %cst_56 : f32 to vector<8x384xf32>
    %144 = arith.addf %143, %142 : vector<8x384xf32>
    %145 = arith.divf %143, %144 : vector<8x384xf32>
    %146 = vector.extract_strided_slice %145 {offsets = [0, 0], sizes = [8, 128], strides = [1, 1]} : vector<8x384xf32> to vector<8x128xf32>
    %147 = vector.extract_strided_slice %145 {offsets = [0, 128], sizes = [8, 128], strides = [1, 1]} : vector<8x384xf32> to vector<8x128xf32>
    %148 = vector.extract_strided_slice %145 {offsets = [0, 256], sizes = [8, 128], strides = [1, 1]} : vector<8x384xf32> to vector<8x128xf32>
    %149 = vector.extract_strided_slice %139 {offsets = [0, 384], sizes = [8, 128], strides = [1, 1]} : vector<8x512xf32> to vector<8x128xf32>
    %150 = math.tanh %149 : vector<8x128xf32>
    %151 = arith.mulf %147, %78 : vector<8x128xf32>
    %152 = arith.mulf %146, %150 : vector<8x128xf32>
    %153 = arith.addf %151, %152 : vector<8x128xf32>
    %154 = math.tanh %153 : vector<8x128xf32>
    %155 = arith.mulf %148, %154 : vector<8x128xf32>
    %156 = tpu.concatenate %133, %105 in 1 : vector<8x128xf32>, vector<8x128xf32> -> vector<8x256xf32>
    %157 = arith.truncf %156 : vector<8x256xf32> to vector<8x256xbf16>
    %c1_57 = arith.constant 1 : index
    %c0_58 = arith.constant 0 : index
    %c0_59 = arith.constant 0 : index
    %158 = vector.load %arg3[%c1_57, %c0_58, %c0_59] : memref<2x256x512xbf16, #tpu.memory_space<vmem>>, vector<1x256x512xbf16>
    %159 = vector.shape_cast %158 : vector<1x256x512xbf16> to vector<256x512xbf16>
    %cst_60 = arith.constant dense<0.000000e+00> : vector<8x512xf32>
    %160 = tpu.matmul %157, %159, %cst_60 {dimension_numbers = #tpu.dot_dimension_numbers<[1], [0], [0], [1], [0, 0, 1, 1], [], []>} : vector<8x256xbf16>, vector<256x512xbf16>, vector<8x512xf32> -> vector<8x512xf32>
    %c2_61 = arith.constant 2 : index
    %c0_62 = arith.constant 0 : index
    %c0_63 = arith.constant 0 : index
    %161 = vector.load %arg4[%c2_61, %c0_62, %c0_63] : memref<3x1x512xf32, #tpu.memory_space<vmem>>, vector<1x1x512xf32>
    %162 = vector.shape_cast %161 : vector<1x1x512xf32> to vector<1x512xf32>
    %163 = vector.broadcast %162 : vector<1x512xf32> to vector<8x512xf32>
    %164 = arith.addf %160, %163 : vector<8x512xf32>
    %165 = vector.extract_strided_slice %164 {offsets = [0, 0], sizes = [8, 384], strides = [1, 1]} : vector<8x512xf32> to vector<8x384xf32>
    %166 = arith.negf %165 : vector<8x384xf32>
    %167 = math.exp %166 : vector<8x384xf32>
    %cst_64 = arith.constant 1.000000e+00 : f32
    %168 = vector.broadcast %cst_64 : f32 to vector<8x384xf32>
    %169 = arith.addf %168, %167 : vector<8x384xf32>
    %170 = arith.divf %168, %169 : vector<8x384xf32>
    %171 = vector.extract_strided_slice %170 {offsets = [0, 0], sizes = [8, 128], strides = [1, 1]} : vector<8x384xf32> to vector<8x128xf32>
    %172 = vector.extract_strided_slice %170 {offsets = [0, 128], sizes = [8, 128], strides = [1, 1]} : vector<8x384xf32> to vector<8x128xf32>
    %173 = vector.extract_strided_slice %170 {offsets = [0, 256], sizes = [8, 128], strides = [1, 1]} : vector<8x384xf32> to vector<8x128xf32>
    %174 = vector.extract_strided_slice %164 {offsets = [0, 384], sizes = [8, 128], strides = [1, 1]} : vector<8x512xf32> to vector<8x128xf32>
    %175 = math.tanh %174 : vector<8x128xf32>
    %176 = arith.mulf %172, %103 : vector<8x128xf32>
    %177 = arith.mulf %171, %175 : vector<8x128xf32>
    %178 = arith.addf %176, %177 : vector<8x128xf32>
    %179 = math.tanh %178 : vector<8x128xf32>
    %180 = arith.mulf %173, %179 : vector<8x128xf32>
    %c1_65 = arith.constant 1 : index
    %c0_66 = arith.constant 0 : index
    %c0_67 = arith.constant 0 : index
    %181 = vector.load %arg7[%c1_65, %c0_66, %c0_67] : memref<8x8x128xf32, #tpu.memory_space<vmem>>, vector<1x8x128xf32>
    %182 = vector.shape_cast %181 : vector<1x8x128xf32> to vector<8x128xf32>
    %183 = vector.shape_cast %180 : vector<8x128xf32> to vector<1x8x128xf32>
    tpu.vector_store %arg7[%c1_65, %c0_66, %c0_67], %183 {strides = array<i32>} : memref<8x8x128xf32, #tpu.memory_space<vmem>>, vector<1x8x128xf32>,
    %184 = tpu.concatenate %155, %133 in 1 : vector<8x128xf32>, vector<8x128xf32> -> vector<8x256xf32>
    %185 = arith.truncf %184 : vector<8x256xf32> to vector<8x256xbf16>
    %c0_68 = arith.constant 0 : index
    %c0_69 = arith.constant 0 : index
    %c0_70 = arith.constant 0 : index
    %186 = vector.load %arg3[%c0_68, %c0_69, %c0_70] : memref<2x256x512xbf16, #tpu.memory_space<vmem>>, vector<1x256x512xbf16>
    %187 = vector.shape_cast %186 : vector<1x256x512xbf16> to vector<256x512xbf16>
    %cst_71 = arith.constant dense<0.000000e+00> : vector<8x512xf32>
    %188 = tpu.matmul %185, %187, %cst_71 {dimension_numbers = #tpu.dot_dimension_numbers<[1], [0], [0], [1], [0, 0, 1, 1], [], []>} : vector<8x256xbf16>, vector<256x512xbf16>, vector<8x512xf32> -> vector<8x512xf32>
    %c1_72 = arith.constant 1 : index
    %c0_73 = arith.constant 0 : index
    %c0_74 = arith.constant 0 : index
    %189 = vector.load %arg4[%c1_72, %c0_73, %c0_74] : memref<3x1x512xf32, #tpu.memory_space<vmem>>, vector<1x1x512xf32>
    %190 = vector.shape_cast %189 : vector<1x1x512xf32> to vector<1x512xf32>
    %191 = vector.broadcast %190 : vector<1x512xf32> to vector<8x512xf32>
    %192 = arith.addf %188, %191 : vector<8x512xf32>
    %193 = vector.extract_strided_slice %192 {offsets = [0, 0], sizes = [8, 384], strides = [1, 1]} : vector<8x512xf32> to vector<8x384xf32>
    %194 = arith.negf %193 : vector<8x384xf32>
    %195 = math.exp %194 : vector<8x384xf32>
    %cst_75 = arith.constant 1.000000e+00 : f32
    %196 = vector.broadcast %cst_75 : f32 to vector<8x384xf32>
    %197 = arith.addf %196, %195 : vector<8x384xf32>
    %198 = arith.divf %196, %197 : vector<8x384xf32>
    %199 = vector.extract_strided_slice %198 {offsets = [0, 0], sizes = [8, 128], strides = [1, 1]} : vector<8x384xf32> to vector<8x128xf32>
    %200 = vector.extract_strided_slice %198 {offsets = [0, 128], sizes = [8, 128], strides = [1, 1]} : vector<8x384xf32> to vector<8x128xf32>
    %201 = vector.extract_strided_slice %198 {offsets = [0, 256], sizes = [8, 128], strides = [1, 1]} : vector<8x384xf32> to vector<8x128xf32>
    %202 = vector.extract_strided_slice %192 {offsets = [0, 384], sizes = [8, 128], strides = [1, 1]} : vector<8x512xf32> to vector<8x128xf32>
    %203 = math.tanh %202 : vector<8x128xf32>
    %204 = arith.mulf %200, %131 : vector<8x128xf32>
    %205 = arith.mulf %199, %203 : vector<8x128xf32>
    %206 = arith.addf %204, %205 : vector<8x128xf32>
    %207 = math.tanh %206 : vector<8x128xf32>
    %208 = arith.mulf %201, %207 : vector<8x128xf32>
    %c3 = arith.constant 3 : index
    %c0_76 = arith.constant 0 : index
    %c0_77 = arith.constant 0 : index
    %209 = vector.load %arg10[%c3, %c0_76, %c0_77] : memref<8x8x512xf32, #tpu.memory_space<vmem>>, vector<1x8x512xf32>
    %210 = vector.shape_cast %209 : vector<1x8x512xf32> to vector<8x512xf32>
    %211 = arith.truncf %155 : vector<8x128xf32> to vector<8x128xbf16>
    %c0_78 = arith.constant 0 : index
    %c0_79 = arith.constant 0 : index
    %212 = vector.load %arg2[%c0_78, %c0_79] : memref<128x512xbf16, #tpu.memory_space<vmem>>, vector<128x512xbf16>
    %cst_80 = arith.constant dense<0.000000e+00> : vector<8x512xf32>
    %213 = tpu.matmul %211, %212, %cst_80 {dimension_numbers = #tpu.dot_dimension_numbers<[1], [0], [0], [1], [0, 0, 1, 1], [], []>} : vector<8x128xbf16>, vector<128x512xbf16>, vector<8x512xf32> -> vector<8x512xf32>
    %214 = arith.addf %210, %213 : vector<8x512xf32>
    %215 = vector.extract_strided_slice %214 {offsets = [0, 0], sizes = [8, 384], strides = [1, 1]} : vector<8x512xf32> to vector<8x384xf32>
    %216 = arith.negf %215 : vector<8x384xf32>
    %217 = math.exp %216 : vector<8x384xf32>
    %cst_81 = arith.constant 1.000000e+00 : f32
    %218 = vector.broadcast %cst_81 : f32 to vector<8x384xf32>
    %219 = arith.addf %218, %217 : vector<8x384xf32>
    %220 = arith.divf %218, %219 : vector<8x384xf32>
    %221 = vector.extract_strided_slice %220 {offsets = [0, 0], sizes = [8, 128], strides = [1, 1]} : vector<8x384xf32> to vector<8x128xf32>
    %222 = vector.extract_strided_slice %220 {offsets = [0, 128], sizes = [8, 128], strides = [1, 1]} : vector<8x384xf32> to vector<8x128xf32>
    %223 = vector.extract_strided_slice %220 {offsets = [0, 256], sizes = [8, 128], strides = [1, 1]} : vector<8x384xf32> to vector<8x128xf32>
    %224 = vector.extract_strided_slice %214 {offsets = [0, 384], sizes = [8, 128], strides = [1, 1]} : vector<8x512xf32> to vector<8x128xf32>
    %225 = math.tanh %224 : vector<8x128xf32>
    %226 = arith.mulf %222, %153 : vector<8x128xf32>
    %227 = arith.mulf %221, %225 : vector<8x128xf32>
    %228 = arith.addf %226, %227 : vector<8x128xf32>
    %229 = math.tanh %228 : vector<8x128xf32>
    %230 = arith.mulf %223, %229 : vector<8x128xf32>
    %231 = tpu.concatenate %208, %180 in 1 : vector<8x128xf32>, vector<8x128xf32> -> vector<8x256xf32>
    %232 = arith.truncf %231 : vector<8x256xf32> to vector<8x256xbf16>
    %c1_82 = arith.constant 1 : index
    %c0_83 = arith.constant 0 : index
    %c0_84 = arith.constant 0 : index
    %233 = vector.load %arg3[%c1_82, %c0_83, %c0_84] : memref<2x256x512xbf16, #tpu.memory_space<vmem>>, vector<1x256x512xbf16>
    %234 = vector.shape_cast %233 : vector<1x256x512xbf16> to vector<256x512xbf16>
    %cst_85 = arith.constant dense<0.000000e+00> : vector<8x512xf32>
    %235 = tpu.matmul %232, %234, %cst_85 {dimension_numbers = #tpu.dot_dimension_numbers<[1], [0], [0], [1], [0, 0, 1, 1], [], []>} : vector<8x256xbf16>, vector<256x512xbf16>, vector<8x512xf32> -> vector<8x512xf32>
    %c2_86 = arith.constant 2 : index
    %c0_87 = arith.constant 0 : index
    %c0_88 = arith.constant 0 : index
    %236 = vector.load %arg4[%c2_86, %c0_87, %c0_88] : memref<3x1x512xf32, #tpu.memory_space<vmem>>, vector<1x1x512xf32>
    %237 = vector.shape_cast %236 : vector<1x1x512xf32> to vector<1x512xf32>
    %238 = vector.broadcast %237 : vector<1x512xf32> to vector<8x512xf32>
    %239 = arith.addf %235, %238 : vector<8x512xf32>
    %240 = vector.extract_strided_slice %239 {offsets = [0, 0], sizes = [8, 384], strides = [1, 1]} : vector<8x512xf32> to vector<8x384xf32>
    %241 = arith.negf %240 : vector<8x384xf32>
    %242 = math.exp %241 : vector<8x384xf32>
    %cst_89 = arith.constant 1.000000e+00 : f32
    %243 = vector.broadcast %cst_89 : f32 to vector<8x384xf32>
    %244 = arith.addf %243, %242 : vector<8x384xf32>
    %245 = arith.divf %243, %244 : vector<8x384xf32>
    %246 = vector.extract_strided_slice %245 {offsets = [0, 0], sizes = [8, 128], strides = [1, 1]} : vector<8x384xf32> to vector<8x128xf32>
    %247 = vector.extract_strided_slice %245 {offsets = [0, 128], sizes = [8, 128], strides = [1, 1]} : vector<8x384xf32> to vector<8x128xf32>
    %248 = vector.extract_strided_slice %245 {offsets = [0, 256], sizes = [8, 128], strides = [1, 1]} : vector<8x384xf32> to vector<8x128xf32>
    %249 = vector.extract_strided_slice %239 {offsets = [0, 384], sizes = [8, 128], strides = [1, 1]} : vector<8x512xf32> to vector<8x128xf32>
    %250 = math.tanh %249 : vector<8x128xf32>
    %251 = arith.mulf %247, %178 : vector<8x128xf32>
    %252 = arith.mulf %246, %250 : vector<8x128xf32>
    %253 = arith.addf %251, %252 : vector<8x128xf32>
    %254 = math.tanh %253 : vector<8x128xf32>
    %255 = arith.mulf %248, %254 : vector<8x128xf32>
    %c2_90 = arith.constant 2 : index
    %c0_91 = arith.constant 0 : index
    %c0_92 = arith.constant 0 : index
    %256 = vector.load %arg7[%c2_90, %c0_91, %c0_92] : memref<8x8x128xf32, #tpu.memory_space<vmem>>, vector<1x8x128xf32>
    %257 = vector.shape_cast %256 : vector<1x8x128xf32> to vector<8x128xf32>
    %258 = vector.shape_cast %255 : vector<8x128xf32> to vector<1x8x128xf32>
    tpu.vector_store %arg7[%c2_90, %c0_91, %c0_92], %258 {strides = array<i32>} : memref<8x8x128xf32, #tpu.memory_space<vmem>>, vector<1x8x128xf32>,
    %259 = tpu.concatenate %230, %208 in 1 : vector<8x128xf32>, vector<8x128xf32> -> vector<8x256xf32>
    %260 = arith.truncf %259 : vector<8x256xf32> to vector<8x256xbf16>
    %c0_93 = arith.constant 0 : index
    %c0_94 = arith.constant 0 : index
    %c0_95 = arith.constant 0 : index
    %261 = vector.load %arg3[%c0_93, %c0_94, %c0_95] : memref<2x256x512xbf16, #tpu.memory_space<vmem>>, vector<1x256x512xbf16>
    %262 = vector.shape_cast %261 : vector<1x256x512xbf16> to vector<256x512xbf16>
    %cst_96 = arith.constant dense<0.000000e+00> : vector<8x512xf32>
    %263 = tpu.matmul %260, %262, %cst_96 {dimension_numbers = #tpu.dot_dimension_numbers<[1], [0], [0], [1], [0, 0, 1, 1], [], []>} : vector<8x256xbf16>, vector<256x512xbf16>, vector<8x512xf32> -> vector<8x512xf32>
    %c1_97 = arith.constant 1 : index
    %c0_98 = arith.constant 0 : index
    %c0_99 = arith.constant 0 : index
    %264 = vector.load %arg4[%c1_97, %c0_98, %c0_99] : memref<3x1x512xf32, #tpu.memory_space<vmem>>, vector<1x1x512xf32>
    %265 = vector.shape_cast %264 : vector<1x1x512xf32> to vector<1x512xf32>
    %266 = vector.broadcast %265 : vector<1x512xf32> to vector<8x512xf32>
    %267 = arith.addf %263, %266 : vector<8x512xf32>
    %268 = vector.extract_strided_slice %267 {offsets = [0, 0], sizes = [8, 384], strides = [1, 1]} : vector<8x512xf32> to vector<8x384xf32>
    %269 = arith.negf %268 : vector<8x384xf32>
    %270 = math.exp %269 : vector<8x384xf32>
    %cst_100 = arith.constant 1.000000e+00 : f32
    %271 = vector.broadcast %cst_100 : f32 to vector<8x384xf32>
    %272 = arith.addf %271, %270 : vector<8x384xf32>
    %273 = arith.divf %271, %272 : vector<8x384xf32>
    %274 = vector.extract_strided_slice %273 {offsets = [0, 0], sizes = [8, 128], strides = [1, 1]} : vector<8x384xf32> to vector<8x128xf32>
    %275 = vector.extract_strided_slice %273 {offsets = [0, 128], sizes = [8, 128], strides = [1, 1]} : vector<8x384xf32> to vector<8x128xf32>
    %276 = vector.extract_strided_slice %273 {offsets = [0, 256], sizes = [8, 128], strides = [1, 1]} : vector<8x384xf32> to vector<8x128xf32>
    %277 = vector.extract_strided_slice %267 {offsets = [0, 384], sizes = [8, 128], strides = [1, 1]} : vector<8x512xf32> to vector<8x128xf32>
    %278 = math.tanh %277 : vector<8x128xf32>
    %279 = arith.mulf %275, %206 : vector<8x128xf32>
    %280 = arith.mulf %274, %278 : vector<8x128xf32>
    %281 = arith.addf %279, %280 : vector<8x128xf32>
    %282 = math.tanh %281 : vector<8x128xf32>
    %283 = arith.mulf %276, %282 : vector<8x128xf32>
    %c4 = arith.constant 4 : index
    %c0_101 = arith.constant 0 : index
    %c0_102 = arith.constant 0 : index
    %284 = vector.load %arg10[%c4, %c0_101, %c0_102] : memref<8x8x512xf32, #tpu.memory_space<vmem>>, vector<1x8x512xf32>
    %285 = vector.shape_cast %284 : vector<1x8x512xf32> to vector<8x512xf32>
    %286 = arith.truncf %230 : vector<8x128xf32> to vector<8x128xbf16>
    %c0_103 = arith.constant 0 : index
    %c0_104 = arith.constant 0 : index
    %287 = vector.load %arg2[%c0_103, %c0_104] : memref<128x512xbf16, #tpu.memory_space<vmem>>, vector<128x512xbf16>
    %cst_105 = arith.constant dense<0.000000e+00> : vector<8x512xf32>
    %288 = tpu.matmul %286, %287, %cst_105 {dimension_numbers = #tpu.dot_dimension_numbers<[1], [0], [0], [1], [0, 0, 1, 1], [], []>} : vector<8x128xbf16>, vector<128x512xbf16>, vector<8x512xf32> -> vector<8x512xf32>
    %289 = arith.addf %285, %288 : vector<8x512xf32>
    %290 = vector.extract_strided_slice %289 {offsets = [0, 0], sizes = [8, 384], strides = [1, 1]} : vector<8x512xf32> to vector<8x384xf32>
    %291 = arith.negf %290 : vector<8x384xf32>
    %292 = math.exp %291 : vector<8x384xf32>
    %cst_106 = arith.constant 1.000000e+00 : f32
    %293 = vector.broadcast %cst_106 : f32 to vector<8x384xf32>
    %294 = arith.addf %293, %292 : vector<8x384xf32>
    %295 = arith.divf %293, %294 : vector<8x384xf32>
    %296 = vector.extract_strided_slice %295 {offsets = [0, 0], sizes = [8, 128], strides = [1, 1]} : vector<8x384xf32> to vector<8x128xf32>
    %297 = vector.extract_strided_slice %295 {offsets = [0, 128], sizes = [8, 128], strides = [1, 1]} : vector<8x384xf32> to vector<8x128xf32>
    %298 = vector.extract_strided_slice %295 {offsets = [0, 256], sizes = [8, 128], strides = [1, 1]} : vector<8x384xf32> to vector<8x128xf32>
    %299 = vector.extract_strided_slice %289 {offsets = [0, 384], sizes = [8, 128], strides = [1, 1]} : vector<8x512xf32> to vector<8x128xf32>
    %300 = math.tanh %299 : vector<8x128xf32>
    %301 = arith.mulf %297, %228 : vector<8x128xf32>
    %302 = arith.mulf %296, %300 : vector<8x128xf32>
    %303 = arith.addf %301, %302 : vector<8x128xf32>
    %304 = math.tanh %303 : vector<8x128xf32>
    %305 = arith.mulf %298, %304 : vector<8x128xf32>
    %306 = tpu.concatenate %283, %255 in 1 : vector<8x128xf32>, vector<8x128xf32> -> vector<8x256xf32>
    %307 = arith.truncf %306 : vector<8x256xf32> to vector<8x256xbf16>
    %c1_107 = arith.constant 1 : index
    %c0_108 = arith.constant 0 : index
    %c0_109 = arith.constant 0 : index
    %308 = vector.load %arg3[%c1_107, %c0_108, %c0_109] : memref<2x256x512xbf16, #tpu.memory_space<vmem>>, vector<1x256x512xbf16>
    %309 = vector.shape_cast %308 : vector<1x256x512xbf16> to vector<256x512xbf16>
    %cst_110 = arith.constant dense<0.000000e+00> : vector<8x512xf32>
    %310 = tpu.matmul %307, %309, %cst_110 {dimension_numbers = #tpu.dot_dimension_numbers<[1], [0], [0], [1], [0, 0, 1, 1], [], []>} : vector<8x256xbf16>, vector<256x512xbf16>, vector<8x512xf32> -> vector<8x512xf32>
    %c2_111 = arith.constant 2 : index
    %c0_112 = arith.constant 0 : index
    %c0_113 = arith.constant 0 : index
    %311 = vector.load %arg4[%c2_111, %c0_112, %c0_113] : memref<3x1x512xf32, #tpu.memory_space<vmem>>, vector<1x1x512xf32>
    %312 = vector.shape_cast %311 : vector<1x1x512xf32> to vector<1x512xf32>
    %313 = vector.broadcast %312 : vector<1x512xf32> to vector<8x512xf32>
    %314 = arith.addf %310, %313 : vector<8x512xf32>
    %315 = vector.extract_strided_slice %314 {offsets = [0, 0], sizes = [8, 384], strides = [1, 1]} : vector<8x512xf32> to vector<8x384xf32>
    %316 = arith.negf %315 : vector<8x384xf32>
    %317 = math.exp %316 : vector<8x384xf32>
    %cst_114 = arith.constant 1.000000e+00 : f32
    %318 = vector.broadcast %cst_114 : f32 to vector<8x384xf32>
    %319 = arith.addf %318, %317 : vector<8x384xf32>
    %320 = arith.divf %318, %319 : vector<8x384xf32>
    %321 = vector.extract_strided_slice %320 {offsets = [0, 0], sizes = [8, 128], strides = [1, 1]} : vector<8x384xf32> to vector<8x128xf32>
    %322 = vector.extract_strided_slice %320 {offsets = [0, 128], sizes = [8, 128], strides = [1, 1]} : vector<8x384xf32> to vector<8x128xf32>
    %323 = vector.extract_strided_slice %320 {offsets = [0, 256], sizes = [8, 128], strides = [1, 1]} : vector<8x384xf32> to vector<8x128xf32>
    %324 = vector.extract_strided_slice %314 {offsets = [0, 384], sizes = [8, 128], strides = [1, 1]} : vector<8x512xf32> to vector<8x128xf32>
    %325 = math.tanh %324 : vector<8x128xf32>
    %326 = arith.mulf %322, %253 : vector<8x128xf32>
    %327 = arith.mulf %321, %325 : vector<8x128xf32>
    %328 = arith.addf %326, %327 : vector<8x128xf32>
    %329 = math.tanh %328 : vector<8x128xf32>
    %330 = arith.mulf %323, %329 : vector<8x128xf32>
    %c3_115 = arith.constant 3 : index
    %c0_116 = arith.constant 0 : index
    %c0_117 = arith.constant 0 : index
    %331 = vector.load %arg7[%c3_115, %c0_116, %c0_117] : memref<8x8x128xf32, #tpu.memory_space<vmem>>, vector<1x8x128xf32>
    %332 = vector.shape_cast %331 : vector<1x8x128xf32> to vector<8x128xf32>
    %333 = vector.shape_cast %330 : vector<8x128xf32> to vector<1x8x128xf32>
    tpu.vector_store %arg7[%c3_115, %c0_116, %c0_117], %333 {strides = array<i32>} : memref<8x8x128xf32, #tpu.memory_space<vmem>>, vector<1x8x128xf32>,
    %334 = tpu.concatenate %305, %283 in 1 : vector<8x128xf32>, vector<8x128xf32> -> vector<8x256xf32>
    %335 = arith.truncf %334 : vector<8x256xf32> to vector<8x256xbf16>
    %c0_118 = arith.constant 0 : index
    %c0_119 = arith.constant 0 : index
    %c0_120 = arith.constant 0 : index
    %336 = vector.load %arg3[%c0_118, %c0_119, %c0_120] : memref<2x256x512xbf16, #tpu.memory_space<vmem>>, vector<1x256x512xbf16>
    %337 = vector.shape_cast %336 : vector<1x256x512xbf16> to vector<256x512xbf16>
    %cst_121 = arith.constant dense<0.000000e+00> : vector<8x512xf32>
    %338 = tpu.matmul %335, %337, %cst_121 {dimension_numbers = #tpu.dot_dimension_numbers<[1], [0], [0], [1], [0, 0, 1, 1], [], []>} : vector<8x256xbf16>, vector<256x512xbf16>, vector<8x512xf32> -> vector<8x512xf32>
    %c1_122 = arith.constant 1 : index
    %c0_123 = arith.constant 0 : index
    %c0_124 = arith.constant 0 : index
    %339 = vector.load %arg4[%c1_122, %c0_123, %c0_124] : memref<3x1x512xf32, #tpu.memory_space<vmem>>, vector<1x1x512xf32>
    %340 = vector.shape_cast %339 : vector<1x1x512xf32> to vector<1x512xf32>
    %341 = vector.broadcast %340 : vector<1x512xf32> to vector<8x512xf32>
    %342 = arith.addf %338, %341 : vector<8x512xf32>
    %343 = vector.extract_strided_slice %342 {offsets = [0, 0], sizes = [8, 384], strides = [1, 1]} : vector<8x512xf32> to vector<8x384xf32>
    %344 = arith.negf %343 : vector<8x384xf32>
    %345 = math.exp %344 : vector<8x384xf32>
    %cst_125 = arith.constant 1.000000e+00 : f32
    %346 = vector.broadcast %cst_125 : f32 to vector<8x384xf32>
    %347 = arith.addf %346, %345 : vector<8x384xf32>
    %348 = arith.divf %346, %347 : vector<8x384xf32>
    %349 = vector.extract_strided_slice %348 {offsets = [0, 0], sizes = [8, 128], strides = [1, 1]} : vector<8x384xf32> to vector<8x128xf32>
    %350 = vector.extract_strided_slice %348 {offsets = [0, 128], sizes = [8, 128], strides = [1, 1]} : vector<8x384xf32> to vector<8x128xf32>
    %351 = vector.extract_strided_slice %348 {offsets = [0, 256], sizes = [8, 128], strides = [1, 1]} : vector<8x384xf32> to vector<8x128xf32>
    %352 = vector.extract_strided_slice %342 {offsets = [0, 384], sizes = [8, 128], strides = [1, 1]} : vector<8x512xf32> to vector<8x128xf32>
    %353 = math.tanh %352 : vector<8x128xf32>
    %354 = arith.mulf %350, %281 : vector<8x128xf32>
    %355 = arith.mulf %349, %353 : vector<8x128xf32>
    %356 = arith.addf %354, %355 : vector<8x128xf32>
    %357 = math.tanh %356 : vector<8x128xf32>
    %358 = arith.mulf %351, %357 : vector<8x128xf32>
    %c5 = arith.constant 5 : index
    %c0_126 = arith.constant 0 : index
    %c0_127 = arith.constant 0 : index
    %359 = vector.load %arg10[%c5, %c0_126, %c0_127] : memref<8x8x512xf32, #tpu.memory_space<vmem>>, vector<1x8x512xf32>
    %360 = vector.shape_cast %359 : vector<1x8x512xf32> to vector<8x512xf32>
    %361 = arith.truncf %305 : vector<8x128xf32> to vector<8x128xbf16>
    %c0_128 = arith.constant 0 : index
    %c0_129 = arith.constant 0 : index
    %362 = vector.load %arg2[%c0_128, %c0_129] : memref<128x512xbf16, #tpu.memory_space<vmem>>, vector<128x512xbf16>
    %cst_130 = arith.constant dense<0.000000e+00> : vector<8x512xf32>
    %363 = tpu.matmul %361, %362, %cst_130 {dimension_numbers = #tpu.dot_dimension_numbers<[1], [0], [0], [1], [0, 0, 1, 1], [], []>} : vector<8x128xbf16>, vector<128x512xbf16>, vector<8x512xf32> -> vector<8x512xf32>
    %364 = arith.addf %360, %363 : vector<8x512xf32>
    %365 = vector.extract_strided_slice %364 {offsets = [0, 0], sizes = [8, 384], strides = [1, 1]} : vector<8x512xf32> to vector<8x384xf32>
    %366 = arith.negf %365 : vector<8x384xf32>
    %367 = math.exp %366 : vector<8x384xf32>
    %cst_131 = arith.constant 1.000000e+00 : f32
    %368 = vector.broadcast %cst_131 : f32 to vector<8x384xf32>
    %369 = arith.addf %368, %367 : vector<8x384xf32>
    %370 = arith.divf %368, %369 : vector<8x384xf32>
    %371 = vector.extract_strided_slice %370 {offsets = [0, 0], sizes = [8, 128], strides = [1, 1]} : vector<8x384xf32> to vector<8x128xf32>
    %372 = vector.extract_strided_slice %370 {offsets = [0, 128], sizes = [8, 128], strides = [1, 1]} : vector<8x384xf32> to vector<8x128xf32>
    %373 = vector.extract_strided_slice %370 {offsets = [0, 256], sizes = [8, 128], strides = [1, 1]} : vector<8x384xf32> to vector<8x128xf32>
    %374 = vector.extract_strided_slice %364 {offsets = [0, 384], sizes = [8, 128], strides = [1, 1]} : vector<8x512xf32> to vector<8x128xf32>
    %375 = math.tanh %374 : vector<8x128xf32>
    %376 = arith.mulf %372, %303 : vector<8x128xf32>
    %377 = arith.mulf %371, %375 : vector<8x128xf32>
    %378 = arith.addf %376, %377 : vector<8x128xf32>
    %379 = math.tanh %378 : vector<8x128xf32>
    %380 = arith.mulf %373, %379 : vector<8x128xf32>
    %381 = tpu.concatenate %358, %330 in 1 : vector<8x128xf32>, vector<8x128xf32> -> vector<8x256xf32>
    %382 = arith.truncf %381 : vector<8x256xf32> to vector<8x256xbf16>
    %c1_132 = arith.constant 1 : index
    %c0_133 = arith.constant 0 : index
    %c0_134 = arith.constant 0 : index
    %383 = vector.load %arg3[%c1_132, %c0_133, %c0_134] : memref<2x256x512xbf16, #tpu.memory_space<vmem>>, vector<1x256x512xbf16>
    %384 = vector.shape_cast %383 : vector<1x256x512xbf16> to vector<256x512xbf16>
    %cst_135 = arith.constant dense<0.000000e+00> : vector<8x512xf32>
    %385 = tpu.matmul %382, %384, %cst_135 {dimension_numbers = #tpu.dot_dimension_numbers<[1], [0], [0], [1], [0, 0, 1, 1], [], []>} : vector<8x256xbf16>, vector<256x512xbf16>, vector<8x512xf32> -> vector<8x512xf32>
    %c2_136 = arith.constant 2 : index
    %c0_137 = arith.constant 0 : index
    %c0_138 = arith.constant 0 : index
    %386 = vector.load %arg4[%c2_136, %c0_137, %c0_138] : memref<3x1x512xf32, #tpu.memory_space<vmem>>, vector<1x1x512xf32>
    %387 = vector.shape_cast %386 : vector<1x1x512xf32> to vector<1x512xf32>
    %388 = vector.broadcast %387 : vector<1x512xf32> to vector<8x512xf32>
    %389 = arith.addf %385, %388 : vector<8x512xf32>
    %390 = vector.extract_strided_slice %389 {offsets = [0, 0], sizes = [8, 384], strides = [1, 1]} : vector<8x512xf32> to vector<8x384xf32>
    %391 = arith.negf %390 : vector<8x384xf32>
    %392 = math.exp %391 : vector<8x384xf32>
    %cst_139 = arith.constant 1.000000e+00 : f32
    %393 = vector.broadcast %cst_139 : f32 to vector<8x384xf32>
    %394 = arith.addf %393, %392 : vector<8x384xf32>
    %395 = arith.divf %393, %394 : vector<8x384xf32>
    %396 = vector.extract_strided_slice %395 {offsets = [0, 0], sizes = [8, 128], strides = [1, 1]} : vector<8x384xf32> to vector<8x128xf32>
    %397 = vector.extract_strided_slice %395 {offsets = [0, 128], sizes = [8, 128], strides = [1, 1]} : vector<8x384xf32> to vector<8x128xf32>
    %398 = vector.extract_strided_slice %395 {offsets = [0, 256], sizes = [8, 128], strides = [1, 1]} : vector<8x384xf32> to vector<8x128xf32>
    %399 = vector.extract_strided_slice %389 {offsets = [0, 384], sizes = [8, 128], strides = [1, 1]} : vector<8x512xf32> to vector<8x128xf32>
    %400 = math.tanh %399 : vector<8x128xf32>
    %401 = arith.mulf %397, %328 : vector<8x128xf32>
    %402 = arith.mulf %396, %400 : vector<8x128xf32>
    %403 = arith.addf %401, %402 : vector<8x128xf32>
    %404 = math.tanh %403 : vector<8x128xf32>
    %405 = arith.mulf %398, %404 : vector<8x128xf32>
    %c4_140 = arith.constant 4 : index
    %c0_141 = arith.constant 0 : index
    %c0_142 = arith.constant 0 : index
    %406 = vector.load %arg7[%c4_140, %c0_141, %c0_142] : memref<8x8x128xf32, #tpu.memory_space<vmem>>, vector<1x8x128xf32>
    %407 = vector.shape_cast %406 : vector<1x8x128xf32> to vector<8x128xf32>
    %408 = vector.shape_cast %405 : vector<8x128xf32> to vector<1x8x128xf32>
    tpu.vector_store %arg7[%c4_140, %c0_141, %c0_142], %408 {strides = array<i32>} : memref<8x8x128xf32, #tpu.memory_space<vmem>>, vector<1x8x128xf32>,
    %409 = tpu.concatenate %380, %358 in 1 : vector<8x128xf32>, vector<8x128xf32> -> vector<8x256xf32>
    %410 = arith.truncf %409 : vector<8x256xf32> to vector<8x256xbf16>
    %c0_143 = arith.constant 0 : index
    %c0_144 = arith.constant 0 : index
    %c0_145 = arith.constant 0 : index
    %411 = vector.load %arg3[%c0_143, %c0_144, %c0_145] : memref<2x256x512xbf16, #tpu.memory_space<vmem>>, vector<1x256x512xbf16>
    %412 = vector.shape_cast %411 : vector<1x256x512xbf16> to vector<256x512xbf16>
    %cst_146 = arith.constant dense<0.000000e+00> : vector<8x512xf32>
    %413 = tpu.matmul %410, %412, %cst_146 {dimension_numbers = #tpu.dot_dimension_numbers<[1], [0], [0], [1], [0, 0, 1, 1], [], []>} : vector<8x256xbf16>, vector<256x512xbf16>, vector<8x512xf32> -> vector<8x512xf32>
    %c1_147 = arith.constant 1 : index
    %c0_148 = arith.constant 0 : index
    %c0_149 = arith.constant 0 : index
    %414 = vector.load %arg4[%c1_147, %c0_148, %c0_149] : memref<3x1x512xf32, #tpu.memory_space<vmem>>, vector<1x1x512xf32>
    %415 = vector.shape_cast %414 : vector<1x1x512xf32> to vector<1x512xf32>
    %416 = vector.broadcast %415 : vector<1x512xf32> to vector<8x512xf32>
    %417 = arith.addf %413, %416 : vector<8x512xf32>
    %418 = vector.extract_strided_slice %417 {offsets = [0, 0], sizes = [8, 384], strides = [1, 1]} : vector<8x512xf32> to vector<8x384xf32>
    %419 = arith.negf %418 : vector<8x384xf32>
    %420 = math.exp %419 : vector<8x384xf32>
    %cst_150 = arith.constant 1.000000e+00 : f32
    %421 = vector.broadcast %cst_150 : f32 to vector<8x384xf32>
    %422 = arith.addf %421, %420 : vector<8x384xf32>
    %423 = arith.divf %421, %422 : vector<8x384xf32>
    %424 = vector.extract_strided_slice %423 {offsets = [0, 0], sizes = [8, 128], strides = [1, 1]} : vector<8x384xf32> to vector<8x128xf32>
    %425 = vector.extract_strided_slice %423 {offsets = [0, 128], sizes = [8, 128], strides = [1, 1]} : vector<8x384xf32> to vector<8x128xf32>
    %426 = vector.extract_strided_slice %423 {offsets = [0, 256], sizes = [8, 128], strides = [1, 1]} : vector<8x384xf32> to vector<8x128xf32>
    %427 = vector.extract_strided_slice %417 {offsets = [0, 384], sizes = [8, 128], strides = [1, 1]} : vector<8x512xf32> to vector<8x128xf32>
    %428 = math.tanh %427 : vector<8x128xf32>
    %429 = arith.mulf %425, %356 : vector<8x128xf32>
    %430 = arith.mulf %424, %428 : vector<8x128xf32>
    %431 = arith.addf %429, %430 : vector<8x128xf32>
    %432 = math.tanh %431 : vector<8x128xf32>
    %433 = arith.mulf %426, %432 : vector<8x128xf32>
    %c6 = arith.constant 6 : index
    %c0_151 = arith.constant 0 : index
    %c0_152 = arith.constant 0 : index
    %434 = vector.load %arg10[%c6, %c0_151, %c0_152] : memref<8x8x512xf32, #tpu.memory_space<vmem>>, vector<1x8x512xf32>
    %435 = vector.shape_cast %434 : vector<1x8x512xf32> to vector<8x512xf32>
    %436 = arith.truncf %380 : vector<8x128xf32> to vector<8x128xbf16>
    %c0_153 = arith.constant 0 : index
    %c0_154 = arith.constant 0 : index
    %437 = vector.load %arg2[%c0_153, %c0_154] : memref<128x512xbf16, #tpu.memory_space<vmem>>, vector<128x512xbf16>
    %cst_155 = arith.constant dense<0.000000e+00> : vector<8x512xf32>
    %438 = tpu.matmul %436, %437, %cst_155 {dimension_numbers = #tpu.dot_dimension_numbers<[1], [0], [0], [1], [0, 0, 1, 1], [], []>} : vector<8x128xbf16>, vector<128x512xbf16>, vector<8x512xf32> -> vector<8x512xf32>
    %439 = arith.addf %435, %438 : vector<8x512xf32>
    %440 = vector.extract_strided_slice %439 {offsets = [0, 0], sizes = [8, 384], strides = [1, 1]} : vector<8x512xf32> to vector<8x384xf32>
    %441 = arith.negf %440 : vector<8x384xf32>
    %442 = math.exp %441 : vector<8x384xf32>
    %cst_156 = arith.constant 1.000000e+00 : f32
    %443 = vector.broadcast %cst_156 : f32 to vector<8x384xf32>
    %444 = arith.addf %443, %442 : vector<8x384xf32>
    %445 = arith.divf %443, %444 : vector<8x384xf32>
    %446 = vector.extract_strided_slice %445 {offsets = [0, 0], sizes = [8, 128], strides = [1, 1]} : vector<8x384xf32> to vector<8x128xf32>
    %447 = vector.extract_strided_slice %445 {offsets = [0, 128], sizes = [8, 128], strides = [1, 1]} : vector<8x384xf32> to vector<8x128xf32>
    %448 = vector.extract_strided_slice %445 {offsets = [0, 256], sizes = [8, 128], strides = [1, 1]} : vector<8x384xf32> to vector<8x128xf32>
    %449 = vector.extract_strided_slice %439 {offsets = [0, 384], sizes = [8, 128], strides = [1, 1]} : vector<8x512xf32> to vector<8x128xf32>
    %450 = math.tanh %449 : vector<8x128xf32>
    %451 = arith.mulf %447, %378 : vector<8x128xf32>
    %452 = arith.mulf %446, %450 : vector<8x128xf32>
    %453 = arith.addf %451, %452 : vector<8x128xf32>
    %454 = math.tanh %453 : vector<8x128xf32>
    %455 = arith.mulf %448, %454 : vector<8x128xf32>
    %456 = tpu.concatenate %433, %405 in 1 : vector<8x128xf32>, vector<8x128xf32> -> vector<8x256xf32>
    %457 = arith.truncf %456 : vector<8x256xf32> to vector<8x256xbf16>
    %c1_157 = arith.constant 1 : index
    %c0_158 = arith.constant 0 : index
    %c0_159 = arith.constant 0 : index
    %458 = vector.load %arg3[%c1_157, %c0_158, %c0_159] : memref<2x256x512xbf16, #tpu.memory_space<vmem>>, vector<1x256x512xbf16>
    %459 = vector.shape_cast %458 : vector<1x256x512xbf16> to vector<256x512xbf16>
    %cst_160 = arith.constant dense<0.000000e+00> : vector<8x512xf32>
    %460 = tpu.matmul %457, %459, %cst_160 {dimension_numbers = #tpu.dot_dimension_numbers<[1], [0], [0], [1], [0, 0, 1, 1], [], []>} : vector<8x256xbf16>, vector<256x512xbf16>, vector<8x512xf32> -> vector<8x512xf32>
    %c2_161 = arith.constant 2 : index
    %c0_162 = arith.constant 0 : index
    %c0_163 = arith.constant 0 : index
    %461 = vector.load %arg4[%c2_161, %c0_162, %c0_163] : memref<3x1x512xf32, #tpu.memory_space<vmem>>, vector<1x1x512xf32>
    %462 = vector.shape_cast %461 : vector<1x1x512xf32> to vector<1x512xf32>
    %463 = vector.broadcast %462 : vector<1x512xf32> to vector<8x512xf32>
    %464 = arith.addf %460, %463 : vector<8x512xf32>
    %465 = vector.extract_strided_slice %464 {offsets = [0, 0], sizes = [8, 384], strides = [1, 1]} : vector<8x512xf32> to vector<8x384xf32>
    %466 = arith.negf %465 : vector<8x384xf32>
    %467 = math.exp %466 : vector<8x384xf32>
    %cst_164 = arith.constant 1.000000e+00 : f32
    %468 = vector.broadcast %cst_164 : f32 to vector<8x384xf32>
    %469 = arith.addf %468, %467 : vector<8x384xf32>
    %470 = arith.divf %468, %469 : vector<8x384xf32>
    %471 = vector.extract_strided_slice %470 {offsets = [0, 0], sizes = [8, 128], strides = [1, 1]} : vector<8x384xf32> to vector<8x128xf32>
    %472 = vector.extract_strided_slice %470 {offsets = [0, 128], sizes = [8, 128], strides = [1, 1]} : vector<8x384xf32> to vector<8x128xf32>
    %473 = vector.extract_strided_slice %470 {offsets = [0, 256], sizes = [8, 128], strides = [1, 1]} : vector<8x384xf32> to vector<8x128xf32>
    %474 = vector.extract_strided_slice %464 {offsets = [0, 384], sizes = [8, 128], strides = [1, 1]} : vector<8x512xf32> to vector<8x128xf32>
    %475 = math.tanh %474 : vector<8x128xf32>
    %476 = arith.mulf %472, %403 : vector<8x128xf32>
    %477 = arith.mulf %471, %475 : vector<8x128xf32>
    %478 = arith.addf %476, %477 : vector<8x128xf32>
    %479 = math.tanh %478 : vector<8x128xf32>
    %480 = arith.mulf %473, %479 : vector<8x128xf32>
    %c5_165 = arith.constant 5 : index
    %c0_166 = arith.constant 0 : index
    %c0_167 = arith.constant 0 : index
    %481 = vector.load %arg7[%c5_165, %c0_166, %c0_167] : memref<8x8x128xf32, #tpu.memory_space<vmem>>, vector<1x8x128xf32>
    %482 = vector.shape_cast %481 : vector<1x8x128xf32> to vector<8x128xf32>
    %483 = vector.shape_cast %480 : vector<8x128xf32> to vector<1x8x128xf32>
    tpu.vector_store %arg7[%c5_165, %c0_166, %c0_167], %483 {strides = array<i32>} : memref<8x8x128xf32, #tpu.memory_space<vmem>>, vector<1x8x128xf32>,
    %484 = tpu.concatenate %455, %433 in 1 : vector<8x128xf32>, vector<8x128xf32> -> vector<8x256xf32>
    %485 = arith.truncf %484 : vector<8x256xf32> to vector<8x256xbf16>
    %c0_168 = arith.constant 0 : index
    %c0_169 = arith.constant 0 : index
    %c0_170 = arith.constant 0 : index
    %486 = vector.load %arg3[%c0_168, %c0_169, %c0_170] : memref<2x256x512xbf16, #tpu.memory_space<vmem>>, vector<1x256x512xbf16>
    %487 = vector.shape_cast %486 : vector<1x256x512xbf16> to vector<256x512xbf16>
    %cst_171 = arith.constant dense<0.000000e+00> : vector<8x512xf32>
    %488 = tpu.matmul %485, %487, %cst_171 {dimension_numbers = #tpu.dot_dimension_numbers<[1], [0], [0], [1], [0, 0, 1, 1], [], []>} : vector<8x256xbf16>, vector<256x512xbf16>, vector<8x512xf32> -> vector<8x512xf32>
    %c1_172 = arith.constant 1 : index
    %c0_173 = arith.constant 0 : index
    %c0_174 = arith.constant 0 : index
    %489 = vector.load %arg4[%c1_172, %c0_173, %c0_174] : memref<3x1x512xf32, #tpu.memory_space<vmem>>, vector<1x1x512xf32>
    %490 = vector.shape_cast %489 : vector<1x1x512xf32> to vector<1x512xf32>
    %491 = vector.broadcast %490 : vector<1x512xf32> to vector<8x512xf32>
    %492 = arith.addf %488, %491 : vector<8x512xf32>
    %493 = vector.extract_strided_slice %492 {offsets = [0, 0], sizes = [8, 384], strides = [1, 1]} : vector<8x512xf32> to vector<8x384xf32>
    %494 = arith.negf %493 : vector<8x384xf32>
    %495 = math.exp %494 : vector<8x384xf32>
    %cst_175 = arith.constant 1.000000e+00 : f32
    %496 = vector.broadcast %cst_175 : f32 to vector<8x384xf32>
    %497 = arith.addf %496, %495 : vector<8x384xf32>
    %498 = arith.divf %496, %497 : vector<8x384xf32>
    %499 = vector.extract_strided_slice %498 {offsets = [0, 0], sizes = [8, 128], strides = [1, 1]} : vector<8x384xf32> to vector<8x128xf32>
    %500 = vector.extract_strided_slice %498 {offsets = [0, 128], sizes = [8, 128], strides = [1, 1]} : vector<8x384xf32> to vector<8x128xf32>
    %501 = vector.extract_strided_slice %498 {offsets = [0, 256], sizes = [8, 128], strides = [1, 1]} : vector<8x384xf32> to vector<8x128xf32>
    %502 = vector.extract_strided_slice %492 {offsets = [0, 384], sizes = [8, 128], strides = [1, 1]} : vector<8x512xf32> to vector<8x128xf32>
    %503 = math.tanh %502 : vector<8x128xf32>
    %504 = arith.mulf %500, %431 : vector<8x128xf32>
    %505 = arith.mulf %499, %503 : vector<8x128xf32>
    %506 = arith.addf %504, %505 : vector<8x128xf32>
    %507 = math.tanh %506 : vector<8x128xf32>
    %508 = arith.mulf %501, %507 : vector<8x128xf32>
    %c7 = arith.constant 7 : index
    %c0_176 = arith.constant 0 : index
    %c0_177 = arith.constant 0 : index
    %509 = vector.load %arg10[%c7, %c0_176, %c0_177] : memref<8x8x512xf32, #tpu.memory_space<vmem>>, vector<1x8x512xf32>
    %510 = vector.shape_cast %509 : vector<1x8x512xf32> to vector<8x512xf32>
    %511 = arith.truncf %455 : vector<8x128xf32> to vector<8x128xbf16>
    %c0_178 = arith.constant 0 : index
    %c0_179 = arith.constant 0 : index
    %512 = vector.load %arg2[%c0_178, %c0_179] : memref<128x512xbf16, #tpu.memory_space<vmem>>, vector<128x512xbf16>
    %cst_180 = arith.constant dense<0.000000e+00> : vector<8x512xf32>
    %513 = tpu.matmul %511, %512, %cst_180 {dimension_numbers = #tpu.dot_dimension_numbers<[1], [0], [0], [1], [0, 0, 1, 1], [], []>} : vector<8x128xbf16>, vector<128x512xbf16>, vector<8x512xf32> -> vector<8x512xf32>
    %514 = arith.addf %510, %513 : vector<8x512xf32>
    %515 = vector.extract_strided_slice %514 {offsets = [0, 0], sizes = [8, 384], strides = [1, 1]} : vector<8x512xf32> to vector<8x384xf32>
    %516 = arith.negf %515 : vector<8x384xf32>
    %517 = math.exp %516 : vector<8x384xf32>
    %cst_181 = arith.constant 1.000000e+00 : f32
    %518 = vector.broadcast %cst_181 : f32 to vector<8x384xf32>
    %519 = arith.addf %518, %517 : vector<8x384xf32>
    %520 = arith.divf %518, %519 : vector<8x384xf32>
    %521 = vector.extract_strided_slice %520 {offsets = [0, 0], sizes = [8, 128], strides = [1, 1]} : vector<8x384xf32> to vector<8x128xf32>
    %522 = vector.extract_strided_slice %520 {offsets = [0, 128], sizes = [8, 128], strides = [1, 1]} : vector<8x384xf32> to vector<8x128xf32>
    %523 = vector.extract_strided_slice %520 {offsets = [0, 256], sizes = [8, 128], strides = [1, 1]} : vector<8x384xf32> to vector<8x128xf32>
    %524 = vector.extract_strided_slice %514 {offsets = [0, 384], sizes = [8, 128], strides = [1, 1]} : vector<8x512xf32> to vector<8x128xf32>
    %525 = math.tanh %524 : vector<8x128xf32>
    %526 = arith.mulf %522, %453 : vector<8x128xf32>
    %527 = arith.mulf %521, %525 : vector<8x128xf32>
    %528 = arith.addf %526, %527 : vector<8x128xf32>
    %529 = math.tanh %528 : vector<8x128xf32>
    %530 = arith.mulf %523, %529 : vector<8x128xf32>
    %531 = tpu.concatenate %508, %480 in 1 : vector<8x128xf32>, vector<8x128xf32> -> vector<8x256xf32>
    %532 = arith.truncf %531 : vector<8x256xf32> to vector<8x256xbf16>
    %c1_182 = arith.constant 1 : index
    %c0_183 = arith.constant 0 : index
    %c0_184 = arith.constant 0 : index
    %533 = vector.load %arg3[%c1_182, %c0_183, %c0_184] : memref<2x256x512xbf16, #tpu.memory_space<vmem>>, vector<1x256x512xbf16>
    %534 = vector.shape_cast %533 : vector<1x256x512xbf16> to vector<256x512xbf16>
    %cst_185 = arith.constant dense<0.000000e+00> : vector<8x512xf32>
    %535 = tpu.matmul %532, %534, %cst_185 {dimension_numbers = #tpu.dot_dimension_numbers<[1], [0], [0], [1], [0, 0, 1, 1], [], []>} : vector<8x256xbf16>, vector<256x512xbf16>, vector<8x512xf32> -> vector<8x512xf32>
    %c2_186 = arith.constant 2 : index
    %c0_187 = arith.constant 0 : index
    %c0_188 = arith.constant 0 : index
    %536 = vector.load %arg4[%c2_186, %c0_187, %c0_188] : memref<3x1x512xf32, #tpu.memory_space<vmem>>, vector<1x1x512xf32>
    %537 = vector.shape_cast %536 : vector<1x1x512xf32> to vector<1x512xf32>
    %538 = vector.broadcast %537 : vector<1x512xf32> to vector<8x512xf32>
    %539 = arith.addf %535, %538 : vector<8x512xf32>
    %540 = vector.extract_strided_slice %539 {offsets = [0, 0], sizes = [8, 384], strides = [1, 1]} : vector<8x512xf32> to vector<8x384xf32>
    %541 = arith.negf %540 : vector<8x384xf32>
    %542 = math.exp %541 : vector<8x384xf32>
    %cst_189 = arith.constant 1.000000e+00 : f32
    %543 = vector.broadcast %cst_189 : f32 to vector<8x384xf32>
    %544 = arith.addf %543, %542 : vector<8x384xf32>
    %545 = arith.divf %543, %544 : vector<8x384xf32>
    %546 = vector.extract_strided_slice %545 {offsets = [0, 0], sizes = [8, 128], strides = [1, 1]} : vector<8x384xf32> to vector<8x128xf32>
    %547 = vector.extract_strided_slice %545 {offsets = [0, 128], sizes = [8, 128], strides = [1, 1]} : vector<8x384xf32> to vector<8x128xf32>
    %548 = vector.extract_strided_slice %545 {offsets = [0, 256], sizes = [8, 128], strides = [1, 1]} : vector<8x384xf32> to vector<8x128xf32>
    %549 = vector.extract_strided_slice %539 {offsets = [0, 384], sizes = [8, 128], strides = [1, 1]} : vector<8x512xf32> to vector<8x128xf32>
    %550 = math.tanh %549 : vector<8x128xf32>
    %551 = arith.mulf %547, %478 : vector<8x128xf32>
    %552 = arith.mulf %546, %550 : vector<8x128xf32>
    %553 = arith.addf %551, %552 : vector<8x128xf32>
    %554 = math.tanh %553 : vector<8x128xf32>
    %555 = arith.mulf %548, %554 : vector<8x128xf32>
    %c6_190 = arith.constant 6 : index
    %c0_191 = arith.constant 0 : index
    %c0_192 = arith.constant 0 : index
    %556 = vector.load %arg7[%c6_190, %c0_191, %c0_192] : memref<8x8x128xf32, #tpu.memory_space<vmem>>, vector<1x8x128xf32>
    %557 = vector.shape_cast %556 : vector<1x8x128xf32> to vector<8x128xf32>
    %558 = vector.shape_cast %555 : vector<8x128xf32> to vector<1x8x128xf32>
    tpu.vector_store %arg7[%c6_190, %c0_191, %c0_192], %558 {strides = array<i32>} : memref<8x8x128xf32, #tpu.memory_space<vmem>>, vector<1x8x128xf32>,
    %559 = tpu.concatenate %530, %508 in 1 : vector<8x128xf32>, vector<8x128xf32> -> vector<8x256xf32>
    %560 = arith.truncf %559 : vector<8x256xf32> to vector<8x256xbf16>
    %c0_193 = arith.constant 0 : index
    %c0_194 = arith.constant 0 : index
    %c0_195 = arith.constant 0 : index
    %561 = vector.load %arg3[%c0_193, %c0_194, %c0_195] : memref<2x256x512xbf16, #tpu.memory_space<vmem>>, vector<1x256x512xbf16>
    %562 = vector.shape_cast %561 : vector<1x256x512xbf16> to vector<256x512xbf16>
    %cst_196 = arith.constant dense<0.000000e+00> : vector<8x512xf32>
    %563 = tpu.matmul %560, %562, %cst_196 {dimension_numbers = #tpu.dot_dimension_numbers<[1], [0], [0], [1], [0, 0, 1, 1], [], []>} : vector<8x256xbf16>, vector<256x512xbf16>, vector<8x512xf32> -> vector<8x512xf32>
    %c1_197 = arith.constant 1 : index
    %c0_198 = arith.constant 0 : index
    %c0_199 = arith.constant 0 : index
    %564 = vector.load %arg4[%c1_197, %c0_198, %c0_199] : memref<3x1x512xf32, #tpu.memory_space<vmem>>, vector<1x1x512xf32>
    %565 = vector.shape_cast %564 : vector<1x1x512xf32> to vector<1x512xf32>
    %566 = vector.broadcast %565 : vector<1x512xf32> to vector<8x512xf32>
    %567 = arith.addf %563, %566 : vector<8x512xf32>
    %568 = vector.extract_strided_slice %567 {offsets = [0, 0], sizes = [8, 384], strides = [1, 1]} : vector<8x512xf32> to vector<8x384xf32>
    %569 = arith.negf %568 : vector<8x384xf32>
    %570 = math.exp %569 : vector<8x384xf32>
    %cst_200 = arith.constant 1.000000e+00 : f32
    %571 = vector.broadcast %cst_200 : f32 to vector<8x384xf32>
    %572 = arith.addf %571, %570 : vector<8x384xf32>
    %573 = arith.divf %571, %572 : vector<8x384xf32>
    %574 = vector.extract_strided_slice %573 {offsets = [0, 0], sizes = [8, 128], strides = [1, 1]} : vector<8x384xf32> to vector<8x128xf32>
    %575 = vector.extract_strided_slice %573 {offsets = [0, 128], sizes = [8, 128], strides = [1, 1]} : vector<8x384xf32> to vector<8x128xf32>
    %576 = vector.extract_strided_slice %573 {offsets = [0, 256], sizes = [8, 128], strides = [1, 1]} : vector<8x384xf32> to vector<8x128xf32>
    %577 = vector.extract_strided_slice %567 {offsets = [0, 384], sizes = [8, 128], strides = [1, 1]} : vector<8x512xf32> to vector<8x128xf32>
    %578 = math.tanh %577 : vector<8x128xf32>
    %579 = arith.mulf %575, %506 : vector<8x128xf32>
    %580 = arith.mulf %574, %578 : vector<8x128xf32>
    %581 = arith.addf %579, %580 : vector<8x128xf32>
    %582 = math.tanh %581 : vector<8x128xf32>
    %583 = arith.mulf %576, %582 : vector<8x128xf32>
    %584 = tpu.concatenate %583, %555 in 1 : vector<8x128xf32>, vector<8x128xf32> -> vector<8x256xf32>
    %585 = arith.truncf %584 : vector<8x256xf32> to vector<8x256xbf16>
    %c1_201 = arith.constant 1 : index
    %c0_202 = arith.constant 0 : index
    %c0_203 = arith.constant 0 : index
    %586 = vector.load %arg3[%c1_201, %c0_202, %c0_203] : memref<2x256x512xbf16, #tpu.memory_space<vmem>>, vector<1x256x512xbf16>
    %587 = vector.shape_cast %586 : vector<1x256x512xbf16> to vector<256x512xbf16>
    %cst_204 = arith.constant dense<0.000000e+00> : vector<8x512xf32>
    %588 = tpu.matmul %585, %587, %cst_204 {dimension_numbers = #tpu.dot_dimension_numbers<[1], [0], [0], [1], [0, 0, 1, 1], [], []>} : vector<8x256xbf16>, vector<256x512xbf16>, vector<8x512xf32> -> vector<8x512xf32>
    %c2_205 = arith.constant 2 : index
    %c0_206 = arith.constant 0 : index
    %c0_207 = arith.constant 0 : index
    %589 = vector.load %arg4[%c2_205, %c0_206, %c0_207] : memref<3x1x512xf32, #tpu.memory_space<vmem>>, vector<1x1x512xf32>
    %590 = vector.shape_cast %589 : vector<1x1x512xf32> to vector<1x512xf32>
    %591 = vector.broadcast %590 : vector<1x512xf32> to vector<8x512xf32>
    %592 = arith.addf %588, %591 : vector<8x512xf32>
    %593 = vector.extract_strided_slice %592 {offsets = [0, 0], sizes = [8, 384], strides = [1, 1]} : vector<8x512xf32> to vector<8x384xf32>
    %594 = arith.negf %593 : vector<8x384xf32>
    %595 = math.exp %594 : vector<8x384xf32>
    %cst_208 = arith.constant 1.000000e+00 : f32
    %596 = vector.broadcast %cst_208 : f32 to vector<8x384xf32>
    %597 = arith.addf %596, %595 : vector<8x384xf32>
    %598 = arith.divf %596, %597 : vector<8x384xf32>
    %599 = vector.extract_strided_slice %598 {offsets = [0, 0], sizes = [8, 128], strides = [1, 1]} : vector<8x384xf32> to vector<8x128xf32>
    %600 = vector.extract_strided_slice %598 {offsets = [0, 128], sizes = [8, 128], strides = [1, 1]} : vector<8x384xf32> to vector<8x128xf32>
    %601 = vector.extract_strided_slice %598 {offsets = [0, 256], sizes = [8, 128], strides = [1, 1]} : vector<8x384xf32> to vector<8x128xf32>
    %602 = vector.extract_strided_slice %592 {offsets = [0, 384], sizes = [8, 128], strides = [1, 1]} : vector<8x512xf32> to vector<8x128xf32>
    %603 = math.tanh %602 : vector<8x128xf32>
    %604 = arith.mulf %600, %553 : vector<8x128xf32>
    %605 = arith.mulf %599, %603 : vector<8x128xf32>
    %606 = arith.addf %604, %605 : vector<8x128xf32>
    %607 = math.tanh %606 : vector<8x128xf32>
    %608 = arith.mulf %601, %607 : vector<8x128xf32>
    %c7_209 = arith.constant 7 : index
    %c0_210 = arith.constant 0 : index
    %c0_211 = arith.constant 0 : index
    %609 = vector.load %arg7[%c7_209, %c0_210, %c0_211] : memref<8x8x128xf32, #tpu.memory_space<vmem>>, vector<1x8x128xf32>
    %610 = vector.shape_cast %609 : vector<1x8x128xf32> to vector<8x128xf32>
    %611 = vector.shape_cast %608 : vector<8x128xf32> to vector<1x8x128xf32>
    tpu.vector_store %arg7[%c7_209, %c0_210, %c0_211], %611 {strides = array<i32>} : memref<8x8x128xf32, #tpu.memory_space<vmem>>, vector<1x8x128xf32>,
    %c0_212 = arith.constant 0 : index
    %c0_213 = arith.constant 0 : index
    %c0_214 = arith.constant 0 : index
    %612 = vector.load %arg7[%c0_212, %c0_213, %c0_214] : memref<8x8x128xf32, #tpu.memory_space<vmem>>, vector<8x8x128xf32>
    %613 = vector.extract_strided_slice %612 {offsets = [0, 3, 0], sizes = [1, 1, 128], strides = [1, 1, 1]} : vector<8x8x128xf32> to vector<1x1x128xf32>
    %614 = vector.shape_cast %613 : vector<1x1x128xf32> to vector<1x128xf32>
    %615 = vector.extract_strided_slice %612 {offsets = [1, 3, 0], sizes = [1, 1, 128], strides = [1, 1, 1]} : vector<8x8x128xf32> to vector<1x1x128xf32>
    %616 = vector.shape_cast %615 : vector<1x1x128xf32> to vector<1x128xf32>
    %617 = vector.extract_strided_slice %612 {offsets = [2, 3, 0], sizes = [1, 1, 128], strides = [1, 1, 1]} : vector<8x8x128xf32> to vector<1x1x128xf32>
    %618 = vector.shape_cast %617 : vector<1x1x128xf32> to vector<1x128xf32>
    %619 = vector.extract_strided_slice %612 {offsets = [3, 3, 0], sizes = [1, 1, 128], strides = [1, 1, 1]} : vector<8x8x128xf32> to vector<1x1x128xf32>
    %620 = vector.shape_cast %619 : vector<1x1x128xf32> to vector<1x128xf32>
    %621 = vector.extract_strided_slice %612 {offsets = [4, 3, 0], sizes = [1, 1, 128], strides = [1, 1, 1]} : vector<8x8x128xf32> to vector<1x1x128xf32>
    %622 = vector.shape_cast %621 : vector<1x1x128xf32> to vector<1x128xf32>
    %623 = vector.extract_strided_slice %612 {offsets = [5, 3, 0], sizes = [1, 1, 128], strides = [1, 1, 1]} : vector<8x8x128xf32> to vector<1x1x128xf32>
    %624 = vector.shape_cast %623 : vector<1x1x128xf32> to vector<1x128xf32>
    %625 = vector.extract_strided_slice %612 {offsets = [6, 3, 0], sizes = [1, 1, 128], strides = [1, 1, 1]} : vector<8x8x128xf32> to vector<1x1x128xf32>
    %626 = vector.shape_cast %625 : vector<1x1x128xf32> to vector<1x128xf32>
    %627 = vector.extract_strided_slice %612 {offsets = [7, 3, 0], sizes = [1, 1, 128], strides = [1, 1, 1]} : vector<8x8x128xf32> to vector<1x1x128xf32>
    %628 = vector.shape_cast %627 : vector<1x1x128xf32> to vector<1x128xf32>
    %629 = tpu.concatenate %614, %616, %618, %620, %622, %624, %626, %628 in 0 : vector<1x128xf32>, vector<1x128xf32>, vector<1x128xf32>, vector<1x128xf32>, vector<1x128xf32>, vector<1x128xf32>, vector<1x128xf32>, vector<1x128xf32> -> vector<8x128xf32>
    %c0_215 = arith.constant 0 : index
    %c0_216 = arith.constant 0 : index
    %630 = vector.load %arg6[%c0_215, %c0_216] : memref<8x128xf32, #tpu.memory_space<vmem>>, vector<1x128xf32>
    %c1_217 = arith.constant 1 : index
    %c0_218 = arith.constant 0 : index
    %631 = vector.load %arg6[%c1_217, %c0_218] : memref<8x128xf32, #tpu.memory_space<vmem>>, vector<1x128xf32>
    %c2_219 = arith.constant 2 : index
    %c0_220 = arith.constant 0 : index
    %632 = vector.load %arg6[%c2_219, %c0_220] : memref<8x128xf32, #tpu.memory_space<vmem>>, vector<1x128xf32>
    %c3_221 = arith.constant 3 : index
    %c0_222 = arith.constant 0 : index
    %633 = vector.load %arg6[%c3_221, %c0_222] : memref<8x128xf32, #tpu.memory_space<vmem>>, vector<1x128xf32>
    %c4_223 = arith.constant 4 : index
    %c0_224 = arith.constant 0 : index
    %634 = vector.load %arg6[%c4_223, %c0_224] : memref<8x128xf32, #tpu.memory_space<vmem>>, vector<1x128xf32>
    %c5_225 = arith.constant 5 : index
    %c0_226 = arith.constant 0 : index
    %635 = vector.load %arg6[%c5_225, %c0_226] : memref<8x128xf32, #tpu.memory_space<vmem>>, vector<1x128xf32>
    %c6_227 = arith.constant 6 : index
    %c0_228 = arith.constant 0 : index
    %636 = vector.load %arg6[%c6_227, %c0_228] : memref<8x128xf32, #tpu.memory_space<vmem>>, vector<1x128xf32>
    %c7_229 = arith.constant 7 : index
    %c0_230 = arith.constant 0 : index
    %637 = vector.load %arg6[%c7_229, %c0_230] : memref<8x128xf32, #tpu.memory_space<vmem>>, vector<1x128xf32>
    %638 = arith.truncf %629 : vector<8x128xf32> to vector<8x128xbf16>
    %c0_231 = arith.constant 0 : index
    %c0_232 = arith.constant 0 : index
    %c0_233 = arith.constant 0 : index
    %639 = vector.load %arg5[%c0_231, %c0_232, %c0_233] : memref<3x128x128xbf16, #tpu.memory_space<vmem>>, vector<1x128x128xbf16>
    %640 = vector.shape_cast %639 : vector<1x128x128xbf16> to vector<128x128xbf16>
    %cst_234 = arith.constant dense<0.000000e+00> : vector<8x128xf32>
    %641 = tpu.matmul %638, %640, %cst_234 {dimension_numbers = #tpu.dot_dimension_numbers<[1], [0], [0], [1], [0, 0, 1, 1], [], []>} : vector<8x128xbf16>, vector<128x128xbf16>, vector<8x128xf32> -> vector<8x128xf32>
    %642 = vector.broadcast %630 : vector<1x128xf32> to vector<8x128xf32>
    %643 = arith.addf %641, %642 : vector<8x128xf32>
    %cst_235 = arith.constant dense<0.000000e+00> : vector<128xf32>
    %644 = vector.multi_reduction <add>, %643, %cst_235 [0] : vector<8x128xf32> to vector<128xf32>
    %645 = vector.shape_cast %644 : vector<128xf32> to vector<1x128xf32>
    %cst_236 = arith.constant 8.000000e+00 : f32
    %646 = vector.broadcast %cst_236 : f32 to vector<1x128xf32>
    %647 = arith.divf %645, %646 : vector<1x128xf32>
    %648 = vector.broadcast %647 : vector<1x128xf32> to vector<8x128xf32>
    %649 = arith.subf %643, %648 : vector<8x128xf32>
    %650 = arith.mulf %649, %649 : vector<8x128xf32>
    %cst_237 = arith.constant dense<0.000000e+00> : vector<128xf32>
    %651 = vector.multi_reduction <add>, %650, %cst_237 [0] : vector<8x128xf32> to vector<128xf32>
    %652 = vector.shape_cast %651 : vector<128xf32> to vector<1x128xf32>
    %cst_238 = arith.constant 8.000000e+00 : f32
    %653 = vector.broadcast %cst_238 : f32 to vector<1x128xf32>
    %654 = arith.divf %652, %653 : vector<1x128xf32>
    %655 = vector.broadcast %647 : vector<1x128xf32> to vector<8x128xf32>
    %656 = arith.subf %643, %655 : vector<8x128xf32>
    %cst_239 = arith.constant 9.99999974E-6 : f32
    %657 = vector.broadcast %cst_239 : f32 to vector<1x128xf32>
    %658 = arith.addf %654, %657 : vector<1x128xf32>
    %659 = math.rsqrt %658 : vector<1x128xf32>
    %660 = vector.broadcast %659 : vector<1x128xf32> to vector<8x128xf32>
    %661 = arith.mulf %656, %660 : vector<8x128xf32>
    %662 = vector.broadcast %631 : vector<1x128xf32> to vector<8x128xf32>
    %663 = arith.mulf %661, %662 : vector<8x128xf32>
    %664 = vector.broadcast %632 : vector<1x128xf32> to vector<8x128xf32>
    %665 = arith.addf %663, %664 : vector<8x128xf32>
    %cst_240 = arith.constant 0.000000e+00 : f32
    %666 = vector.broadcast %cst_240 : f32 to vector<8x128xf32>
    %667 = arith.maximumf %665, %666 : vector<8x128xf32>
    %668 = arith.truncf %667 : vector<8x128xf32> to vector<8x128xbf16>
    %c1_241 = arith.constant 1 : index
    %c0_242 = arith.constant 0 : index
    %c0_243 = arith.constant 0 : index
    %669 = vector.load %arg5[%c1_241, %c0_242, %c0_243] : memref<3x128x128xbf16, #tpu.memory_space<vmem>>, vector<1x128x128xbf16>
    %670 = vector.shape_cast %669 : vector<1x128x128xbf16> to vector<128x128xbf16>
    %cst_244 = arith.constant dense<0.000000e+00> : vector<8x128xf32>
    %671 = tpu.matmul %668, %670, %cst_244 {dimension_numbers = #tpu.dot_dimension_numbers<[1], [0], [0], [1], [0, 0, 1, 1], [], []>} : vector<8x128xbf16>, vector<128x128xbf16>, vector<8x128xf32> -> vector<8x128xf32>
    %672 = vector.broadcast %633 : vector<1x128xf32> to vector<8x128xf32>
    %673 = arith.addf %671, %672 : vector<8x128xf32>
    %cst_245 = arith.constant dense<0.000000e+00> : vector<128xf32>
    %674 = vector.multi_reduction <add>, %673, %cst_245 [0] : vector<8x128xf32> to vector<128xf32>
    %675 = vector.shape_cast %674 : vector<128xf32> to vector<1x128xf32>
    %cst_246 = arith.constant 8.000000e+00 : f32
    %676 = vector.broadcast %cst_246 : f32 to vector<1x128xf32>
    %677 = arith.divf %675, %676 : vector<1x128xf32>
    %678 = vector.broadcast %677 : vector<1x128xf32> to vector<8x128xf32>
    %679 = arith.subf %673, %678 : vector<8x128xf32>
    %680 = arith.mulf %679, %679 : vector<8x128xf32>
    %cst_247 = arith.constant dense<0.000000e+00> : vector<128xf32>
    %681 = vector.multi_reduction <add>, %680, %cst_247 [0] : vector<8x128xf32> to vector<128xf32>
    %682 = vector.shape_cast %681 : vector<128xf32> to vector<1x128xf32>
    %cst_248 = arith.constant 8.000000e+00 : f32
    %683 = vector.broadcast %cst_248 : f32 to vector<1x128xf32>
    %684 = arith.divf %682, %683 : vector<1x128xf32>
    %685 = vector.broadcast %677 : vector<1x128xf32> to vector<8x128xf32>
    %686 = arith.subf %673, %685 : vector<8x128xf32>
    %cst_249 = arith.constant 9.99999974E-6 : f32
    %687 = vector.broadcast %cst_249 : f32 to vector<1x128xf32>
    %688 = arith.addf %684, %687 : vector<1x128xf32>
    %689 = math.rsqrt %688 : vector<1x128xf32>
    %690 = vector.broadcast %689 : vector<1x128xf32> to vector<8x128xf32>
    %691 = arith.mulf %686, %690 : vector<8x128xf32>
    %692 = vector.broadcast %634 : vector<1x128xf32> to vector<8x128xf32>
    %693 = arith.mulf %691, %692 : vector<8x128xf32>
    %694 = vector.broadcast %635 : vector<1x128xf32> to vector<8x128xf32>
    %695 = arith.addf %693, %694 : vector<8x128xf32>
    %cst_250 = arith.constant 0.000000e+00 : f32
    %696 = vector.broadcast %cst_250 : f32 to vector<8x128xf32>
    %697 = arith.maximumf %695, %696 : vector<8x128xf32>
    %c0_251 = arith.constant 0 : index
    %c0_252 = arith.constant 0 : index
    %698 = vector.load %arg8[%c0_251, %c0_252] : memref<8x128xf32, #tpu.memory_space<vmem>>, vector<8x128xf32>
    tpu.vector_store %arg8[%c0_251, %c0_252], %697 {strides = array<i32>} : memref<8x128xf32, #tpu.memory_space<vmem>>, vector<8x128xf32>,
    %699 = arith.truncf %697 : vector<8x128xf32> to vector<8x128xbf16>
    %c2_253 = arith.constant 2 : index
    %c0_254 = arith.constant 0 : index
    %c0_255 = arith.constant 0 : index
    %700 = vector.load %arg5[%c2_253, %c0_254, %c0_255] : memref<3x128x128xbf16, #tpu.memory_space<vmem>>, vector<1x128x128xbf16>
    %701 = vector.shape_cast %700 : vector<1x128x128xbf16> to vector<128x128xbf16>
    %cst_256 = arith.constant dense<0.000000e+00> : vector<8x128xf32>
    %702 = tpu.matmul %699, %701, %cst_256 {dimension_numbers = #tpu.dot_dimension_numbers<[1], [0], [0], [1], [0, 0, 1, 1], [], []>} : vector<8x128xbf16>, vector<128x128xbf16>, vector<8x128xf32> -> vector<8x128xf32>
    %703 = vector.broadcast %637 : vector<1x128xf32> to vector<8x128xf32>
    %704 = arith.mulf %702, %703 : vector<8x128xf32>
    %705 = vector.broadcast %636 : vector<1x128xf32> to vector<8x128xf32>
    %706 = arith.addf %704, %705 : vector<8x128xf32>
    %c0_257 = arith.constant 0 : index
    %c0_258 = arith.constant 0 : index
    %707 = vector.load %arg9[%c0_257, %c0_258] : memref<8x128xf32, #tpu.memory_space<vmem>>, vector<8x128xf32>
    tpu.vector_store %arg9[%c0_257, %c0_258], %706 {strides = array<i32>} : memref<8x128xf32, #tpu.memory_space<vmem>>, vector<8x128xf32>,
    return
  }
}

</mosaic_0001>

<llo_original>
// kernel: tpu_custom_call.1
$region0: #{tpu_custom_call.1}
  #allocation0 [shape = 'u32[]', space=smem, size = 0x4, offset = 0x4, fixed_abs, tag = 'smem constant byte address 0x4 - core index']
  #allocation1 [shape = 'u32[144,128]{1,0:T(1,128)}', space=vmem, size = 0x12000, scoped, tag = 'internal scratch']
  #allocation2 [shape = 'f32[8,8,512]{2,1,0:T(8,128)}', space=vmem, size = 0x20000, scoped, tag = 'scratch operand']
  %s0 = inlined_call_operand.hbm [shape: f32[8,8,128], index: 0, kind: input, shape index: {}]
  %s1 = inlined_call_operand.hbm [shape: bf16[128,512], index: 1, kind: input, shape index: {}]
  %s2 = inlined_call_operand.hbm [shape: bf16[128,512], index: 2, kind: input, shape index: {}]
  %s3 = inlined_call_operand.hbm [shape: bf16[2,256,512], index: 3, kind: input, shape index: {}]
  %s4 = inlined_call_operand.hbm [shape: f32[3,1,512], index: 4, kind: input, shape index: {}]
  %s5 = inlined_call_operand.hbm [shape: bf16[3,128,128], index: 5, kind: input, shape index: {}]
  %s6 = inlined_call_operand.vmem [shape: f32[8,128], index: 6, kind: input, shape index: {}]
  %s7 = inlined_call_operand.hbm [shape: f32[8,8,128], index: 7, kind: output, shape index: {0}]
  %s8 = inlined_call_operand.hbm [shape: f32[8,128], index: 8, kind: output, shape index: {1}]
  %s9 = inlined_call_operand.hbm [shape: f32[8,128], index: 9, kind: output, shape index: {2}]
  %10 = xla_tuple %s7, %s8, %s9
  %s11 = sld [smem:[#allocation0]]
  $region78: #{tpu_custom_call.1} parent=0
    _
  %s13 = ssub.s32 1, %s11
  %s14 = scalar_select 0, %s13, %s11
  $region1: #{tpu_custom_call.1} parent=0
    #allocation3 [shape = 'u8[32768]{0}', space=vmem, size = 0x8000, scoped, tag = 'input window, operand 0, single buffered']
    #allocation4 [shape = 's32[1]{0}', space=sflag, size = 0x4, scoped, tag = 'scoped memory for tpu_custom_call.1']
    #allocation5 [shape = 's32[1]{0}', space=sflag, size = 0x4, scoped, tag = 'scoped memory for tpu_custom_call.1']
    #allocation6 [shape = 'u8[131072]{0}', space=vmem, size = 0x20000, scoped, tag = 'input window, operand 1, single buffered']
    #allocation7 [shape = 's32[1]{0}', space=sflag, size = 0x4, scoped, tag = 'scoped memory for tpu_custom_call.1']
    #allocation8 [shape = 'u8[131072]{0}', space=vmem, size = 0x20000, scoped, tag = 'input window, operand 2, single buffered']
    #allocation9 [shape = 'u8[524288]{0}', space=vmem, size = 0x80000, scoped, tag = 'input window, operand 3, single buffered']
    #allocation10 [shape = 's32[1]{0}', space=sflag, size = 0x4, scoped, tag = 'scoped memory for tpu_custom_call.1']
    #allocation11 [shape = 'u8[6144]{0}', space=vmem, size = 0x1800, scoped, tag = 'input window, operand 4, single buffered']
    #allocation12 [shape = 'u8[98304]{0}', space=vmem, size = 0x18000, scoped, tag = 'input window, operand 5, single buffered']
    #allocation13 [shape = 's32[1]{0}', space=sflag, size = 0x4, scoped, tag = 'scoped memory for tpu_custom_call.1']
    #allocation14 [shape = 'u8[32768]{0}', space=vmem, size = 0x8000, scoped, tag = 'output window, operand 0, single buffered']
    #allocation15 [shape = 'u8[4096]{0}', space=vmem, size = 0x1000, scoped, tag = 'output window, operand 1, single buffered']
    #allocation16 [shape = 's32[1]{0}', space=sflag, size = 0x4, scoped, tag = 'scoped memory for tpu_custom_call.1']
    #allocation17 [shape = 'u8[4096]{0}', space=vmem, size = 0x1000, scoped, tag = 'output window, operand 2, single buffered']
    %15 = vsyncpa [#allocation4], 0
    %16 = vsyncpa [#allocation7], 0
    %17 = vsyncpa [#allocation10], 0
    %18 = vsyncpa [#allocation13], 0
    %19 = vsyncpa [#allocation5], 0
    %20 = vsyncpa [#allocation16], 0
    // Predicated region
    $region2: #{tpu_custom_call.1} parent=1 // pred_check
      _
    $region3: #{tpu_custom_call.1} parent=1 // pred_check_branch
      %22 = sbr.rel (0) target = $region5
    $region4: #{tpu_custom_call.1} parent=1 // pred_region
      %s24 = ssub.s32 1024, 1024
      %25 = vsyncadd [#allocation4], %s24
      %s26 = sshll.u32 [#allocation3], 4
      %s27 = int_to_ptr.vmem [resolvable:$true] %s26
      %32 = dma.hbm_to_vmem [thread:$0]  %s0, 1024, %s27, [#allocation4], 128, 128, 8
    $region5: #{tpu_custom_call.1} parent=1 // pred_fallthru
      _
    // Predicated region
    $region6: #{tpu_custom_call.1} parent=1 // pred_check
      _
    $region7: #{tpu_custom_call.1} parent=1 // pred_check_branch
      %34 = sbr.rel (0) target = $region9
    $region8: #{tpu_custom_call.1} parent=1 // pred_region
      %s36 = ssub.s32 4096, 4096
      %37 = vsyncadd [#allocation7], %s36
      %s38 = sshll.u32 [#allocation6], 4
      %s39 = int_to_ptr.vmem [resolvable:$true] %s38
      %44 = dma.hbm_to_vmem [thread:$0]  %s1, 4096, %s39, [#allocation7], 256, 256, 16
    $region9: #{tpu_custom_call.1} parent=1 // pred_fallthru
      _
    // Predicated region
    $region10: #{tpu_custom_call.1} parent=1 // pred_check
      _
    $region11: #{tpu_custom_call.1} parent=1 // pred_check_branch
      %46 = sbr.rel (0) target = $region13
    $region12: #{tpu_custom_call.1} parent=1 // pred_region
      %s48 = ssub.s32 4096, 4096
      %49 = vsyncadd [#allocation7], %s48
      %s50 = sshll.u32 [#allocation8], 4
      %s51 = int_to_ptr.vmem [resolvable:$true] %s50
      %56 = dma.hbm_to_vmem [thread:$0]  %s2, 4096, %s51, [#allocation7], 256, 256, 16
    $region13: #{tpu_custom_call.1} parent=1 // pred_fallthru
      _
    // Predicated region
    $region14: #{tpu_custom_call.1} parent=1 // pred_check
      _
    $region15: #{tpu_custom_call.1} parent=1 // pred_check_branch
      %58 = sbr.rel (0) target = $region17
    $region16: #{tpu_custom_call.1} parent=1 // pred_region
      %s60 = ssub.s32 16384, 16384
      %61 = vsyncadd [#allocation10], %s60
      %s62 = sshll.u32 [#allocation9], 4
      %s63 = int_to_ptr.vmem [resolvable:$true] %s62
      %68 = dma.hbm_to_vmem [thread:$0]  %s3, 16384, %s63, [#allocation10], 256, 256, 16
    $region17: #{tpu_custom_call.1} parent=1 // pred_fallthru
      _
    // Predicated region
    $region18: #{tpu_custom_call.1} parent=1 // pred_check
      _
    $region19: #{tpu_custom_call.1} parent=1 // pred_check_branch
      %70 = sbr.rel (0) target = $region21
    $region20: #{tpu_custom_call.1} parent=1 // pred_region
      %s72 = ssub.s32 192, 192
      %73 = vsyncadd [#allocation10], %s72
      %s74 = sshll.u32 [#allocation11], 4
      %s75 = int_to_ptr.vmem [resolvable:$true] %s74
      %80 = dma.hbm_to_vmem [thread:$0]  %s4, 192, %s75, [#allocation10], 64, 64, 4
    $region21: #{tpu_custom_call.1} parent=1 // pred_fallthru
      _
    // Predicated region
    $region22: #{tpu_custom_call.1} parent=1 // pred_check
      _
    $region23: #{tpu_custom_call.1} parent=1 // pred_check_branch
      %82 = sbr.rel (0) target = $region25
    $region24: #{tpu_custom_call.1} parent=1 // pred_region
      %s84 = ssub.s32 3072, 3072
      %85 = vsyncadd [#allocation13], %s84
      %s86 = sshll.u32 [#allocation12], 4
      %s87 = int_to_ptr.vmem [resolvable:$true] %s86
      %92 = dma.hbm_to_vmem [thread:$0]  %s5, 3072, %s87, [#allocation13], 64, 64, 4
    $region25: #{tpu_custom_call.1} parent=1 // pred_fallthru
      _
    // Predicated region
    $region26: #{tpu_custom_call.1} parent=1 // pred_check
      _
    $region27: #{tpu_custom_call.1} parent=1 // pred_check_branch
      %94 = sbr.rel (0) target = $region29
    $region28: #{tpu_custom_call.1} parent=1 // pred_region
      _
    $region29: #{tpu_custom_call.1} parent=1 // pred_fallthru
      _
    // Predicated region
    $region30: #{tpu_custom_call.1} parent=1 // pred_check
      _
    $region31: #{tpu_custom_call.1} parent=1 // pred_check_branch
      %96 = sbr.rel (0) target = $region33
    $region32: #{tpu_custom_call.1} parent=1 // pred_region
      %97 = dma.done [#allocation4], 1024
    $region33: #{tpu_custom_call.1} parent=1 // pred_fallthru
      _
    // Predicated region
    $region34: #{tpu_custom_call.1} parent=1 // pred_check
      _
    $region35: #{tpu_custom_call.1} parent=1 // pred_check_branch
      %99 = sbr.rel (0) target = $region37
    $region36: #{tpu_custom_call.1} parent=1 // pred_region
      %100 = dma.done [#allocation7], 4096
    $region37: #{tpu_custom_call.1} parent=1 // pred_fallthru
      _
    // Predicated region
    $region38: #{tpu_custom_call.1} parent=1 // pred_check
      _
    $region39: #{tpu_custom_call.1} parent=1 // pred_check_branch
      %102 = sbr.rel (0) target = $region41
    $region40: #{tpu_custom_call.1} parent=1 // pred_region
      %103 = dma.done [#allocation7], 4096
    $region41: #{tpu_custom_call.1} parent=1 // pred_fallthru
      _
    // Predicated region
    $region42: #{tpu_custom_call.1} parent=1 // pred_check
      _
    $region43: #{tpu_custom_call.1} parent=1 // pred_check_branch
      %105 = sbr.rel (0) target = $region45
    $region44: #{tpu_custom_call.1} parent=1 // pred_region
      %106 = dma.done [#allocation10], 16384
    $region45: #{tpu_custom_call.1} parent=1 // pred_fallthru
      _
    // Predicated region
    $region46: #{tpu_custom_call.1} parent=1 // pred_check
      _
    $region47: #{tpu_custom_call.1} parent=1 // pred_check_branch
      %108 = sbr.rel (0) target = $region49
    $region48: #{tpu_custom_call.1} parent=1 // pred_region
      %109 = dma.done [#allocation10], 192
    $region49: #{tpu_custom_call.1} parent=1 // pred_fallthru
      _
    // Predicated region
    $region50: #{tpu_custom_call.1} parent=1 // pred_check
      _
    $region51: #{tpu_custom_call.1} parent=1 // pred_check_branch
      %111 = sbr.rel (0) target = $region53
    $region52: #{tpu_custom_call.1} parent=1 // pred_region
      %112 = dma.done [#allocation13], 3072
    $region53: #{tpu_custom_call.1} parent=1 // pred_fallthru
      _
    %v114 = vld [vmem:[#allocation3] sm:$0xff]
    %v115 = vld [vmem:[#allocation3 + $0x8] sm:$0xff]
    %v116 = vld [vmem:[#allocation3 + $0x10] sm:$0xff]
    %v117 = vld [vmem:[#allocation3 + $0x18] sm:$0xff]
    %v118 = vld [vmem:[#allocation3 + $0x20] sm:$0xff]
    %v119 = vld [vmem:[#allocation3 + $0x28] sm:$0xff]
    %v120 = vld [vmem:[#allocation3 + $0x30] sm:$0xff]
    %v121 = vld [vmem:[#allocation3 + $0x38] sm:$0xff]
    %v122 = vpack.c.bf16 %v115, %v114
    %v123 = vpack.c.bf16 %v117, %v116
    %v124 = vpack.c.bf16 %v119, %v118
    %v125 = vpack.c.bf16 %v121, %v120
    %v126 = vld [vmem:[#allocation6] sm:$0xff]
    %v127 = vld [vmem:[#allocation6 + $0x8] sm:$0xff]
    %v128 = vld [vmem:[#allocation6 + $0x10] sm:$0xff]
    %v129 = vld [vmem:[#allocation6 + $0x18] sm:$0xff]
    %v130 = vld [vmem:[#allocation6 + $0x20] sm:$0xff]
    %v131 = vld [vmem:[#allocation6 + $0x28] sm:$0xff]
    %v132 = vld [vmem:[#allocation6 + $0x30] sm:$0xff]
    %v133 = vld [vmem:[#allocation6 + $0x38] sm:$0xff]
    %v134 = vld [vmem:[#allocation6 + $0x40] sm:$0xff]
    %v135 = vld [vmem:[#allocation6 + $0x48] sm:$0xff]
    %v136 = vld [vmem:[#allocation6 + $0x50] sm:$0xff]
    %v137 = vld [vmem:[#allocation6 + $0x58] sm:$0xff]
    %v138 = vld [vmem:[#allocation6 + $0x60] sm:$0xff]
    %v139 = vld [vmem:[#allocation6 + $0x68] sm:$0xff]
    %v140 = vld [vmem:[#allocation6 + $0x70] sm:$0xff]
    %v141 = vld [vmem:[#allocation6 + $0x78] sm:$0xff]
    %v142 = vld [vmem:[#allocation6 + $0x80] sm:$0xff]
    %v143 = vld [vmem:[#allocation6 + $0x88] sm:$0xff]
    %v144 = vld [vmem:[#allocation6 + $0x90] sm:$0xff]
    %v145 = vld [vmem:[#allocation6 + $0x98] sm:$0xff]
    %v146 = vld [vmem:[#allocation6 + $0xa0] sm:$0xff]
    %v147 = vld [vmem:[#allocation6 + $0xa8] sm:$0xff]
    %v148 = vld [vmem:[#allocation6 + $0xb0] sm:$0xff]
    %v149 = vld [vmem:[#allocation6 + $0xb8] sm:$0xff]
    %v150 = vld [vmem:[#allocation6 + $0xc0] sm:$0xff]
    %v151 = vld [vmem:[#allocation6 + $0xc8] sm:$0xff]
    %v152 = vld [vmem:[#allocation6 + $0xd0] sm:$0xff]
    %v153 = vld [vmem:[#allocation6 + $0xd8] sm:$0xff]
    %v154 = vld [vmem:[#allocation6 + $0xe0] sm:$0xff]
    %v155 = vld [vmem:[#allocation6 + $0xe8] sm:$0xff]
    %v156 = vld [vmem:[#allocation6 + $0xf0] sm:$0xff]
    %v157 = vld [vmem:[#allocation6 + $0xf8] sm:$0xff]
    %v158 = vld [vmem:[#allocation11] sm:$0xf]
    %v160 = vlaneseq
    %v161 = vshrl.u32 %v160, 7
    %v162 = vsub.s32 0, %v161
    %v163 = vrot.slane %v158, %v162
    %v164 = vlaneseq
    %v165 = vshrl.u32 %v164, 7
    %v166 = vsub.s32 1, %v165
    %v167 = vrot.slane %v158, %v166
    %v168 = vlaneseq
    %v169 = vshrl.u32 %v168, 7
    %v170 = vsub.s32 2, %v169
    %v171 = vrot.slane %v158, %v170
    %v172 = vlaneseq
    %v173 = vshrl.u32 %v172, 7
    %v174 = vsub.s32 3, %v173
    %v175 = vrot.slane %v158, %v174
    %v212 = vunpack.c.l.b16 %v126
    %v213 = vunpack.c.h.b16 %v126
    %v214 = vunpack.c.l.b16 %v127
    %v215 = vunpack.c.h.b16 %v127
    %v216 = vunpack.c.l.b16 %v128
    %v217 = vunpack.c.h.b16 %v128
    %v218 = vunpack.c.l.b16 %v129
    %v219 = vunpack.c.h.b16 %v129
    %v220 = vunpack.c.l.b16 %v130
    %v221 = vunpack.c.h.b16 %v130
    %v222 = vunpack.c.l.b16 %v131
    %v223 = vunpack.c.h.b16 %v131
    %v224 = vunpack.c.l.b16 %v132
    %v225 = vunpack.c.h.b16 %v132
    %v226 = vunpack.c.l.b16 %v133
    %v227 = vunpack.c.h.b16 %v133
    %v228 = vunpack.c.l.b16 %v134
    %v229 = vunpack.c.h.b16 %v134
    %v230 = vunpack.c.l.b16 %v135
    %v231 = vunpack.c.h.b16 %v135
    %v232 = vunpack.c.l.b16 %v136
    %v233 = vunpack.c.h.b16 %v136
    %v234 = vunpack.c.l.b16 %v137
    %v235 = vunpack.c.h.b16 %v137
    %v236 = vunpack.c.l.b16 %v138
    %v237 = vunpack.c.h.b16 %v138
    %v238 = vunpack.c.l.b16 %v139
    %v239 = vunpack.c.h.b16 %v139
    %v240 = vunpack.c.l.b16 %v140
    %v241 = vunpack.c.h.b16 %v140
    %v242 = vunpack.c.l.b16 %v141
    %v243 = vunpack.c.h.b16 %v141
    %v244 = vunpack.c.l.b16 %v142
    %v245 = vunpack.c.h.b16 %v142
    %v246 = vunpack.c.l.b16 %v143
    %v247 = vunpack.c.h.b16 %v143
    %v248 = vunpack.c.l.b16 %v144
    %v249 = vunpack.c.h.b16 %v144
    %v250 = vunpack.c.l.b16 %v145
    %v251 = vunpack.c.h.b16 %v145
    %v252 = vunpack.c.l.b16 %v146
    %v253 = vunpack.c.h.b16 %v146
    %v254 = vunpack.c.l.b16 %v147
    %v255 = vunpack.c.h.b16 %v147
    %v256 = vunpack.c.l.b16 %v148
    %v257 = vunpack.c.h.b16 %v148
    %v258 = vunpack.c.l.b16 %v149
    %v259 = vunpack.c.h.b16 %v149
    %v260 = vunpack.c.l.b16 %v150
    %v261 = vunpack.c.h.b16 %v150
    %v262 = vunpack.c.l.b16 %v151
    %v263 = vunpack.c.h.b16 %v151
    %v264 = vunpack.c.l.b16 %v152
    %v265 = vunpack.c.h.b16 %v152
    %v266 = vunpack.c.l.b16 %v153
    %v267 = vunpack.c.h.b16 %v153
    %v268 = vunpack.c.l.b16 %v154
    %v269 = vunpack.c.h.b16 %v154
    %v270 = vunpack.c.l.b16 %v155
    %v271 = vunpack.c.h.b16 %v155
    %v272 = vunpack.c.l.b16 %v156
    %v273 = vunpack.c.h.b16 %v156
    %v274 = vunpack.c.l.b16 %v157
    %v275 = vunpack.c.h.b16 %v157
    %v276 = vpack.c.b16 %v216, %v212
    %v277 = vpack.c.b16 %v217, %v213
    %v278 = vpack.c.b16 %v218, %v214
    %v279 = vpack.c.b16 %v219, %v215
    %v280 = vpack.c.b16 %v224, %v220
    %v281 = vpack.c.b16 %v225, %v221
    %v282 = vpack.c.b16 %v226, %v222
    %v283 = vpack.c.b16 %v227, %v223
    %v284 = vpack.c.b16 %v232, %v228
    %v285 = vpack.c.b16 %v233, %v229
    %v286 = vpack.c.b16 %v234, %v230
    %v287 = vpack.c.b16 %v235, %v231
    %v288 = vpack.c.b16 %v240, %v236
    %v289 = vpack.c.b16 %v241, %v237
    %v290 = vpack.c.b16 %v242, %v238
    %v291 = vpack.c.b16 %v243, %v239
    %v292 = vpack.c.b16 %v248, %v244
    %v293 = vpack.c.b16 %v249, %v245
    %v294 = vpack.c.b16 %v250, %v246
    %v295 = vpack.c.b16 %v251, %v247
    %v296 = vpack.c.b16 %v256, %v252
    %v297 = vpack.c.b16 %v257, %v253
    %v298 = vpack.c.b16 %v258, %v254
    %v299 = vpack.c.b16 %v259, %v255
    %v300 = vpack.c.b16 %v264, %v260
    %v301 = vpack.c.b16 %v265, %v261
    %v302 = vpack.c.b16 %v266, %v262
    %v303 = vpack.c.b16 %v267, %v263
    %v304 = vpack.c.b16 %v272, %v268
    %v305 = vpack.c.b16 %v273, %v269
    %v306 = vpack.c.b16 %v274, %v270
    %v307 = vpack.c.b16 %v275, %v271
    %340 = vmatprep.subr.bf16.mxu0 %v305
    %341 = vmatpush1.bf16.msra.mxu0 %v304
    %342 = vmatprep.subr.bf16.mxu0 %v301
    %343 = vmatpush1.bf16.msra.mxu0 %v300
    %344 = vmatprep.subr.bf16.mxu0 %v297
    %345 = vmatpush1.bf16.msra.mxu0 %v296
    %346 = vmatprep.subr.bf16.mxu0 %v293
    %347 = vmatpush1.bf16.msra.mxu0 %v292
    %348 = vmatprep.subr.bf16.mxu0 %v289
    %349 = vmatpush1.bf16.msra.mxu0 %v288
    %350 = vmatprep.subr.bf16.mxu0 %v285
    %351 = vmatpush1.bf16.msra.mxu0 %v284
    %352 = vmatprep.subr.bf16.mxu0 %v281
    %353 = vmatpush1.bf16.msra.mxu0 %v280
    %354 = vmatprep.subr.bf16.mxu0 %v277
    %355 = vmatpush1.bf16.msra.mxu0 %v276
    %356 = vmatprep.subr.bf16.mxu0 0
    %357 = vmatpush2.bf16.msra.mxu0 0
    %358 = vmatprep.subr.bf16.mxu0 0
    %359 = vmatpush2.bf16.msra.mxu0 0
    %360 = vmatprep.subr.bf16.mxu0 0
    %361 = vmatpush2.bf16.msra.mxu0 0
    %362 = vmatprep.subr.bf16.mxu0 0
    %363 = vmatpush2.bf16.msra.mxu0 0
    %364 = vmatprep.subr.bf16.mxu0 0
    %365 = vmatpush2.bf16.msra.mxu0 0
    %366 = vmatprep.subr.bf16.mxu0 0
    %367 = vmatpush2.bf16.msra.mxu0 0
    %368 = vmatprep.subr.bf16.mxu0 0
    %369 = vmatpush2.bf16.msra.mxu0 0
    %370 = vmatprep.subr.bf16.mxu0 0
    %371 = vmatpush2.bf16.msra.mxu0 0
    %372 = vmatprep.mubr.bf16.mxu0 0
    %373 = vmatmul.mubr.bf16.gmra.mxu0 %v122
    %v374 = vpop.f32.mrf.mxu0
    %v375 = vadd.f32 %v163, %v374
    %v376 = vpop.f32.mrf.mxu0
    %v377 = vadd.f32 %v167, %v376
    %v378 = vpop.f32.mrf.mxu0
    %v379 = vadd.f32 %v163, %v378
    %v380 = vpop.f32.mrf.mxu0
    %v381 = vadd.f32 %v167, %v380
    %382 = vmatprep.mubr.bf16.mxu0 0
    %383 = vmatmul.mubr.bf16.gmra.mxu0 %v123
    %v384 = vpop.f32.mrf.mxu0
    %v385 = vadd.f32 %v163, %v384
    %v386 = vpop.f32.mrf.mxu0
    %v387 = vadd.f32 %v167, %v386
    %v388 = vpop.f32.mrf.mxu0
    %v389 = vadd.f32 %v163, %v388
    %v390 = vpop.f32.mrf.mxu0
    %v391 = vadd.f32 %v167, %v390
    %392 = vmatprep.mubr.bf16.mxu0 0
    %393 = vmatmul.mubr.bf16.gmra.mxu0 %v124
    %v394 = vpop.f32.mrf.mxu0
    %v395 = vadd.f32 %v163, %v394
    %v396 = vpop.f32.mrf.mxu0
    %v397 = vadd.f32 %v167, %v396
    %v398 = vpop.f32.mrf.mxu0
    %v399 = vadd.f32 %v163, %v398
    %v400 = vpop.f32.mrf.mxu0
    %v401 = vadd.f32 %v167, %v400
    %402 = vmatprep.mubr.bf16.mxu0 0
    %403 = vmatmul.mubr.bf16.gmra.mxu0 %v125
    %v404 = vpop.f32.mrf.mxu0
    %v405 = vadd.f32 %v163, %v404
    %v406 = vpop.f32.mrf.mxu0
    %v407 = vadd.f32 %v167, %v406
    %v408 = vpop.f32.mrf.mxu0
    %v409 = vadd.f32 %v163, %v408
    %v410 = vpop.f32.mrf.mxu0
    %v411 = vadd.f32 %v167, %v410
    %412 = vdwg.mxu0
    %413 = vmatprep.subr.bf16.mxu0 %v307
    %414 = vmatpush1.bf16.msra.mxu0 %v306
    %415 = vmatprep.subr.bf16.mxu0 %v303
    %416 = vmatpush1.bf16.msra.mxu0 %v302
    %417 = vmatprep.subr.bf16.mxu0 %v299
    %418 = vmatpush1.bf16.msra.mxu0 %v298
    %419 = vmatprep.subr.bf16.mxu0 %v295
    %420 = vmatpush1.bf16.msra.mxu0 %v294
    %421 = vmatprep.subr.bf16.mxu0 %v291
    %422 = vmatpush1.bf16.msra.mxu0 %v290
    %423 = vmatprep.subr.bf16.mxu0 %v287
    %424 = vmatpush1.bf16.msra.mxu0 %v286
    %425 = vmatprep.subr.bf16.mxu0 %v283
    %426 = vmatpush1.bf16.msra.mxu0 %v282
    %427 = vmatprep.subr.bf16.mxu0 %v279
    %428 = vmatpush1.bf16.msra.mxu0 %v278
    %429 = vmatprep.subr.bf16.mxu0 0
    %430 = vmatpush2.bf16.msra.mxu0 0
    %431 = vmatprep.subr.bf16.mxu0 0
    %432 = vmatpush2.bf16.msra.mxu0 0
    %433 = vmatprep.subr.bf16.mxu0 0
    %434 = vmatpush2.bf16.msra.mxu0 0
    %435 = vmatprep.subr.bf16.mxu0 0
    %436 = vmatpush2.bf16.msra.mxu0 0
    %437 = vmatprep.subr.bf16.mxu0 0
    %438 = vmatpush2.bf16.msra.mxu0 0
    %439 = vmatprep.subr.bf16.mxu0 0
    %440 = vmatpush2.bf16.msra.mxu0 0
    %441 = vmatprep.subr.bf16.mxu0 0
    %442 = vmatpush2.bf16.msra.mxu0 0
    %443 = vmatprep.subr.bf16.mxu0 0
    %444 = vmatpush2.bf16.msra.mxu0 0
    %445 = vmatprep.mubr.bf16.mxu0 0
    %446 = vmatmul.mubr.bf16.gmra.mxu0 %v122
    %v447 = vpop.f32.mrf.mxu0
    %v448 = vadd.f32 %v171, %v447
    %v449 = vpop.f32.mrf.mxu0
    %v450 = vadd.f32 %v175, %v449
    %v451 = vpop.f32.mrf.mxu0
    %v452 = vadd.f32 %v171, %v451
    %v453 = vpop.f32.mrf.mxu0
    %v454 = vadd.f32 %v175, %v453
    %455 = vmatprep.mubr.bf16.mxu0 0
    %456 = vmatmul.mubr.bf16.gmra.mxu0 %v123
    %v457 = vpop.f32.mrf.mxu0
    %v458 = vadd.f32 %v171, %v457
    %v459 = vpop.f32.mrf.mxu0
    %v460 = vadd.f32 %v175, %v459
    %v461 = vpop.f32.mrf.mxu0
    %v462 = vadd.f32 %v171, %v461
    %v463 = vpop.f32.mrf.mxu0
    %v464 = vadd.f32 %v175, %v463
    %465 = vmatprep.mubr.bf16.mxu0 0
    %466 = vmatmul.mubr.bf16.gmra.mxu0 %v124
    %v467 = vpop.f32.mrf.mxu0
    %v468 = vadd.f32 %v171, %v467
    %v469 = vpop.f32.mrf.mxu0
    %v470 = vadd.f32 %v175, %v469
    %v471 = vpop.f32.mrf.mxu0
    %v472 = vadd.f32 %v171, %v471
    %v473 = vpop.f32.mrf.mxu0
    %v474 = vadd.f32 %v175, %v473
    %475 = vmatprep.mubr.bf16.mxu0 0
    %476 = vmatmul.mubr.bf16.gmra.mxu0 %v125
    %v477 = vpop.f32.mrf.mxu0
    %v478 = vadd.f32 %v171, %v477
    %v479 = vpop.f32.mrf.mxu0
    %v480 = vadd.f32 %v175, %v479
    %v481 = vpop.f32.mrf.mxu0
    %v482 = vadd.f32 %v171, %v481
    %v483 = vpop.f32.mrf.mxu0
    %v484 = vadd.f32 %v175, %v483
    %485 = vdwg.mxu0
    %486 = vst [vmem:[#allocation2] sm:$0xff] %v375
    %487 = vst [vmem:[#allocation2 + $0x8] sm:$0xff] %v377
    %488 = vst [vmem:[#allocation2 + $0x10] sm:$0xff] %v448
    %489 = vst [vmem:[#allocation2 + $0x18] sm:$0xff] %v450
    %490 = vst [vmem:[#allocation2 + $0x20] sm:$0xff] %v379
    %491 = vst [vmem:[#allocation2 + $0x28] sm:$0xff] %v381
    %492 = vst [vmem:[#allocation2 + $0x30] sm:$0xff] %v452
    %493 = vst [vmem:[#allocation2 + $0x38] sm:$0xff] %v454
    %494 = vst [vmem:[#allocation2 + $0x40] sm:$0xff] %v385
    %495 = vst [vmem:[#allocation2 + $0x48] sm:$0xff] %v387
    %496 = vst [vmem:[#allocation2 + $0x50] sm:$0xff] %v458
    %497 = vst [vmem:[#allocation2 + $0x58] sm:$0xff] %v460
    %498 = vst [vmem:[#allocation2 + $0x60] sm:$0xff] %v389
    %499 = vst [vmem:[#allocation2 + $0x68] sm:$0xff] %v391
    %500 = vst [vmem:[#allocation2 + $0x70] sm:$0xff] %v462
    %501 = vst [vmem:[#allocation2 + $0x78] sm:$0xff] %v464
    %502 = vst [vmem:[#allocation2 + $0x80] sm:$0xff] %v395
    %503 = vst [vmem:[#allocation2 + $0x88] sm:$0xff] %v397
    %504 = vst [vmem:[#allocation2 + $0x90] sm:$0xff] %v468
    %505 = vst [vmem:[#allocation2 + $0x98] sm:$0xff] %v470
    %506 = vst [vmem:[#allocation2 + $0xa0] sm:$0xff] %v399
    %507 = vst [vmem:[#allocation2 + $0xa8] sm:$0xff] %v401
    %508 = vst [vmem:[#allocation2 + $0xb0] sm:$0xff] %v472
    %509 = vst [vmem:[#allocation2 + $0xb8] sm:$0xff] %v474
    %510 = vst [vmem:[#allocation2 + $0xc0] sm:$0xff] %v405
    %511 = vst [vmem:[#allocation2 + $0xc8] sm:$0xff] %v407
    %512 = vst [vmem:[#allocation2 + $0xd0] sm:$0xff] %v478
    %513 = vst [vmem:[#allocation2 + $0xd8] sm:$0xff] %v480
    %514 = vst [vmem:[#allocation2 + $0xe0] sm:$0xff] %v409
    %515 = vst [vmem:[#allocation2 + $0xe8] sm:$0xff] %v411
    %516 = vst [vmem:[#allocation2 + $0xf0] sm:$0xff] %v482
    %517 = vst [vmem:[#allocation2 + $0xf8] sm:$0xff] %v484
    %v518 = vld [vmem:[#allocation2] sm:$0xff]
    %v519 = vld [vmem:[#allocation2 + $0x8] sm:$0xff]
    %v520 = vld [vmem:[#allocation2 + $0x10] sm:$0xff]
    %v521 = vld [vmem:[#allocation2 + $0x18] sm:$0xff]
    %v522 = vld [vmem:[#allocation8] sm:$0xff]
    %v523 = vld [vmem:[#allocation8 + $0x8] sm:$0xff]
    %v524 = vld [vmem:[#allocation8 + $0x10] sm:$0xff]
    %v525 = vld [vmem:[#allocation8 + $0x18] sm:$0xff]
    %v526 = vld [vmem:[#allocation8 + $0x20] sm:$0xff]
    %v527 = vld [vmem:[#allocation8 + $0x28] sm:$0xff]
    %v528 = vld [vmem:[#allocation8 + $0x30] sm:$0xff]
    %v529 = vld [vmem:[#allocation8 + $0x38] sm:$0xff]
    %v530 = vld [vmem:[#allocation8 + $0x40] sm:$0xff]
    %v531 = vld [vmem:[#allocation8 + $0x48] sm:$0xff]
    %v532 = vld [vmem:[#allocation8 + $0x50] sm:$0xff]
    %v533 = vld [vmem:[#allocation8 + $0x58] sm:$0xff]
    %v534 = vld [vmem:[#allocation8 + $0x60] sm:$0xff]
    %v535 = vld [vmem:[#allocation8 + $0x68] sm:$0xff]
    %v536 = vld [vmem:[#allocation8 + $0x70] sm:$0xff]
    %v537 = vld [vmem:[#allocation8 + $0x78] sm:$0xff]
    %v538 = vld [vmem:[#allocation8 + $0x80] sm:$0xff]
    %v539 = vld [vmem:[#allocation8 + $0x88] sm:$0xff]
    %v540 = vld [vmem:[#allocation8 + $0x90] sm:$0xff]
    %v541 = vld [vmem:[#allocation8 + $0x98] sm:$0xff]
    %v542 = vld [vmem:[#allocation8 + $0xa0] sm:$0xff]
    %v543 = vld [vmem:[#allocation8 + $0xa8] sm:$0xff]
    %v544 = vld [vmem:[#allocation8 + $0xb0] sm:$0xff]
    %v545 = vld [vmem:[#allocation8 + $0xb8] sm:$0xff]
    %v546 = vld [vmem:[#allocation8 + $0xc0] sm:$0xff]
    %v547 = vld [vmem:[#allocation8 + $0xc8] sm:$0xff]
    %v548 = vld [vmem:[#allocation8 + $0xd0] sm:$0xff]
    %v549 = vld [vmem:[#allocation8 + $0xd8] sm:$0xff]
    %v550 = vld [vmem:[#allocation8 + $0xe0] sm:$0xff]
    %v551 = vld [vmem:[#allocation8 + $0xe8] sm:$0xff]
    %v552 = vld [vmem:[#allocation8 + $0xf0] sm:$0xff]
    %v553 = vld [vmem:[#allocation8 + $0xf8] sm:$0xff]
    %v586 = vunpack.c.l.b16 %v522
    %v587 = vunpack.c.h.b16 %v522
    %v588 = vunpack.c.l.b16 %v523
    %v589 = vunpack.c.h.b16 %v523
    %v590 = vunpack.c.l.b16 %v524
    %v591 = vunpack.c.h.b16 %v524
    %v592 = vunpack.c.l.b16 %v525
    %v593 = vunpack.c.h.b16 %v525
    %v594 = vunpack.c.l.b16 %v526
    %v595 = vunpack.c.h.b16 %v526
    %v596 = vunpack.c.l.b16 %v527
    %v597 = vunpack.c.h.b16 %v527
    %v598 = vunpack.c.l.b16 %v528
    %v599 = vunpack.c.h.b16 %v528
    %v600 = vunpack.c.l.b16 %v529
    %v601 = vunpack.c.h.b16 %v529
    %v602 = vunpack.c.l.b16 %v530
    %v603 = vunpack.c.h.b16 %v530
    %v604 = vunpack.c.l.b16 %v531
    %v605 = vunpack.c.h.b16 %v531
    %v606 = vunpack.c.l.b16 %v532
    %v607 = vunpack.c.h.b16 %v532
    %v608 = vunpack.c.l.b16 %v533
    %v609 = vunpack.c.h.b16 %v533
    %v610 = vunpack.c.l.b16 %v534
    %v611 = vunpack.c.h.b16 %v534
    %v612 = vunpack.c.l.b16 %v535
    %v613 = vunpack.c.h.b16 %v535
    %v614 = vunpack.c.l.b16 %v536
    %v615 = vunpack.c.h.b16 %v536
    %v616 = vunpack.c.l.b16 %v537
    %v617 = vunpack.c.h.b16 %v537
    %v618 = vunpack.c.l.b16 %v538
    %v619 = vunpack.c.h.b16 %v538
    %v620 = vunpack.c.l.b16 %v539
    %v621 = vunpack.c.h.b16 %v539
    %v622 = vunpack.c.l.b16 %v540
    %v623 = vunpack.c.h.b16 %v540
    %v624 = vunpack.c.l.b16 %v541
    %v625 = vunpack.c.h.b16 %v541
    %v626 = vunpack.c.l.b16 %v542
    %v627 = vunpack.c.h.b16 %v542
    %v628 = vunpack.c.l.b16 %v543
    %v629 = vunpack.c.h.b16 %v543
    %v630 = vunpack.c.l.b16 %v544
    %v631 = vunpack.c.h.b16 %v544
    %v632 = vunpack.c.l.b16 %v545
    %v633 = vunpack.c.h.b16 %v545
    %v634 = vunpack.c.l.b16 %v546
    %v635 = vunpack.c.h.b16 %v546
    %v636 = vunpack.c.l.b16 %v547
    %v637 = vunpack.c.h.b16 %v547
    %v638 = vunpack.c.l.b16 %v548
    %v639 = vunpack.c.h.b16 %v548
    %v640 = vunpack.c.l.b16 %v549
    %v641 = vunpack.c.h.b16 %v549
    %v642 = vunpack.c.l.b16 %v550
    %v643 = vunpack.c.h.b16 %v550
    %v644 = vunpack.c.l.b16 %v551
    %v645 = vunpack.c.h.b16 %v551
    %v646 = vunpack.c.l.b16 %v552
    %v647 = vunpack.c.h.b16 %v552
    %v648 = vunpack.c.l.b16 %v553
    %v649 = vunpack.c.h.b16 %v553
    %v650 = vpack.c.b16 %v590, %v586
    %v651 = vpack.c.b16 %v591, %v587
    %v652 = vpack.c.b16 %v592, %v588
    %v653 = vpack.c.b16 %v593, %v589
    %v654 = vpack.c.b16 %v598, %v594
    %v655 = vpack.c.b16 %v599, %v595
    %v656 = vpack.c.b16 %v600, %v596
    %v657 = vpack.c.b16 %v601, %v597
    %v658 = vpack.c.b16 %v606, %v602
    %v659 = vpack.c.b16 %v607, %v603
    %v660 = vpack.c.b16 %v608, %v604
    %v661 = vpack.c.b16 %v609, %v605
    %v662 = vpack.c.b16 %v614, %v610
    %v663 = vpack.c.b16 %v615, %v611
    %v664 = vpack.c.b16 %v616, %v612
    %v665 = vpack.c.b16 %v617, %v613
    %v666 = vpack.c.b16 %v622, %v618
    %v667 = vpack.c.b16 %v623, %v619
    %v668 = vpack.c.b16 %v624, %v620
    %v669 = vpack.c.b16 %v625, %v621
    %v670 = vpack.c.b16 %v630, %v626
    %v671 = vpack.c.b16 %v631, %v627
    %v672 = vpack.c.b16 %v632, %v628
    %v673 = vpack.c.b16 %v633, %v629
    %v674 = vpack.c.b16 %v638, %v634
    %v675 = vpack.c.b16 %v639, %v635
    %v676 = vpack.c.b16 %v640, %v636
    %v677 = vpack.c.b16 %v641, %v637
    %v678 = vpack.c.b16 %v646, %v642
    %v679 = vpack.c.b16 %v647, %v643
    %v680 = vpack.c.b16 %v648, %v644
    %v681 = vpack.c.b16 %v649, %v645
    %714 = vmatprep.subr.bf16.mxu0 %v679
    %715 = vmatpush1.bf16.msra.mxu0 %v678
    %716 = vmatprep.subr.bf16.mxu0 %v675
    %717 = vmatpush1.bf16.msra.mxu0 %v674
    %718 = vmatprep.subr.bf16.mxu0 %v671
    %719 = vmatpush1.bf16.msra.mxu0 %v670
    %720 = vmatprep.subr.bf16.mxu0 %v667
    %721 = vmatpush1.bf16.msra.mxu0 %v666
    %722 = vmatprep.subr.bf16.mxu0 %v663
    %723 = vmatpush1.bf16.msra.mxu0 %v662
    %724 = vmatprep.subr.bf16.mxu0 %v659
    %725 = vmatpush1.bf16.msra.mxu0 %v658
    %726 = vmatprep.subr.bf16.mxu0 %v655
    %727 = vmatpush1.bf16.msra.mxu0 %v654
    %728 = vmatprep.subr.bf16.mxu0 %v651
    %729 = vmatpush1.bf16.msra.mxu0 %v650
    %730 = vmatprep.subr.bf16.mxu0 0
    %731 = vmatpush2.bf16.msra.mxu0 0
    %732 = vmatprep.subr.bf16.mxu0 0
    %733 = vmatpush2.bf16.msra.mxu0 0
    %734 = vmatprep.subr.bf16.mxu0 0
    %735 = vmatpush2.bf16.msra.mxu0 0
    %736 = vmatprep.subr.bf16.mxu0 0
    %737 = vmatpush2.bf16.msra.mxu0 0
    %738 = vmatprep.subr.bf16.mxu0 0
    %739 = vmatpush2.bf16.msra.mxu0 0
    %740 = vmatprep.subr.bf16.mxu0 0
    %741 = vmatpush2.bf16.msra.mxu0 0
    %742 = vmatprep.subr.bf16.mxu0 0
    %743 = vmatpush2.bf16.msra.mxu0 0
    %744 = vmatprep.subr.bf16.mxu0 0
    %745 = vmatpush2.bf16.msra.mxu0 0
    %746 = vmatprep.mubr.bf16.mxu0 0
    %747 = vmatmul.mubr.bf16.gmra.mxu0 0
    %v748 = vpop.f32.mrf.mxu0
    %v749 = vadd.f32 0.0, %v748
    %v750 = vpop.f32.mrf.mxu0
    %v751 = vadd.f32 0.0, %v750
    %v752 = vpop.f32.mrf.mxu0
    %v753 = vpop.f32.mrf.mxu0
    %754 = vdwg.mxu0
    %755 = vmatprep.subr.bf16.mxu0 %v681
    %756 = vmatpush1.bf16.msra.mxu0 %v680
    %757 = vmatprep.subr.bf16.mxu0 %v677
    %758 = vmatpush1.bf16.msra.mxu0 %v676
    %759 = vmatprep.subr.bf16.mxu0 %v673
    %760 = vmatpush1.bf16.msra.mxu0 %v672
    %761 = vmatprep.subr.bf16.mxu0 %v669
    %762 = vmatpush1.bf16.msra.mxu0 %v668
    %763 = vmatprep.subr.bf16.mxu0 %v665
    %764 = vmatpush1.bf16.msra.mxu0 %v664
    %765 = vmatprep.subr.bf16.mxu0 %v661
    %766 = vmatpush1.bf16.msra.mxu0 %v660
    %767 = vmatprep.subr.bf16.mxu0 %v657
    %768 = vmatpush1.bf16.msra.mxu0 %v656
    %769 = vmatprep.subr.bf16.mxu0 %v653
    %770 = vmatpush1.bf16.msra.mxu0 %v652
    %771 = vmatprep.subr.bf16.mxu0 0
    %772 = vmatpush2.bf16.msra.mxu0 0
    %773 = vmatprep.subr.bf16.mxu0 0
    %774 = vmatpush2.bf16.msra.mxu0 0
    %775 = vmatprep.subr.bf16.mxu0 0
    %776 = vmatpush2.bf16.msra.mxu0 0
    %777 = vmatprep.subr.bf16.mxu0 0
    %778 = vmatpush2.bf16.msra.mxu0 0
    %779 = vmatprep.subr.bf16.mxu0 0
    %780 = vmatpush2.bf16.msra.mxu0 0
    %781 = vmatprep.subr.bf16.mxu0 0
    %782 = vmatpush2.bf16.msra.mxu0 0
    %783 = vmatprep.subr.bf16.mxu0 0
    %784 = vmatpush2.bf16.msra.mxu0 0
    %785 = vmatprep.subr.bf16.mxu0 0
    %786 = vmatpush2.bf16.msra.mxu0 0
    %787 = vmatprep.mubr.bf16.mxu0 0
    %788 = vmatmul.mubr.bf16.gmra.mxu0 0
    %v789 = vpop.f32.mrf.mxu0
    %v790 = vadd.f32 0.0, %v789
    %v791 = vpop.f32.mrf.mxu0
    %v792 = vadd.f32 0.0, %v791
    %v793 = vpop.f32.mrf.mxu0
    %v794 = vpop.f32.mrf.mxu0
    %795 = vdwg.mxu0
    %v796 = vadd.f32 %v518, %v749
    %v797 = vadd.f32 %v519, %v751
    %v798 = vadd.f32 %v520, %v790
    %v799 = vadd.f32 %v521, %v792
    %v800 = vxor.u32 %v796, 2147483648
    %v801 = vxor.u32 %v797, 2147483648
    %v802 = vxor.u32 %v798, 2147483648
    %v803 = vmul.f32 %v800, 1.442695
    %v804 = vpow.pop %v803
    %v805 = vmul.f32 %v801, 1.442695
    %v806 = vpow.pop %v805
    %v807 = vmul.f32 %v802, 1.442695
    %v808 = vpow.pop %v807
    %v809 = vadd.f32 %v804, 1.0
    %v810 = vadd.f32 %v806, 1.0
    %v811 = vadd.f32 %v808, 1.0
    %v812 = vrcp.pop %v809
    %v813 = vmul.f32 1.0, %v812
    %v814 = vrcp.pop %v810
    %v815 = vmul.f32 1.0, %v814
    %v816 = vrcp.pop %v811
    %v817 = vmul.f32 1.0, %v816
    %v818 = vtanh.pop %v799
    %v819 = vmul.f32 %v815, 0.0
    %v820 = vmul.f32 %v813, %v818
    %v821 = vadd.f32 %v819, %v820
    %v822 = vtanh.pop %v821
    %v823 = vmul.f32 %v817, %v822
    %v824 = vpack.c.bf16 %v823, %v823
    %v825 = vpack.c.bf16 0.0, 0.0
    %v826 = vld [vmem:[#allocation9] sm:$0xff]
    %v827 = vld [vmem:[#allocation9 + $0x8] sm:$0xff]
    %v828 = vld [vmem:[#allocation9 + $0x10] sm:$0xff]
    %v829 = vld [vmem:[#allocation9 + $0x18] sm:$0xff]
    %v830 = vld [vmem:[#allocation9 + $0x20] sm:$0xff]
    %v831 = vld [vmem:[#allocation9 + $0x28] sm:$0xff]
    %v832 = vld [vmem:[#allocation9 + $0x30] sm:$0xff]
    %v833 = vld [vmem:[#allocation9 + $0x38] sm:$0xff]
    %v834 = vld [vmem:[#allocation9 + $0x40] sm:$0xff]
    %v835 = vld [vmem:[#allocation9 + $0x48] sm:$0xff]
    %v836 = vld [vmem:[#allocation9 + $0x50] sm:$0xff]
    %v837 = vld [vmem:[#allocation9 + $0x58] sm:$0xff]
    %v838 = vld [vmem:[#allocation9 + $0x60] sm:$0xff]
    %v839 = vld [vmem:[#allocation9 + $0x68] sm:$0xff]
    %v840 = vld [vmem:[#allocation9 + $0x70] sm:$0xff]
    %v841 = vld [vmem:[#allocation9 + $0x78] sm:$0xff]
    %v842 = vld [vmem:[#allocation9 + $0x80] sm:$0xff]
    %v843 = vld [vmem:[#allocation9 + $0x88] sm:$0xff]
    %v844 = vld [vmem:[#allocation9 + $0x90] sm:$0xff]
    %v845 = vld [vmem:[#allocation9 + $0x98] sm:$0xff]
    %v846 = vld [vmem:[#allocation9 + $0xa0] sm:$0xff]
    %v847 = vld [vmem:[#allocation9 + $0xa8] sm:$0xff]
    %v848 = vld [vmem:[#allocation9 + $0xb0] sm:$0xff]
    %v849 = vld [vmem:[#allocation9 + $0xb8] sm:$0xff]
    %v850 = vld [vmem:[#allocation9 + $0xc0] sm:$0xff]
    %v851 = vld [vmem:[#allocation9 + $0xc8] sm:$0xff]
    %v852 = vld [vmem:[#allocation9 + $0xd0] sm:$0xff]
    %v853 = vld [vmem:[#allocation9 + $0xd8] sm:$0xff]
    %v854 = vld [vmem:[#allocation9 + $0xe0] sm:$0xff]
    %v855 = vld [vmem:[#allocation9 + $0xe8] sm:$0xff]
    %v856 = vld [vmem:[#allocation9 + $0xf0] sm:$0xff]
    %v857 = vld [vmem:[#allocation9 + $0xf8] sm:$0xff]
    %v858 = vld [vmem:[#allocation9 + $0x100] sm:$0xff]
    %v859 = vld [vmem:[#allocation9 + $0x108] sm:$0xff]
    %v860 = vld [vmem:[#allocation9 + $0x110] sm:$0xff]
    %v861 = vld [vmem:[#allocation9 + $0x118] sm:$0xff]
    %v862 = vld [vmem:[#allocation9 + $0x120] sm:$0xff]
    %v863 = vld [vmem:[#allocation9 + $0x128] sm:$0xff]
    %v864 = vld [vmem:[#allocation9 + $0x130] sm:$0xff]
    %v865 = vld [vmem:[#allocation9 + $0x138] sm:$0xff]
    %v866 = vld [vmem:[#allocation9 + $0x140] sm:$0xff]
    %v867 = vld [vmem:[#allocation9 + $0x148] sm:$0xff]
    %v868 = vld [vmem:[#allocation9 + $0x150] sm:$0xff]
    %v869 = vld [vmem:[#allocation9 + $0x158] sm:$0xff]
    %v870 = vld [vmem:[#allocation9 + $0x160] sm:$0xff]
    %v871 = vld [vmem:[#allocation9 + $0x168] sm:$0xff]
    %v872 = vld [vmem:[#allocation9 + $0x170] sm:$0xff]
    %v873 = vld [vmem:[#allocation9 + $0x178] sm:$0xff]
    %v874 = vld [vmem:[#allocation9 + $0x180] sm:$0xff]
    %v875 = vld [vmem:[#allocation9 + $0x188] sm:$0xff]
    %v876 = vld [vmem:[#allocation9 + $0x190] sm:$0xff]
    %v877 = vld [vmem:[#allocation9 + $0x198] sm:$0xff]
    %v878 = vld [vmem:[#allocation9 + $0x1a0] sm:$0xff]
    %v879 = vld [vmem:[#allocation9 + $0x1a8] sm:$0xff]
    %v880 = vld [vmem:[#allocation9 + $0x1b0] sm:$0xff]
    %v881 = vld [vmem:[#allocation9 + $0x1b8] sm:$0xff]
    %v882 = vld [vmem:[#allocation9 + $0x1c0] sm:$0xff]
    %v883 = vld [vmem:[#allocation9 + $0x1c8] sm:$0xff]
    %v884 = vld [vmem:[#allocation9 + $0x1d0] sm:$0xff]
    %v885 = vld [vmem:[#allocation9 + $0x1d8] sm:$0xff]
    %v886 = vld [vmem:[#allocation9 + $0x1e0] sm:$0xff]
    %v887 = vld [vmem:[#allocation9 + $0x1e8] sm:$0xff]
    %v888 = vld [vmem:[#allocation9 + $0x1f0] sm:$0xff]
    %v889 = vld [vmem:[#allocation9 + $0x1f8] sm:$0xff]
    %s890 = scalar_lea.vmem [#allocation11], 4
    %v891 = vld [vmem:[%s890] sm:$0xf]
    %v893 = vlaneseq
    %v894 = vshrl.u32 %v893, 7
    %v895 = vsub.s32 0, %v894
    %v896 = vrot.slane %v891, %v895
    %v897 = vlaneseq
    %v898 = vshrl.u32 %v897, 7
    %v899 = vsub.s32 1, %v898
    %v900 = vrot.slane %v891, %v899
    %v901 = vlaneseq
    %v902 = vshrl.u32 %v901, 7
    %v903 = vsub.s32 2, %v902
    %v904 = vrot.slane %v891, %v903
    %v905 = vlaneseq
    %v906 = vshrl.u32 %v905, 7
    %v907 = vsub.s32 3, %v906
    %v908 = vrot.slane %v891, %v907
    %v977 = vunpack.c.l.b16 %v826
    %v978 = vunpack.c.h.b16 %v826
    %v979 = vunpack.c.l.b16 %v827
    %v980 = vunpack.c.h.b16 %v827
    %v981 = vunpack.c.l.b16 %v828
    %v982 = vunpack.c.h.b16 %v828
    %v983 = vunpack.c.l.b16 %v829
    %v984 = vunpack.c.h.b16 %v829
    %v985 = vunpack.c.l.b16 %v830
    %v986 = vunpack.c.h.b16 %v830
    %v987 = vunpack.c.l.b16 %v831
    %v988 = vunpack.c.h.b16 %v831
    %v989 = vunpack.c.l.b16 %v832
    %v990 = vunpack.c.h.b16 %v832
    %v991 = vunpack.c.l.b16 %v833
    %v992 = vunpack.c.h.b16 %v833
    %v993 = vunpack.c.l.b16 %v834
    %v994 = vunpack.c.h.b16 %v834
    %v995 = vunpack.c.l.b16 %v835
    %v996 = vunpack.c.h.b16 %v835
    %v997 = vunpack.c.l.b16 %v836
    %v998 = vunpack.c.h.b16 %v836
    %v999 = vunpack.c.l.b16 %v837
    %v1000 = vunpack.c.h.b16 %v837
    %v1001 = vunpack.c.l.b16 %v838
    %v1002 = vunpack.c.h.b16 %v838
    %v1003 = vunpack.c.l.b16 %v839
    %v1004 = vunpack.c.h.b16 %v839
    %v1005 = vunpack.c.l.b16 %v840
    %v1006 = vunpack.c.h.b16 %v840
    %v1007 = vunpack.c.l.b16 %v841
    %v1008 = vunpack.c.h.b16 %v841
    %v1009 = vunpack.c.l.b16 %v842
    %v1010 = vunpack.c.h.b16 %v842
    %v1011 = vunpack.c.l.b16 %v843
    %v1012 = vunpack.c.h.b16 %v843
    %v1013 = vunpack.c.l.b16 %v844
    %v1014 = vunpack.c.h.b16 %v844
    %v1015 = vunpack.c.l.b16 %v845
    %v1016 = vunpack.c.h.b16 %v845
    %v1017 = vunpack.c.l.b16 %v846
    %v1018 = vunpack.c.h.b16 %v846
    %v1019 = vunpack.c.l.b16 %v847
    %v1020 = vunpack.c.h.b16 %v847
    %v1021 = vunpack.c.l.b16 %v848
    %v1022 = vunpack.c.h.b16 %v848
    %v1023 = vunpack.c.l.b16 %v849
    %v1024 = vunpack.c.h.b16 %v849
    %v1025 = vunpack.c.l.b16 %v850
    %v1026 = vunpack.c.h.b16 %v850
    %v1027 = vunpack.c.l.b16 %v851
    %v1028 = vunpack.c.h.b16 %v851
    %v1029 = vunpack.c.l.b16 %v852
    %v1030 = vunpack.c.h.b16 %v852
    %v1031 = vunpack.c.l.b16 %v853
    %v1032 = vunpack.c.h.b16 %v853
    %v1033 = vunpack.c.l.b16 %v854
    %v1034 = vunpack.c.h.b16 %v854
    %v1035 = vunpack.c.l.b16 %v855
    %v1036 = vunpack.c.h.b16 %v855
    %v1037 = vunpack.c.l.b16 %v856
    %v1038 = vunpack.c.h.b16 %v856
    %v1039 = vunpack.c.l.b16 %v857
    %v1040 = vunpack.c.h.b16 %v857
    %v1041 = vunpack.c.l.b16 %v858
    %v1042 = vunpack.c.h.b16 %v858
    %v1043 = vunpack.c.l.b16 %v859
    %v1044 = vunpack.c.h.b16 %v859
    %v1045 = vunpack.c.l.b16 %v860
    %v1046 = vunpack.c.h.b16 %v860
    %v1047 = vunpack.c.l.b16 %v861
    %v1048 = vunpack.c.h.b16 %v861
    %v1049 = vunpack.c.l.b16 %v862
    %v1050 = vunpack.c.h.b16 %v862
    %v1051 = vunpack.c.l.b16 %v863
    %v1052 = vunpack.c.h.b16 %v863
    %v1053 = vunpack.c.l.b16 %v864
    %v1054 = vunpack.c.h.b16 %v864
    %v1055 = vunpack.c.l.b16 %v865
    %v1056 = vunpack.c.h.b16 %v865
    %v1057 = vunpack.c.l.b16 %v866
    %v1058 = vunpack.c.h.b16 %v866
    %v1059 = vunpack.c.l.b16 %v867
    %v1060 = vunpack.c.h.b16 %v867
    %v1061 = vunpack.c.l.b16 %v868
    %v1062 = vunpack.c.h.b16 %v868
    %v1063 = vunpack.c.l.b16 %v869
    %v1064 = vunpack.c.h.b16 %v869
    %v1065 = vunpack.c.l.b16 %v870
    %v1066 = vunpack.c.h.b16 %v870
    %v1067 = vunpack.c.l.b16 %v871
    %v1068 = vunpack.c.h.b16 %v871
    %v1069 = vunpack.c.l.b16 %v872
    %v1070 = vunpack.c.h.b16 %v872
    %v1071 = vunpack.c.l.b16 %v873
    %v1072 = vunpack.c.h.b16 %v873
    %v1073 = vunpack.c.l.b16 %v874
    %v1074 = vunpack.c.h.b16 %v874
    %v1075 = vunpack.c.l.b16 %v875
    %v1076 = vunpack.c.h.b16 %v875
    %v1077 = vunpack.c.l.b16 %v876
    %v1078 = vunpack.c.h.b16 %v876
    %v1079 = vunpack.c.l.b16 %v877
    %v1080 = vunpack.c.h.b16 %v877
    %v1081 = vunpack.c.l.b16 %v878
    %v1082 = vunpack.c.h.b16 %v878
    %v1083 = vunpack.c.l.b16 %v879
    %v1084 = vunpack.c.h.b16 %v879
    %v1085 = vunpack.c.l.b16 %v880
    %v1086 = vunpack.c.h.b16 %v880
    %v1087 = vunpack.c.l.b16 %v881
    %v1088 = vunpack.c.h.b16 %v881
    %v1089 = vunpack.c.l.b16 %v882
    %v1090 = vunpack.c.h.b16 %v882
    %v1091 = vunpack.c.l.b16 %v883
    %v1092 = vunpack.c.h.b16 %v883
    %v1093 = vunpack.c.l.b16 %v884
    %v1094 = vunpack.c.h.b16 %v884
    %v1095 = vunpack.c.l.b16 %v885
    %v1096 = vunpack.c.h.b16 %v885
    %v1097 = vunpack.c.l.b16 %v886
    %v1098 = vunpack.c.h.b16 %v886
    %v1099 = vunpack.c.l.b16 %v887
    %v1100 = vunpack.c.h.b16 %v887
    %v1101 = vunpack.c.l.b16 %v888
    %v1102 = vunpack.c.h.b16 %v888
    %v1103 = vunpack.c.l.b16 %v889
    %v1104 = vunpack.c.h.b16 %v889
    %v1105 = vpack.c.b16 %v981, %v977
    %v1106 = vpack.c.b16 %v982, %v978
    %v1107 = vpack.c.b16 %v983, %v979
    %v1108 = vpack.c.b16 %v984, %v980
    %v1109 = vpack.c.b16 %v989, %v985
    %v1110 = vpack.c.b16 %v990, %v986
    %v1111 = vpack.c.b16 %v991, %v987
    %v1112 = vpack.c.b16 %v992, %v988
    %v1113 = vpack.c.b16 %v997, %v993
    %v1114 = vpack.c.b16 %v998, %v994
    %v1115 = vpack.c.b16 %v999, %v995
    %v1116 = vpack.c.b16 %v1000, %v996
    %v1117 = vpack.c.b16 %v1005, %v1001
    %v1118 = vpack.c.b16 %v1006, %v1002
    %v1119 = vpack.c.b16 %v1007, %v1003
    %v1120 = vpack.c.b16 %v1008, %v1004
    %v1121 = vpack.c.b16 %v1013, %v1009
    %v1122 = vpack.c.b16 %v1014, %v1010
    %v1123 = vpack.c.b16 %v1015, %v1011
    %v1124 = vpack.c.b16 %v1016, %v1012
    %v1125 = vpack.c.b16 %v1021, %v1017
    %v1126 = vpack.c.b16 %v1022, %v1018
    %v1127 = vpack.c.b16 %v1023, %v1019
    %v1128 = vpack.c.b16 %v1024, %v1020
    %v1129 = vpack.c.b16 %v1029, %v1025
    %v1130 = vpack.c.b16 %v1030, %v1026
    %v1131 = vpack.c.b16 %v1031, %v1027
    %v1132 = vpack.c.b16 %v1032, %v1028
    %v1133 = vpack.c.b16 %v1037, %v1033
    %v1134 = vpack.c.b16 %v1038, %v1034
    %v1135 = vpack.c.b16 %v1039, %v1035
    %v1136 = vpack.c.b16 %v1040, %v1036
    %v1137 = vpack.c.b16 %v1045, %v1041
    %v1138 = vpack.c.b16 %v1046, %v1042
    %v1139 = vpack.c.b16 %v1047, %v1043
    %v1140 = vpack.c.b16 %v1048, %v1044
    %v1141 = vpack.c.b16 %v1053, %v1049
    %v1142 = vpack.c.b16 %v1054, %v1050
    %v1143 = vpack.c.b16 %v1055, %v1051
    %v1144 = vpack.c.b16 %v1056, %v1052
    %v1145 = vpack.c.b16 %v1061, %v1057
    %v1146 = vpack.c.b16 %v1062, %v1058
    %v1147 = vpack.c.b16 %v1063, %v1059
    %v1148 = vpack.c.b16 %v1064, %v1060
    %v1149 = vpack.c.b16 %v1069, %v1065
    %v1150 = vpack.c.b16 %v1070, %v1066
    %v1151 = vpack.c.b16 %v1071, %v1067
    %v1152 = vpack.c.b16 %v1072, %v1068
    %v1153 = vpack.c.b16 %v1077, %v1073
    %v1154 = vpack.c.b16 %v1078, %v1074
    %v1155 = vpack.c.b16 %v1079, %v1075
    %v1156 = vpack.c.b16 %v1080, %v1076
    %v1157 = vpack.c.b16 %v1085, %v1081
    %v1158 = vpack.c.b16 %v1086, %v1082
    %v1159 = vpack.c.b16 %v1087, %v1083
    %v1160 = vpack.c.b16 %v1088, %v1084
    %v1161 = vpack.c.b16 %v1093, %v1089
    %v1162 = vpack.c.b16 %v1094, %v1090
    %v1163 = vpack.c.b16 %v1095, %v1091
    %v1164 = vpack.c.b16 %v1096, %v1092
    %v1165 = vpack.c.b16 %v1101, %v1097
    %v1166 = vpack.c.b16 %v1102, %v1098
    %v1167 = vpack.c.b16 %v1103, %v1099
    %v1168 = vpack.c.b16 %v1104, %v1100
    %1233 = vmatprep.subr.bf16.mxu0 %v1134
    %1234 = vmatpush1.bf16.msra.mxu0 %v1133
    %1235 = vmatprep.subr.bf16.mxu0 %v1130
    %1236 = vmatpush1.bf16.msra.mxu0 %v1129
    %1237 = vmatprep.subr.bf16.mxu0 %v1126
    %1238 = vmatpush1.bf16.msra.mxu0 %v1125
    %1239 = vmatprep.subr.bf16.mxu0 %v1122
    %1240 = vmatpush1.bf16.msra.mxu0 %v1121
    %1241 = vmatprep.subr.bf16.mxu0 %v1118
    %1242 = vmatpush1.bf16.msra.mxu0 %v1117
    %1243 = vmatprep.subr.bf16.mxu0 %v1114
    %1244 = vmatpush1.bf16.msra.mxu0 %v1113
    %1245 = vmatprep.subr.bf16.mxu0 %v1110
    %1246 = vmatpush1.bf16.msra.mxu0 %v1109
    %1247 = vmatprep.subr.bf16.mxu0 %v1106
    %1248 = vmatpush1.bf16.msra.mxu0 %v1105
    %1249 = vmatprep.subr.bf16.mxu0 %v1166
    %1250 = vmatpush2.bf16.msra.mxu0 %v1165
    %1251 = vmatprep.subr.bf16.mxu0 %v1162
    %1252 = vmatpush2.bf16.msra.mxu0 %v1161
    %1253 = vmatprep.subr.bf16.mxu0 %v1158
    %1254 = vmatpush2.bf16.msra.mxu0 %v1157
    %1255 = vmatprep.subr.bf16.mxu0 %v1154
    %1256 = vmatpush2.bf16.msra.mxu0 %v1153
    %1257 = vmatprep.subr.bf16.mxu0 %v1150
    %1258 = vmatpush2.bf16.msra.mxu0 %v1149
    %1259 = vmatprep.subr.bf16.mxu0 %v1146
    %1260 = vmatpush2.bf16.msra.mxu0 %v1145
    %1261 = vmatprep.subr.bf16.mxu0 %v1142
    %1262 = vmatpush2.bf16.msra.mxu0 %v1141
    %1263 = vmatprep.subr.bf16.mxu0 %v1138
    %1264 = vmatpush2.bf16.msra.mxu0 %v1137
    %1265 = vmatprep.mubr.bf16.mxu0 %v825
    %1266 = vmatmul.mubr.bf16.gmra.mxu0 %v824
    %v1267 = vpop.f32.mrf.mxu0
    %v1268 = vadd.f32 %v896, %v1267
    %v1269 = vpop.f32.mrf.mxu0
    %v1270 = vadd.f32 %v900, %v1269
    %v1271 = vpop.f32.mrf.mxu0
    %v1272 = vpop.f32.mrf.mxu0
    %1273 = vdwg.mxu0
    %1274 = vmatprep.subr.bf16.mxu0 %v1136
    %1275 = vmatpush1.bf16.msra.mxu0 %v1135
    %1276 = vmatprep.subr.bf16.mxu0 %v1132
    %1277 = vmatpush1.bf16.msra.mxu0 %v1131
    %1278 = vmatprep.subr.bf16.mxu0 %v1128
    %1279 = vmatpush1.bf16.msra.mxu0 %v1127
    %1280 = vmatprep.subr.bf16.mxu0 %v1124
    %1281 = vmatpush1.bf16.msra.mxu0 %v1123
    %1282 = vmatprep.subr.bf16.mxu0 %v1120
    %1283 = vmatpush1.bf16.msra.mxu0 %v1119
    %1284 = vmatprep.subr.bf16.mxu0 %v1116
    %1285 = vmatpush1.bf16.msra.mxu0 %v1115
    %1286 = vmatprep.subr.bf16.mxu0 %v1112
    %1287 = vmatpush1.bf16.msra.mxu0 %v1111
    %1288 = vmatprep.subr.bf16.mxu0 %v1108
    %1289 = vmatpush1.bf16.msra.mxu0 %v1107
    %1290 = vmatprep.subr.bf16.mxu0 %v1168
    %1291 = vmatpush2.bf16.msra.mxu0 %v1167
    %1292 = vmatprep.subr.bf16.mxu0 %v1164
    %1293 = vmatpush2.bf16.msra.mxu0 %v1163
    %1294 = vmatprep.subr.bf16.mxu0 %v1160
    %1295 = vmatpush2.bf16.msra.mxu0 %v1159
    %1296 = vmatprep.subr.bf16.mxu0 %v1156
    %1297 = vmatpush2.bf16.msra.mxu0 %v1155
    %1298 = vmatprep.subr.bf16.mxu0 %v1152
    %1299 = vmatpush2.bf16.msra.mxu0 %v1151
    %1300 = vmatprep.subr.bf16.mxu0 %v1148
    %1301 = vmatpush2.bf16.msra.mxu0 %v1147
    %1302 = vmatprep.subr.bf16.mxu0 %v1144
    %1303 = vmatpush2.bf16.msra.mxu0 %v1143
    %1304 = vmatprep.subr.bf16.mxu0 %v1140
    %1305 = vmatpush2.bf16.msra.mxu0 %v1139
    %1306 = vmatprep.mubr.bf16.mxu0 %v825
    %1307 = vmatmul.mubr.bf16.gmra.mxu0 %v824
    %v1308 = vpop.f32.mrf.mxu0
    %v1309 = vadd.f32 %v904, %v1308
    %v1310 = vpop.f32.mrf.mxu0
    %v1311 = vadd.f32 %v908, %v1310
    %v1312 = vpop.f32.mrf.mxu0
    %v1313 = vpop.f32.mrf.mxu0
    %1314 = vdwg.mxu0
    %v1315 = vxor.u32 %v1268, 2147483648
    %v1316 = vxor.u32 %v1270, 2147483648
    %v1317 = vxor.u32 %v1309, 2147483648
    %v1318 = vmul.f32 %v1315, 1.442695
    %v1319 = vpow.pop %v1318
    %v1320 = vmul.f32 %v1316, 1.442695
    %v1321 = vpow.pop %v1320
    %v1322 = vmul.f32 %v1317, 1.442695
    %v1323 = vpow.pop %v1322
    %v1324 = vadd.f32 %v1319, 1.0
    %v1325 = vadd.f32 %v1321, 1.0
    %v1326 = vadd.f32 %v1323, 1.0
    %v1327 = vrcp.pop %v1324
    %v1328 = vmul.f32 1.0, %v1327
    %v1329 = vrcp.pop %v1325
    %v1330 = vmul.f32 1.0, %v1329
    %v1331 = vrcp.pop %v1326
    %v1332 = vmul.f32 1.0, %v1331
    %v1333 = vtanh.pop %v1311
    %v1334 = vmul.f32 %v1330, 0.0
    %v1335 = vmul.f32 %v1328, %v1333
    %v1336 = vadd.f32 %v1334, %v1335
    %v1337 = vtanh.pop %v1336
    %v1338 = vmul.f32 %v1332, %v1337
    %s1339 = scalar_lea.vmem [#allocation2], 32
    %v1340 = vld [vmem:[%s1339] sm:$0xff]
    %v1341 = vld [vmem:[%s1339 + $0x8] sm:$0xff]
    %v1342 = vld [vmem:[%s1339 + $0x10] sm:$0xff]
    %v1343 = vld [vmem:[%s1339 + $0x18] sm:$0xff]
    %1344 = vmatprep.subr.bf16.mxu0 %v679
    %1345 = vmatpush1.bf16.msra.mxu0 %v678
    %1346 = vmatprep.subr.bf16.mxu0 %v675
    %1347 = vmatpush1.bf16.msra.mxu0 %v674
    %1348 = vmatprep.subr.bf16.mxu0 %v671
    %1349 = vmatpush1.bf16.msra.mxu0 %v670
    %1350 = vmatprep.subr.bf16.mxu0 %v667
    %1351 = vmatpush1.bf16.msra.mxu0 %v666
    %1352 = vmatprep.subr.bf16.mxu0 %v663
    %1353 = vmatpush1.bf16.msra.mxu0 %v662
    %1354 = vmatprep.subr.bf16.mxu0 %v659
    %1355 = vmatpush1.bf16.msra.mxu0 %v658
    %1356 = vmatprep.subr.bf16.mxu0 %v655
    %1357 = vmatpush1.bf16.msra.mxu0 %v654
    %1358 = vmatprep.subr.bf16.mxu0 %v651
    %1359 = vmatpush1.bf16.msra.mxu0 %v650
    %1360 = vmatprep.subr.bf16.mxu0 0
    %1361 = vmatpush2.bf16.msra.mxu0 0
    %1362 = vmatprep.subr.bf16.mxu0 0
    %1363 = vmatpush2.bf16.msra.mxu0 0
    %1364 = vmatprep.subr.bf16.mxu0 0
    %1365 = vmatpush2.bf16.msra.mxu0 0
    %1366 = vmatprep.subr.bf16.mxu0 0
    %1367 = vmatpush2.bf16.msra.mxu0 0
    %1368 = vmatprep.subr.bf16.mxu0 0
    %1369 = vmatpush2.bf16.msra.mxu0 0
    %1370 = vmatprep.subr.bf16.mxu0 0
    %1371 = vmatpush2.bf16.msra.mxu0 0
    %1372 = vmatprep.subr.bf16.mxu0 0
    %1373 = vmatpush2.bf16.msra.mxu0 0
    %1374 = vmatprep.subr.bf16.mxu0 0
    %1375 = vmatpush2.bf16.msra.mxu0 0
    %1376 = vmatprep.mubr.bf16.mxu0 0
    %1377 = vmatmul.mubr.bf16.gmra.mxu0 %v824
    %v1378 = vpop.f32.mrf.mxu0
    %v1379 = vadd.f32 0.0, %v1378
    %v1380 = vpop.f32.mrf.mxu0
    %v1381 = vadd.f32 0.0, %v1380
    %v1382 = vpop.f32.mrf.mxu0
    %v1383 = vpop.f32.mrf.mxu0
    %1384 = vdwg.mxu0
    %1385 = vmatprep.subr.bf16.mxu0 %v681
    %1386 = vmatpush1.bf16.msra.mxu0 %v680
    %1387 = vmatprep.subr.bf16.mxu0 %v677
    %1388 = vmatpush1.bf16.msra.mxu0 %v676
    %1389 = vmatprep.subr.bf16.mxu0 %v673
    %1390 = vmatpush1.bf16.msra.mxu0 %v672
    %1391 = vmatprep.subr.bf16.mxu0 %v669
    %1392 = vmatpush1.bf16.msra.mxu0 %v668
    %1393 = vmatprep.subr.bf16.mxu0 %v665
    %1394 = vmatpush1.bf16.msra.mxu0 %v664
    %1395 = vmatprep.subr.bf16.mxu0 %v661
    %1396 = vmatpush1.bf16.msra.mxu0 %v660
    %1397 = vmatprep.subr.bf16.mxu0 %v657
    %1398 = vmatpush1.bf16.msra.mxu0 %v656
    %1399 = vmatprep.subr.bf16.mxu0 %v653
    %1400 = vmatpush1.bf16.msra.mxu0 %v652
    %1401 = vmatprep.subr.bf16.mxu0 0
    %1402 = vmatpush2.bf16.msra.mxu0 0
    %1403 = vmatprep.subr.bf16.mxu0 0
    %1404 = vmatpush2.bf16.msra.mxu0 0
    %1405 = vmatprep.subr.bf16.mxu0 0
    %1406 = vmatpush2.bf16.msra.mxu0 0
    %1407 = vmatprep.subr.bf16.mxu0 0
    %1408 = vmatpush2.bf16.msra.mxu0 0
    %1409 = vmatprep.subr.bf16.mxu0 0
    %1410 = vmatpush2.bf16.msra.mxu0 0
    %1411 = vmatprep.subr.bf16.mxu0 0
    %1412 = vmatpush2.bf16.msra.mxu0 0
    %1413 = vmatprep.subr.bf16.mxu0 0
    %1414 = vmatpush2.bf16.msra.mxu0 0
    %1415 = vmatprep.subr.bf16.mxu0 0
    %1416 = vmatpush2.bf16.msra.mxu0 0
    %1417 = vmatprep.mubr.bf16.mxu0 0
    %1418 = vmatmul.mubr.bf16.gmra.mxu0 %v824
    %v1419 = vpop.f32.mrf.mxu0
    %v1420 = vadd.f32 0.0, %v1419
    %v1421 = vpop.f32.mrf.mxu0
    %v1422 = vadd.f32 0.0, %v1421
    %v1423 = vpop.f32.mrf.mxu0
    %v1424 = vpop.f32.mrf.mxu0
    %1425 = vdwg.mxu0
    %v1426 = vadd.f32 %v1340, %v1379
    %v1427 = vadd.f32 %v1341, %v1381
    %v1428 = vadd.f32 %v1342, %v1420
    %v1429 = vadd.f32 %v1343, %v1422
    %v1430 = vxor.u32 %v1426, 2147483648
    %v1431 = vxor.u32 %v1427, 2147483648
    %v1432 = vxor.u32 %v1428, 2147483648
    %v1433 = vmul.f32 %v1430, 1.442695
    %v1434 = vpow.pop %v1433
    %v1435 = vmul.f32 %v1431, 1.442695
    %v1436 = vpow.pop %v1435
    %v1437 = vmul.f32 %v1432, 1.442695
    %v1438 = vpow.pop %v1437
    %v1439 = vadd.f32 %v1434, 1.0
    %v1440 = vadd.f32 %v1436, 1.0
    %v1441 = vadd.f32 %v1438, 1.0
    %v1442 = vrcp.pop %v1439
    %v1443 = vmul.f32 1.0, %v1442
    %v1444 = vrcp.pop %v1440
    %v1445 = vmul.f32 1.0, %v1444
    %v1446 = vrcp.pop %v1441
    %v1447 = vmul.f32 1.0, %v1446
    %v1448 = vtanh.pop %v1429
    %v1449 = vmul.f32 %v1445, %v821
    %v1450 = vmul.f32 %v1443, %v1448
    %v1451 = vadd.f32 %v1449, %v1450
    %v1452 = vtanh.pop %v1451
    %v1453 = vmul.f32 %v1447, %v1452
    %v1454 = vpack.c.bf16 %v1338, %v1338
    %s1455 = scalar_lea.vmem [#allocation9], 512
    %v1456 = vld [vmem:[%s1455] sm:$0xff]
    %v1457 = vld [vmem:[%s1455 + $0x8] sm:$0xff]
    %v1458 = vld [vmem:[%s1455 + $0x10] sm:$0xff]
    %v1459 = vld [vmem:[%s1455 + $0x18] sm:$0xff]
    %v1460 = vld [vmem:[%s1455 + $0x20] sm:$0xff]
    %v1461 = vld [vmem:[%s1455 + $0x28] sm:$0xff]
    %v1462 = vld [vmem:[%s1455 + $0x30] sm:$0xff]
    %v1463 = vld [vmem:[%s1455 + $0x38] sm:$0xff]
    %v1464 = vld [vmem:[%s1455 + $0x40] sm:$0xff]
    %v1465 = vld [vmem:[%s1455 + $0x48] sm:$0xff]
    %v1466 = vld [vmem:[%s1455 + $0x50] sm:$0xff]
    %v1467 = vld [vmem:[%s1455 + $0x58] sm:$0xff]
    %v1468 = vld [vmem:[%s1455 + $0x60] sm:$0xff]
    %v1469 = vld [vmem:[%s1455 + $0x68] sm:$0xff]
    %v1470 = vld [vmem:[%s1455 + $0x70] sm:$0xff]
    %v1471 = vld [vmem:[%s1455 + $0x78] sm:$0xff]
    %v1472 = vld [vmem:[%s1455 + $0x80] sm:$0xff]
    %v1473 = vld [vmem:[%s1455 + $0x88] sm:$0xff]
    %v1474 = vld [vmem:[%s1455 + $0x90] sm:$0xff]
    %v1475 = vld [vmem:[%s1455 + $0x98] sm:$0xff]
    %v1476 = vld [vmem:[%s1455 + $0xa0] sm:$0xff]
    %v1477 = vld [vmem:[%s1455 + $0xa8] sm:$0xff]
    %v1478 = vld [vmem:[%s1455 + $0xb0] sm:$0xff]
    %v1479 = vld [vmem:[%s1455 + $0xb8] sm:$0xff]
    %v1480 = vld [vmem:[%s1455 + $0xc0] sm:$0xff]
    %v1481 = vld [vmem:[%s1455 + $0xc8] sm:$0xff]
    %v1482 = vld [vmem:[%s1455 + $0xd0] sm:$0xff]
    %v1483 = vld [vmem:[%s1455 + $0xd8] sm:$0xff]
    %v1484 = vld [vmem:[%s1455 + $0xe0] sm:$0xff]
    %v1485 = vld [vmem:[%s1455 + $0xe8] sm:$0xff]
    %v1486 = vld [vmem:[%s1455 + $0xf0] sm:$0xff]
    %v1487 = vld [vmem:[%s1455 + $0xf8] sm:$0xff]
    %v1488 = vld [vmem:[%s1455 + $0x100] sm:$0xff]
    %v1489 = vld [vmem:[%s1455 + $0x108] sm:$0xff]
    %v1490 = vld [vmem:[%s1455 + $0x110] sm:$0xff]
    %v1491 = vld [vmem:[%s1455 + $0x118] sm:$0xff]
    %v1492 = vld [vmem:[%s1455 + $0x120] sm:$0xff]
    %v1493 = vld [vmem:[%s1455 + $0x128] sm:$0xff]
    %v1494 = vld [vmem:[%s1455 + $0x130] sm:$0xff]
    %v1495 = vld [vmem:[%s1455 + $0x138] sm:$0xff]
    %v1496 = vld [vmem:[%s1455 + $0x140] sm:$0xff]
    %v1497 = vld [vmem:[%s1455 + $0x148] sm:$0xff]
    %v1498 = vld [vmem:[%s1455 + $0x150] sm:$0xff]
    %v1499 = vld [vmem:[%s1455 + $0x158] sm:$0xff]
    %v1500 = vld [vmem:[%s1455 + $0x160] sm:$0xff]
    %v1501 = vld [vmem:[%s1455 + $0x168] sm:$0xff]
    %v1502 = vld [vmem:[%s1455 + $0x170] sm:$0xff]
    %v1503 = vld [vmem:[%s1455 + $0x178] sm:$0xff]
    %v1504 = vld [vmem:[%s1455 + $0x180] sm:$0xff]
    %v1505 = vld [vmem:[%s1455 + $0x188] sm:$0xff]
    %v1506 = vld [vmem:[%s1455 + $0x190] sm:$0xff]
    %v1507 = vld [vmem:[%s1455 + $0x198] sm:$0xff]
    %v1508 = vld [vmem:[%s1455 + $0x1a0] sm:$0xff]
    %v1509 = vld [vmem:[%s1455 + $0x1a8] sm:$0xff]
    %v1510 = vld [vmem:[%s1455 + $0x1b0] sm:$0xff]
    %v1511 = vld [vmem:[%s1455 + $0x1b8] sm:$0xff]
    %v1512 = vld [vmem:[%s1455 + $0x1c0] sm:$0xff]
    %v1513 = vld [vmem:[%s1455 + $0x1c8] sm:$0xff]
    %v1514 = vld [vmem:[%s1455 + $0x1d0] sm:$0xff]
    %v1515 = vld [vmem:[%s1455 + $0x1d8] sm:$0xff]
    %v1516 = vld [vmem:[%s1455 + $0x1e0] sm:$0xff]
    %v1517 = vld [vmem:[%s1455 + $0x1e8] sm:$0xff]
    %v1518 = vld [vmem:[%s1455 + $0x1f0] sm:$0xff]
    %v1519 = vld [vmem:[%s1455 + $0x1f8] sm:$0xff]
    %s1520 = scalar_lea.vmem [#allocation11], 8
    %v1521 = vld [vmem:[%s1520] sm:$0xf]
    %v1523 = vlaneseq
    %v1524 = vshrl.u32 %v1523, 7
    %v1525 = vsub.s32 0, %v1524
    %v1526 = vrot.slane %v1521, %v1525
    %v1527 = vlaneseq
    %v1528 = vshrl.u32 %v1527, 7
    %v1529 = vsub.s32 1, %v1528
    %v1530 = vrot.slane %v1521, %v1529
    %v1531 = vlaneseq
    %v1532 = vshrl.u32 %v1531, 7
    %v1533 = vsub.s32 2, %v1532
    %v1534 = vrot.slane %v1521, %v1533
    %v1535 = vlaneseq
    %v1536 = vshrl.u32 %v1535, 7
    %v1537 = vsub.s32 3, %v1536
    %v1538 = vrot.slane %v1521, %v1537
    %v1607 = vunpack.c.l.b16 %v1456
    %v1608 = vunpack.c.h.b16 %v1456
    %v1609 = vunpack.c.l.b16 %v1457
    %v1610 = vunpack.c.h.b16 %v1457
    %v1611 = vunpack.c.l.b16 %v1458
    %v1612 = vunpack.c.h.b16 %v1458
    %v1613 = vunpack.c.l.b16 %v1459
    %v1614 = vunpack.c.h.b16 %v1459
    %v1615 = vunpack.c.l.b16 %v1460
    %v1616 = vunpack.c.h.b16 %v1460
    %v1617 = vunpack.c.l.b16 %v1461
    %v1618 = vunpack.c.h.b16 %v1461
    %v1619 = vunpack.c.l.b16 %v1462
    %v1620 = vunpack.c.h.b16 %v1462
    %v1621 = vunpack.c.l.b16 %v1463
    %v1622 = vunpack.c.h.b16 %v1463
    %v1623 = vunpack.c.l.b16 %v1464
    %v1624 = vunpack.c.h.b16 %v1464
    %v1625 = vunpack.c.l.b16 %v1465
    %v1626 = vunpack.c.h.b16 %v1465
    %v1627 = vunpack.c.l.b16 %v1466
    %v1628 = vunpack.c.h.b16 %v1466
    %v1629 = vunpack.c.l.b16 %v1467
    %v1630 = vunpack.c.h.b16 %v1467
    %v1631 = vunpack.c.l.b16 %v1468
    %v1632 = vunpack.c.h.b16 %v1468
    %v1633 = vunpack.c.l.b16 %v1469
    %v1634 = vunpack.c.h.b16 %v1469
    %v1635 = vunpack.c.l.b16 %v1470
    %v1636 = vunpack.c.h.b16 %v1470
    %v1637 = vunpack.c.l.b16 %v1471
    %v1638 = vunpack.c.h.b16 %v1471
    %v1639 = vunpack.c.l.b16 %v1472
    %v1640 = vunpack.c.h.b16 %v1472
    %v1641 = vunpack.c.l.b16 %v1473
    %v1642 = vunpack.c.h.b16 %v1473
    %v1643 = vunpack.c.l.b16 %v1474
    %v1644 = vunpack.c.h.b16 %v1474
    %v1645 = vunpack.c.l.b16 %v1475
    %v1646 = vunpack.c.h.b16 %v1475
    %v1647 = vunpack.c.l.b16 %v1476
    %v1648 = vunpack.c.h.b16 %v1476
    %v1649 = vunpack.c.l.b16 %v1477
    %v1650 = vunpack.c.h.b16 %v1477
    %v1651 = vunpack.c.l.b16 %v1478
    %v1652 = vunpack.c.h.b16 %v1478
    %v1653 = vunpack.c.l.b16 %v1479
    %v1654 = vunpack.c.h.b16 %v1479
    %v1655 = vunpack.c.l.b16 %v1480
    %v1656 = vunpack.c.h.b16 %v1480
    %v1657 = vunpack.c.l.b16 %v1481
    %v1658 = vunpack.c.h.b16 %v1481
    %v1659 = vunpack.c.l.b16 %v1482
    %v1660 = vunpack.c.h.b16 %v1482
    %v1661 = vunpack.c.l.b16 %v1483
    %v1662 = vunpack.c.h.b16 %v1483
    %v1663 = vunpack.c.l.b16 %v1484
    %v1664 = vunpack.c.h.b16 %v1484
    %v1665 = vunpack.c.l.b16 %v1485
    %v1666 = vunpack.c.h.b16 %v1485
    %v1667 = vunpack.c.l.b16 %v1486
    %v1668 = vunpack.c.h.b16 %v1486
    %v1669 = vunpack.c.l.b16 %v1487
    %v1670 = vunpack.c.h.b16 %v1487
    %v1671 = vunpack.c.l.b16 %v1488
    %v1672 = vunpack.c.h.b16 %v1488
    %v1673 = vunpack.c.l.b16 %v1489
    %v1674 = vunpack.c.h.b16 %v1489
    %v1675 = vunpack.c.l.b16 %v1490
    %v1676 = vunpack.c.h.b16 %v1490
    %v1677 = vunpack.c.l.b16 %v1491
    %v1678 = vunpack.c.h.b16 %v1491
    %v1679 = vunpack.c.l.b16 %v1492
    %v1680 = vunpack.c.h.b16 %v1492
    %v1681 = vunpack.c.l.b16 %v1493
    %v1682 = vunpack.c.h.b16 %v1493
    %v1683 = vunpack.c.l.b16 %v1494
    %v1684 = vunpack.c.h.b16 %v1494
    %v1685 = vunpack.c.l.b16 %v1495
    %v1686 = vunpack.c.h.b16 %v1495
    %v1687 = vunpack.c.l.b16 %v1496
    %v1688 = vunpack.c.h.b16 %v1496
    %v1689 = vunpack.c.l.b16 %v1497
    %v1690 = vunpack.c.h.b16 %v1497
    %v1691 = vunpack.c.l.b16 %v1498
    %v1692 = vunpack.c.h.b16 %v1498
    %v1693 = vunpack.c.l.b16 %v1499
    %v1694 = vunpack.c.h.b16 %v1499
    %v1695 = vunpack.c.l.b16 %v1500
    %v1696 = vunpack.c.h.b16 %v1500
    %v1697 = vunpack.c.l.b16 %v1501
    %v1698 = vunpack.c.h.b16 %v1501
    %v1699 = vunpack.c.l.b16 %v1502
    %v1700 = vunpack.c.h.b16 %v1502
    %v1701 = vunpack.c.l.b16 %v1503
    %v1702 = vunpack.c.h.b16 %v1503
    %v1703 = vunpack.c.l.b16 %v1504
    %v1704 = vunpack.c.h.b16 %v1504
    %v1705 = vunpack.c.l.b16 %v1505
    %v1706 = vunpack.c.h.b16 %v1505
    %v1707 = vunpack.c.l.b16 %v1506
    %v1708 = vunpack.c.h.b16 %v1506
    %v1709 = vunpack.c.l.b16 %v1507
    %v1710 = vunpack.c.h.b16 %v1507
    %v1711 = vunpack.c.l.b16 %v1508
    %v1712 = vunpack.c.h.b16 %v1508
    %v1713 = vunpack.c.l.b16 %v1509
    %v1714 = vunpack.c.h.b16 %v1509
    %v1715 = vunpack.c.l.b16 %v1510
    %v1716 = vunpack.c.h.b16 %v1510
    %v1717 = vunpack.c.l.b16 %v1511
    %v1718 = vunpack.c.h.b16 %v1511
    %v1719 = vunpack.c.l.b16 %v1512
    %v1720 = vunpack.c.h.b16 %v1512
    %v1721 = vunpack.c.l.b16 %v1513
    %v1722 = vunpack.c.h.b16 %v1513
    %v1723 = vunpack.c.l.b16 %v1514
    %v1724 = vunpack.c.h.b16 %v1514
    %v1725 = vunpack.c.l.b16 %v1515
    %v1726 = vunpack.c.h.b16 %v1515
    %v1727 = vunpack.c.l.b16 %v1516
    %v1728 = vunpack.c.h.b16 %v1516
    %v1729 = vunpack.c.l.b16 %v1517
    %v1730 = vunpack.c.h.b16 %v1517
    %v1731 = vunpack.c.l.b16 %v1518
    %v1732 = vunpack.c.h.b16 %v1518
    %v1733 = vunpack.c.l.b16 %v1519
    %v1734 = vunpack.c.h.b16 %v1519
    %v1735 = vpack.c.b16 %v1611, %v1607
    %v1736 = vpack.c.b16 %v1612, %v1608
    %v1737 = vpack.c.b16 %v1613, %v1609
    %v1738 = vpack.c.b16 %v1614, %v1610
    %v1739 = vpack.c.b16 %v1619, %v1615
    %v1740 = vpack.c.b16 %v1620, %v1616
    %v1741 = vpack.c.b16 %v1621, %v1617
    %v1742 = vpack.c.b16 %v1622, %v1618
    %v1743 = vpack.c.b16 %v1627, %v1623
    %v1744 = vpack.c.b16 %v1628, %v1624
    %v1745 = vpack.c.b16 %v1629, %v1625
    %v1746 = vpack.c.b16 %v1630, %v1626
    %v1747 = vpack.c.b16 %v1635, %v1631
    %v1748 = vpack.c.b16 %v1636, %v1632
    %v1749 = vpack.c.b16 %v1637, %v1633
    %v1750 = vpack.c.b16 %v1638, %v1634
    %v1751 = vpack.c.b16 %v1643, %v1639
    %v1752 = vpack.c.b16 %v1644, %v1640
    %v1753 = vpack.c.b16 %v1645, %v1641
    %v1754 = vpack.c.b16 %v1646, %v1642
    %v1755 = vpack.c.b16 %v1651, %v1647
    %v1756 = vpack.c.b16 %v1652, %v1648
    %v1757 = vpack.c.b16 %v1653, %v1649
    %v1758 = vpack.c.b16 %v1654, %v1650
    %v1759 = vpack.c.b16 %v1659, %v1655
    %v1760 = vpack.c.b16 %v1660, %v1656
    %v1761 = vpack.c.b16 %v1661, %v1657
    %v1762 = vpack.c.b16 %v1662, %v1658
    %v1763 = vpack.c.b16 %v1667, %v1663
    %v1764 = vpack.c.b16 %v1668, %v1664
    %v1765 = vpack.c.b16 %v1669, %v1665
    %v1766 = vpack.c.b16 %v1670, %v1666
    %v1767 = vpack.c.b16 %v1675, %v1671
    %v1768 = vpack.c.b16 %v1676, %v1672
    %v1769 = vpack.c.b16 %v1677, %v1673
    %v1770 = vpack.c.b16 %v1678, %v1674
    %v1771 = vpack.c.b16 %v1683, %v1679
    %v1772 = vpack.c.b16 %v1684, %v1680
    %v1773 = vpack.c.b16 %v1685, %v1681
    %v1774 = vpack.c.b16 %v1686, %v1682
    %v1775 = vpack.c.b16 %v1691, %v1687
    %v1776 = vpack.c.b16 %v1692, %v1688
    %v1777 = vpack.c.b16 %v1693, %v1689
    %v1778 = vpack.c.b16 %v1694, %v1690
    %v1779 = vpack.c.b16 %v1699, %v1695
    %v1780 = vpack.c.b16 %v1700, %v1696
    %v1781 = vpack.c.b16 %v1701, %v1697
    %v1782 = vpack.c.b16 %v1702, %v1698
    %v1783 = vpack.c.b16 %v1707, %v1703
    %v1784 = vpack.c.b16 %v1708, %v1704
    %v1785 = vpack.c.b16 %v1709, %v1705
    %v1786 = vpack.c.b16 %v1710, %v1706
    %v1787 = vpack.c.b16 %v1715, %v1711
    %v1788 = vpack.c.b16 %v1716, %v1712
    %v1789 = vpack.c.b16 %v1717, %v1713
    %v1790 = vpack.c.b16 %v1718, %v1714
    %v1791 = vpack.c.b16 %v1723, %v1719
    %v1792 = vpack.c.b16 %v1724, %v1720
    %v1793 = vpack.c.b16 %v1725, %v1721
    %v1794 = vpack.c.b16 %v1726, %v1722
    %v1795 = vpack.c.b16 %v1731, %v1727
    %v1796 = vpack.c.b16 %v1732, %v1728
    %v1797 = vpack.c.b16 %v1733, %v1729
    %v1798 = vpack.c.b16 %v1734, %v1730
    %1863 = vmatprep.subr.bf16.mxu0 %v1764
    %1864 = vmatpush1.bf16.msra.mxu0 %v1763
    %1865 = vmatprep.subr.bf16.mxu0 %v1760
    %1866 = vmatpush1.bf16.msra.mxu0 %v1759
    %1867 = vmatprep.subr.bf16.mxu0 %v1756
    %1868 = vmatpush1.bf16.msra.mxu0 %v1755
    %1869 = vmatprep.subr.bf16.mxu0 %v1752
    %1870 = vmatpush1.bf16.msra.mxu0 %v1751
    %1871 = vmatprep.subr.bf16.mxu0 %v1748
    %1872 = vmatpush1.bf16.msra.mxu0 %v1747
    %1873 = vmatprep.subr.bf16.mxu0 %v1744
    %1874 = vmatpush1.bf16.msra.mxu0 %v1743
    %1875 = vmatprep.subr.bf16.mxu0 %v1740
    %1876 = vmatpush1.bf16.msra.mxu0 %v1739
    %1877 = vmatprep.subr.bf16.mxu0 %v1736
    %1878 = vmatpush1.bf16.msra.mxu0 %v1735
    %1879 = vmatprep.subr.bf16.mxu0 %v1796
    %1880 = vmatpush2.bf16.msra.mxu0 %v1795
    %1881 = vmatprep.subr.bf16.mxu0 %v1792
    %1882 = vmatpush2.bf16.msra.mxu0 %v1791
    %1883 = vmatprep.subr.bf16.mxu0 %v1788
    %1884 = vmatpush2.bf16.msra.mxu0 %v1787
    %1885 = vmatprep.subr.bf16.mxu0 %v1784
    %1886 = vmatpush2.bf16.msra.mxu0 %v1783
    %1887 = vmatprep.subr.bf16.mxu0 %v1780
    %1888 = vmatpush2.bf16.msra.mxu0 %v1779
    %1889 = vmatprep.subr.bf16.mxu0 %v1776
    %1890 = vmatpush2.bf16.msra.mxu0 %v1775
    %1891 = vmatprep.subr.bf16.mxu0 %v1772
    %1892 = vmatpush2.bf16.msra.mxu0 %v1771
    %1893 = vmatprep.subr.bf16.mxu0 %v1768
    %1894 = vmatpush2.bf16.msra.mxu0 %v1767
    %1895 = vmatprep.mubr.bf16.mxu0 %v825
    %1896 = vmatmul.mubr.bf16.gmra.mxu0 %v1454
    %v1897 = vpop.f32.mrf.mxu0
    %v1898 = vadd.f32 %v1526, %v1897
    %v1899 = vpop.f32.mrf.mxu0
    %v1900 = vadd.f32 %v1530, %v1899
    %v1901 = vpop.f32.mrf.mxu0
    %v1902 = vpop.f32.mrf.mxu0
    %1903 = vdwg.mxu0
    %1904 = vmatprep.subr.bf16.mxu0 %v1766
    %1905 = vmatpush1.bf16.msra.mxu0 %v1765
    %1906 = vmatprep.subr.bf16.mxu0 %v1762
    %1907 = vmatpush1.bf16.msra.mxu0 %v1761
    %1908 = vmatprep.subr.bf16.mxu0 %v1758
    %1909 = vmatpush1.bf16.msra.mxu0 %v1757
    %1910 = vmatprep.subr.bf16.mxu0 %v1754
    %1911 = vmatpush1.bf16.msra.mxu0 %v1753
    %1912 = vmatprep.subr.bf16.mxu0 %v1750
    %1913 = vmatpush1.bf16.msra.mxu0 %v1749
    %1914 = vmatprep.subr.bf16.mxu0 %v1746
    %1915 = vmatpush1.bf16.msra.mxu0 %v1745
    %1916 = vmatprep.subr.bf16.mxu0 %v1742
    %1917 = vmatpush1.bf16.msra.mxu0 %v1741
    %1918 = vmatprep.subr.bf16.mxu0 %v1738
    %1919 = vmatpush1.bf16.msra.mxu0 %v1737
    %1920 = vmatprep.subr.bf16.mxu0 %v1798
    %1921 = vmatpush2.bf16.msra.mxu0 %v1797
    %1922 = vmatprep.subr.bf16.mxu0 %v1794
    %1923 = vmatpush2.bf16.msra.mxu0 %v1793
    %1924 = vmatprep.subr.bf16.mxu0 %v1790
    %1925 = vmatpush2.bf16.msra.mxu0 %v1789
    %1926 = vmatprep.subr.bf16.mxu0 %v1786
    %1927 = vmatpush2.bf16.msra.mxu0 %v1785
    %1928 = vmatprep.subr.bf16.mxu0 %v1782
    %1929 = vmatpush2.bf16.msra.mxu0 %v1781
    %1930 = vmatprep.subr.bf16.mxu0 %v1778
    %1931 = vmatpush2.bf16.msra.mxu0 %v1777
    %1932 = vmatprep.subr.bf16.mxu0 %v1774
    %1933 = vmatpush2.bf16.msra.mxu0 %v1773
    %1934 = vmatprep.subr.bf16.mxu0 %v1770
    %1935 = vmatpush2.bf16.msra.mxu0 %v1769
    %1936 = vmatprep.mubr.bf16.mxu0 %v825
    %1937 = vmatmul.mubr.bf16.gmra.mxu0 %v1454
    %v1938 = vpop.f32.mrf.mxu0
    %v1939 = vadd.f32 %v1534, %v1938
    %v1940 = vpop.f32.mrf.mxu0
    %v1941 = vadd.f32 %v1538, %v1940
    %v1942 = vpop.f32.mrf.mxu0
    %v1943 = vpop.f32.mrf.mxu0
    %1944 = vdwg.mxu0
    %v1945 = vxor.u32 %v1898, 2147483648
    %v1946 = vxor.u32 %v1900, 2147483648
    %v1947 = vxor.u32 %v1939, 2147483648
    %v1948 = vmul.f32 %v1945, 1.442695
    %v1949 = vpow.pop %v1948
    %v1950 = vmul.f32 %v1946, 1.442695
    %v1951 = vpow.pop %v1950
    %v1952 = vmul.f32 %v1947, 1.442695
    %v1953 = vpow.pop %v1952
    %v1954 = vadd.f32 %v1949, 1.0
    %v1955 = vadd.f32 %v1951, 1.0
    %v1956 = vadd.f32 %v1953, 1.0
    %v1957 = vrcp.pop %v1954
    %v1958 = vmul.f32 1.0, %v1957
    %v1959 = vrcp.pop %v1955
    %v1960 = vmul.f32 1.0, %v1959
    %v1961 = vrcp.pop %v1956
    %v1962 = vmul.f32 1.0, %v1961
    %v1963 = vtanh.pop %v1941
    %v1964 = vmul.f32 %v1960, 0.0
    %v1965 = vmul.f32 %v1958, %v1963
    %v1966 = vadd.f32 %v1964, %v1965
    %v1967 = vtanh.pop %v1966
    %v1968 = vmul.f32 %v1962, %v1967
    %1969 = vst [vmem:[#allocation14] sm:$0xff] %v1968
    %v1970 = vpack.c.bf16 %v1453, %v1453
    %v1971 = vld [vmem:[#allocation9] sm:$0xff]
    %v1972 = vld [vmem:[#allocation9 + $0x8] sm:$0xff]
    %v1973 = vld [vmem:[#allocation9 + $0x10] sm:$0xff]
    %v1974 = vld [vmem:[#allocation9 + $0x18] sm:$0xff]
    %v1975 = vld [vmem:[#allocation9 + $0x20] sm:$0xff]
    %v1976 = vld [vmem:[#allocation9 + $0x28] sm:$0xff]
    %v1977 = vld [vmem:[#allocation9 + $0x30] sm:$0xff]
    %v1978 = vld [vmem:[#allocation9 + $0x38] sm:$0xff]
    %v1979 = vld [vmem:[#allocation9 + $0x40] sm:$0xff]
    %v1980 = vld [vmem:[#allocation9 + $0x48] sm:$0xff]
    %v1981 = vld [vmem:[#allocation9 + $0x50] sm:$0xff]
    %v1982 = vld [vmem:[#allocation9 + $0x58] sm:$0xff]
    %v1983 = vld [vmem:[#allocation9 + $0x60] sm:$0xff]
    %v1984 = vld [vmem:[#allocation9 + $0x68] sm:$0xff]
    %v1985 = vld [vmem:[#allocation9 + $0x70] sm:$0xff]
    %v1986 = vld [vmem:[#allocation9 + $0x78] sm:$0xff]
    %v1987 = vld [vmem:[#allocation9 + $0x80] sm:$0xff]
    %v1988 = vld [vmem:[#allocation9 + $0x88] sm:$0xff]
    %v1989 = vld [vmem:[#allocation9 + $0x90] sm:$0xff]
    %v1990 = vld [vmem:[#allocation9 + $0x98] sm:$0xff]
    %v1991 = vld [vmem:[#allocation9 + $0xa0] sm:$0xff]
    %v1992 = vld [vmem:[#allocation9 + $0xa8] sm:$0xff]
    %v1993 = vld [vmem:[#allocation9 + $0xb0] sm:$0xff]
    %v1994 = vld [vmem:[#allocation9 + $0xb8] sm:$0xff]
    %v1995 = vld [vmem:[#allocation9 + $0xc0] sm:$0xff]
    %v1996 = vld [vmem:[#allocation9 + $0xc8] sm:$0xff]
    %v1997 = vld [vmem:[#allocation9 + $0xd0] sm:$0xff]
    %v1998 = vld [vmem:[#allocation9 + $0xd8] sm:$0xff]
    %v1999 = vld [vmem:[#allocation9 + $0xe0] sm:$0xff]
    %v2000 = vld [vmem:[#allocation9 + $0xe8] sm:$0xff]
    %v2001 = vld [vmem:[#allocation9 + $0xf0] sm:$0xff]
    %v2002 = vld [vmem:[#allocation9 + $0xf8] sm:$0xff]
    %v2003 = vld [vmem:[#allocation9 + $0x100] sm:$0xff]
    %v2004 = vld [vmem:[#allocation9 + $0x108] sm:$0xff]
    %v2005 = vld [vmem:[#allocation9 + $0x110] sm:$0xff]
    %v2006 = vld [vmem:[#allocation9 + $0x118] sm:$0xff]
    %v2007 = vld [vmem:[#allocation9 + $0x120] sm:$0xff]
    %v2008 = vld [vmem:[#allocation9 + $0x128] sm:$0xff]
    %v2009 = vld [vmem:[#allocation9 + $0x130] sm:$0xff]
    %v2010 = vld [vmem:[#allocation9 + $0x138] sm:$0xff]
    %v2011 = vld [vmem:[#allocation9 + $0x140] sm:$0xff]
    %v2012 = vld [vmem:[#allocation9 + $0x148] sm:$0xff]
    %v2013 = vld [vmem:[#allocation9 + $0x150] sm:$0xff]
    %v2014 = vld [vmem:[#allocation9 + $0x158] sm:$0xff]
    %v2015 = vld [vmem:[#allocation9 + $0x160] sm:$0xff]
    %v2016 = vld [vmem:[#allocation9 + $0x168] sm:$0xff]
    %v2017 = vld [vmem:[#allocation9 + $0x170] sm:$0xff]
    %v2018 = vld [vmem:[#allocation9 + $0x178] sm:$0xff]
    %v2019 = vld [vmem:[#allocation9 + $0x180] sm:$0xff]
    %v2020 = vld [vmem:[#allocation9 + $0x188] sm:$0xff]
    %v2021 = vld [vmem:[#allocation9 + $0x190] sm:$0xff]
    %v2022 = vld [vmem:[#allocation9 + $0x198] sm:$0xff]
    %v2023 = vld [vmem:[#allocation9 + $0x1a0] sm:$0xff]
    %v2024 = vld [vmem:[#allocation9 + $0x1a8] sm:$0xff]
    %v2025 = vld [vmem:[#allocation9 + $0x1b0] sm:$0xff]
    %v2026 = vld [vmem:[#allocation9 + $0x1b8] sm:$0xff]
    %v2027 = vld [vmem:[#allocation9 + $0x1c0] sm:$0xff]
    %v2028 = vld [vmem:[#allocation9 + $0x1c8] sm:$0xff]
    %v2029 = vld [vmem:[#allocation9 + $0x1d0] sm:$0xff]
    %v2030 = vld [vmem:[#allocation9 + $0x1d8] sm:$0xff]
    %v2031 = vld [vmem:[#allocation9 + $0x1e0] sm:$0xff]
    %v2032 = vld [vmem:[#allocation9 + $0x1e8] sm:$0xff]
    %v2033 = vld [vmem:[#allocation9 + $0x1f0] sm:$0xff]
    %v2034 = vld [vmem:[#allocation9 + $0x1f8] sm:$0xff]
    %v2035 = vld [vmem:[%s890] sm:$0xf]
    %v2037 = vlaneseq
    %v2038 = vshrl.u32 %v2037, 7
    %v2039 = vsub.s32 0, %v2038
    %v2040 = vrot.slane %v2035, %v2039
    %v2041 = vlaneseq
    %v2042 = vshrl.u32 %v2041, 7
    %v2043 = vsub.s32 1, %v2042
    %v2044 = vrot.slane %v2035, %v2043
    %v2045 = vlaneseq
    %v2046 = vshrl.u32 %v2045, 7
    %v2047 = vsub.s32 2, %v2046
    %v2048 = vrot.slane %v2035, %v2047
    %v2049 = vlaneseq
    %v2050 = vshrl.u32 %v2049, 7
    %v2051 = vsub.s32 3, %v2050
    %v2052 = vrot.slane %v2035, %v2051
    %v2121 = vunpack.c.l.b16 %v1971
    %v2122 = vunpack.c.h.b16 %v1971
    %v2123 = vunpack.c.l.b16 %v1972
    %v2124 = vunpack.c.h.b16 %v1972
    %v2125 = vunpack.c.l.b16 %v1973
    %v2126 = vunpack.c.h.b16 %v1973
    %v2127 = vunpack.c.l.b16 %v1974
    %v2128 = vunpack.c.h.b16 %v1974
    %v2129 = vunpack.c.l.b16 %v1975
    %v2130 = vunpack.c.h.b16 %v1975
    %v2131 = vunpack.c.l.b16 %v1976
    %v2132 = vunpack.c.h.b16 %v1976
    %v2133 = vunpack.c.l.b16 %v1977
    %v2134 = vunpack.c.h.b16 %v1977
    %v2135 = vunpack.c.l.b16 %v1978
    %v2136 = vunpack.c.h.b16 %v1978
    %v2137 = vunpack.c.l.b16 %v1979
    %v2138 = vunpack.c.h.b16 %v1979
    %v2139 = vunpack.c.l.b16 %v1980
    %v2140 = vunpack.c.h.b16 %v1980
    %v2141 = vunpack.c.l.b16 %v1981
    %v2142 = vunpack.c.h.b16 %v1981
    %v2143 = vunpack.c.l.b16 %v1982
    %v2144 = vunpack.c.h.b16 %v1982
    %v2145 = vunpack.c.l.b16 %v1983
    %v2146 = vunpack.c.h.b16 %v1983
    %v2147 = vunpack.c.l.b16 %v1984
    %v2148 = vunpack.c.h.b16 %v1984
    %v2149 = vunpack.c.l.b16 %v1985
    %v2150 = vunpack.c.h.b16 %v1985
    %v2151 = vunpack.c.l.b16 %v1986
    %v2152 = vunpack.c.h.b16 %v1986
    %v2153 = vunpack.c.l.b16 %v1987
    %v2154 = vunpack.c.h.b16 %v1987
    %v2155 = vunpack.c.l.b16 %v1988
    %v2156 = vunpack.c.h.b16 %v1988
    %v2157 = vunpack.c.l.b16 %v1989
    %v2158 = vunpack.c.h.b16 %v1989
    %v2159 = vunpack.c.l.b16 %v1990
    %v2160 = vunpack.c.h.b16 %v1990
    %v2161 = vunpack.c.l.b16 %v1991
    %v2162 = vunpack.c.h.b16 %v1991
    %v2163 = vunpack.c.l.b16 %v1992
    %v2164 = vunpack.c.h.b16 %v1992
    %v2165 = vunpack.c.l.b16 %v1993
    %v2166 = vunpack.c.h.b16 %v1993
    %v2167 = vunpack.c.l.b16 %v1994
    %v2168 = vunpack.c.h.b16 %v1994
    %v2169 = vunpack.c.l.b16 %v1995
    %v2170 = vunpack.c.h.b16 %v1995
    %v2171 = vunpack.c.l.b16 %v1996
    %v2172 = vunpack.c.h.b16 %v1996
    %v2173 = vunpack.c.l.b16 %v1997
    %v2174 = vunpack.c.h.b16 %v1997
    %v2175 = vunpack.c.l.b16 %v1998
    %v2176 = vunpack.c.h.b16 %v1998
    %v2177 = vunpack.c.l.b16 %v1999
    %v2178 = vunpack.c.h.b16 %v1999
    %v2179 = vunpack.c.l.b16 %v2000
    %v2180 = vunpack.c.h.b16 %v2000
    %v2181 = vunpack.c.l.b16 %v2001
    %v2182 = vunpack.c.h.b16 %v2001
    %v2183 = vunpack.c.l.b16 %v2002
    %v2184 = vunpack.c.h.b16 %v2002
    %v2185 = vunpack.c.l.b16 %v2003
    %v2186 = vunpack.c.h.b16 %v2003
    %v2187 = vunpack.c.l.b16 %v2004
    %v2188 = vunpack.c.h.b16 %v2004
    %v2189 = vunpack.c.l.b16 %v2005
    %v2190 = vunpack.c.h.b16 %v2005
    %v2191 = vunpack.c.l.b16 %v2006
    %v2192 = vunpack.c.h.b16 %v2006
    %v2193 = vunpack.c.l.b16 %v2007
    %v2194 = vunpack.c.h.b16 %v2007
    %v2195 = vunpack.c.l.b16 %v2008
    %v2196 = vunpack.c.h.b16 %v2008
    %v2197 = vunpack.c.l.b16 %v2009
    %v2198 = vunpack.c.h.b16 %v2009
    %v2199 = vunpack.c.l.b16 %v2010
    %v2200 = vunpack.c.h.b16 %v2010
    %v2201 = vunpack.c.l.b16 %v2011
    %v2202 = vunpack.c.h.b16 %v2011
    %v2203 = vunpack.c.l.b16 %v2012
    %v2204 = vunpack.c.h.b16 %v2012
    %v2205 = vunpack.c.l.b16 %v2013
    %v2206 = vunpack.c.h.b16 %v2013
    %v2207 = vunpack.c.l.b16 %v2014
    %v2208 = vunpack.c.h.b16 %v2014
    %v2209 = vunpack.c.l.b16 %v2015
    %v2210 = vunpack.c.h.b16 %v2015
    %v2211 = vunpack.c.l.b16 %v2016
    %v2212 = vunpack.c.h.b16 %v2016
    %v2213 = vunpack.c.l.b16 %v2017
    %v2214 = vunpack.c.h.b16 %v2017
    %v2215 = vunpack.c.l.b16 %v2018
    %v2216 = vunpack.c.h.b16 %v2018
    %v2217 = vunpack.c.l.b16 %v2019
    %v2218 = vunpack.c.h.b16 %v2019
    %v2219 = vunpack.c.l.b16 %v2020
    %v2220 = vunpack.c.h.b16 %v2020
    %v2221 = vunpack.c.l.b16 %v2021
    %v2222 = vunpack.c.h.b16 %v2021
    %v2223 = vunpack.c.l.b16 %v2022
    %v2224 = vunpack.c.h.b16 %v2022
    %v2225 = vunpack.c.l.b16 %v2023
    %v2226 = vunpack.c.h.b16 %v2023
    %v2227 = vunpack.c.l.b16 %v2024
    %v2228 = vunpack.c.h.b16 %v2024
    %v2229 = vunpack.c.l.b16 %v2025
    %v2230 = vunpack.c.h.b16 %v2025
    %v2231 = vunpack.c.l.b16 %v2026
    %v2232 = vunpack.c.h.b16 %v2026
    %v2233 = vunpack.c.l.b16 %v2027
    %v2234 = vunpack.c.h.b16 %v2027
    %v2235 = vunpack.c.l.b16 %v2028
    %v2236 = vunpack.c.h.b16 %v2028
    %v2237 = vunpack.c.l.b16 %v2029
    %v2238 = vunpack.c.h.b16 %v2029
    %v2239 = vunpack.c.l.b16 %v2030
    %v2240 = vunpack.c.h.b16 %v2030
    %v2241 = vunpack.c.l.b16 %v2031
    %v2242 = vunpack.c.h.b16 %v2031
    %v2243 = vunpack.c.l.b16 %v2032
    %v2244 = vunpack.c.h.b16 %v2032
    %v2245 = vunpack.c.l.b16 %v2033
    %v2246 = vunpack.c.h.b16 %v2033
    %v2247 = vunpack.c.l.b16 %v2034
    %v2248 = vunpack.c.h.b16 %v2034
    %v2249 = vpack.c.b16 %v2125, %v2121
    %v2250 = vpack.c.b16 %v2126, %v2122
    %v2251 = vpack.c.b16 %v2127, %v2123
    %v2252 = vpack.c.b16 %v2128, %v2124
    %v2253 = vpack.c.b16 %v2133, %v2129
    %v2254 = vpack.c.b16 %v2134, %v2130
    %v2255 = vpack.c.b16 %v2135, %v2131
    %v2256 = vpack.c.b16 %v2136, %v2132
    %v2257 = vpack.c.b16 %v2141, %v2137
    %v2258 = vpack.c.b16 %v2142, %v2138
    %v2259 = vpack.c.b16 %v2143, %v2139
    %v2260 = vpack.c.b16 %v2144, %v2140
    %v2261 = vpack.c.b16 %v2149, %v2145
    %v2262 = vpack.c.b16 %v2150, %v2146
    %v2263 = vpack.c.b16 %v2151, %v2147
    %v2264 = vpack.c.b16 %v2152, %v2148
    %v2265 = vpack.c.b16 %v2157, %v2153
    %v2266 = vpack.c.b16 %v2158, %v2154
    %v2267 = vpack.c.b16 %v2159, %v2155
    %v2268 = vpack.c.b16 %v2160, %v2156
    %v2269 = vpack.c.b16 %v2165, %v2161
    %v2270 = vpack.c.b16 %v2166, %v2162
    %v2271 = vpack.c.b16 %v2167, %v2163
    %v2272 = vpack.c.b16 %v2168, %v2164
    %v2273 = vpack.c.b16 %v2173, %v2169
    %v2274 = vpack.c.b16 %v2174, %v2170
    %v2275 = vpack.c.b16 %v2175, %v2171
    %v2276 = vpack.c.b16 %v2176, %v2172
    %v2277 = vpack.c.b16 %v2181, %v2177
    %v2278 = vpack.c.b16 %v2182, %v2178
    %v2279 = vpack.c.b16 %v2183, %v2179
    %v2280 = vpack.c.b16 %v2184, %v2180
    %v2281 = vpack.c.b16 %v2189, %v2185
    %v2282 = vpack.c.b16 %v2190, %v2186
    %v2283 = vpack.c.b16 %v2191, %v2187
    %v2284 = vpack.c.b16 %v2192, %v2188
    %v2285 = vpack.c.b16 %v2197, %v2193
    %v2286 = vpack.c.b16 %v2198, %v2194
    %v2287 = vpack.c.b16 %v2199, %v2195
    %v2288 = vpack.c.b16 %v2200, %v2196
    %v2289 = vpack.c.b16 %v2205, %v2201
    %v2290 = vpack.c.b16 %v2206, %v2202
    %v2291 = vpack.c.b16 %v2207, %v2203
    %v2292 = vpack.c.b16 %v2208, %v2204
    %v2293 = vpack.c.b16 %v2213, %v2209
    %v2294 = vpack.c.b16 %v2214, %v2210
    %v2295 = vpack.c.b16 %v2215, %v2211
    %v2296 = vpack.c.b16 %v2216, %v2212
    %v2297 = vpack.c.b16 %v2221, %v2217
    %v2298 = vpack.c.b16 %v2222, %v2218
    %v2299 = vpack.c.b16 %v2223, %v2219
    %v2300 = vpack.c.b16 %v2224, %v2220
    %v2301 = vpack.c.b16 %v2229, %v2225
    %v2302 = vpack.c.b16 %v2230, %v2226
    %v2303 = vpack.c.b16 %v2231, %v2227
    %v2304 = vpack.c.b16 %v2232, %v2228
    %v2305 = vpack.c.b16 %v2237, %v2233
    %v2306 = vpack.c.b16 %v2238, %v2234
    %v2307 = vpack.c.b16 %v2239, %v2235
    %v2308 = vpack.c.b16 %v2240, %v2236
    %v2309 = vpack.c.b16 %v2245, %v2241
    %v2310 = vpack.c.b16 %v2246, %v2242
    %v2311 = vpack.c.b16 %v2247, %v2243
    %v2312 = vpack.c.b16 %v2248, %v2244
    %2377 = vmatprep.subr.bf16.mxu0 %v2278
    %2378 = vmatpush1.bf16.msra.mxu0 %v2277
    %2379 = vmatprep.subr.bf16.mxu0 %v2274
    %2380 = vmatpush1.bf16.msra.mxu0 %v2273
    %2381 = vmatprep.subr.bf16.mxu0 %v2270
    %2382 = vmatpush1.bf16.msra.mxu0 %v2269
    %2383 = vmatprep.subr.bf16.mxu0 %v2266
    %2384 = vmatpush1.bf16.msra.mxu0 %v2265
    %2385 = vmatprep.subr.bf16.mxu0 %v2262
    %2386 = vmatpush1.bf16.msra.mxu0 %v2261
    %2387 = vmatprep.subr.bf16.mxu0 %v2258
    %2388 = vmatpush1.bf16.msra.mxu0 %v2257
    %2389 = vmatprep.subr.bf16.mxu0 %v2254
    %2390 = vmatpush1.bf16.msra.mxu0 %v2253
    %2391 = vmatprep.subr.bf16.mxu0 %v2250
    %2392 = vmatpush1.bf16.msra.mxu0 %v2249
    %2393 = vmatprep.subr.bf16.mxu0 %v2310
    %2394 = vmatpush2.bf16.msra.mxu0 %v2309
    %2395 = vmatprep.subr.bf16.mxu0 %v2306
    %2396 = vmatpush2.bf16.msra.mxu0 %v2305
    %2397 = vmatprep.subr.bf16.mxu0 %v2302
    %2398 = vmatpush2.bf16.msra.mxu0 %v2301
    %2399 = vmatprep.subr.bf16.mxu0 %v2298
    %2400 = vmatpush2.bf16.msra.mxu0 %v2297
    %2401 = vmatprep.subr.bf16.mxu0 %v2294
    %2402 = vmatpush2.bf16.msra.mxu0 %v2293
    %2403 = vmatprep.subr.bf16.mxu0 %v2290
    %2404 = vmatpush2.bf16.msra.mxu0 %v2289
    %2405 = vmatprep.subr.bf16.mxu0 %v2286
    %2406 = vmatpush2.bf16.msra.mxu0 %v2285
    %2407 = vmatprep.subr.bf16.mxu0 %v2282
    %2408 = vmatpush2.bf16.msra.mxu0 %v2281
    %2409 = vmatprep.mubr.bf16.mxu0 %v1454
    %2410 = vmatmul.mubr.bf16.gmra.mxu0 %v1970
    %v2411 = vpop.f32.mrf.mxu0
    %v2412 = vadd.f32 %v2040, %v2411
    %v2413 = vpop.f32.mrf.mxu0
    %v2414 = vadd.f32 %v2044, %v2413
    %v2415 = vpop.f32.mrf.mxu0
    %v2416 = vpop.f32.mrf.mxu0
    %2417 = vdwg.mxu0
    %2418 = vmatprep.subr.bf16.mxu0 %v2280
    %2419 = vmatpush1.bf16.msra.mxu0 %v2279
    %2420 = vmatprep.subr.bf16.mxu0 %v2276
    %2421 = vmatpush1.bf16.msra.mxu0 %v2275
    %2422 = vmatprep.subr.bf16.mxu0 %v2272
    %2423 = vmatpush1.bf16.msra.mxu0 %v2271
    %2424 = vmatprep.subr.bf16.mxu0 %v2268
    %2425 = vmatpush1.bf16.msra.mxu0 %v2267
    %2426 = vmatprep.subr.bf16.mxu0 %v2264
    %2427 = vmatpush1.bf16.msra.mxu0 %v2263
    %2428 = vmatprep.subr.bf16.mxu0 %v2260
    %2429 = vmatpush1.bf16.msra.mxu0 %v2259
    %2430 = vmatprep.subr.bf16.mxu0 %v2256
    %2431 = vmatpush1.bf16.msra.mxu0 %v2255
    %2432 = vmatprep.subr.bf16.mxu0 %v2252
    %2433 = vmatpush1.bf16.msra.mxu0 %v2251
    %2434 = vmatprep.subr.bf16.mxu0 %v2312
    %2435 = vmatpush2.bf16.msra.mxu0 %v2311
    %2436 = vmatprep.subr.bf16.mxu0 %v2308
    %2437 = vmatpush2.bf16.msra.mxu0 %v2307
    %2438 = vmatprep.subr.bf16.mxu0 %v2304
    %2439 = vmatpush2.bf16.msra.mxu0 %v2303
    %2440 = vmatprep.subr.bf16.mxu0 %v2300
    %2441 = vmatpush2.bf16.msra.mxu0 %v2299
    %2442 = vmatprep.subr.bf16.mxu0 %v2296
    %2443 = vmatpush2.bf16.msra.mxu0 %v2295
    %2444 = vmatprep.subr.bf16.mxu0 %v2292
    %2445 = vmatpush2.bf16.msra.mxu0 %v2291
    %2446 = vmatprep.subr.bf16.mxu0 %v2288
    %2447 = vmatpush2.bf16.msra.mxu0 %v2287
    %2448 = vmatprep.subr.bf16.mxu0 %v2284
    %2449 = vmatpush2.bf16.msra.mxu0 %v2283
    %2450 = vmatprep.mubr.bf16.mxu0 %v1454
    %2451 = vmatmul.mubr.bf16.gmra.mxu0 %v1970
    %v2452 = vpop.f32.mrf.mxu0
    %v2453 = vadd.f32 %v2048, %v2452
    %v2454 = vpop.f32.mrf.mxu0
    %v2455 = vadd.f32 %v2052, %v2454
    %v2456 = vpop.f32.mrf.mxu0
    %v2457 = vpop.f32.mrf.mxu0
    %2458 = vdwg.mxu0
    %v2459 = vxor.u32 %v2412, 2147483648
    %v2460 = vxor.u32 %v2414, 2147483648
    %v2461 = vxor.u32 %v2453, 2147483648
    %v2462 = vmul.f32 %v2459, 1.442695
    %v2463 = vpow.pop %v2462
    %v2464 = vmul.f32 %v2460, 1.442695
    %v2465 = vpow.pop %v2464
    %v2466 = vmul.f32 %v2461, 1.442695
    %v2467 = vpow.pop %v2466
    %v2468 = vadd.f32 %v2463, 1.0
    %v2469 = vadd.f32 %v2465, 1.0
    %v2470 = vadd.f32 %v2467, 1.0
    %v2471 = vrcp.pop %v2468
    %v2472 = vmul.f32 1.0, %v2471
    %v2473 = vrcp.pop %v2469
    %v2474 = vmul.f32 1.0, %v2473
    %v2475 = vrcp.pop %v2470
    %v2476 = vmul.f32 1.0, %v2475
    %v2477 = vtanh.pop %v2455
    %v2478 = vmul.f32 %v2474, %v1336
    %v2479 = vmul.f32 %v2472, %v2477
    %v2480 = vadd.f32 %v2478, %v2479
    %v2481 = vtanh.pop %v2480
    %v2482 = vmul.f32 %v2476, %v2481
    %s2483 = scalar_lea.vmem [#allocation2], 64
    %v2484 = vld [vmem:[%s2483] sm:$0xff]
    %v2485 = vld [vmem:[%s2483 + $0x8] sm:$0xff]
    %v2486 = vld [vmem:[%s2483 + $0x10] sm:$0xff]
    %v2487 = vld [vmem:[%s2483 + $0x18] sm:$0xff]
    %v2488 = vld [vmem:[#allocation8] sm:$0xff]
    %v2489 = vld [vmem:[#allocation8 + $0x8] sm:$0xff]
    %v2490 = vld [vmem:[#allocation8 + $0x10] sm:$0xff]
    %v2491 = vld [vmem:[#allocation8 + $0x18] sm:$0xff]
    %v2492 = vld [vmem:[#allocation8 + $0x20] sm:$0xff]
    %v2493 = vld [vmem:[#allocation8 + $0x28] sm:$0xff]
    %v2494 = vld [vmem:[#allocation8 + $0x30] sm:$0xff]
    %v2495 = vld [vmem:[#allocation8 + $0x38] sm:$0xff]
    %v2496 = vld [vmem:[#allocation8 + $0x40] sm:$0xff]
    %v2497 = vld [vmem:[#allocation8 + $0x48] sm:$0xff]
    %v2498 = vld [vmem:[#allocation8 + $0x50] sm:$0xff]
    %v2499 = vld [vmem:[#allocation8 + $0x58] sm:$0xff]
    %v2500 = vld [vmem:[#allocation8 + $0x60] sm:$0xff]
    %v2501 = vld [vmem:[#allocation8 + $0x68] sm:$0xff]
    %v2502 = vld [vmem:[#allocation8 + $0x70] sm:$0xff]
    %v2503 = vld [vmem:[#allocation8 + $0x78] sm:$0xff]
    %v2504 = vld [vmem:[#allocation8 + $0x80] sm:$0xff]
    %v2505 = vld [vmem:[#allocation8 + $0x88] sm:$0xff]
    %v2506 = vld [vmem:[#allocation8 + $0x90] sm:$0xff]
    %v2507 = vld [vmem:[#allocation8 + $0x98] sm:$0xff]
    %v2508 = vld [vmem:[#allocation8 + $0xa0] sm:$0xff]
    %v2509 = vld [vmem:[#allocation8 + $0xa8] sm:$0xff]
    %v2510 = vld [vmem:[#allocation8 + $0xb0] sm:$0xff]
    %v2511 = vld [vmem:[#allocation8 + $0xb8] sm:$0xff]
    %v2512 = vld [vmem:[#allocation8 + $0xc0] sm:$0xff]
    %v2513 = vld [vmem:[#allocation8 + $0xc8] sm:$0xff]
    %v2514 = vld [vmem:[#allocation8 + $0xd0] sm:$0xff]
    %v2515 = vld [vmem:[#allocation8 + $0xd8] sm:$0xff]
    %v2516 = vld [vmem:[#allocation8 + $0xe0] sm:$0xff]
    %v2517 = vld [vmem:[#allocation8 + $0xe8] sm:$0xff]
    %v2518 = vld [vmem:[#allocation8 + $0xf0] sm:$0xff]
    %v2519 = vld [vmem:[#allocation8 + $0xf8] sm:$0xff]
    %v2552 = vunpack.c.l.b16 %v2488
    %v2553 = vunpack.c.h.b16 %v2488
    %v2554 = vunpack.c.l.b16 %v2489
    %v2555 = vunpack.c.h.b16 %v2489
    %v2556 = vunpack.c.l.b16 %v2490
    %v2557 = vunpack.c.h.b16 %v2490
    %v2558 = vunpack.c.l.b16 %v2491
    %v2559 = vunpack.c.h.b16 %v2491
    %v2560 = vunpack.c.l.b16 %v2492
    %v2561 = vunpack.c.h.b16 %v2492
    %v2562 = vunpack.c.l.b16 %v2493
    %v2563 = vunpack.c.h.b16 %v2493
    %v2564 = vunpack.c.l.b16 %v2494
    %v2565 = vunpack.c.h.b16 %v2494
    %v2566 = vunpack.c.l.b16 %v2495
    %v2567 = vunpack.c.h.b16 %v2495
    %v2568 = vunpack.c.l.b16 %v2496
    %v2569 = vunpack.c.h.b16 %v2496
    %v2570 = vunpack.c.l.b16 %v2497
    %v2571 = vunpack.c.h.b16 %v2497
    %v2572 = vunpack.c.l.b16 %v2498
    %v2573 = vunpack.c.h.b16 %v2498
    %v2574 = vunpack.c.l.b16 %v2499
    %v2575 = vunpack.c.h.b16 %v2499
    %v2576 = vunpack.c.l.b16 %v2500
    %v2577 = vunpack.c.h.b16 %v2500
    %v2578 = vunpack.c.l.b16 %v2501
    %v2579 = vunpack.c.h.b16 %v2501
    %v2580 = vunpack.c.l.b16 %v2502
    %v2581 = vunpack.c.h.b16 %v2502
    %v2582 = vunpack.c.l.b16 %v2503
    %v2583 = vunpack.c.h.b16 %v2503
    %v2584 = vunpack.c.l.b16 %v2504
    %v2585 = vunpack.c.h.b16 %v2504
    %v2586 = vunpack.c.l.b16 %v2505
    %v2587 = vunpack.c.h.b16 %v2505
    %v2588 = vunpack.c.l.b16 %v2506
    %v2589 = vunpack.c.h.b16 %v2506
    %v2590 = vunpack.c.l.b16 %v2507
    %v2591 = vunpack.c.h.b16 %v2507
    %v2592 = vunpack.c.l.b16 %v2508
    %v2593 = vunpack.c.h.b16 %v2508
    %v2594 = vunpack.c.l.b16 %v2509
    %v2595 = vunpack.c.h.b16 %v2509
    %v2596 = vunpack.c.l.b16 %v2510
    %v2597 = vunpack.c.h.b16 %v2510
    %v2598 = vunpack.c.l.b16 %v2511
    %v2599 = vunpack.c.h.b16 %v2511
    %v2600 = vunpack.c.l.b16 %v2512
    %v2601 = vunpack.c.h.b16 %v2512
    %v2602 = vunpack.c.l.b16 %v2513
    %v2603 = vunpack.c.h.b16 %v2513
    %v2604 = vunpack.c.l.b16 %v2514
    %v2605 = vunpack.c.h.b16 %v2514
    %v2606 = vunpack.c.l.b16 %v2515
    %v2607 = vunpack.c.h.b16 %v2515
    %v2608 = vunpack.c.l.b16 %v2516
    %v2609 = vunpack.c.h.b16 %v2516
    %v2610 = vunpack.c.l.b16 %v2517
    %v2611 = vunpack.c.h.b16 %v2517
    %v2612 = vunpack.c.l.b16 %v2518
    %v2613 = vunpack.c.h.b16 %v2518
    %v2614 = vunpack.c.l.b16 %v2519
    %v2615 = vunpack.c.h.b16 %v2519
    %v2616 = vpack.c.b16 %v2556, %v2552
    %v2617 = vpack.c.b16 %v2557, %v2553
    %v2618 = vpack.c.b16 %v2558, %v2554
    %v2619 = vpack.c.b16 %v2559, %v2555
    %v2620 = vpack.c.b16 %v2564, %v2560
    %v2621 = vpack.c.b16 %v2565, %v2561
    %v2622 = vpack.c.b16 %v2566, %v2562
    %v2623 = vpack.c.b16 %v2567, %v2563
    %v2624 = vpack.c.b16 %v2572, %v2568
    %v2625 = vpack.c.b16 %v2573, %v2569
    %v2626 = vpack.c.b16 %v2574, %v2570
    %v2627 = vpack.c.b16 %v2575, %v2571
    %v2628 = vpack.c.b16 %v2580, %v2576
    %v2629 = vpack.c.b16 %v2581, %v2577
    %v2630 = vpack.c.b16 %v2582, %v2578
    %v2631 = vpack.c.b16 %v2583, %v2579
    %v2632 = vpack.c.b16 %v2588, %v2584
    %v2633 = vpack.c.b16 %v2589, %v2585
    %v2634 = vpack.c.b16 %v2590, %v2586
    %v2635 = vpack.c.b16 %v2591, %v2587
    %v2636 = vpack.c.b16 %v2596, %v2592
    %v2637 = vpack.c.b16 %v2597, %v2593
    %v2638 = vpack.c.b16 %v2598, %v2594
    %v2639 = vpack.c.b16 %v2599, %v2595
    %v2640 = vpack.c.b16 %v2604, %v2600
    %v2641 = vpack.c.b16 %v2605, %v2601
    %v2642 = vpack.c.b16 %v2606, %v2602
    %v2643 = vpack.c.b16 %v2607, %v2603
    %v2644 = vpack.c.b16 %v2612, %v2608
    %v2645 = vpack.c.b16 %v2613, %v2609
    %v2646 = vpack.c.b16 %v2614, %v2610
    %v2647 = vpack.c.b16 %v2615, %v2611
    %2680 = vmatprep.subr.bf16.mxu0 %v2645
    %2681 = vmatpush1.bf16.msra.mxu0 %v2644
    %2682 = vmatprep.subr.bf16.mxu0 %v2641
    %2683 = vmatpush1.bf16.msra.mxu0 %v2640
    %2684 = vmatprep.subr.bf16.mxu0 %v2637
    %2685 = vmatpush1.bf16.msra.mxu0 %v2636
    %2686 = vmatprep.subr.bf16.mxu0 %v2633
    %2687 = vmatpush1.bf16.msra.mxu0 %v2632
    %2688 = vmatprep.subr.bf16.mxu0 %v2629
    %2689 = vmatpush1.bf16.msra.mxu0 %v2628
    %2690 = vmatprep.subr.bf16.mxu0 %v2625
    %2691 = vmatpush1.bf16.msra.mxu0 %v2624
    %2692 = vmatprep.subr.bf16.mxu0 %v2621
    %2693 = vmatpush1.bf16.msra.mxu0 %v2620
    %2694 = vmatprep.subr.bf16.mxu0 %v2617
    %2695 = vmatpush1.bf16.msra.mxu0 %v2616
    %2696 = vmatprep.subr.bf16.mxu0 0
    %2697 = vmatpush2.bf16.msra.mxu0 0
    %2698 = vmatprep.subr.bf16.mxu0 0
    %2699 = vmatpush2.bf16.msra.mxu0 0
    %2700 = vmatprep.subr.bf16.mxu0 0
    %2701 = vmatpush2.bf16.msra.mxu0 0
    %2702 = vmatprep.subr.bf16.mxu0 0
    %2703 = vmatpush2.bf16.msra.mxu0 0
    %2704 = vmatprep.subr.bf16.mxu0 0
    %2705 = vmatpush2.bf16.msra.mxu0 0
    %2706 = vmatprep.subr.bf16.mxu0 0
    %2707 = vmatpush2.bf16.msra.mxu0 0
    %2708 = vmatprep.subr.bf16.mxu0 0
    %2709 = vmatpush2.bf16.msra.mxu0 0
    %2710 = vmatprep.subr.bf16.mxu0 0
    %2711 = vmatpush2.bf16.msra.mxu0 0
    %2712 = vmatprep.mubr.bf16.mxu0 0
    %2713 = vmatmul.mubr.bf16.gmra.mxu0 %v1970
    %v2714 = vpop.f32.mrf.mxu0
    %v2715 = vadd.f32 0.0, %v2714
    %v2716 = vpop.f32.mrf.mxu0
    %v2717 = vadd.f32 0.0, %v2716
    %v2718 = vpop.f32.mrf.mxu0
    %v2719 = vpop.f32.mrf.mxu0
    %2720 = vdwg.mxu0
    %2721 = vmatprep.subr.bf16.mxu0 %v2647
    %2722 = vmatpush1.bf16.msra.mxu0 %v2646
    %2723 = vmatprep.subr.bf16.mxu0 %v2643
    %2724 = vmatpush1.bf16.msra.mxu0 %v2642
    %2725 = vmatprep.subr.bf16.mxu0 %v2639
    %2726 = vmatpush1.bf16.msra.mxu0 %v2638
    %2727 = vmatprep.subr.bf16.mxu0 %v2635
    %2728 = vmatpush1.bf16.msra.mxu0 %v2634
    %2729 = vmatprep.subr.bf16.mxu0 %v2631
    %2730 = vmatpush1.bf16.msra.mxu0 %v2630
    %2731 = vmatprep.subr.bf16.mxu0 %v2627
    %2732 = vmatpush1.bf16.msra.mxu0 %v2626
    %2733 = vmatprep.subr.bf16.mxu0 %v2623
    %2734 = vmatpush1.bf16.msra.mxu0 %v2622
    %2735 = vmatprep.subr.bf16.mxu0 %v2619
    %2736 = vmatpush1.bf16.msra.mxu0 %v2618
    %2737 = vmatprep.subr.bf16.mxu0 0
    %2738 = vmatpush2.bf16.msra.mxu0 0
    %2739 = vmatprep.subr.bf16.mxu0 0
    %2740 = vmatpush2.bf16.msra.mxu0 0
    %2741 = vmatprep.subr.bf16.mxu0 0
    %2742 = vmatpush2.bf16.msra.mxu0 0
    %2743 = vmatprep.subr.bf16.mxu0 0
    %2744 = vmatpush2.bf16.msra.mxu0 0
    %2745 = vmatprep.subr.bf16.mxu0 0
    %2746 = vmatpush2.bf16.msra.mxu0 0
    %2747 = vmatprep.subr.bf16.mxu0 0
    %2748 = vmatpush2.bf16.msra.mxu0 0
    %2749 = vmatprep.subr.bf16.mxu0 0
    %2750 = vmatpush2.bf16.msra.mxu0 0
    %2751 = vmatprep.subr.bf16.mxu0 0
    %2752 = vmatpush2.bf16.msra.mxu0 0
    %2753 = vmatprep.mubr.bf16.mxu0 0
    %2754 = vmatmul.mubr.bf16.gmra.mxu0 %v1970
    %v2755 = vpop.f32.mrf.mxu0
    %v2756 = vadd.f32 0.0, %v2755
    %v2757 = vpop.f32.mrf.mxu0
    %v2758 = vadd.f32 0.0, %v2757
    %v2759 = vpop.f32.mrf.mxu0
    %v2760 = vpop.f32.mrf.mxu0
    %2761 = vdwg.mxu0
    %v2762 = vadd.f32 %v2484, %v2715
    %v2763 = vadd.f32 %v2485, %v2717
    %v2764 = vadd.f32 %v2486, %v2756
    %v2765 = vadd.f32 %v2487, %v2758
    %v2766 = vxor.u32 %v2762, 2147483648
    %v2767 = vxor.u32 %v2763, 2147483648
    %v2768 = vxor.u32 %v2764, 2147483648
    %v2769 = vmul.f32 %v2766, 1.442695
    %v2770 = vpow.pop %v2769
    %v2771 = vmul.f32 %v2767, 1.442695
    %v2772 = vpow.pop %v2771
    %v2773 = vmul.f32 %v2768, 1.442695
    %v2774 = vpow.pop %v2773
    %v2775 = vadd.f32 %v2770, 1.0
    %v2776 = vadd.f32 %v2772, 1.0
    %v2777 = vadd.f32 %v2774, 1.0
    %v2778 = vrcp.pop %v2775
    %v2779 = vmul.f32 1.0, %v2778
    %v2780 = vrcp.pop %v2776
    %v2781 = vmul.f32 1.0, %v2780
    %v2782 = vrcp.pop %v2777
    %v2783 = vmul.f32 1.0, %v2782
    %v2784 = vtanh.pop %v2765
    %v2785 = vmul.f32 %v2781, %v1451
    %v2786 = vmul.f32 %v2779, %v2784
    %v2787 = vadd.f32 %v2785, %v2786
    %v2788 = vtanh.pop %v2787
    %v2789 = vmul.f32 %v2783, %v2788
    %v2790 = vpack.c.bf16 %v2482, %v2482
    %v2791 = vpack.c.bf16 %v1968, %v1968
    %v2792 = vld [vmem:[%s1455] sm:$0xff]
    %v2793 = vld [vmem:[%s1455 + $0x8] sm:$0xff]
    %v2794 = vld [vmem:[%s1455 + $0x10] sm:$0xff]
    %v2795 = vld [vmem:[%s1455 + $0x18] sm:$0xff]
    %v2796 = vld [vmem:[%s1455 + $0x20] sm:$0xff]
    %v2797 = vld [vmem:[%s1455 + $0x28] sm:$0xff]
    %v2798 = vld [vmem:[%s1455 + $0x30] sm:$0xff]
    %v2799 = vld [vmem:[%s1455 + $0x38] sm:$0xff]
    %v2800 = vld [vmem:[%s1455 + $0x40] sm:$0xff]
    %v2801 = vld [vmem:[%s1455 + $0x48] sm:$0xff]
    %v2802 = vld [vmem:[%s1455 + $0x50] sm:$0xff]
    %v2803 = vld [vmem:[%s1455 + $0x58] sm:$0xff]
    %v2804 = vld [vmem:[%s1455 + $0x60] sm:$0xff]
    %v2805 = vld [vmem:[%s1455 + $0x68] sm:$0xff]
    %v2806 = vld [vmem:[%s1455 + $0x70] sm:$0xff]
    %v2807 = vld [vmem:[%s1455 + $0x78] sm:$0xff]
    %v2808 = vld [vmem:[%s1455 + $0x80] sm:$0xff]
    %v2809 = vld [vmem:[%s1455 + $0x88] sm:$0xff]
    %v2810 = vld [vmem:[%s1455 + $0x90] sm:$0xff]
    %v2811 = vld [vmem:[%s1455 + $0x98] sm:$0xff]
    %v2812 = vld [vmem:[%s1455 + $0xa0] sm:$0xff]
    %v2813 = vld [vmem:[%s1455 + $0xa8] sm:$0xff]
    %v2814 = vld [vmem:[%s1455 + $0xb0] sm:$0xff]
    %v2815 = vld [vmem:[%s1455 + $0xb8] sm:$0xff]
    %v2816 = vld [vmem:[%s1455 + $0xc0] sm:$0xff]
    %v2817 = vld [vmem:[%s1455 + $0xc8] sm:$0xff]
    %v2818 = vld [vmem:[%s1455 + $0xd0] sm:$0xff]
    %v2819 = vld [vmem:[%s1455 + $0xd8] sm:$0xff]
    %v2820 = vld [vmem:[%s1455 + $0xe0] sm:$0xff]
    %v2821 = vld [vmem:[%s1455 + $0xe8] sm:$0xff]
    %v2822 = vld [vmem:[%s1455 + $0xf0] sm:$0xff]
    %v2823 = vld [vmem:[%s1455 + $0xf8] sm:$0xff]
    %v2824 = vld [vmem:[%s1455 + $0x100] sm:$0xff]
    %v2825 = vld [vmem:[%s1455 + $0x108] sm:$0xff]
    %v2826 = vld [vmem:[%s1455 + $0x110] sm:$0xff]
    %v2827 = vld [vmem:[%s1455 + $0x118] sm:$0xff]
    %v2828 = vld [vmem:[%s1455 + $0x120] sm:$0xff]
    %v2829 = vld [vmem:[%s1455 + $0x128] sm:$0xff]
    %v2830 = vld [vmem:[%s1455 + $0x130] sm:$0xff]
    %v2831 = vld [vmem:[%s1455 + $0x138] sm:$0xff]
    %v2832 = vld [vmem:[%s1455 + $0x140] sm:$0xff]
    %v2833 = vld [vmem:[%s1455 + $0x148] sm:$0xff]
    %v2834 = vld [vmem:[%s1455 + $0x150] sm:$0xff]
    %v2835 = vld [vmem:[%s1455 + $0x158] sm:$0xff]
    %v2836 = vld [vmem:[%s1455 + $0x160] sm:$0xff]
    %v2837 = vld [vmem:[%s1455 + $0x168] sm:$0xff]
    %v2838 = vld [vmem:[%s1455 + $0x170] sm:$0xff]
    %v2839 = vld [vmem:[%s1455 + $0x178] sm:$0xff]
    %v2840 = vld [vmem:[%s1455 + $0x180] sm:$0xff]
    %v2841 = vld [vmem:[%s1455 + $0x188] sm:$0xff]
    %v2842 = vld [vmem:[%s1455 + $0x190] sm:$0xff]
    %v2843 = vld [vmem:[%s1455 + $0x198] sm:$0xff]
    %v2844 = vld [vmem:[%s1455 + $0x1a0] sm:$0xff]
    %v2845 = vld [vmem:[%s1455 + $0x1a8] sm:$0xff]
    %v2846 = vld [vmem:[%s1455 + $0x1b0] sm:$0xff]
    %v2847 = vld [vmem:[%s1455 + $0x1b8] sm:$0xff]
    %v2848 = vld [vmem:[%s1455 + $0x1c0] sm:$0xff]
    %v2849 = vld [vmem:[%s1455 + $0x1c8] sm:$0xff]
    %v2850 = vld [vmem:[%s1455 + $0x1d0] sm:$0xff]
    %v2851 = vld [vmem:[%s1455 + $0x1d8] sm:$0xff]
    %v2852 = vld [vmem:[%s1455 + $0x1e0] sm:$0xff]
    %v2853 = vld [vmem:[%s1455 + $0x1e8] sm:$0xff]
    %v2854 = vld [vmem:[%s1455 + $0x1f0] sm:$0xff]
    %v2855 = vld [vmem:[%s1455 + $0x1f8] sm:$0xff]
    %v2856 = vld [vmem:[%s1520] sm:$0xf]
    %v2858 = vlaneseq
    %v2859 = vshrl.u32 %v2858, 7
    %v2860 = vsub.s32 0, %v2859
    %v2861 = vrot.slane %v2856, %v2860
    %v2862 = vlaneseq
    %v2863 = vshrl.u32 %v2862, 7
    %v2864 = vsub.s32 1, %v2863
    %v2865 = vrot.slane %v2856, %v2864
    %v2866 = vlaneseq
    %v2867 = vshrl.u32 %v2866, 7
    %v2868 = vsub.s32 2, %v2867
    %v2869 = vrot.slane %v2856, %v2868
    %v2870 = vlaneseq
    %v2871 = vshrl.u32 %v2870, 7
    %v2872 = vsub.s32 3, %v2871
    %v2873 = vrot.slane %v2856, %v2872
    %v2942 = vunpack.c.l.b16 %v2792
    %v2943 = vunpack.c.h.b16 %v2792
    %v2944 = vunpack.c.l.b16 %v2793
    %v2945 = vunpack.c.h.b16 %v2793
    %v2946 = vunpack.c.l.b16 %v2794
    %v2947 = vunpack.c.h.b16 %v2794
    %v2948 = vunpack.c.l.b16 %v2795
    %v2949 = vunpack.c.h.b16 %v2795
    %v2950 = vunpack.c.l.b16 %v2796
    %v2951 = vunpack.c.h.b16 %v2796
    %v2952 = vunpack.c.l.b16 %v2797
    %v2953 = vunpack.c.h.b16 %v2797
    %v2954 = vunpack.c.l.b16 %v2798
    %v2955 = vunpack.c.h.b16 %v2798
    %v2956 = vunpack.c.l.b16 %v2799
    %v2957 = vunpack.c.h.b16 %v2799
    %v2958 = vunpack.c.l.b16 %v2800
    %v2959 = vunpack.c.h.b16 %v2800
    %v2960 = vunpack.c.l.b16 %v2801
    %v2961 = vunpack.c.h.b16 %v2801
    %v2962 = vunpack.c.l.b16 %v2802
    %v2963 = vunpack.c.h.b16 %v2802
    %v2964 = vunpack.c.l.b16 %v2803
    %v2965 = vunpack.c.h.b16 %v2803
    %v2966 = vunpack.c.l.b16 %v2804
    %v2967 = vunpack.c.h.b16 %v2804
    %v2968 = vunpack.c.l.b16 %v2805
    %v2969 = vunpack.c.h.b16 %v2805
    %v2970 = vunpack.c.l.b16 %v2806
    %v2971 = vunpack.c.h.b16 %v2806
    %v2972 = vunpack.c.l.b16 %v2807
    %v2973 = vunpack.c.h.b16 %v2807
    %v2974 = vunpack.c.l.b16 %v2808
    %v2975 = vunpack.c.h.b16 %v2808
    %v2976 = vunpack.c.l.b16 %v2809
    %v2977 = vunpack.c.h.b16 %v2809
    %v2978 = vunpack.c.l.b16 %v2810
    %v2979 = vunpack.c.h.b16 %v2810
    %v2980 = vunpack.c.l.b16 %v2811
    %v2981 = vunpack.c.h.b16 %v2811
    %v2982 = vunpack.c.l.b16 %v2812
    %v2983 = vunpack.c.h.b16 %v2812
    %v2984 = vunpack.c.l.b16 %v2813
    %v2985 = vunpack.c.h.b16 %v2813
    %v2986 = vunpack.c.l.b16 %v2814
    %v2987 = vunpack.c.h.b16 %v2814
    %v2988 = vunpack.c.l.b16 %v2815
    %v2989 = vunpack.c.h.b16 %v2815
    %v2990 = vunpack.c.l.b16 %v2816
    %v2991 = vunpack.c.h.b16 %v2816
    %v2992 = vunpack.c.l.b16 %v2817
    %v2993 = vunpack.c.h.b16 %v2817
    %v2994 = vunpack.c.l.b16 %v2818
    %v2995 = vunpack.c.h.b16 %v2818
    %v2996 = vunpack.c.l.b16 %v2819
    %v2997 = vunpack.c.h.b16 %v2819
    %v2998 = vunpack.c.l.b16 %v2820
    %v2999 = vunpack.c.h.b16 %v2820
    %v3000 = vunpack.c.l.b16 %v2821
    %v3001 = vunpack.c.h.b16 %v2821
    %v3002 = vunpack.c.l.b16 %v2822
    %v3003 = vunpack.c.h.b16 %v2822
    %v3004 = vunpack.c.l.b16 %v2823
    %v3005 = vunpack.c.h.b16 %v2823
    %v3006 = vunpack.c.l.b16 %v2824
    %v3007 = vunpack.c.h.b16 %v2824
    %v3008 = vunpack.c.l.b16 %v2825
    %v3009 = vunpack.c.h.b16 %v2825
    %v3010 = vunpack.c.l.b16 %v2826
    %v3011 = vunpack.c.h.b16 %v2826
    %v3012 = vunpack.c.l.b16 %v2827
    %v3013 = vunpack.c.h.b16 %v2827
    %v3014 = vunpack.c.l.b16 %v2828
    %v3015 = vunpack.c.h.b16 %v2828
    %v3016 = vunpack.c.l.b16 %v2829
    %v3017 = vunpack.c.h.b16 %v2829
    %v3018 = vunpack.c.l.b16 %v2830
    %v3019 = vunpack.c.h.b16 %v2830
    %v3020 = vunpack.c.l.b16 %v2831
    %v3021 = vunpack.c.h.b16 %v2831
    %v3022 = vunpack.c.l.b16 %v2832
    %v3023 = vunpack.c.h.b16 %v2832
    %v3024 = vunpack.c.l.b16 %v2833
    %v3025 = vunpack.c.h.b16 %v2833
    %v3026 = vunpack.c.l.b16 %v2834
    %v3027 = vunpack.c.h.b16 %v2834
    %v3028 = vunpack.c.l.b16 %v2835
    %v3029 = vunpack.c.h.b16 %v2835
    %v3030 = vunpack.c.l.b16 %v2836
    %v3031 = vunpack.c.h.b16 %v2836
    %v3032 = vunpack.c.l.b16 %v2837
    %v3033 = vunpack.c.h.b16 %v2837
    %v3034 = vunpack.c.l.b16 %v2838
    %v3035 = vunpack.c.h.b16 %v2838
    %v3036 = vunpack.c.l.b16 %v2839
    %v3037 = vunpack.c.h.b16 %v2839
    %v3038 = vunpack.c.l.b16 %v2840
    %v3039 = vunpack.c.h.b16 %v2840
    %v3040 = vunpack.c.l.b16 %v2841
    %v3041 = vunpack.c.h.b16 %v2841
    %v3042 = vunpack.c.l.b16 %v2842
    %v3043 = vunpack.c.h.b16 %v2842
    %v3044 = vunpack.c.l.b16 %v2843
    %v3045 = vunpack.c.h.b16 %v2843
    %v3046 = vunpack.c.l.b16 %v2844
    %v3047 = vunpack.c.h.b16 %v2844
    %v3048 = vunpack.c.l.b16 %v2845
    %v3049 = vunpack.c.h.b16 %v2845
    %v3050 = vunpack.c.l.b16 %v2846
    %v3051 = vunpack.c.h.b16 %v2846
    %v3052 = vunpack.c.l.b16 %v2847
    %v3053 = vunpack.c.h.b16 %v2847
    %v3054 = vunpack.c.l.b16 %v2848
    %v3055 = vunpack.c.h.b16 %v2848
    %v3056 = vunpack.c.l.b16 %v2849
    %v3057 = vunpack.c.h.b16 %v2849
    %v3058 = vunpack.c.l.b16 %v2850
    %v3059 = vunpack.c.h.b16 %v2850
    %v3060 = vunpack.c.l.b16 %v2851
    %v3061 = vunpack.c.h.b16 %v2851
    %v3062 = vunpack.c.l.b16 %v2852
    %v3063 = vunpack.c.h.b16 %v2852
    %v3064 = vunpack.c.l.b16 %v2853
    %v3065 = vunpack.c.h.b16 %v2853
    %v3066 = vunpack.c.l.b16 %v2854
    %v3067 = vunpack.c.h.b16 %v2854
    %v3068 = vunpack.c.l.b16 %v2855
    %v3069 = vunpack.c.h.b16 %v2855
    %v3070 = vpack.c.b16 %v2946, %v2942
    %v3071 = vpack.c.b16 %v2947, %v2943
    %v3072 = vpack.c.b16 %v2948, %v2944
    %v3073 = vpack.c.b16 %v2949, %v2945
    %v3074 = vpack.c.b16 %v2954, %v2950
    %v3075 = vpack.c.b16 %v2955, %v2951
    %v3076 = vpack.c.b16 %v2956, %v2952
    %v3077 = vpack.c.b16 %v2957, %v2953
    %v3078 = vpack.c.b16 %v2962, %v2958
    %v3079 = vpack.c.b16 %v2963, %v2959
    %v3080 = vpack.c.b16 %v2964, %v2960
    %v3081 = vpack.c.b16 %v2965, %v2961
    %v3082 = vpack.c.b16 %v2970, %v2966
    %v3083 = vpack.c.b16 %v2971, %v2967
    %v3084 = vpack.c.b16 %v2972, %v2968
    %v3085 = vpack.c.b16 %v2973, %v2969
    %v3086 = vpack.c.b16 %v2978, %v2974
    %v3087 = vpack.c.b16 %v2979, %v2975
    %v3088 = vpack.c.b16 %v2980, %v2976
    %v3089 = vpack.c.b16 %v2981, %v2977
    %v3090 = vpack.c.b16 %v2986, %v2982
    %v3091 = vpack.c.b16 %v2987, %v2983
    %v3092 = vpack.c.b16 %v2988, %v2984
    %v3093 = vpack.c.b16 %v2989, %v2985
    %v3094 = vpack.c.b16 %v2994, %v2990
    %v3095 = vpack.c.b16 %v2995, %v2991
    %v3096 = vpack.c.b16 %v2996, %v2992
    %v3097 = vpack.c.b16 %v2997, %v2993
    %v3098 = vpack.c.b16 %v3002, %v2998
    %v3099 = vpack.c.b16 %v3003, %v2999
    %v3100 = vpack.c.b16 %v3004, %v3000
    %v3101 = vpack.c.b16 %v3005, %v3001
    %v3102 = vpack.c.b16 %v3010, %v3006
    %v3103 = vpack.c.b16 %v3011, %v3007
    %v3104 = vpack.c.b16 %v3012, %v3008
    %v3105 = vpack.c.b16 %v3013, %v3009
    %v3106 = vpack.c.b16 %v3018, %v3014
    %v3107 = vpack.c.b16 %v3019, %v3015
    %v3108 = vpack.c.b16 %v3020, %v3016
    %v3109 = vpack.c.b16 %v3021, %v3017
    %v3110 = vpack.c.b16 %v3026, %v3022
    %v3111 = vpack.c.b16 %v3027, %v3023
    %v3112 = vpack.c.b16 %v3028, %v3024
    %v3113 = vpack.c.b16 %v3029, %v3025
    %v3114 = vpack.c.b16 %v3034, %v3030
    %v3115 = vpack.c.b16 %v3035, %v3031
    %v3116 = vpack.c.b16 %v3036, %v3032
    %v3117 = vpack.c.b16 %v3037, %v3033
    %v3118 = vpack.c.b16 %v3042, %v3038
    %v3119 = vpack.c.b16 %v3043, %v3039
    %v3120 = vpack.c.b16 %v3044, %v3040
    %v3121 = vpack.c.b16 %v3045, %v3041
    %v3122 = vpack.c.b16 %v3050, %v3046
    %v3123 = vpack.c.b16 %v3051, %v3047
    %v3124 = vpack.c.b16 %v3052, %v3048
    %v3125 = vpack.c.b16 %v3053, %v3049
    %v3126 = vpack.c.b16 %v3058, %v3054
    %v3127 = vpack.c.b16 %v3059, %v3055
    %v3128 = vpack.c.b16 %v3060, %v3056
    %v3129 = vpack.c.b16 %v3061, %v3057
    %v3130 = vpack.c.b16 %v3066, %v3062
    %v3131 = vpack.c.b16 %v3067, %v3063
    %v3132 = vpack.c.b16 %v3068, %v3064
    %v3133 = vpack.c.b16 %v3069, %v3065
    %3198 = vmatprep.subr.bf16.mxu0 %v3099
    %3199 = vmatpush1.bf16.msra.mxu0 %v3098
    %3200 = vmatprep.subr.bf16.mxu0 %v3095
    %3201 = vmatpush1.bf16.msra.mxu0 %v3094
    %3202 = vmatprep.subr.bf16.mxu0 %v3091
    %3203 = vmatpush1.bf16.msra.mxu0 %v3090
    %3204 = vmatprep.subr.bf16.mxu0 %v3087
    %3205 = vmatpush1.bf16.msra.mxu0 %v3086
    %3206 = vmatprep.subr.bf16.mxu0 %v3083
    %3207 = vmatpush1.bf16.msra.mxu0 %v3082
    %3208 = vmatprep.subr.bf16.mxu0 %v3079
    %3209 = vmatpush1.bf16.msra.mxu0 %v3078
    %3210 = vmatprep.subr.bf16.mxu0 %v3075
    %3211 = vmatpush1.bf16.msra.mxu0 %v3074
    %3212 = vmatprep.subr.bf16.mxu0 %v3071
    %3213 = vmatpush1.bf16.msra.mxu0 %v3070
    %3214 = vmatprep.subr.bf16.mxu0 %v3131
    %3215 = vmatpush2.bf16.msra.mxu0 %v3130
    %3216 = vmatprep.subr.bf16.mxu0 %v3127
    %3217 = vmatpush2.bf16.msra.mxu0 %v3126
    %3218 = vmatprep.subr.bf16.mxu0 %v3123
    %3219 = vmatpush2.bf16.msra.mxu0 %v3122
    %3220 = vmatprep.subr.bf16.mxu0 %v3119
    %3221 = vmatpush2.bf16.msra.mxu0 %v3118
    %3222 = vmatprep.subr.bf16.mxu0 %v3115
    %3223 = vmatpush2.bf16.msra.mxu0 %v3114
    %3224 = vmatprep.subr.bf16.mxu0 %v3111
    %3225 = vmatpush2.bf16.msra.mxu0 %v3110
    %3226 = vmatprep.subr.bf16.mxu0 %v3107
    %3227 = vmatpush2.bf16.msra.mxu0 %v3106
    %3228 = vmatprep.subr.bf16.mxu0 %v3103
    %3229 = vmatpush2.bf16.msra.mxu0 %v3102
    %3230 = vmatprep.mubr.bf16.mxu0 %v2791
    %3231 = vmatmul.mubr.bf16.gmra.mxu0 %v2790
    %v3232 = vpop.f32.mrf.mxu0
    %v3233 = vadd.f32 %v2861, %v3232
    %v3234 = vpop.f32.mrf.mxu0
    %v3235 = vadd.f32 %v2865, %v3234
    %v3236 = vpop.f32.mrf.mxu0
    %v3237 = vpop.f32.mrf.mxu0
    %3238 = vdwg.mxu0
    %3239 = vmatprep.subr.bf16.mxu0 %v3101
    %3240 = vmatpush1.bf16.msra.mxu0 %v3100
    %3241 = vmatprep.subr.bf16.mxu0 %v3097
    %3242 = vmatpush1.bf16.msra.mxu0 %v3096
    %3243 = vmatprep.subr.bf16.mxu0 %v3093
    %3244 = vmatpush1.bf16.msra.mxu0 %v3092
    %3245 = vmatprep.subr.bf16.mxu0 %v3089
    %3246 = vmatpush1.bf16.msra.mxu0 %v3088
    %3247 = vmatprep.subr.bf16.mxu0 %v3085
    %3248 = vmatpush1.bf16.msra.mxu0 %v3084
    %3249 = vmatprep.subr.bf16.mxu0 %v3081
    %3250 = vmatpush1.bf16.msra.mxu0 %v3080
    %3251 = vmatprep.subr.bf16.mxu0 %v3077
    %3252 = vmatpush1.bf16.msra.mxu0 %v3076
    %3253 = vmatprep.subr.bf16.mxu0 %v3073
    %3254 = vmatpush1.bf16.msra.mxu0 %v3072
    %3255 = vmatprep.subr.bf16.mxu0 %v3133
    %3256 = vmatpush2.bf16.msra.mxu0 %v3132
    %3257 = vmatprep.subr.bf16.mxu0 %v3129
    %3258 = vmatpush2.bf16.msra.mxu0 %v3128
    %3259 = vmatprep.subr.bf16.mxu0 %v3125
    %3260 = vmatpush2.bf16.msra.mxu0 %v3124
    %3261 = vmatprep.subr.bf16.mxu0 %v3121
    %3262 = vmatpush2.bf16.msra.mxu0 %v3120
    %3263 = vmatprep.subr.bf16.mxu0 %v3117
    %3264 = vmatpush2.bf16.msra.mxu0 %v3116
    %3265 = vmatprep.subr.bf16.mxu0 %v3113
    %3266 = vmatpush2.bf16.msra.mxu0 %v3112
    %3267 = vmatprep.subr.bf16.mxu0 %v3109
    %3268 = vmatpush2.bf16.msra.mxu0 %v3108
    %3269 = vmatprep.subr.bf16.mxu0 %v3105
    %3270 = vmatpush2.bf16.msra.mxu0 %v3104
    %3271 = vmatprep.mubr.bf16.mxu0 %v2791
    %3272 = vmatmul.mubr.bf16.gmra.mxu0 %v2790
    %v3273 = vpop.f32.mrf.mxu0
    %v3274 = vadd.f32 %v2869, %v3273
    %v3275 = vpop.f32.mrf.mxu0
    %v3276 = vadd.f32 %v2873, %v3275
    %v3277 = vpop.f32.mrf.mxu0
    %v3278 = vpop.f32.mrf.mxu0
    %3279 = vdwg.mxu0
    %v3280 = vxor.u32 %v3233, 2147483648
    %v3281 = vxor.u32 %v3235, 2147483648
    %v3282 = vxor.u32 %v3274, 2147483648
    %v3283 = vmul.f32 %v3280, 1.442695
    %v3284 = vpow.pop %v3283
    %v3285 = vmul.f32 %v3281, 1.442695
    %v3286 = vpow.pop %v3285
    %v3287 = vmul.f32 %v3282, 1.442695
    %v3288 = vpow.pop %v3287
    %v3289 = vadd.f32 %v3284, 1.0
    %v3290 = vadd.f32 %v3286, 1.0
    %v3291 = vadd.f32 %v3288, 1.0
    %v3292 = vrcp.pop %v3289
    %v3293 = vmul.f32 1.0, %v3292
    %v3294 = vrcp.pop %v3290
    %v3295 = vmul.f32 1.0, %v3294
    %v3296 = vrcp.pop %v3291
    %v3297 = vmul.f32 1.0, %v3296
    %v3298 = vtanh.pop %v3276
    %v3299 = vmul.f32 %v3295, %v1966
    %v3300 = vmul.f32 %v3293, %v3298
    %v3301 = vadd.f32 %v3299, %v3300
    %v3302 = vtanh.pop %v3301
    %v3303 = vmul.f32 %v3297, %v3302
    %s3304 = scalar_lea.vmem [#allocation14], 8
    %3305 = vst [vmem:[%s3304] sm:$0xff] %v3303
    %v3306 = vpack.c.bf16 %v2789, %v2789
    %v3307 = vld [vmem:[#allocation9] sm:$0xff]
    %v3308 = vld [vmem:[#allocation9 + $0x8] sm:$0xff]
    %v3309 = vld [vmem:[#allocation9 + $0x10] sm:$0xff]
    %v3310 = vld [vmem:[#allocation9 + $0x18] sm:$0xff]
    %v3311 = vld [vmem:[#allocation9 + $0x20] sm:$0xff]
    %v3312 = vld [vmem:[#allocation9 + $0x28] sm:$0xff]
    %v3313 = vld [vmem:[#allocation9 + $0x30] sm:$0xff]
    %v3314 = vld [vmem:[#allocation9 + $0x38] sm:$0xff]
    %v3315 = vld [vmem:[#allocation9 + $0x40] sm:$0xff]
    %v3316 = vld [vmem:[#allocation9 + $0x48] sm:$0xff]
    %v3317 = vld [vmem:[#allocation9 + $0x50] sm:$0xff]
    %v3318 = vld [vmem:[#allocation9 + $0x58] sm:$0xff]
    %v3319 = vld [vmem:[#allocation9 + $0x60] sm:$0xff]
    %v3320 = vld [vmem:[#allocation9 + $0x68] sm:$0xff]
    %v3321 = vld [vmem:[#allocation9 + $0x70] sm:$0xff]
    %v3322 = vld [vmem:[#allocation9 + $0x78] sm:$0xff]
    %v3323 = vld [vmem:[#allocation9 + $0x80] sm:$0xff]
    %v3324 = vld [vmem:[#allocation9 + $0x88] sm:$0xff]
    %v3325 = vld [vmem:[#allocation9 + $0x90] sm:$0xff]
    %v3326 = vld [vmem:[#allocation9 + $0x98] sm:$0xff]
    %v3327 = vld [vmem:[#allocation9 + $0xa0] sm:$0xff]
    %v3328 = vld [vmem:[#allocation9 + $0xa8] sm:$0xff]
    %v3329 = vld [vmem:[#allocation9 + $0xb0] sm:$0xff]
    %v3330 = vld [vmem:[#allocation9 + $0xb8] sm:$0xff]
    %v3331 = vld [vmem:[#allocation9 + $0xc0] sm:$0xff]
    %v3332 = vld [vmem:[#allocation9 + $0xc8] sm:$0xff]
    %v3333 = vld [vmem:[#allocation9 + $0xd0] sm:$0xff]
    %v3334 = vld [vmem:[#allocation9 + $0xd8] sm:$0xff]
    %v3335 = vld [vmem:[#allocation9 + $0xe0] sm:$0xff]
    %v3336 = vld [vmem:[#allocation9 + $0xe8] sm:$0xff]
    %v3337 = vld [vmem:[#allocation9 + $0xf0] sm:$0xff]
    %v3338 = vld [vmem:[#allocation9 + $0xf8] sm:$0xff]
    %v3339 = vld [vmem:[#allocation9 + $0x100] sm:$0xff]
    %v3340 = vld [vmem:[#allocation9 + $0x108] sm:$0xff]
    %v3341 = vld [vmem:[#allocation9 + $0x110] sm:$0xff]
    %v3342 = vld [vmem:[#allocation9 + $0x118] sm:$0xff]
    %v3343 = vld [vmem:[#allocation9 + $0x120] sm:$0xff]
    %v3344 = vld [vmem:[#allocation9 + $0x128] sm:$0xff]
    %v3345 = vld [vmem:[#allocation9 + $0x130] sm:$0xff]
    %v3346 = vld [vmem:[#allocation9 + $0x138] sm:$0xff]
    %v3347 = vld [vmem:[#allocation9 + $0x140] sm:$0xff]
    %v3348 = vld [vmem:[#allocation9 + $0x148] sm:$0xff]
    %v3349 = vld [vmem:[#allocation9 + $0x150] sm:$0xff]
    %v3350 = vld [vmem:[#allocation9 + $0x158] sm:$0xff]
    %v3351 = vld [vmem:[#allocation9 + $0x160] sm:$0xff]
    %v3352 = vld [vmem:[#allocation9 + $0x168] sm:$0xff]
    %v3353 = vld [vmem:[#allocation9 + $0x170] sm:$0xff]
    %v3354 = vld [vmem:[#allocation9 + $0x178] sm:$0xff]
    %v3355 = vld [vmem:[#allocation9 + $0x180] sm:$0xff]
    %v3356 = vld [vmem:[#allocation9 + $0x188] sm:$0xff]
    %v3357 = vld [vmem:[#allocation9 + $0x190] sm:$0xff]
    %v3358 = vld [vmem:[#allocation9 + $0x198] sm:$0xff]
    %v3359 = vld [vmem:[#allocation9 + $0x1a0] sm:$0xff]
    %v3360 = vld [vmem:[#allocation9 + $0x1a8] sm:$0xff]
    %v3361 = vld [vmem:[#allocation9 + $0x1b0] sm:$0xff]
    %v3362 = vld [vmem:[#allocation9 + $0x1b8] sm:$0xff]
    %v3363 = vld [vmem:[#allocation9 + $0x1c0] sm:$0xff]
    %v3364 = vld [vmem:[#allocation9 + $0x1c8] sm:$0xff]
    %v3365 = vld [vmem:[#allocation9 + $0x1d0] sm:$0xff]
    %v3366 = vld [vmem:[#allocation9 + $0x1d8] sm:$0xff]
    %v3367 = vld [vmem:[#allocation9 + $0x1e0] sm:$0xff]
    %v3368 = vld [vmem:[#allocation9 + $0x1e8] sm:$0xff]
    %v3369 = vld [vmem:[#allocation9 + $0x1f0] sm:$0xff]
    %v3370 = vld [vmem:[#allocation9 + $0x1f8] sm:$0xff]
    %v3371 = vld [vmem:[%s890] sm:$0xf]
    %v3373 = vlaneseq
    %v3374 = vshrl.u32 %v3373, 7
    %v3375 = vsub.s32 0, %v3374
    %v3376 = vrot.slane %v3371, %v3375
    %v3377 = vlaneseq
    %v3378 = vshrl.u32 %v3377, 7
    %v3379 = vsub.s32 1, %v3378
    %v3380 = vrot.slane %v3371, %v3379
    %v3381 = vlaneseq
    %v3382 = vshrl.u32 %v3381, 7
    %v3383 = vsub.s32 2, %v3382
    %v3384 = vrot.slane %v3371, %v3383
    %v3385 = vlaneseq
    %v3386 = vshrl.u32 %v3385, 7
    %v3387 = vsub.s32 3, %v3386
    %v3388 = vrot.slane %v3371, %v3387
    %v3457 = vunpack.c.l.b16 %v3307
    %v3458 = vunpack.c.h.b16 %v3307
    %v3459 = vunpack.c.l.b16 %v3308
    %v3460 = vunpack.c.h.b16 %v3308
    %v3461 = vunpack.c.l.b16 %v3309
    %v3462 = vunpack.c.h.b16 %v3309
    %v3463 = vunpack.c.l.b16 %v3310
    %v3464 = vunpack.c.h.b16 %v3310
    %v3465 = vunpack.c.l.b16 %v3311
    %v3466 = vunpack.c.h.b16 %v3311
    %v3467 = vunpack.c.l.b16 %v3312
    %v3468 = vunpack.c.h.b16 %v3312
    %v3469 = vunpack.c.l.b16 %v3313
    %v3470 = vunpack.c.h.b16 %v3313
    %v3471 = vunpack.c.l.b16 %v3314
    %v3472 = vunpack.c.h.b16 %v3314
    %v3473 = vunpack.c.l.b16 %v3315
    %v3474 = vunpack.c.h.b16 %v3315
    %v3475 = vunpack.c.l.b16 %v3316
    %v3476 = vunpack.c.h.b16 %v3316
    %v3477 = vunpack.c.l.b16 %v3317
    %v3478 = vunpack.c.h.b16 %v3317
    %v3479 = vunpack.c.l.b16 %v3318
    %v3480 = vunpack.c.h.b16 %v3318
    %v3481 = vunpack.c.l.b16 %v3319
    %v3482 = vunpack.c.h.b16 %v3319
    %v3483 = vunpack.c.l.b16 %v3320
    %v3484 = vunpack.c.h.b16 %v3320
    %v3485 = vunpack.c.l.b16 %v3321
    %v3486 = vunpack.c.h.b16 %v3321
    %v3487 = vunpack.c.l.b16 %v3322
    %v3488 = vunpack.c.h.b16 %v3322
    %v3489 = vunpack.c.l.b16 %v3323
    %v3490 = vunpack.c.h.b16 %v3323
    %v3491 = vunpack.c.l.b16 %v3324
    %v3492 = vunpack.c.h.b16 %v3324
    %v3493 = vunpack.c.l.b16 %v3325
    %v3494 = vunpack.c.h.b16 %v3325
    %v3495 = vunpack.c.l.b16 %v3326
    %v3496 = vunpack.c.h.b16 %v3326
    %v3497 = vunpack.c.l.b16 %v3327
    %v3498 = vunpack.c.h.b16 %v3327
    %v3499 = vunpack.c.l.b16 %v3328
    %v3500 = vunpack.c.h.b16 %v3328
    %v3501 = vunpack.c.l.b16 %v3329
    %v3502 = vunpack.c.h.b16 %v3329
    %v3503 = vunpack.c.l.b16 %v3330
    %v3504 = vunpack.c.h.b16 %v3330
    %v3505 = vunpack.c.l.b16 %v3331
    %v3506 = vunpack.c.h.b16 %v3331
    %v3507 = vunpack.c.l.b16 %v3332
    %v3508 = vunpack.c.h.b16 %v3332
    %v3509 = vunpack.c.l.b16 %v3333
    %v3510 = vunpack.c.h.b16 %v3333
    %v3511 = vunpack.c.l.b16 %v3334
    %v3512 = vunpack.c.h.b16 %v3334
    %v3513 = vunpack.c.l.b16 %v3335
    %v3514 = vunpack.c.h.b16 %v3335
    %v3515 = vunpack.c.l.b16 %v3336
    %v3516 = vunpack.c.h.b16 %v3336
    %v3517 = vunpack.c.l.b16 %v3337
    %v3518 = vunpack.c.h.b16 %v3337
    %v3519 = vunpack.c.l.b16 %v3338
    %v3520 = vunpack.c.h.b16 %v3338
    %v3521 = vunpack.c.l.b16 %v3339
    %v3522 = vunpack.c.h.b16 %v3339
    %v3523 = vunpack.c.l.b16 %v3340
    %v3524 = vunpack.c.h.b16 %v3340
    %v3525 = vunpack.c.l.b16 %v3341
    %v3526 = vunpack.c.h.b16 %v3341
    %v3527 = vunpack.c.l.b16 %v3342
    %v3528 = vunpack.c.h.b16 %v3342
    %v3529 = vunpack.c.l.b16 %v3343
    %v3530 = vunpack.c.h.b16 %v3343
    %v3531 = vunpack.c.l.b16 %v3344
    %v3532 = vunpack.c.h.b16 %v3344
    %v3533 = vunpack.c.l.b16 %v3345
    %v3534 = vunpack.c.h.b16 %v3345
    %v3535 = vunpack.c.l.b16 %v3346
    %v3536 = vunpack.c.h.b16 %v3346
    %v3537 = vunpack.c.l.b16 %v3347
    %v3538 = vunpack.c.h.b16 %v3347
    %v3539 = vunpack.c.l.b16 %v3348
    %v3540 = vunpack.c.h.b16 %v3348
    %v3541 = vunpack.c.l.b16 %v3349
    %v3542 = vunpack.c.h.b16 %v3349
    %v3543 = vunpack.c.l.b16 %v3350
    %v3544 = vunpack.c.h.b16 %v3350
    %v3545 = vunpack.c.l.b16 %v3351
    %v3546 = vunpack.c.h.b16 %v3351
    %v3547 = vunpack.c.l.b16 %v3352
    %v3548 = vunpack.c.h.b16 %v3352
    %v3549 = vunpack.c.l.b16 %v3353
    %v3550 = vunpack.c.h.b16 %v3353
    %v3551 = vunpack.c.l.b16 %v3354
    %v3552 = vunpack.c.h.b16 %v3354
    %v3553 = vunpack.c.l.b16 %v3355
    %v3554 = vunpack.c.h.b16 %v3355
    %v3555 = vunpack.c.l.b16 %v3356
    %v3556 = vunpack.c.h.b16 %v3356
    %v3557 = vunpack.c.l.b16 %v3357
    %v3558 = vunpack.c.h.b16 %v3357
    %v3559 = vunpack.c.l.b16 %v3358
    %v3560 = vunpack.c.h.b16 %v3358
    %v3561 = vunpack.c.l.b16 %v3359
    %v3562 = vunpack.c.h.b16 %v3359
    %v3563 = vunpack.c.l.b16 %v3360
    %v3564 = vunpack.c.h.b16 %v3360
    %v3565 = vunpack.c.l.b16 %v3361
    %v3566 = vunpack.c.h.b16 %v3361
    %v3567 = vunpack.c.l.b16 %v3362
    %v3568 = vunpack.c.h.b16 %v3362
    %v3569 = vunpack.c.l.b16 %v3363
    %v3570 = vunpack.c.h.b16 %v3363
    %v3571 = vunpack.c.l.b16 %v3364
    %v3572 = vunpack.c.h.b16 %v3364
    %v3573 = vunpack.c.l.b16 %v3365
    %v3574 = vunpack.c.h.b16 %v3365
    %v3575 = vunpack.c.l.b16 %v3366
    %v3576 = vunpack.c.h.b16 %v3366
    %v3577 = vunpack.c.l.b16 %v3367
    %v3578 = vunpack.c.h.b16 %v3367
    %v3579 = vunpack.c.l.b16 %v3368
    %v3580 = vunpack.c.h.b16 %v3368
    %v3581 = vunpack.c.l.b16 %v3369
    %v3582 = vunpack.c.h.b16 %v3369
    %v3583 = vunpack.c.l.b16 %v3370
    %v3584 = vunpack.c.h.b16 %v3370
    %v3585 = vpack.c.b16 %v3461, %v3457
    %v3586 = vpack.c.b16 %v3462, %v3458
    %v3587 = vpack.c.b16 %v3463, %v3459
    %v3588 = vpack.c.b16 %v3464, %v3460
    %v3589 = vpack.c.b16 %v3469, %v3465
    %v3590 = vpack.c.b16 %v3470, %v3466
    %v3591 = vpack.c.b16 %v3471, %v3467
    %v3592 = vpack.c.b16 %v3472, %v3468
    %v3593 = vpack.c.b16 %v3477, %v3473
    %v3594 = vpack.c.b16 %v3478, %v3474
    %v3595 = vpack.c.b16 %v3479, %v3475
    %v3596 = vpack.c.b16 %v3480, %v3476
    %v3597 = vpack.c.b16 %v3485, %v3481
    %v3598 = vpack.c.b16 %v3486, %v3482
    %v3599 = vpack.c.b16 %v3487, %v3483
    %v3600 = vpack.c.b16 %v3488, %v3484
    %v3601 = vpack.c.b16 %v3493, %v3489
    %v3602 = vpack.c.b16 %v3494, %v3490
    %v3603 = vpack.c.b16 %v3495, %v3491
    %v3604 = vpack.c.b16 %v3496, %v3492
    %v3605 = vpack.c.b16 %v3501, %v3497
    %v3606 = vpack.c.b16 %v3502, %v3498
    %v3607 = vpack.c.b16 %v3503, %v3499
    %v3608 = vpack.c.b16 %v3504, %v3500
    %v3609 = vpack.c.b16 %v3509, %v3505
    %v3610 = vpack.c.b16 %v3510, %v3506
    %v3611 = vpack.c.b16 %v3511, %v3507
    %v3612 = vpack.c.b16 %v3512, %v3508
    %v3613 = vpack.c.b16 %v3517, %v3513
    %v3614 = vpack.c.b16 %v3518, %v3514
    %v3615 = vpack.c.b16 %v3519, %v3515
    %v3616 = vpack.c.b16 %v3520, %v3516
    %v3617 = vpack.c.b16 %v3525, %v3521
    %v3618 = vpack.c.b16 %v3526, %v3522
    %v3619 = vpack.c.b16 %v3527, %v3523
    %v3620 = vpack.c.b16 %v3528, %v3524
    %v3621 = vpack.c.b16 %v3533, %v3529
    %v3622 = vpack.c.b16 %v3534, %v3530
    %v3623 = vpack.c.b16 %v3535, %v3531
    %v3624 = vpack.c.b16 %v3536, %v3532
    %v3625 = vpack.c.b16 %v3541, %v3537
    %v3626 = vpack.c.b16 %v3542, %v3538
    %v3627 = vpack.c.b16 %v3543, %v3539
    %v3628 = vpack.c.b16 %v3544, %v3540
    %v3629 = vpack.c.b16 %v3549, %v3545
    %v3630 = vpack.c.b16 %v3550, %v3546
    %v3631 = vpack.c.b16 %v3551, %v3547
    %v3632 = vpack.c.b16 %v3552, %v3548
    %v3633 = vpack.c.b16 %v3557, %v3553
    %v3634 = vpack.c.b16 %v3558, %v3554
    %v3635 = vpack.c.b16 %v3559, %v3555
    %v3636 = vpack.c.b16 %v3560, %v3556
    %v3637 = vpack.c.b16 %v3565, %v3561
    %v3638 = vpack.c.b16 %v3566, %v3562
    %v3639 = vpack.c.b16 %v3567, %v3563
    %v3640 = vpack.c.b16 %v3568, %v3564
    %v3641 = vpack.c.b16 %v3573, %v3569
    %v3642 = vpack.c.b16 %v3574, %v3570
    %v3643 = vpack.c.b16 %v3575, %v3571
    %v3644 = vpack.c.b16 %v3576, %v3572
    %v3645 = vpack.c.b16 %v3581, %v3577
    %v3646 = vpack.c.b16 %v3582, %v3578
    %v3647 = vpack.c.b16 %v3583, %v3579
    %v3648 = vpack.c.b16 %v3584, %v3580
    %3713 = vmatprep.subr.bf16.mxu0 %v3614
    %3714 = vmatpush1.bf16.msra.mxu0 %v3613
    %3715 = vmatprep.subr.bf16.mxu0 %v3610
    %3716 = vmatpush1.bf16.msra.mxu0 %v3609
    %3717 = vmatprep.subr.bf16.mxu0 %v3606
    %3718 = vmatpush1.bf16.msra.mxu0 %v3605
    %3719 = vmatprep.subr.bf16.mxu0 %v3602
    %3720 = vmatpush1.bf16.msra.mxu0 %v3601
    %3721 = vmatprep.subr.bf16.mxu0 %v3598
    %3722 = vmatpush1.bf16.msra.mxu0 %v3597
    %3723 = vmatprep.subr.bf16.mxu0 %v3594
    %3724 = vmatpush1.bf16.msra.mxu0 %v3593
    %3725 = vmatprep.subr.bf16.mxu0 %v3590
    %3726 = vmatpush1.bf16.msra.mxu0 %v3589
    %3727 = vmatprep.subr.bf16.mxu0 %v3586
    %3728 = vmatpush1.bf16.msra.mxu0 %v3585
    %3729 = vmatprep.subr.bf16.mxu0 %v3646
    %3730 = vmatpush2.bf16.msra.mxu0 %v3645
    %3731 = vmatprep.subr.bf16.mxu0 %v3642
    %3732 = vmatpush2.bf16.msra.mxu0 %v3641
    %3733 = vmatprep.subr.bf16.mxu0 %v3638
    %3734 = vmatpush2.bf16.msra.mxu0 %v3637
    %3735 = vmatprep.subr.bf16.mxu0 %v3634
    %3736 = vmatpush2.bf16.msra.mxu0 %v3633
    %3737 = vmatprep.subr.bf16.mxu0 %v3630
    %3738 = vmatpush2.bf16.msra.mxu0 %v3629
    %3739 = vmatprep.subr.bf16.mxu0 %v3626
    %3740 = vmatpush2.bf16.msra.mxu0 %v3625
    %3741 = vmatprep.subr.bf16.mxu0 %v3622
    %3742 = vmatpush2.bf16.msra.mxu0 %v3621
    %3743 = vmatprep.subr.bf16.mxu0 %v3618
    %3744 = vmatpush2.bf16.msra.mxu0 %v3617
    %3745 = vmatprep.mubr.bf16.mxu0 %v2790
    %3746 = vmatmul.mubr.bf16.gmra.mxu0 %v3306
    %v3747 = vpop.f32.mrf.mxu0
    %v3748 = vadd.f32 %v3376, %v3747
    %v3749 = vpop.f32.mrf.mxu0
    %v3750 = vadd.f32 %v3380, %v3749
    %v3751 = vpop.f32.mrf.mxu0
    %v3752 = vpop.f32.mrf.mxu0
    %3753 = vdwg.mxu0
    %3754 = vmatprep.subr.bf16.mxu0 %v3616
    %3755 = vmatpush1.bf16.msra.mxu0 %v3615
    %3756 = vmatprep.subr.bf16.mxu0 %v3612
    %3757 = vmatpush1.bf16.msra.mxu0 %v3611
    %3758 = vmatprep.subr.bf16.mxu0 %v3608
    %3759 = vmatpush1.bf16.msra.mxu0 %v3607
    %3760 = vmatprep.subr.bf16.mxu0 %v3604
    %3761 = vmatpush1.bf16.msra.mxu0 %v3603
    %3762 = vmatprep.subr.bf16.mxu0 %v3600
    %3763 = vmatpush1.bf16.msra.mxu0 %v3599
    %3764 = vmatprep.subr.bf16.mxu0 %v3596
    %3765 = vmatpush1.bf16.msra.mxu0 %v3595
    %3766 = vmatprep.subr.bf16.mxu0 %v3592
    %3767 = vmatpush1.bf16.msra.mxu0 %v3591
    %3768 = vmatprep.subr.bf16.mxu0 %v3588
    %3769 = vmatpush1.bf16.msra.mxu0 %v3587
    %3770 = vmatprep.subr.bf16.mxu0 %v3648
    %3771 = vmatpush2.bf16.msra.mxu0 %v3647
    %3772 = vmatprep.subr.bf16.mxu0 %v3644
    %3773 = vmatpush2.bf16.msra.mxu0 %v3643
    %3774 = vmatprep.subr.bf16.mxu0 %v3640
    %3775 = vmatpush2.bf16.msra.mxu0 %v3639
    %3776 = vmatprep.subr.bf16.mxu0 %v3636
    %3777 = vmatpush2.bf16.msra.mxu0 %v3635
    %3778 = vmatprep.subr.bf16.mxu0 %v3632
    %3779 = vmatpush2.bf16.msra.mxu0 %v3631
    %3780 = vmatprep.subr.bf16.mxu0 %v3628
    %3781 = vmatpush2.bf16.msra.mxu0 %v3627
    %3782 = vmatprep.subr.bf16.mxu0 %v3624
    %3783 = vmatpush2.bf16.msra.mxu0 %v3623
    %3784 = vmatprep.subr.bf16.mxu0 %v3620
    %3785 = vmatpush2.bf16.msra.mxu0 %v3619
    %3786 = vmatprep.mubr.bf16.mxu0 %v2790
    %3787 = vmatmul.mubr.bf16.gmra.mxu0 %v3306
    %v3788 = vpop.f32.mrf.mxu0
    %v3789 = vadd.f32 %v3384, %v3788
    %v3790 = vpop.f32.mrf.mxu0
    %v3791 = vadd.f32 %v3388, %v3790
    %v3792 = vpop.f32.mrf.mxu0
    %v3793 = vpop.f32.mrf.mxu0
    %3794 = vdwg.mxu0
    %v3795 = vxor.u32 %v3748, 2147483648
    %v3796 = vxor.u32 %v3750, 2147483648
    %v3797 = vxor.u32 %v3789, 2147483648
    %v3798 = vmul.f32 %v3795, 1.442695
    %v3799 = vpow.pop %v3798
    %v3800 = vmul.f32 %v3796, 1.442695
    %v3801 = vpow.pop %v3800
    %v3802 = vmul.f32 %v3797, 1.442695
    %v3803 = vpow.pop %v3802
    %v3804 = vadd.f32 %v3799, 1.0
    %v3805 = vadd.f32 %v3801, 1.0
    %v3806 = vadd.f32 %v3803, 1.0
    %v3807 = vrcp.pop %v3804
    %v3808 = vmul.f32 1.0, %v3807
    %v3809 = vrcp.pop %v3805
    %v3810 = vmul.f32 1.0, %v3809
    %v3811 = vrcp.pop %v3806
    %v3812 = vmul.f32 1.0, %v3811
    %v3813 = vtanh.pop %v3791
    %v3814 = vmul.f32 %v3810, %v2480
    %v3815 = vmul.f32 %v3808, %v3813
    %v3816 = vadd.f32 %v3814, %v3815
    %v3817 = vtanh.pop %v3816
    %v3818 = vmul.f32 %v3812, %v3817
    %s3819 = scalar_lea.vmem [#allocation2], 96
    %v3820 = vld [vmem:[%s3819] sm:$0xff]
    %v3821 = vld [vmem:[%s3819 + $0x8] sm:$0xff]
    %v3822 = vld [vmem:[%s3819 + $0x10] sm:$0xff]
    %v3823 = vld [vmem:[%s3819 + $0x18] sm:$0xff]
    %v3824 = vld [vmem:[#allocation8] sm:$0xff]
    %v3825 = vld [vmem:[#allocation8 + $0x8] sm:$0xff]
    %v3826 = vld [vmem:[#allocation8 + $0x10] sm:$0xff]
    %v3827 = vld [vmem:[#allocation8 + $0x18] sm:$0xff]
    %v3828 = vld [vmem:[#allocation8 + $0x20] sm:$0xff]
    %v3829 = vld [vmem:[#allocation8 + $0x28] sm:$0xff]
    %v3830 = vld [vmem:[#allocation8 + $0x30] sm:$0xff]
    %v3831 = vld [vmem:[#allocation8 + $0x38] sm:$0xff]
    %v3832 = vld [vmem:[#allocation8 + $0x40] sm:$0xff]
    %v3833 = vld [vmem:[#allocation8 + $0x48] sm:$0xff]
    %v3834 = vld [vmem:[#allocation8 + $0x50] sm:$0xff]
    %v3835 = vld [vmem:[#allocation8 + $0x58] sm:$0xff]
    %v3836 = vld [vmem:[#allocation8 + $0x60] sm:$0xff]
    %v3837 = vld [vmem:[#allocation8 + $0x68] sm:$0xff]
    %v3838 = vld [vmem:[#allocation8 + $0x70] sm:$0xff]
    %v3839 = vld [vmem:[#allocation8 + $0x78] sm:$0xff]
    %v3840 = vld [vmem:[#allocation8 + $0x80] sm:$0xff]
    %v3841 = vld [vmem:[#allocation8 + $0x88] sm:$0xff]
    %v3842 = vld [vmem:[#allocation8 + $0x90] sm:$0xff]
    %v3843 = vld [vmem:[#allocation8 + $0x98] sm:$0xff]
    %v3844 = vld [vmem:[#allocation8 + $0xa0] sm:$0xff]
    %v3845 = vld [vmem:[#allocation8 + $0xa8] sm:$0xff]
    %v3846 = vld [vmem:[#allocation8 + $0xb0] sm:$0xff]
    %v3847 = vld [vmem:[#allocation8 + $0xb8] sm:$0xff]
    %v3848 = vld [vmem:[#allocation8 + $0xc0] sm:$0xff]
    %v3849 = vld [vmem:[#allocation8 + $0xc8] sm:$0xff]
    %v3850 = vld [vmem:[#allocation8 + $0xd0] sm:$0xff]
    %v3851 = vld [vmem:[#allocation8 + $0xd8] sm:$0xff]
    %v3852 = vld [vmem:[#allocation8 + $0xe0] sm:$0xff]
    %v3853 = vld [vmem:[#allocation8 + $0xe8] sm:$0xff]
    %v3854 = vld [vmem:[#allocation8 + $0xf0] sm:$0xff]
    %v3855 = vld [vmem:[#allocation8 + $0xf8] sm:$0xff]
    %v3888 = vunpack.c.l.b16 %v3824
    %v3889 = vunpack.c.h.b16 %v3824
    %v3890 = vunpack.c.l.b16 %v3825
    %v3891 = vunpack.c.h.b16 %v3825
    %v3892 = vunpack.c.l.b16 %v3826
    %v3893 = vunpack.c.h.b16 %v3826
    %v3894 = vunpack.c.l.b16 %v3827
    %v3895 = vunpack.c.h.b16 %v3827
    %v3896 = vunpack.c.l.b16 %v3828
    %v3897 = vunpack.c.h.b16 %v3828
    %v3898 = vunpack.c.l.b16 %v3829
    %v3899 = vunpack.c.h.b16 %v3829
    %v3900 = vunpack.c.l.b16 %v3830
    %v3901 = vunpack.c.h.b16 %v3830
    %v3902 = vunpack.c.l.b16 %v3831
    %v3903 = vunpack.c.h.b16 %v3831
    %v3904 = vunpack.c.l.b16 %v3832
    %v3905 = vunpack.c.h.b16 %v3832
    %v3906 = vunpack.c.l.b16 %v3833
    %v3907 = vunpack.c.h.b16 %v3833
    %v3908 = vunpack.c.l.b16 %v3834
    %v3909 = vunpack.c.h.b16 %v3834
    %v3910 = vunpack.c.l.b16 %v3835
    %v3911 = vunpack.c.h.b16 %v3835
    %v3912 = vunpack.c.l.b16 %v3836
    %v3913 = vunpack.c.h.b16 %v3836
    %v3914 = vunpack.c.l.b16 %v3837
    %v3915 = vunpack.c.h.b16 %v3837
    %v3916 = vunpack.c.l.b16 %v3838
    %v3917 = vunpack.c.h.b16 %v3838
    %v3918 = vunpack.c.l.b16 %v3839
    %v3919 = vunpack.c.h.b16 %v3839
    %v3920 = vunpack.c.l.b16 %v3840
    %v3921 = vunpack.c.h.b16 %v3840
    %v3922 = vunpack.c.l.b16 %v3841
    %v3923 = vunpack.c.h.b16 %v3841
    %v3924 = vunpack.c.l.b16 %v3842
    %v3925 = vunpack.c.h.b16 %v3842
    %v3926 = vunpack.c.l.b16 %v3843
    %v3927 = vunpack.c.h.b16 %v3843
    %v3928 = vunpack.c.l.b16 %v3844
    %v3929 = vunpack.c.h.b16 %v3844
    %v3930 = vunpack.c.l.b16 %v3845
    %v3931 = vunpack.c.h.b16 %v3845
    %v3932 = vunpack.c.l.b16 %v3846
    %v3933 = vunpack.c.h.b16 %v3846
    %v3934 = vunpack.c.l.b16 %v3847
    %v3935 = vunpack.c.h.b16 %v3847
    %v3936 = vunpack.c.l.b16 %v3848
    %v3937 = vunpack.c.h.b16 %v3848
    %v3938 = vunpack.c.l.b16 %v3849
    %v3939 = vunpack.c.h.b16 %v3849
    %v3940 = vunpack.c.l.b16 %v3850
    %v3941 = vunpack.c.h.b16 %v3850
    %v3942 = vunpack.c.l.b16 %v3851
    %v3943 = vunpack.c.h.b16 %v3851
    %v3944 = vunpack.c.l.b16 %v3852
    %v3945 = vunpack.c.h.b16 %v3852
    %v3946 = vunpack.c.l.b16 %v3853
    %v3947 = vunpack.c.h.b16 %v3853
    %v3948 = vunpack.c.l.b16 %v3854
    %v3949 = vunpack.c.h.b16 %v3854
    %v3950 = vunpack.c.l.b16 %v3855
    %v3951 = vunpack.c.h.b16 %v3855
    %v3952 = vpack.c.b16 %v3892, %v3888
    %v3953 = vpack.c.b16 %v3893, %v3889
    %v3954 = vpack.c.b16 %v3894, %v3890
    %v3955 = vpack.c.b16 %v3895, %v3891
    %v3956 = vpack.c.b16 %v3900, %v3896
    %v3957 = vpack.c.b16 %v3901, %v3897
    %v3958 = vpack.c.b16 %v3902, %v3898
    %v3959 = vpack.c.b16 %v3903, %v3899
    %v3960 = vpack.c.b16 %v3908, %v3904
    %v3961 = vpack.c.b16 %v3909, %v3905
    %v3962 = vpack.c.b16 %v3910, %v3906
    %v3963 = vpack.c.b16 %v3911, %v3907
    %v3964 = vpack.c.b16 %v3916, %v3912
    %v3965 = vpack.c.b16 %v3917, %v3913
    %v3966 = vpack.c.b16 %v3918, %v3914
    %v3967 = vpack.c.b16 %v3919, %v3915
    %v3968 = vpack.c.b16 %v3924, %v3920
    %v3969 = vpack.c.b16 %v3925, %v3921
    %v3970 = vpack.c.b16 %v3926, %v3922
    %v3971 = vpack.c.b16 %v3927, %v3923
    %v3972 = vpack.c.b16 %v3932, %v3928
    %v3973 = vpack.c.b16 %v3933, %v3929
    %v3974 = vpack.c.b16 %v3934, %v3930
    %v3975 = vpack.c.b16 %v3935, %v3931
    %v3976 = vpack.c.b16 %v3940, %v3936
    %v3977 = vpack.c.b16 %v3941, %v3937
    %v3978 = vpack.c.b16 %v3942, %v3938
    %v3979 = vpack.c.b16 %v3943, %v3939
    %v3980 = vpack.c.b16 %v3948, %v3944
    %v3981 = vpack.c.b16 %v3949, %v3945
    %v3982 = vpack.c.b16 %v3950, %v3946
    %v3983 = vpack.c.b16 %v3951, %v3947
    %4016 = vmatprep.subr.bf16.mxu0 %v3981
    %4017 = vmatpush1.bf16.msra.mxu0 %v3980
    %4018 = vmatprep.subr.bf16.mxu0 %v3977
    %4019 = vmatpush1.bf16.msra.mxu0 %v3976
    %4020 = vmatprep.subr.bf16.mxu0 %v3973
    %4021 = vmatpush1.bf16.msra.mxu0 %v3972
    %4022 = vmatprep.subr.bf16.mxu0 %v3969
    %4023 = vmatpush1.bf16.msra.mxu0 %v3968
    %4024 = vmatprep.subr.bf16.mxu0 %v3965
    %4025 = vmatpush1.bf16.msra.mxu0 %v3964
    %4026 = vmatprep.subr.bf16.mxu0 %v3961
    %4027 = vmatpush1.bf16.msra.mxu0 %v3960
    %4028 = vmatprep.subr.bf16.mxu0 %v3957
    %4029 = vmatpush1.bf16.msra.mxu0 %v3956
    %4030 = vmatprep.subr.bf16.mxu0 %v3953
    %4031 = vmatpush1.bf16.msra.mxu0 %v3952
    %4032 = vmatprep.subr.bf16.mxu0 0
    %4033 = vmatpush2.bf16.msra.mxu0 0
    %4034 = vmatprep.subr.bf16.mxu0 0
    %4035 = vmatpush2.bf16.msra.mxu0 0
    %4036 = vmatprep.subr.bf16.mxu0 0
    %4037 = vmatpush2.bf16.msra.mxu0 0
    %4038 = vmatprep.subr.bf16.mxu0 0
    %4039 = vmatpush2.bf16.msra.mxu0 0
    %4040 = vmatprep.subr.bf16.mxu0 0
    %4041 = vmatpush2.bf16.msra.mxu0 0
    %4042 = vmatprep.subr.bf16.mxu0 0
    %4043 = vmatpush2.bf16.msra.mxu0 0
    %4044 = vmatprep.subr.bf16.mxu0 0
    %4045 = vmatpush2.bf16.msra.mxu0 0
    %4046 = vmatprep.subr.bf16.mxu0 0
    %4047 = vmatpush2.bf16.msra.mxu0 0
    %4048 = vmatprep.mubr.bf16.mxu0 0
    %4049 = vmatmul.mubr.bf16.gmra.mxu0 %v3306
    %v4050 = vpop.f32.mrf.mxu0
    %v4051 = vadd.f32 0.0, %v4050
    %v4052 = vpop.f32.mrf.mxu0
    %v4053 = vadd.f32 0.0, %v4052
    %v4054 = vpop.f32.mrf.mxu0
    %v4055 = vpop.f32.mrf.mxu0
    %4056 = vdwg.mxu0
    %4057 = vmatprep.subr.bf16.mxu0 %v3983
    %4058 = vmatpush1.bf16.msra.mxu0 %v3982
    %4059 = vmatprep.subr.bf16.mxu0 %v3979
    %4060 = vmatpush1.bf16.msra.mxu0 %v3978
    %4061 = vmatprep.subr.bf16.mxu0 %v3975
    %4062 = vmatpush1.bf16.msra.mxu0 %v3974
    %4063 = vmatprep.subr.bf16.mxu0 %v3971
    %4064 = vmatpush1.bf16.msra.mxu0 %v3970
    %4065 = vmatprep.subr.bf16.mxu0 %v3967
    %4066 = vmatpush1.bf16.msra.mxu0 %v3966
    %4067 = vmatprep.subr.bf16.mxu0 %v3963
    %4068 = vmatpush1.bf16.msra.mxu0 %v3962
    %4069 = vmatprep.subr.bf16.mxu0 %v3959
    %4070 = vmatpush1.bf16.msra.mxu0 %v3958
    %4071 = vmatprep.subr.bf16.mxu0 %v3955
    %4072 = vmatpush1.bf16.msra.mxu0 %v3954
    %4073 = vmatprep.subr.bf16.mxu0 0
    %4074 = vmatpush2.bf16.msra.mxu0 0
    %4075 = vmatprep.subr.bf16.mxu0 0
    %4076 = vmatpush2.bf16.msra.mxu0 0
    %4077 = vmatprep.subr.bf16.mxu0 0
    %4078 = vmatpush2.bf16.msra.mxu0 0
    %4079 = vmatprep.subr.bf16.mxu0 0
    %4080 = vmatpush2.bf16.msra.mxu0 0
    %4081 = vmatprep.subr.bf16.mxu0 0
    %4082 = vmatpush2.bf16.msra.mxu0 0
    %4083 = vmatprep.subr.bf16.mxu0 0
    %4084 = vmatpush2.bf16.msra.mxu0 0
    %4085 = vmatprep.subr.bf16.mxu0 0
    %4086 = vmatpush2.bf16.msra.mxu0 0
    %4087 = vmatprep.subr.bf16.mxu0 0
    %4088 = vmatpush2.bf16.msra.mxu0 0
    %4089 = vmatprep.mubr.bf16.mxu0 0
    %4090 = vmatmul.mubr.bf16.gmra.mxu0 %v3306
    %v4091 = vpop.f32.mrf.mxu0
    %v4092 = vadd.f32 0.0, %v4091
    %v4093 = vpop.f32.mrf.mxu0
    %v4094 = vadd.f32 0.0, %v4093
    %v4095 = vpop.f32.mrf.mxu0
    %v4096 = vpop.f32.mrf.mxu0
    %4097 = vdwg.mxu0
    %v4098 = vadd.f32 %v3820, %v4051
    %v4099 = vadd.f32 %v3821, %v4053
    %v4100 = vadd.f32 %v3822, %v4092
    %v4101 = vadd.f32 %v3823, %v4094
    %v4102 = vxor.u32 %v4098, 2147483648
    %v4103 = vxor.u32 %v4099, 2147483648
    %v4104 = vxor.u32 %v4100, 2147483648
    %v4105 = vmul.f32 %v4102, 1.442695
    %v4106 = vpow.pop %v4105
    %v4107 = vmul.f32 %v4103, 1.442695
    %v4108 = vpow.pop %v4107
    %v4109 = vmul.f32 %v4104, 1.442695
    %v4110 = vpow.pop %v4109
    %v4111 = vadd.f32 %v4106, 1.0
    %v4112 = vadd.f32 %v4108, 1.0
    %v4113 = vadd.f32 %v4110, 1.0
    %v4114 = vrcp.pop %v4111
    %v4115 = vmul.f32 1.0, %v4114
    %v4116 = vrcp.pop %v4112
    %v4117 = vmul.f32 1.0, %v4116
    %v4118 = vrcp.pop %v4113
    %v4119 = vmul.f32 1.0, %v4118
    %v4120 = vtanh.pop %v4101
    %v4121 = vmul.f32 %v4117, %v2787
    %v4122 = vmul.f32 %v4115, %v4120
    %v4123 = vadd.f32 %v4121, %v4122
    %v4124 = vtanh.pop %v4123
    %v4125 = vmul.f32 %v4119, %v4124
    %v4126 = vpack.c.bf16 %v3818, %v3818
    %v4127 = vpack.c.bf16 %v3303, %v3303
    %v4128 = vld [vmem:[%s1455] sm:$0xff]
    %v4129 = vld [vmem:[%s1455 + $0x8] sm:$0xff]
    %v4130 = vld [vmem:[%s1455 + $0x10] sm:$0xff]
    %v4131 = vld [vmem:[%s1455 + $0x18] sm:$0xff]
    %v4132 = vld [vmem:[%s1455 + $0x20] sm:$0xff]
    %v4133 = vld [vmem:[%s1455 + $0x28] sm:$0xff]
    %v4134 = vld [vmem:[%s1455 + $0x30] sm:$0xff]
    %v4135 = vld [vmem:[%s1455 + $0x38] sm:$0xff]
    %v4136 = vld [vmem:[%s1455 + $0x40] sm:$0xff]
    %v4137 = vld [vmem:[%s1455 + $0x48] sm:$0xff]
    %v4138 = vld [vmem:[%s1455 + $0x50] sm:$0xff]
    %v4139 = vld [vmem:[%s1455 + $0x58] sm:$0xff]
    %v4140 = vld [vmem:[%s1455 + $0x60] sm:$0xff]
    %v4141 = vld [vmem:[%s1455 + $0x68] sm:$0xff]
    %v4142 = vld [vmem:[%s1455 + $0x70] sm:$0xff]
    %v4143 = vld [vmem:[%s1455 + $0x78] sm:$0xff]
    %v4144 = vld [vmem:[%s1455 + $0x80] sm:$0xff]
    %v4145 = vld [vmem:[%s1455 + $0x88] sm:$0xff]
    %v4146 = vld [vmem:[%s1455 + $0x90] sm:$0xff]
    %v4147 = vld [vmem:[%s1455 + $0x98] sm:$0xff]
    %v4148 = vld [vmem:[%s1455 + $0xa0] sm:$0xff]
    %v4149 = vld [vmem:[%s1455 + $0xa8] sm:$0xff]
    %v4150 = vld [vmem:[%s1455 + $0xb0] sm:$0xff]
    %v4151 = vld [vmem:[%s1455 + $0xb8] sm:$0xff]
    %v4152 = vld [vmem:[%s1455 + $0xc0] sm:$0xff]
    %v4153 = vld [vmem:[%s1455 + $0xc8] sm:$0xff]
    %v4154 = vld [vmem:[%s1455 + $0xd0] sm:$0xff]
    %v4155 = vld [vmem:[%s1455 + $0xd8] sm:$0xff]
    %v4156 = vld [vmem:[%s1455 + $0xe0] sm:$0xff]
    %v4157 = vld [vmem:[%s1455 + $0xe8] sm:$0xff]
    %v4158 = vld [vmem:[%s1455 + $0xf0] sm:$0xff]
    %v4159 = vld [vmem:[%s1455 + $0xf8] sm:$0xff]
    %v4160 = vld [vmem:[%s1455 + $0x100] sm:$0xff]
    %v4161 = vld [vmem:[%s1455 + $0x108] sm:$0xff]
    %v4162 = vld [vmem:[%s1455 + $0x110] sm:$0xff]
    %v4163 = vld [vmem:[%s1455 + $0x118] sm:$0xff]
    %v4164 = vld [vmem:[%s1455 + $0x120] sm:$0xff]
    %v4165 = vld [vmem:[%s1455 + $0x128] sm:$0xff]
    %v4166 = vld [vmem:[%s1455 + $0x130] sm:$0xff]
    %v4167 = vld [vmem:[%s1455 + $0x138] sm:$0xff]
    %v4168 = vld [vmem:[%s1455 + $0x140] sm:$0xff]
    %v4169 = vld [vmem:[%s1455 + $0x148] sm:$0xff]
    %v4170 = vld [vmem:[%s1455 + $0x150] sm:$0xff]
    %v4171 = vld [vmem:[%s1455 + $0x158] sm:$0xff]
    %v4172 = vld [vmem:[%s1455 + $0x160] sm:$0xff]
    %v4173 = vld [vmem:[%s1455 + $0x168] sm:$0xff]
    %v4174 = vld [vmem:[%s1455 + $0x170] sm:$0xff]
    %v4175 = vld [vmem:[%s1455 + $0x178] sm:$0xff]
    %v4176 = vld [vmem:[%s1455 + $0x180] sm:$0xff]
    %v4177 = vld [vmem:[%s1455 + $0x188] sm:$0xff]
    %v4178 = vld [vmem:[%s1455 + $0x190] sm:$0xff]
    %v4179 = vld [vmem:[%s1455 + $0x198] sm:$0xff]
    %v4180 = vld [vmem:[%s1455 + $0x1a0] sm:$0xff]
    %v4181 = vld [vmem:[%s1455 + $0x1a8] sm:$0xff]
    %v4182 = vld [vmem:[%s1455 + $0x1b0] sm:$0xff]
    %v4183 = vld [vmem:[%s1455 + $0x1b8] sm:$0xff]
    %v4184 = vld [vmem:[%s1455 + $0x1c0] sm:$0xff]
    %v4185 = vld [vmem:[%s1455 + $0x1c8] sm:$0xff]
    %v4186 = vld [vmem:[%s1455 + $0x1d0] sm:$0xff]
    %v4187 = vld [vmem:[%s1455 + $0x1d8] sm:$0xff]
    %v4188 = vld [vmem:[%s1455 + $0x1e0] sm:$0xff]
    %v4189 = vld [vmem:[%s1455 + $0x1e8] sm:$0xff]
    %v4190 = vld [vmem:[%s1455 + $0x1f0] sm:$0xff]
    %v4191 = vld [vmem:[%s1455 + $0x1f8] sm:$0xff]
    %v4192 = vld [vmem:[%s1520] sm:$0xf]
    %v4194 = vlaneseq
    %v4195 = vshrl.u32 %v4194, 7
    %v4196 = vsub.s32 0, %v4195
    %v4197 = vrot.slane %v4192, %v4196
    %v4198 = vlaneseq
    %v4199 = vshrl.u32 %v4198, 7
    %v4200 = vsub.s32 1, %v4199
    %v4201 = vrot.slane %v4192, %v4200
    %v4202 = vlaneseq
    %v4203 = vshrl.u32 %v4202, 7
    %v4204 = vsub.s32 2, %v4203
    %v4205 = vrot.slane %v4192, %v4204
    %v4206 = vlaneseq
    %v4207 = vshrl.u32 %v4206, 7
    %v4208 = vsub.s32 3, %v4207
    %v4209 = vrot.slane %v4192, %v4208
    %v4278 = vunpack.c.l.b16 %v4128
    %v4279 = vunpack.c.h.b16 %v4128
    %v4280 = vunpack.c.l.b16 %v4129
    %v4281 = vunpack.c.h.b16 %v4129
    %v4282 = vunpack.c.l.b16 %v4130
    %v4283 = vunpack.c.h.b16 %v4130
    %v4284 = vunpack.c.l.b16 %v4131
    %v4285 = vunpack.c.h.b16 %v4131
    %v4286 = vunpack.c.l.b16 %v4132
    %v4287 = vunpack.c.h.b16 %v4132
    %v4288 = vunpack.c.l.b16 %v4133
    %v4289 = vunpack.c.h.b16 %v4133
    %v4290 = vunpack.c.l.b16 %v4134
    %v4291 = vunpack.c.h.b16 %v4134
    %v4292 = vunpack.c.l.b16 %v4135
    %v4293 = vunpack.c.h.b16 %v4135
    %v4294 = vunpack.c.l.b16 %v4136
    %v4295 = vunpack.c.h.b16 %v4136
    %v4296 = vunpack.c.l.b16 %v4137
    %v4297 = vunpack.c.h.b16 %v4137
    %v4298 = vunpack.c.l.b16 %v4138
    %v4299 = vunpack.c.h.b16 %v4138
    %v4300 = vunpack.c.l.b16 %v4139
    %v4301 = vunpack.c.h.b16 %v4139
    %v4302 = vunpack.c.l.b16 %v4140
    %v4303 = vunpack.c.h.b16 %v4140
    %v4304 = vunpack.c.l.b16 %v4141
    %v4305 = vunpack.c.h.b16 %v4141
    %v4306 = vunpack.c.l.b16 %v4142
    %v4307 = vunpack.c.h.b16 %v4142
    %v4308 = vunpack.c.l.b16 %v4143
    %v4309 = vunpack.c.h.b16 %v4143
    %v4310 = vunpack.c.l.b16 %v4144
    %v4311 = vunpack.c.h.b16 %v4144
    %v4312 = vunpack.c.l.b16 %v4145
    %v4313 = vunpack.c.h.b16 %v4145
    %v4314 = vunpack.c.l.b16 %v4146
    %v4315 = vunpack.c.h.b16 %v4146
    %v4316 = vunpack.c.l.b16 %v4147
    %v4317 = vunpack.c.h.b16 %v4147
    %v4318 = vunpack.c.l.b16 %v4148
    %v4319 = vunpack.c.h.b16 %v4148
    %v4320 = vunpack.c.l.b16 %v4149
    %v4321 = vunpack.c.h.b16 %v4149
    %v4322 = vunpack.c.l.b16 %v4150
    %v4323 = vunpack.c.h.b16 %v4150
    %v4324 = vunpack.c.l.b16 %v4151
    %v4325 = vunpack.c.h.b16 %v4151
    %v4326 = vunpack.c.l.b16 %v4152
    %v4327 = vunpack.c.h.b16 %v4152
    %v4328 = vunpack.c.l.b16 %v4153
    %v4329 = vunpack.c.h.b16 %v4153
    %v4330 = vunpack.c.l.b16 %v4154
    %v4331 = vunpack.c.h.b16 %v4154
    %v4332 = vunpack.c.l.b16 %v4155
    %v4333 = vunpack.c.h.b16 %v4155
    %v4334 = vunpack.c.l.b16 %v4156
    %v4335 = vunpack.c.h.b16 %v4156
    %v4336 = vunpack.c.l.b16 %v4157
    %v4337 = vunpack.c.h.b16 %v4157
    %v4338 = vunpack.c.l.b16 %v4158
    %v4339 = vunpack.c.h.b16 %v4158
    %v4340 = vunpack.c.l.b16 %v4159
    %v4341 = vunpack.c.h.b16 %v4159
    %v4342 = vunpack.c.l.b16 %v4160
    %v4343 = vunpack.c.h.b16 %v4160
    %v4344 = vunpack.c.l.b16 %v4161
    %v4345 = vunpack.c.h.b16 %v4161
    %v4346 = vunpack.c.l.b16 %v4162
    %v4347 = vunpack.c.h.b16 %v4162
    %v4348 = vunpack.c.l.b16 %v4163
    %v4349 = vunpack.c.h.b16 %v4163
    %v4350 = vunpack.c.l.b16 %v4164
    %v4351 = vunpack.c.h.b16 %v4164
    %v4352 = vunpack.c.l.b16 %v4165
    %v4353 = vunpack.c.h.b16 %v4165
    %v4354 = vunpack.c.l.b16 %v4166
    %v4355 = vunpack.c.h.b16 %v4166
    %v4356 = vunpack.c.l.b16 %v4167
    %v4357 = vunpack.c.h.b16 %v4167
    %v4358 = vunpack.c.l.b16 %v4168
    %v4359 = vunpack.c.h.b16 %v4168
    %v4360 = vunpack.c.l.b16 %v4169
    %v4361 = vunpack.c.h.b16 %v4169
    %v4362 = vunpack.c.l.b16 %v4170
    %v4363 = vunpack.c.h.b16 %v4170
    %v4364 = vunpack.c.l.b16 %v4171
    %v4365 = vunpack.c.h.b16 %v4171
    %v4366 = vunpack.c.l.b16 %v4172
    %v4367 = vunpack.c.h.b16 %v4172
    %v4368 = vunpack.c.l.b16 %v4173
    %v4369 = vunpack.c.h.b16 %v4173
    %v4370 = vunpack.c.l.b16 %v4174
    %v4371 = vunpack.c.h.b16 %v4174
    %v4372 = vunpack.c.l.b16 %v4175
    %v4373 = vunpack.c.h.b16 %v4175
    %v4374 = vunpack.c.l.b16 %v4176
    %v4375 = vunpack.c.h.b16 %v4176
    %v4376 = vunpack.c.l.b16 %v4177
    %v4377 = vunpack.c.h.b16 %v4177
    %v4378 = vunpack.c.l.b16 %v4178
    %v4379 = vunpack.c.h.b16 %v4178
    %v4380 = vunpack.c.l.b16 %v4179
    %v4381 = vunpack.c.h.b16 %v4179
    %v4382 = vunpack.c.l.b16 %v4180
    %v4383 = vunpack.c.h.b16 %v4180
    %v4384 = vunpack.c.l.b16 %v4181
    %v4385 = vunpack.c.h.b16 %v4181
    %v4386 = vunpack.c.l.b16 %v4182
    %v4387 = vunpack.c.h.b16 %v4182
    %v4388 = vunpack.c.l.b16 %v4183
    %v4389 = vunpack.c.h.b16 %v4183
    %v4390 = vunpack.c.l.b16 %v4184
    %v4391 = vunpack.c.h.b16 %v4184
    %v4392 = vunpack.c.l.b16 %v4185
    %v4393 = vunpack.c.h.b16 %v4185
    %v4394 = vunpack.c.l.b16 %v4186
    %v4395 = vunpack.c.h.b16 %v4186
    %v4396 = vunpack.c.l.b16 %v4187
    %v4397 = vunpack.c.h.b16 %v4187
    %v4398 = vunpack.c.l.b16 %v4188
    %v4399 = vunpack.c.h.b16 %v4188
    %v4400 = vunpack.c.l.b16 %v4189
    %v4401 = vunpack.c.h.b16 %v4189
    %v4402 = vunpack.c.l.b16 %v4190
    %v4403 = vunpack.c.h.b16 %v4190
    %v4404 = vunpack.c.l.b16 %v4191
    %v4405 = vunpack.c.h.b16 %v4191
    %v4406 = vpack.c.b16 %v4282, %v4278
    %v4407 = vpack.c.b16 %v4283, %v4279
    %v4408 = vpack.c.b16 %v4284, %v4280
    %v4409 = vpack.c.b16 %v4285, %v4281
    %v4410 = vpack.c.b16 %v4290, %v4286
    %v4411 = vpack.c.b16 %v4291, %v4287
    %v4412 = vpack.c.b16 %v4292, %v4288
    %v4413 = vpack.c.b16 %v4293, %v4289
    %v4414 = vpack.c.b16 %v4298, %v4294
    %v4415 = vpack.c.b16 %v4299, %v4295
    %v4416 = vpack.c.b16 %v4300, %v4296
    %v4417 = vpack.c.b16 %v4301, %v4297
    %v4418 = vpack.c.b16 %v4306, %v4302
    %v4419 = vpack.c.b16 %v4307, %v4303
    %v4420 = vpack.c.b16 %v4308, %v4304
    %v4421 = vpack.c.b16 %v4309, %v4305
    %v4422 = vpack.c.b16 %v4314, %v4310
    %v4423 = vpack.c.b16 %v4315, %v4311
    %v4424 = vpack.c.b16 %v4316, %v4312
    %v4425 = vpack.c.b16 %v4317, %v4313
    %v4426 = vpack.c.b16 %v4322, %v4318
    %v4427 = vpack.c.b16 %v4323, %v4319
    %v4428 = vpack.c.b16 %v4324, %v4320
    %v4429 = vpack.c.b16 %v4325, %v4321
    %v4430 = vpack.c.b16 %v4330, %v4326
    %v4431 = vpack.c.b16 %v4331, %v4327
    %v4432 = vpack.c.b16 %v4332, %v4328
    %v4433 = vpack.c.b16 %v4333, %v4329
    %v4434 = vpack.c.b16 %v4338, %v4334
    %v4435 = vpack.c.b16 %v4339, %v4335
    %v4436 = vpack.c.b16 %v4340, %v4336
    %v4437 = vpack.c.b16 %v4341, %v4337
    %v4438 = vpack.c.b16 %v4346, %v4342
    %v4439 = vpack.c.b16 %v4347, %v4343
    %v4440 = vpack.c.b16 %v4348, %v4344
    %v4441 = vpack.c.b16 %v4349, %v4345
    %v4442 = vpack.c.b16 %v4354, %v4350
    %v4443 = vpack.c.b16 %v4355, %v4351
    %v4444 = vpack.c.b16 %v4356, %v4352
    %v4445 = vpack.c.b16 %v4357, %v4353
    %v4446 = vpack.c.b16 %v4362, %v4358
    %v4447 = vpack.c.b16 %v4363, %v4359
    %v4448 = vpack.c.b16 %v4364, %v4360
    %v4449 = vpack.c.b16 %v4365, %v4361
    %v4450 = vpack.c.b16 %v4370, %v4366
    %v4451 = vpack.c.b16 %v4371, %v4367
    %v4452 = vpack.c.b16 %v4372, %v4368
    %v4453 = vpack.c.b16 %v4373, %v4369
    %v4454 = vpack.c.b16 %v4378, %v4374
    %v4455 = vpack.c.b16 %v4379, %v4375
    %v4456 = vpack.c.b16 %v4380, %v4376
    %v4457 = vpack.c.b16 %v4381, %v4377
    %v4458 = vpack.c.b16 %v4386, %v4382
    %v4459 = vpack.c.b16 %v4387, %v4383
    %v4460 = vpack.c.b16 %v4388, %v4384
    %v4461 = vpack.c.b16 %v4389, %v4385
    %v4462 = vpack.c.b16 %v4394, %v4390
    %v4463 = vpack.c.b16 %v4395, %v4391
    %v4464 = vpack.c.b16 %v4396, %v4392
    %v4465 = vpack.c.b16 %v4397, %v4393
    %v4466 = vpack.c.b16 %v4402, %v4398
    %v4467 = vpack.c.b16 %v4403, %v4399
    %v4468 = vpack.c.b16 %v4404, %v4400
    %v4469 = vpack.c.b16 %v4405, %v4401
    %4534 = vmatprep.subr.bf16.mxu0 %v4435
    %4535 = vmatpush1.bf16.msra.mxu0 %v4434
    %4536 = vmatprep.subr.bf16.mxu0 %v4431
    %4537 = vmatpush1.bf16.msra.mxu0 %v4430
    %4538 = vmatprep.subr.bf16.mxu0 %v4427
    %4539 = vmatpush1.bf16.msra.mxu0 %v4426
    %4540 = vmatprep.subr.bf16.mxu0 %v4423
    %4541 = vmatpush1.bf16.msra.mxu0 %v4422
    %4542 = vmatprep.subr.bf16.mxu0 %v4419
    %4543 = vmatpush1.bf16.msra.mxu0 %v4418
    %4544 = vmatprep.subr.bf16.mxu0 %v4415
    %4545 = vmatpush1.bf16.msra.mxu0 %v4414
    %4546 = vmatprep.subr.bf16.mxu0 %v4411
    %4547 = vmatpush1.bf16.msra.mxu0 %v4410
    %4548 = vmatprep.subr.bf16.mxu0 %v4407
    %4549 = vmatpush1.bf16.msra.mxu0 %v4406
    %4550 = vmatprep.subr.bf16.mxu0 %v4467
    %4551 = vmatpush2.bf16.msra.mxu0 %v4466
    %4552 = vmatprep.subr.bf16.mxu0 %v4463
    %4553 = vmatpush2.bf16.msra.mxu0 %v4462
    %4554 = vmatprep.subr.bf16.mxu0 %v4459
    %4555 = vmatpush2.bf16.msra.mxu0 %v4458
    %4556 = vmatprep.subr.bf16.mxu0 %v4455
    %4557 = vmatpush2.bf16.msra.mxu0 %v4454
    %4558 = vmatprep.subr.bf16.mxu0 %v4451
    %4559 = vmatpush2.bf16.msra.mxu0 %v4450
    %4560 = vmatprep.subr.bf16.mxu0 %v4447
    %4561 = vmatpush2.bf16.msra.mxu0 %v4446
    %4562 = vmatprep.subr.bf16.mxu0 %v4443
    %4563 = vmatpush2.bf16.msra.mxu0 %v4442
    %4564 = vmatprep.subr.bf16.mxu0 %v4439
    %4565 = vmatpush2.bf16.msra.mxu0 %v4438
    %4566 = vmatprep.mubr.bf16.mxu0 %v4127
    %4567 = vmatmul.mubr.bf16.gmra.mxu0 %v4126
    %v4568 = vpop.f32.mrf.mxu0
    %v4569 = vadd.f32 %v4197, %v4568
    %v4570 = vpop.f32.mrf.mxu0
    %v4571 = vadd.f32 %v4201, %v4570
    %v4572 = vpop.f32.mrf.mxu0
    %v4573 = vpop.f32.mrf.mxu0
    %4574 = vdwg.mxu0
    %4575 = vmatprep.subr.bf16.mxu0 %v4437
    %4576 = vmatpush1.bf16.msra.mxu0 %v4436
    %4577 = vmatprep.subr.bf16.mxu0 %v4433
    %4578 = vmatpush1.bf16.msra.mxu0 %v4432
    %4579 = vmatprep.subr.bf16.mxu0 %v4429
    %4580 = vmatpush1.bf16.msra.mxu0 %v4428
    %4581 = vmatprep.subr.bf16.mxu0 %v4425
    %4582 = vmatpush1.bf16.msra.mxu0 %v4424
    %4583 = vmatprep.subr.bf16.mxu0 %v4421
    %4584 = vmatpush1.bf16.msra.mxu0 %v4420
    %4585 = vmatprep.subr.bf16.mxu0 %v4417
    %4586 = vmatpush1.bf16.msra.mxu0 %v4416
    %4587 = vmatprep.subr.bf16.mxu0 %v4413
    %4588 = vmatpush1.bf16.msra.mxu0 %v4412
    %4589 = vmatprep.subr.bf16.mxu0 %v4409
    %4590 = vmatpush1.bf16.msra.mxu0 %v4408
    %4591 = vmatprep.subr.bf16.mxu0 %v4469
    %4592 = vmatpush2.bf16.msra.mxu0 %v4468
    %4593 = vmatprep.subr.bf16.mxu0 %v4465
    %4594 = vmatpush2.bf16.msra.mxu0 %v4464
    %4595 = vmatprep.subr.bf16.mxu0 %v4461
    %4596 = vmatpush2.bf16.msra.mxu0 %v4460
    %4597 = vmatprep.subr.bf16.mxu0 %v4457
    %4598 = vmatpush2.bf16.msra.mxu0 %v4456
    %4599 = vmatprep.subr.bf16.mxu0 %v4453
    %4600 = vmatpush2.bf16.msra.mxu0 %v4452
    %4601 = vmatprep.subr.bf16.mxu0 %v4449
    %4602 = vmatpush2.bf16.msra.mxu0 %v4448
    %4603 = vmatprep.subr.bf16.mxu0 %v4445
    %4604 = vmatpush2.bf16.msra.mxu0 %v4444
    %4605 = vmatprep.subr.bf16.mxu0 %v4441
    %4606 = vmatpush2.bf16.msra.mxu0 %v4440
    %4607 = vmatprep.mubr.bf16.mxu0 %v4127
    %4608 = vmatmul.mubr.bf16.gmra.mxu0 %v4126
    %v4609 = vpop.f32.mrf.mxu0
    %v4610 = vadd.f32 %v4205, %v4609
    %v4611 = vpop.f32.mrf.mxu0
    %v4612 = vadd.f32 %v4209, %v4611
    %v4613 = vpop.f32.mrf.mxu0
    %v4614 = vpop.f32.mrf.mxu0
    %4615 = vdwg.mxu0
    %v4616 = vxor.u32 %v4569, 2147483648
    %v4617 = vxor.u32 %v4571, 2147483648
    %v4618 = vxor.u32 %v4610, 2147483648
    %v4619 = vmul.f32 %v4616, 1.442695
    %v4620 = vpow.pop %v4619
    %v4621 = vmul.f32 %v4617, 1.442695
    %v4622 = vpow.pop %v4621
    %v4623 = vmul.f32 %v4618, 1.442695
    %v4624 = vpow.pop %v4623
    %v4625 = vadd.f32 %v4620, 1.0
    %v4626 = vadd.f32 %v4622, 1.0
    %v4627 = vadd.f32 %v4624, 1.0
    %v4628 = vrcp.pop %v4625
    %v4629 = vmul.f32 1.0, %v4628
    %v4630 = vrcp.pop %v4626
    %v4631 = vmul.f32 1.0, %v4630
    %v4632 = vrcp.pop %v4627
    %v4633 = vmul.f32 1.0, %v4632
    %v4634 = vtanh.pop %v4612
    %v4635 = vmul.f32 %v4631, %v3301
    %v4636 = vmul.f32 %v4629, %v4634
    %v4637 = vadd.f32 %v4635, %v4636
    %v4638 = vtanh.pop %v4637
    %v4639 = vmul.f32 %v4633, %v4638
    %s4640 = scalar_lea.vmem [#allocation14], 16
    %4641 = vst [vmem:[%s4640] sm:$0xff] %v4639
    %v4642 = vpack.c.bf16 %v4125, %v4125
    %v4643 = vld [vmem:[#allocation9] sm:$0xff]
    %v4644 = vld [vmem:[#allocation9 + $0x8] sm:$0xff]
    %v4645 = vld [vmem:[#allocation9 + $0x10] sm:$0xff]
    %v4646 = vld [vmem:[#allocation9 + $0x18] sm:$0xff]
    %v4647 = vld [vmem:[#allocation9 + $0x20] sm:$0xff]
    %v4648 = vld [vmem:[#allocation9 + $0x28] sm:$0xff]
    %v4649 = vld [vmem:[#allocation9 + $0x30] sm:$0xff]
    %v4650 = vld [vmem:[#allocation9 + $0x38] sm:$0xff]
    %v4651 = vld [vmem:[#allocation9 + $0x40] sm:$0xff]
    %v4652 = vld [vmem:[#allocation9 + $0x48] sm:$0xff]
    %v4653 = vld [vmem:[#allocation9 + $0x50] sm:$0xff]
    %v4654 = vld [vmem:[#allocation9 + $0x58] sm:$0xff]
    %v4655 = vld [vmem:[#allocation9 + $0x60] sm:$0xff]
    %v4656 = vld [vmem:[#allocation9 + $0x68] sm:$0xff]
    %v4657 = vld [vmem:[#allocation9 + $0x70] sm:$0xff]
    %v4658 = vld [vmem:[#allocation9 + $0x78] sm:$0xff]
    %v4659 = vld [vmem:[#allocation9 + $0x80] sm:$0xff]
    %v4660 = vld [vmem:[#allocation9 + $0x88] sm:$0xff]
    %v4661 = vld [vmem:[#allocation9 + $0x90] sm:$0xff]
    %v4662 = vld [vmem:[#allocation9 + $0x98] sm:$0xff]
    %v4663 = vld [vmem:[#allocation9 + $0xa0] sm:$0xff]
    %v4664 = vld [vmem:[#allocation9 + $0xa8] sm:$0xff]
    %v4665 = vld [vmem:[#allocation9 + $0xb0] sm:$0xff]
    %v4666 = vld [vmem:[#allocation9 + $0xb8] sm:$0xff]
    %v4667 = vld [vmem:[#allocation9 + $0xc0] sm:$0xff]
    %v4668 = vld [vmem:[#allocation9 + $0xc8] sm:$0xff]
    %v4669 = vld [vmem:[#allocation9 + $0xd0] sm:$0xff]
    %v4670 = vld [vmem:[#allocation9 + $0xd8] sm:$0xff]
    %v4671 = vld [vmem:[#allocation9 + $0xe0] sm:$0xff]
    %v4672 = vld [vmem:[#allocation9 + $0xe8] sm:$0xff]
    %v4673 = vld [vmem:[#allocation9 + $0xf0] sm:$0xff]
    %v4674 = vld [vmem:[#allocation9 + $0xf8] sm:$0xff]
    %v4675 = vld [vmem:[#allocation9 + $0x100] sm:$0xff]
    %v4676 = vld [vmem:[#allocation9 + $0x108] sm:$0xff]
    %v4677 = vld [vmem:[#allocation9 + $0x110] sm:$0xff]
    %v4678 = vld [vmem:[#allocation9 + $0x118] sm:$0xff]
    %v4679 = vld [vmem:[#allocation9 + $0x120] sm:$0xff]
    %v4680 = vld [vmem:[#allocation9 + $0x128] sm:$0xff]
    %v4681 = vld [vmem:[#allocation9 + $0x130] sm:$0xff]
    %v4682 = vld [vmem:[#allocation9 + $0x138] sm:$0xff]
    %v4683 = vld [vmem:[#allocation9 + $0x140] sm:$0xff]
    %v4684 = vld [vmem:[#allocation9 + $0x148] sm:$0xff]
    %v4685 = vld [vmem:[#allocation9 + $0x150] sm:$0xff]
    %v4686 = vld [vmem:[#allocation9 + $0x158] sm:$0xff]
    %v4687 = vld [vmem:[#allocation9 + $0x160] sm:$0xff]
    %v4688 = vld [vmem:[#allocation9 + $0x168] sm:$0xff]
    %v4689 = vld [vmem:[#allocation9 + $0x170] sm:$0xff]
    %v4690 = vld [vmem:[#allocation9 + $0x178] sm:$0xff]
    %v4691 = vld [vmem:[#allocation9 + $0x180] sm:$0xff]
    %v4692 = vld [vmem:[#allocation9 + $0x188] sm:$0xff]
    %v4693 = vld [vmem:[#allocation9 + $0x190] sm:$0xff]
    %v4694 = vld [vmem:[#allocation9 + $0x198] sm:$0xff]
    %v4695 = vld [vmem:[#allocation9 + $0x1a0] sm:$0xff]
    %v4696 = vld [vmem:[#allocation9 + $0x1a8] sm:$0xff]
    %v4697 = vld [vmem:[#allocation9 + $0x1b0] sm:$0xff]
    %v4698 = vld [vmem:[#allocation9 + $0x1b8] sm:$0xff]
    %v4699 = vld [vmem:[#allocation9 + $0x1c0] sm:$0xff]
    %v4700 = vld [vmem:[#allocation9 + $0x1c8] sm:$0xff]
    %v4701 = vld [vmem:[#allocation9 + $0x1d0] sm:$0xff]
    %v4702 = vld [vmem:[#allocation9 + $0x1d8] sm:$0xff]
    %v4703 = vld [vmem:[#allocation9 + $0x1e0] sm:$0xff]
    %v4704 = vld [vmem:[#allocation9 + $0x1e8] sm:$0xff]
    %v4705 = vld [vmem:[#allocation9 + $0x1f0] sm:$0xff]
    %v4706 = vld [vmem:[#allocation9 + $0x1f8] sm:$0xff]
    %v4707 = vld [vmem:[%s890] sm:$0xf]
    %v4709 = vlaneseq
    %v4710 = vshrl.u32 %v4709, 7
    %v4711 = vsub.s32 0, %v4710
    %v4712 = vrot.slane %v4707, %v4711
    %v4713 = vlaneseq
    %v4714 = vshrl.u32 %v4713, 7
    %v4715 = vsub.s32 1, %v4714
    %v4716 = vrot.slane %v4707, %v4715
    %v4717 = vlaneseq
    %v4718 = vshrl.u32 %v4717, 7
    %v4719 = vsub.s32 2, %v4718
    %v4720 = vrot.slane %v4707, %v4719
    %v4721 = vlaneseq
    %v4722 = vshrl.u32 %v4721, 7
    %v4723 = vsub.s32 3, %v4722
    %v4724 = vrot.slane %v4707, %v4723
    %v4793 = vunpack.c.l.b16 %v4643
    %v4794 = vunpack.c.h.b16 %v4643
    %v4795 = vunpack.c.l.b16 %v4644
    %v4796 = vunpack.c.h.b16 %v4644
    %v4797 = vunpack.c.l.b16 %v4645
    %v4798 = vunpack.c.h.b16 %v4645
    %v4799 = vunpack.c.l.b16 %v4646
    %v4800 = vunpack.c.h.b16 %v4646
    %v4801 = vunpack.c.l.b16 %v4647
    %v4802 = vunpack.c.h.b16 %v4647
    %v4803 = vunpack.c.l.b16 %v4648
    %v4804 = vunpack.c.h.b16 %v4648
    %v4805 = vunpack.c.l.b16 %v4649
    %v4806 = vunpack.c.h.b16 %v4649
    %v4807 = vunpack.c.l.b16 %v4650
    %v4808 = vunpack.c.h.b16 %v4650
    %v4809 = vunpack.c.l.b16 %v4651
    %v4810 = vunpack.c.h.b16 %v4651
    %v4811 = vunpack.c.l.b16 %v4652
    %v4812 = vunpack.c.h.b16 %v4652
    %v4813 = vunpack.c.l.b16 %v4653
    %v4814 = vunpack.c.h.b16 %v4653
    %v4815 = vunpack.c.l.b16 %v4654
    %v4816 = vunpack.c.h.b16 %v4654
    %v4817 = vunpack.c.l.b16 %v4655
    %v4818 = vunpack.c.h.b16 %v4655
    %v4819 = vunpack.c.l.b16 %v4656
    %v4820 = vunpack.c.h.b16 %v4656
    %v4821 = vunpack.c.l.b16 %v4657
    %v4822 = vunpack.c.h.b16 %v4657
    %v4823 = vunpack.c.l.b16 %v4658
    %v4824 = vunpack.c.h.b16 %v4658
    %v4825 = vunpack.c.l.b16 %v4659
    %v4826 = vunpack.c.h.b16 %v4659
    %v4827 = vunpack.c.l.b16 %v4660
    %v4828 = vunpack.c.h.b16 %v4660
    %v4829 = vunpack.c.l.b16 %v4661
    %v4830 = vunpack.c.h.b16 %v4661
    %v4831 = vunpack.c.l.b16 %v4662
    %v4832 = vunpack.c.h.b16 %v4662
    %v4833 = vunpack.c.l.b16 %v4663
    %v4834 = vunpack.c.h.b16 %v4663
    %v4835 = vunpack.c.l.b16 %v4664
    %v4836 = vunpack.c.h.b16 %v4664
    %v4837 = vunpack.c.l.b16 %v4665
    %v4838 = vunpack.c.h.b16 %v4665
    %v4839 = vunpack.c.l.b16 %v4666
    %v4840 = vunpack.c.h.b16 %v4666
    %v4841 = vunpack.c.l.b16 %v4667
    %v4842 = vunpack.c.h.b16 %v4667
    %v4843 = vunpack.c.l.b16 %v4668
    %v4844 = vunpack.c.h.b16 %v4668
    %v4845 = vunpack.c.l.b16 %v4669
    %v4846 = vunpack.c.h.b16 %v4669
    %v4847 = vunpack.c.l.b16 %v4670
    %v4848 = vunpack.c.h.b16 %v4670
    %v4849 = vunpack.c.l.b16 %v4671
    %v4850 = vunpack.c.h.b16 %v4671
    %v4851 = vunpack.c.l.b16 %v4672
    %v4852 = vunpack.c.h.b16 %v4672
    %v4853 = vunpack.c.l.b16 %v4673
    %v4854 = vunpack.c.h.b16 %v4673
    %v4855 = vunpack.c.l.b16 %v4674
    %v4856 = vunpack.c.h.b16 %v4674
    %v4857 = vunpack.c.l.b16 %v4675
    %v4858 = vunpack.c.h.b16 %v4675
    %v4859 = vunpack.c.l.b16 %v4676
    %v4860 = vunpack.c.h.b16 %v4676
    %v4861 = vunpack.c.l.b16 %v4677
    %v4862 = vunpack.c.h.b16 %v4677
    %v4863 = vunpack.c.l.b16 %v4678
    %v4864 = vunpack.c.h.b16 %v4678
    %v4865 = vunpack.c.l.b16 %v4679
    %v4866 = vunpack.c.h.b16 %v4679
    %v4867 = vunpack.c.l.b16 %v4680
    %v4868 = vunpack.c.h.b16 %v4680
    %v4869 = vunpack.c.l.b16 %v4681
    %v4870 = vunpack.c.h.b16 %v4681
    %v4871 = vunpack.c.l.b16 %v4682
    %v4872 = vunpack.c.h.b16 %v4682
    %v4873 = vunpack.c.l.b16 %v4683
    %v4874 = vunpack.c.h.b16 %v4683
    %v4875 = vunpack.c.l.b16 %v4684
    %v4876 = vunpack.c.h.b16 %v4684
    %v4877 = vunpack.c.l.b16 %v4685
    %v4878 = vunpack.c.h.b16 %v4685
    %v4879 = vunpack.c.l.b16 %v4686
    %v4880 = vunpack.c.h.b16 %v4686
    %v4881 = vunpack.c.l.b16 %v4687
    %v4882 = vunpack.c.h.b16 %v4687
    %v4883 = vunpack.c.l.b16 %v4688
    %v4884 = vunpack.c.h.b16 %v4688
    %v4885 = vunpack.c.l.b16 %v4689
    %v4886 = vunpack.c.h.b16 %v4689
    %v4887 = vunpack.c.l.b16 %v4690
    %v4888 = vunpack.c.h.b16 %v4690
    %v4889 = vunpack.c.l.b16 %v4691
    %v4890 = vunpack.c.h.b16 %v4691
    %v4891 = vunpack.c.l.b16 %v4692
    %v4892 = vunpack.c.h.b16 %v4692
    %v4893 = vunpack.c.l.b16 %v4693
    %v4894 = vunpack.c.h.b16 %v4693
    %v4895 = vunpack.c.l.b16 %v4694
    %v4896 = vunpack.c.h.b16 %v4694
    %v4897 = vunpack.c.l.b16 %v4695
    %v4898 = vunpack.c.h.b16 %v4695
    %v4899 = vunpack.c.l.b16 %v4696
    %v4900 = vunpack.c.h.b16 %v4696
    %v4901 = vunpack.c.l.b16 %v4697
    %v4902 = vunpack.c.h.b16 %v4697
    %v4903 = vunpack.c.l.b16 %v4698
    %v4904 = vunpack.c.h.b16 %v4698
    %v4905 = vunpack.c.l.b16 %v4699
    %v4906 = vunpack.c.h.b16 %v4699
    %v4907 = vunpack.c.l.b16 %v4700
    %v4908 = vunpack.c.h.b16 %v4700
    %v4909 = vunpack.c.l.b16 %v4701
    %v4910 = vunpack.c.h.b16 %v4701
    %v4911 = vunpack.c.l.b16 %v4702
    %v4912 = vunpack.c.h.b16 %v4702
    %v4913 = vunpack.c.l.b16 %v4703
    %v4914 = vunpack.c.h.b16 %v4703
    %v4915 = vunpack.c.l.b16 %v4704
    %v4916 = vunpack.c.h.b16 %v4704
    %v4917 = vunpack.c.l.b16 %v4705
    %v4918 = vunpack.c.h.b16 %v4705
    %v4919 = vunpack.c.l.b16 %v4706
    %v4920 = vunpack.c.h.b16 %v4706
    %v4921 = vpack.c.b16 %v4797, %v4793
    %v4922 = vpack.c.b16 %v4798, %v4794
    %v4923 = vpack.c.b16 %v4799, %v4795
    %v4924 = vpack.c.b16 %v4800, %v4796
    %v4925 = vpack.c.b16 %v4805, %v4801
    %v4926 = vpack.c.b16 %v4806, %v4802
    %v4927 = vpack.c.b16 %v4807, %v4803
    %v4928 = vpack.c.b16 %v4808, %v4804
    %v4929 = vpack.c.b16 %v4813, %v4809
    %v4930 = vpack.c.b16 %v4814, %v4810
    %v4931 = vpack.c.b16 %v4815, %v4811
    %v4932 = vpack.c.b16 %v4816, %v4812
    %v4933 = vpack.c.b16 %v4821, %v4817
    %v4934 = vpack.c.b16 %v4822, %v4818
    %v4935 = vpack.c.b16 %v4823, %v4819
    %v4936 = vpack.c.b16 %v4824, %v4820
    %v4937 = vpack.c.b16 %v4829, %v4825
    %v4938 = vpack.c.b16 %v4830, %v4826
    %v4939 = vpack.c.b16 %v4831, %v4827
    %v4940 = vpack.c.b16 %v4832, %v4828
    %v4941 = vpack.c.b16 %v4837, %v4833
    %v4942 = vpack.c.b16 %v4838, %v4834
    %v4943 = vpack.c.b16 %v4839, %v4835
    %v4944 = vpack.c.b16 %v4840, %v4836
    %v4945 = vpack.c.b16 %v4845, %v4841
    %v4946 = vpack.c.b16 %v4846, %v4842
    %v4947 = vpack.c.b16 %v4847, %v4843
    %v4948 = vpack.c.b16 %v4848, %v4844
    %v4949 = vpack.c.b16 %v4853, %v4849
    %v4950 = vpack.c.b16 %v4854, %v4850
    %v4951 = vpack.c.b16 %v4855, %v4851
    %v4952 = vpack.c.b16 %v4856, %v4852
    %v4953 = vpack.c.b16 %v4861, %v4857
    %v4954 = vpack.c.b16 %v4862, %v4858
    %v4955 = vpack.c.b16 %v4863, %v4859
    %v4956 = vpack.c.b16 %v4864, %v4860
    %v4957 = vpack.c.b16 %v4869, %v4865
    %v4958 = vpack.c.b16 %v4870, %v4866
    %v4959 = vpack.c.b16 %v4871, %v4867
    %v4960 = vpack.c.b16 %v4872, %v4868
    %v4961 = vpack.c.b16 %v4877, %v4873
    %v4962 = vpack.c.b16 %v4878, %v4874
    %v4963 = vpack.c.b16 %v4879, %v4875
    %v4964 = vpack.c.b16 %v4880, %v4876
    %v4965 = vpack.c.b16 %v4885, %v4881
    %v4966 = vpack.c.b16 %v4886, %v4882
    %v4967 = vpack.c.b16 %v4887, %v4883
    %v4968 = vpack.c.b16 %v4888, %v4884
    %v4969 = vpack.c.b16 %v4893, %v4889
    %v4970 = vpack.c.b16 %v4894, %v4890
    %v4971 = vpack.c.b16 %v4895, %v4891
    %v4972 = vpack.c.b16 %v4896, %v4892
    %v4973 = vpack.c.b16 %v4901, %v4897
    %v4974 = vpack.c.b16 %v4902, %v4898
    %v4975 = vpack.c.b16 %v4903, %v4899
    %v4976 = vpack.c.b16 %v4904, %v4900
    %v4977 = vpack.c.b16 %v4909, %v4905
    %v4978 = vpack.c.b16 %v4910, %v4906
    %v4979 = vpack.c.b16 %v4911, %v4907
    %v4980 = vpack.c.b16 %v4912, %v4908
    %v4981 = vpack.c.b16 %v4917, %v4913
    %v4982 = vpack.c.b16 %v4918, %v4914
    %v4983 = vpack.c.b16 %v4919, %v4915
    %v4984 = vpack.c.b16 %v4920, %v4916
    %5049 = vmatprep.subr.bf16.mxu0 %v4950
    %5050 = vmatpush1.bf16.msra.mxu0 %v4949
    %5051 = vmatprep.subr.bf16.mxu0 %v4946
    %5052 = vmatpush1.bf16.msra.mxu0 %v4945
    %5053 = vmatprep.subr.bf16.mxu0 %v4942
    %5054 = vmatpush1.bf16.msra.mxu0 %v4941
    %5055 = vmatprep.subr.bf16.mxu0 %v4938
    %5056 = vmatpush1.bf16.msra.mxu0 %v4937
    %5057 = vmatprep.subr.bf16.mxu0 %v4934
    %5058 = vmatpush1.bf16.msra.mxu0 %v4933
    %5059 = vmatprep.subr.bf16.mxu0 %v4930
    %5060 = vmatpush1.bf16.msra.mxu0 %v4929
    %5061 = vmatprep.subr.bf16.mxu0 %v4926
    %5062 = vmatpush1.bf16.msra.mxu0 %v4925
    %5063 = vmatprep.subr.bf16.mxu0 %v4922
    %5064 = vmatpush1.bf16.msra.mxu0 %v4921
    %5065 = vmatprep.subr.bf16.mxu0 %v4982
    %5066 = vmatpush2.bf16.msra.mxu0 %v4981
    %5067 = vmatprep.subr.bf16.mxu0 %v4978
    %5068 = vmatpush2.bf16.msra.mxu0 %v4977
    %5069 = vmatprep.subr.bf16.mxu0 %v4974
    %5070 = vmatpush2.bf16.msra.mxu0 %v4973
    %5071 = vmatprep.subr.bf16.mxu0 %v4970
    %5072 = vmatpush2.bf16.msra.mxu0 %v4969
    %5073 = vmatprep.subr.bf16.mxu0 %v4966
    %5074 = vmatpush2.bf16.msra.mxu0 %v4965
    %5075 = vmatprep.subr.bf16.mxu0 %v4962
    %5076 = vmatpush2.bf16.msra.mxu0 %v4961
    %5077 = vmatprep.subr.bf16.mxu0 %v4958
    %5078 = vmatpush2.bf16.msra.mxu0 %v4957
    %5079 = vmatprep.subr.bf16.mxu0 %v4954
    %5080 = vmatpush2.bf16.msra.mxu0 %v4953
    %5081 = vmatprep.mubr.bf16.mxu0 %v4126
    %5082 = vmatmul.mubr.bf16.gmra.mxu0 %v4642
    %v5083 = vpop.f32.mrf.mxu0
    %v5084 = vadd.f32 %v4712, %v5083
    %v5085 = vpop.f32.mrf.mxu0
    %v5086 = vadd.f32 %v4716, %v5085
    %v5087 = vpop.f32.mrf.mxu0
    %v5088 = vpop.f32.mrf.mxu0
    %5089 = vdwg.mxu0
    %5090 = vmatprep.subr.bf16.mxu0 %v4952
    %5091 = vmatpush1.bf16.msra.mxu0 %v4951
    %5092 = vmatprep.subr.bf16.mxu0 %v4948
    %5093 = vmatpush1.bf16.msra.mxu0 %v4947
    %5094 = vmatprep.subr.bf16.mxu0 %v4944
    %5095 = vmatpush1.bf16.msra.mxu0 %v4943
    %5096 = vmatprep.subr.bf16.mxu0 %v4940
    %5097 = vmatpush1.bf16.msra.mxu0 %v4939
    %5098 = vmatprep.subr.bf16.mxu0 %v4936
    %5099 = vmatpush1.bf16.msra.mxu0 %v4935
    %5100 = vmatprep.subr.bf16.mxu0 %v4932
    %5101 = vmatpush1.bf16.msra.mxu0 %v4931
    %5102 = vmatprep.subr.bf16.mxu0 %v4928
    %5103 = vmatpush1.bf16.msra.mxu0 %v4927
    %5104 = vmatprep.subr.bf16.mxu0 %v4924
    %5105 = vmatpush1.bf16.msra.mxu0 %v4923
    %5106 = vmatprep.subr.bf16.mxu0 %v4984
    %5107 = vmatpush2.bf16.msra.mxu0 %v4983
    %5108 = vmatprep.subr.bf16.mxu0 %v4980
    %5109 = vmatpush2.bf16.msra.mxu0 %v4979
    %5110 = vmatprep.subr.bf16.mxu0 %v4976
    %5111 = vmatpush2.bf16.msra.mxu0 %v4975
    %5112 = vmatprep.subr.bf16.mxu0 %v4972
    %5113 = vmatpush2.bf16.msra.mxu0 %v4971
    %5114 = vmatprep.subr.bf16.mxu0 %v4968
    %5115 = vmatpush2.bf16.msra.mxu0 %v4967
    %5116 = vmatprep.subr.bf16.mxu0 %v4964
    %5117 = vmatpush2.bf16.msra.mxu0 %v4963
    %5118 = vmatprep.subr.bf16.mxu0 %v4960
    %5119 = vmatpush2.bf16.msra.mxu0 %v4959
    %5120 = vmatprep.subr.bf16.mxu0 %v4956
    %5121 = vmatpush2.bf16.msra.mxu0 %v4955
    %5122 = vmatprep.mubr.bf16.mxu0 %v4126
    %5123 = vmatmul.mubr.bf16.gmra.mxu0 %v4642
    %v5124 = vpop.f32.mrf.mxu0
    %v5125 = vadd.f32 %v4720, %v5124
    %v5126 = vpop.f32.mrf.mxu0
    %v5127 = vadd.f32 %v4724, %v5126
    %v5128 = vpop.f32.mrf.mxu0
    %v5129 = vpop.f32.mrf.mxu0
    %5130 = vdwg.mxu0
    %v5131 = vxor.u32 %v5084, 2147483648
    %v5132 = vxor.u32 %v5086, 2147483648
    %v5133 = vxor.u32 %v5125, 2147483648
    %v5134 = vmul.f32 %v5131, 1.442695
    %v5135 = vpow.pop %v5134
    %v5136 = vmul.f32 %v5132, 1.442695
    %v5137 = vpow.pop %v5136
    %v5138 = vmul.f32 %v5133, 1.442695
    %v5139 = vpow.pop %v5138
    %v5140 = vadd.f32 %v5135, 1.0
    %v5141 = vadd.f32 %v5137, 1.0
    %v5142 = vadd.f32 %v5139, 1.0
    %v5143 = vrcp.pop %v5140
    %v5144 = vmul.f32 1.0, %v5143
    %v5145 = vrcp.pop %v5141
    %v5146 = vmul.f32 1.0, %v5145
    %v5147 = vrcp.pop %v5142
    %v5148 = vmul.f32 1.0, %v5147
    %v5149 = vtanh.pop %v5127
    %v5150 = vmul.f32 %v5146, %v3816
    %v5151 = vmul.f32 %v5144, %v5149
    %v5152 = vadd.f32 %v5150, %v5151
    %v5153 = vtanh.pop %v5152
    %v5154 = vmul.f32 %v5148, %v5153
    %s5155 = scalar_lea.vmem [#allocation2], 128
    %v5156 = vld [vmem:[%s5155] sm:$0xff]
    %v5157 = vld [vmem:[%s5155 + $0x8] sm:$0xff]
    %v5158 = vld [vmem:[%s5155 + $0x10] sm:$0xff]
    %v5159 = vld [vmem:[%s5155 + $0x18] sm:$0xff]
    %v5160 = vld [vmem:[#allocation8] sm:$0xff]
    %v5161 = vld [vmem:[#allocation8 + $0x8] sm:$0xff]
    %v5162 = vld [vmem:[#allocation8 + $0x10] sm:$0xff]
    %v5163 = vld [vmem:[#allocation8 + $0x18] sm:$0xff]
    %v5164 = vld [vmem:[#allocation8 + $0x20] sm:$0xff]
    %v5165 = vld [vmem:[#allocation8 + $0x28] sm:$0xff]
    %v5166 = vld [vmem:[#allocation8 + $0x30] sm:$0xff]
    %v5167 = vld [vmem:[#allocation8 + $0x38] sm:$0xff]
    %v5168 = vld [vmem:[#allocation8 + $0x40] sm:$0xff]
    %v5169 = vld [vmem:[#allocation8 + $0x48] sm:$0xff]
    %v5170 = vld [vmem:[#allocation8 + $0x50] sm:$0xff]
    %v5171 = vld [vmem:[#allocation8 + $0x58] sm:$0xff]
    %v5172 = vld [vmem:[#allocation8 + $0x60] sm:$0xff]
    %v5173 = vld [vmem:[#allocation8 + $0x68] sm:$0xff]
    %v5174 = vld [vmem:[#allocation8 + $0x70] sm:$0xff]
    %v5175 = vld [vmem:[#allocation8 + $0x78] sm:$0xff]
    %v5176 = vld [vmem:[#allocation8 + $0x80] sm:$0xff]
    %v5177 = vld [vmem:[#allocation8 + $0x88] sm:$0xff]
    %v5178 = vld [vmem:[#allocation8 + $0x90] sm:$0xff]
    %v5179 = vld [vmem:[#allocation8 + $0x98] sm:$0xff]
    %v5180 = vld [vmem:[#allocation8 + $0xa0] sm:$0xff]
    %v5181 = vld [vmem:[#allocation8 + $0xa8] sm:$0xff]
    %v5182 = vld [vmem:[#allocation8 + $0xb0] sm:$0xff]
    %v5183 = vld [vmem:[#allocation8 + $0xb8] sm:$0xff]
    %v5184 = vld [vmem:[#allocation8 + $0xc0] sm:$0xff]
    %v5185 = vld [vmem:[#allocation8 + $0xc8] sm:$0xff]
    %v5186 = vld [vmem:[#allocation8 + $0xd0] sm:$0xff]
    %v5187 = vld [vmem:[#allocation8 + $0xd8] sm:$0xff]
    %v5188 = vld [vmem:[#allocation8 + $0xe0] sm:$0xff]
    %v5189 = vld [vmem:[#allocation8 + $0xe8] sm:$0xff]
    %v5190 = vld [vmem:[#allocation8 + $0xf0] sm:$0xff]
    %v5191 = vld [vmem:[#allocation8 + $0xf8] sm:$0xff]
    %v5224 = vunpack.c.l.b16 %v5160
    %v5225 = vunpack.c.h.b16 %v5160
    %v5226 = vunpack.c.l.b16 %v5161
    %v5227 = vunpack.c.h.b16 %v5161
    %v5228 = vunpack.c.l.b16 %v5162
    %v5229 = vunpack.c.h.b16 %v5162
    %v5230 = vunpack.c.l.b16 %v5163
    %v5231 = vunpack.c.h.b16 %v5163
    %v5232 = vunpack.c.l.b16 %v5164
    %v5233 = vunpack.c.h.b16 %v5164
    %v5234 = vunpack.c.l.b16 %v5165
    %v5235 = vunpack.c.h.b16 %v5165
    %v5236 = vunpack.c.l.b16 %v5166
    %v5237 = vunpack.c.h.b16 %v5166
    %v5238 = vunpack.c.l.b16 %v5167
    %v5239 = vunpack.c.h.b16 %v5167
    %v5240 = vunpack.c.l.b16 %v5168
    %v5241 = vunpack.c.h.b16 %v5168
    %v5242 = vunpack.c.l.b16 %v5169
    %v5243 = vunpack.c.h.b16 %v5169
    %v5244 = vunpack.c.l.b16 %v5170
    %v5245 = vunpack.c.h.b16 %v5170
    %v5246 = vunpack.c.l.b16 %v5171
    %v5247 = vunpack.c.h.b16 %v5171
    %v5248 = vunpack.c.l.b16 %v5172
    %v5249 = vunpack.c.h.b16 %v5172
    %v5250 = vunpack.c.l.b16 %v5173
    %v5251 = vunpack.c.h.b16 %v5173
    %v5252 = vunpack.c.l.b16 %v5174
    %v5253 = vunpack.c.h.b16 %v5174
    %v5254 = vunpack.c.l.b16 %v5175
    %v5255 = vunpack.c.h.b16 %v5175
    %v5256 = vunpack.c.l.b16 %v5176
    %v5257 = vunpack.c.h.b16 %v5176
    %v5258 = vunpack.c.l.b16 %v5177
    %v5259 = vunpack.c.h.b16 %v5177
    %v5260 = vunpack.c.l.b16 %v5178
    %v5261 = vunpack.c.h.b16 %v5178
    %v5262 = vunpack.c.l.b16 %v5179
    %v5263 = vunpack.c.h.b16 %v5179
    %v5264 = vunpack.c.l.b16 %v5180
    %v5265 = vunpack.c.h.b16 %v5180
    %v5266 = vunpack.c.l.b16 %v5181
    %v5267 = vunpack.c.h.b16 %v5181
    %v5268 = vunpack.c.l.b16 %v5182
    %v5269 = vunpack.c.h.b16 %v5182
    %v5270 = vunpack.c.l.b16 %v5183
    %v5271 = vunpack.c.h.b16 %v5183
    %v5272 = vunpack.c.l.b16 %v5184
    %v5273 = vunpack.c.h.b16 %v5184
    %v5274 = vunpack.c.l.b16 %v5185
    %v5275 = vunpack.c.h.b16 %v5185
    %v5276 = vunpack.c.l.b16 %v5186
    %v5277 = vunpack.c.h.b16 %v5186
    %v5278 = vunpack.c.l.b16 %v5187
    %v5279 = vunpack.c.h.b16 %v5187
    %v5280 = vunpack.c.l.b16 %v5188
    %v5281 = vunpack.c.h.b16 %v5188
    %v5282 = vunpack.c.l.b16 %v5189
    %v5283 = vunpack.c.h.b16 %v5189
    %v5284 = vunpack.c.l.b16 %v5190
    %v5285 = vunpack.c.h.b16 %v5190
    %v5286 = vunpack.c.l.b16 %v5191
    %v5287 = vunpack.c.h.b16 %v5191
    %v5288 = vpack.c.b16 %v5228, %v5224
    %v5289 = vpack.c.b16 %v5229, %v5225
    %v5290 = vpack.c.b16 %v5230, %v5226
    %v5291 = vpack.c.b16 %v5231, %v5227
    %v5292 = vpack.c.b16 %v5236, %v5232
    %v5293 = vpack.c.b16 %v5237, %v5233
    %v5294 = vpack.c.b16 %v5238, %v5234
    %v5295 = vpack.c.b16 %v5239, %v5235
    %v5296 = vpack.c.b16 %v5244, %v5240
    %v5297 = vpack.c.b16 %v5245, %v5241
    %v5298 = vpack.c.b16 %v5246, %v5242
    %v5299 = vpack.c.b16 %v5247, %v5243
    %v5300 = vpack.c.b16 %v5252, %v5248
    %v5301 = vpack.c.b16 %v5253, %v5249
    %v5302 = vpack.c.b16 %v5254, %v5250
    %v5303 = vpack.c.b16 %v5255, %v5251
    %v5304 = vpack.c.b16 %v5260, %v5256
    %v5305 = vpack.c.b16 %v5261, %v5257
    %v5306 = vpack.c.b16 %v5262, %v5258
    %v5307 = vpack.c.b16 %v5263, %v5259
    %v5308 = vpack.c.b16 %v5268, %v5264
    %v5309 = vpack.c.b16 %v5269, %v5265
    %v5310 = vpack.c.b16 %v5270, %v5266
    %v5311 = vpack.c.b16 %v5271, %v5267
    %v5312 = vpack.c.b16 %v5276, %v5272
    %v5313 = vpack.c.b16 %v5277, %v5273
    %v5314 = vpack.c.b16 %v5278, %v5274
    %v5315 = vpack.c.b16 %v5279, %v5275
    %v5316 = vpack.c.b16 %v5284, %v5280
    %v5317 = vpack.c.b16 %v5285, %v5281
    %v5318 = vpack.c.b16 %v5286, %v5282
    %v5319 = vpack.c.b16 %v5287, %v5283
    %5352 = vmatprep.subr.bf16.mxu0 %v5317
    %5353 = vmatpush1.bf16.msra.mxu0 %v5316
    %5354 = vmatprep.subr.bf16.mxu0 %v5313
    %5355 = vmatpush1.bf16.msra.mxu0 %v5312
    %5356 = vmatprep.subr.bf16.mxu0 %v5309
    %5357 = vmatpush1.bf16.msra.mxu0 %v5308
    %5358 = vmatprep.subr.bf16.mxu0 %v5305
    %5359 = vmatpush1.bf16.msra.mxu0 %v5304
    %5360 = vmatprep.subr.bf16.mxu0 %v5301
    %5361 = vmatpush1.bf16.msra.mxu0 %v5300
    %5362 = vmatprep.subr.bf16.mxu0 %v5297
    %5363 = vmatpush1.bf16.msra.mxu0 %v5296
    %5364 = vmatprep.subr.bf16.mxu0 %v5293
    %5365 = vmatpush1.bf16.msra.mxu0 %v5292
    %5366 = vmatprep.subr.bf16.mxu0 %v5289
    %5367 = vmatpush1.bf16.msra.mxu0 %v5288
    %5368 = vmatprep.subr.bf16.mxu0 0
    %5369 = vmatpush2.bf16.msra.mxu0 0
    %5370 = vmatprep.subr.bf16.mxu0 0
    %5371 = vmatpush2.bf16.msra.mxu0 0
    %5372 = vmatprep.subr.bf16.mxu0 0
    %5373 = vmatpush2.bf16.msra.mxu0 0
    %5374 = vmatprep.subr.bf16.mxu0 0
    %5375 = vmatpush2.bf16.msra.mxu0 0
    %5376 = vmatprep.subr.bf16.mxu0 0
    %5377 = vmatpush2.bf16.msra.mxu0 0
    %5378 = vmatprep.subr.bf16.mxu0 0
    %5379 = vmatpush2.bf16.msra.mxu0 0
    %5380 = vmatprep.subr.bf16.mxu0 0
    %5381 = vmatpush2.bf16.msra.mxu0 0
    %5382 = vmatprep.subr.bf16.mxu0 0
    %5383 = vmatpush2.bf16.msra.mxu0 0
    %5384 = vmatprep.mubr.bf16.mxu0 0
    %5385 = vmatmul.mubr.bf16.gmra.mxu0 %v4642
    %v5386 = vpop.f32.mrf.mxu0
    %v5387 = vadd.f32 0.0, %v5386
    %v5388 = vpop.f32.mrf.mxu0
    %v5389 = vadd.f32 0.0, %v5388
    %v5390 = vpop.f32.mrf.mxu0
    %v5391 = vpop.f32.mrf.mxu0
    %5392 = vdwg.mxu0
    %5393 = vmatprep.subr.bf16.mxu0 %v5319
    %5394 = vmatpush1.bf16.msra.mxu0 %v5318
    %5395 = vmatprep.subr.bf16.mxu0 %v5315
    %5396 = vmatpush1.bf16.msra.mxu0 %v5314
    %5397 = vmatprep.subr.bf16.mxu0 %v5311
    %5398 = vmatpush1.bf16.msra.mxu0 %v5310
    %5399 = vmatprep.subr.bf16.mxu0 %v5307
    %5400 = vmatpush1.bf16.msra.mxu0 %v5306
    %5401 = vmatprep.subr.bf16.mxu0 %v5303
    %5402 = vmatpush1.bf16.msra.mxu0 %v5302
    %5403 = vmatprep.subr.bf16.mxu0 %v5299
    %5404 = vmatpush1.bf16.msra.mxu0 %v5298
    %5405 = vmatprep.subr.bf16.mxu0 %v5295
    %5406 = vmatpush1.bf16.msra.mxu0 %v5294
    %5407 = vmatprep.subr.bf16.mxu0 %v5291
    %5408 = vmatpush1.bf16.msra.mxu0 %v5290
    %5409 = vmatprep.subr.bf16.mxu0 0
    %5410 = vmatpush2.bf16.msra.mxu0 0
    %5411 = vmatprep.subr.bf16.mxu0 0
    %5412 = vmatpush2.bf16.msra.mxu0 0
    %5413 = vmatprep.subr.bf16.mxu0 0
    %5414 = vmatpush2.bf16.msra.mxu0 0
    %5415 = vmatprep.subr.bf16.mxu0 0
    %5416 = vmatpush2.bf16.msra.mxu0 0
    %5417 = vmatprep.subr.bf16.mxu0 0
    %5418 = vmatpush2.bf16.msra.mxu0 0
    %5419 = vmatprep.subr.bf16.mxu0 0
    %5420 = vmatpush2.bf16.msra.mxu0 0
    %5421 = vmatprep.subr.bf16.mxu0 0
    %5422 = vmatpush2.bf16.msra.mxu0 0
    %5423 = vmatprep.subr.bf16.mxu0 0
    %5424 = vmatpush2.bf16.msra.mxu0 0
    %5425 = vmatprep.mubr.bf16.mxu0 0
    %5426 = vmatmul.mubr.bf16.gmra.mxu0 %v4642
    %v5427 = vpop.f32.mrf.mxu0
    %v5428 = vadd.f32 0.0, %v5427
    %v5429 = vpop.f32.mrf.mxu0
    %v5430 = vadd.f32 0.0, %v5429
    %v5431 = vpop.f32.mrf.mxu0
    %v5432 = vpop.f32.mrf.mxu0
    %5433 = vdwg.mxu0
    %v5434 = vadd.f32 %v5156, %v5387
    %v5435 = vadd.f32 %v5157, %v5389
    %v5436 = vadd.f32 %v5158, %v5428
    %v5437 = vadd.f32 %v5159, %v5430
    %v5438 = vxor.u32 %v5434, 2147483648
    %v5439 = vxor.u32 %v5435, 2147483648
    %v5440 = vxor.u32 %v5436, 2147483648
    %v5441 = vmul.f32 %v5438, 1.442695
    %v5442 = vpow.pop %v5441
    %v5443 = vmul.f32 %v5439, 1.442695
    %v5444 = vpow.pop %v5443
    %v5445 = vmul.f32 %v5440, 1.442695
    %v5446 = vpow.pop %v5445
    %v5447 = vadd.f32 %v5442, 1.0
    %v5448 = vadd.f32 %v5444, 1.0
    %v5449 = vadd.f32 %v5446, 1.0
    %v5450 = vrcp.pop %v5447
    %v5451 = vmul.f32 1.0, %v5450
    %v5452 = vrcp.pop %v5448
    %v5453 = vmul.f32 1.0, %v5452
    %v5454 = vrcp.pop %v5449
    %v5455 = vmul.f32 1.0, %v5454
    %v5456 = vtanh.pop %v5437
    %v5457 = vmul.f32 %v5453, %v4123
    %v5458 = vmul.f32 %v5451, %v5456
    %v5459 = vadd.f32 %v5457, %v5458
    %v5460 = vtanh.pop %v5459
    %v5461 = vmul.f32 %v5455, %v5460
    %v5462 = vpack.c.bf16 %v5154, %v5154
    %v5463 = vpack.c.bf16 %v4639, %v4639
    %v5464 = vld [vmem:[%s1455] sm:$0xff]
    %v5465 = vld [vmem:[%s1455 + $0x8] sm:$0xff]
    %v5466 = vld [vmem:[%s1455 + $0x10] sm:$0xff]
    %v5467 = vld [vmem:[%s1455 + $0x18] sm:$0xff]
    %v5468 = vld [vmem:[%s1455 + $0x20] sm:$0xff]
    %v5469 = vld [vmem:[%s1455 + $0x28] sm:$0xff]
    %v5470 = vld [vmem:[%s1455 + $0x30] sm:$0xff]
    %v5471 = vld [vmem:[%s1455 + $0x38] sm:$0xff]
    %v5472 = vld [vmem:[%s1455 + $0x40] sm:$0xff]
    %v5473 = vld [vmem:[%s1455 + $0x48] sm:$0xff]
    %v5474 = vld [vmem:[%s1455 + $0x50] sm:$0xff]
    %v5475 = vld [vmem:[%s1455 + $0x58] sm:$0xff]
    %v5476 = vld [vmem:[%s1455 + $0x60] sm:$0xff]
    %v5477 = vld [vmem:[%s1455 + $0x68] sm:$0xff]
    %v5478 = vld [vmem:[%s1455 + $0x70] sm:$0xff]
    %v5479 = vld [vmem:[%s1455 + $0x78] sm:$0xff]
    %v5480 = vld [vmem:[%s1455 + $0x80] sm:$0xff]
    %v5481 = vld [vmem:[%s1455 + $0x88] sm:$0xff]
    %v5482 = vld [vmem:[%s1455 + $0x90] sm:$0xff]
    %v5483 = vld [vmem:[%s1455 + $0x98] sm:$0xff]
    %v5484 = vld [vmem:[%s1455 + $0xa0] sm:$0xff]
    %v5485 = vld [vmem:[%s1455 + $0xa8] sm:$0xff]
    %v5486 = vld [vmem:[%s1455 + $0xb0] sm:$0xff]
    %v5487 = vld [vmem:[%s1455 + $0xb8] sm:$0xff]
    %v5488 = vld [vmem:[%s1455 + $0xc0] sm:$0xff]
    %v5489 = vld [vmem:[%s1455 + $0xc8] sm:$0xff]
    %v5490 = vld [vmem:[%s1455 + $0xd0] sm:$0xff]
    %v5491 = vld [vmem:[%s1455 + $0xd8] sm:$0xff]
    %v5492 = vld [vmem:[%s1455 + $0xe0] sm:$0xff]
    %v5493 = vld [vmem:[%s1455 + $0xe8] sm:$0xff]
    %v5494 = vld [vmem:[%s1455 + $0xf0] sm:$0xff]
    %v5495 = vld [vmem:[%s1455 + $0xf8] sm:$0xff]
    %v5496 = vld [vmem:[%s1455 + $0x100] sm:$0xff]
    %v5497 = vld [vmem:[%s1455 + $0x108] sm:$0xff]
    %v5498 = vld [vmem:[%s1455 + $0x110] sm:$0xff]
    %v5499 = vld [vmem:[%s1455 + $0x118] sm:$0xff]
    %v5500 = vld [vmem:[%s1455 + $0x120] sm:$0xff]
    %v5501 = vld [vmem:[%s1455 + $0x128] sm:$0xff]
    %v5502 = vld [vmem:[%s1455 + $0x130] sm:$0xff]
    %v5503 = vld [vmem:[%s1455 + $0x138] sm:$0xff]
    %v5504 = vld [vmem:[%s1455 + $0x140] sm:$0xff]
    %v5505 = vld [vmem:[%s1455 + $0x148] sm:$0xff]
    %v5506 = vld [vmem:[%s1455 + $0x150] sm:$0xff]
    %v5507 = vld [vmem:[%s1455 + $0x158] sm:$0xff]
    %v5508 = vld [vmem:[%s1455 + $0x160] sm:$0xff]
    %v5509 = vld [vmem:[%s1455 + $0x168] sm:$0xff]
    %v5510 = vld [vmem:[%s1455 + $0x170] sm:$0xff]
    %v5511 = vld [vmem:[%s1455 + $0x178] sm:$0xff]
    %v5512 = vld [vmem:[%s1455 + $0x180] sm:$0xff]
    %v5513 = vld [vmem:[%s1455 + $0x188] sm:$0xff]
    %v5514 = vld [vmem:[%s1455 + $0x190] sm:$0xff]
    %v5515 = vld [vmem:[%s1455 + $0x198] sm:$0xff]
    %v5516 = vld [vmem:[%s1455 + $0x1a0] sm:$0xff]
    %v5517 = vld [vmem:[%s1455 + $0x1a8] sm:$0xff]
    %v5518 = vld [vmem:[%s1455 + $0x1b0] sm:$0xff]
    %v5519 = vld [vmem:[%s1455 + $0x1b8] sm:$0xff]
    %v5520 = vld [vmem:[%s1455 + $0x1c0] sm:$0xff]
    %v5521 = vld [vmem:[%s1455 + $0x1c8] sm:$0xff]
    %v5522 = vld [vmem:[%s1455 + $0x1d0] sm:$0xff]
    %v5523 = vld [vmem:[%s1455 + $0x1d8] sm:$0xff]
    %v5524 = vld [vmem:[%s1455 + $0x1e0] sm:$0xff]
    %v5525 = vld [vmem:[%s1455 + $0x1e8] sm:$0xff]
    %v5526 = vld [vmem:[%s1455 + $0x1f0] sm:$0xff]
    %v5527 = vld [vmem:[%s1455 + $0x1f8] sm:$0xff]
    %v5528 = vld [vmem:[%s1520] sm:$0xf]
    %v5530 = vlaneseq
    %v5531 = vshrl.u32 %v5530, 7
    %v5532 = vsub.s32 0, %v5531
    %v5533 = vrot.slane %v5528, %v5532
    %v5534 = vlaneseq
    %v5535 = vshrl.u32 %v5534, 7
    %v5536 = vsub.s32 1, %v5535
    %v5537 = vrot.slane %v5528, %v5536
    %v5538 = vlaneseq
    %v5539 = vshrl.u32 %v5538, 7
    %v5540 = vsub.s32 2, %v5539
    %v5541 = vrot.slane %v5528, %v5540
    %v5542 = vlaneseq
    %v5543 = vshrl.u32 %v5542, 7
    %v5544 = vsub.s32 3, %v5543
    %v5545 = vrot.slane %v5528, %v5544
    %v5614 = vunpack.c.l.b16 %v5464
    %v5615 = vunpack.c.h.b16 %v5464
    %v5616 = vunpack.c.l.b16 %v5465
    %v5617 = vunpack.c.h.b16 %v5465
    %v5618 = vunpack.c.l.b16 %v5466
    %v5619 = vunpack.c.h.b16 %v5466
    %v5620 = vunpack.c.l.b16 %v5467
    %v5621 = vunpack.c.h.b16 %v5467
    %v5622 = vunpack.c.l.b16 %v5468
    %v5623 = vunpack.c.h.b16 %v5468
    %v5624 = vunpack.c.l.b16 %v5469
    %v5625 = vunpack.c.h.b16 %v5469
    %v5626 = vunpack.c.l.b16 %v5470
    %v5627 = vunpack.c.h.b16 %v5470
    %v5628 = vunpack.c.l.b16 %v5471
    %v5629 = vunpack.c.h.b16 %v5471
    %v5630 = vunpack.c.l.b16 %v5472
    %v5631 = vunpack.c.h.b16 %v5472
    %v5632 = vunpack.c.l.b16 %v5473
    %v5633 = vunpack.c.h.b16 %v5473
    %v5634 = vunpack.c.l.b16 %v5474
    %v5635 = vunpack.c.h.b16 %v5474
    %v5636 = vunpack.c.l.b16 %v5475
    %v5637 = vunpack.c.h.b16 %v5475
    %v5638 = vunpack.c.l.b16 %v5476
    %v5639 = vunpack.c.h.b16 %v5476
    %v5640 = vunpack.c.l.b16 %v5477
    %v5641 = vunpack.c.h.b16 %v5477
    %v5642 = vunpack.c.l.b16 %v5478
    %v5643 = vunpack.c.h.b16 %v5478
    %v5644 = vunpack.c.l.b16 %v5479
    %v5645 = vunpack.c.h.b16 %v5479
    %v5646 = vunpack.c.l.b16 %v5480
    %v5647 = vunpack.c.h.b16 %v5480
    %v5648 = vunpack.c.l.b16 %v5481
    %v5649 = vunpack.c.h.b16 %v5481
    %v5650 = vunpack.c.l.b16 %v5482
    %v5651 = vunpack.c.h.b16 %v5482
    %v5652 = vunpack.c.l.b16 %v5483
    %v5653 = vunpack.c.h.b16 %v5483
    %v5654 = vunpack.c.l.b16 %v5484
    %v5655 = vunpack.c.h.b16 %v5484
    %v5656 = vunpack.c.l.b16 %v5485
    %v5657 = vunpack.c.h.b16 %v5485
    %v5658 = vunpack.c.l.b16 %v5486
    %v5659 = vunpack.c.h.b16 %v5486
    %v5660 = vunpack.c.l.b16 %v5487
    %v5661 = vunpack.c.h.b16 %v5487
    %v5662 = vunpack.c.l.b16 %v5488
    %v5663 = vunpack.c.h.b16 %v5488
    %v5664 = vunpack.c.l.b16 %v5489
    %v5665 = vunpack.c.h.b16 %v5489
    %v5666 = vunpack.c.l.b16 %v5490
    %v5667 = vunpack.c.h.b16 %v5490
    %v5668 = vunpack.c.l.b16 %v5491
    %v5669 = vunpack.c.h.b16 %v5491
    %v5670 = vunpack.c.l.b16 %v5492
    %v5671 = vunpack.c.h.b16 %v5492
    %v5672 = vunpack.c.l.b16 %v5493
    %v5673 = vunpack.c.h.b16 %v5493
    %v5674 = vunpack.c.l.b16 %v5494
    %v5675 = vunpack.c.h.b16 %v5494
    %v5676 = vunpack.c.l.b16 %v5495
    %v5677 = vunpack.c.h.b16 %v5495
    %v5678 = vunpack.c.l.b16 %v5496
    %v5679 = vunpack.c.h.b16 %v5496
    %v5680 = vunpack.c.l.b16 %v5497
    %v5681 = vunpack.c.h.b16 %v5497
    %v5682 = vunpack.c.l.b16 %v5498
    %v5683 = vunpack.c.h.b16 %v5498
    %v5684 = vunpack.c.l.b16 %v5499
    %v5685 = vunpack.c.h.b16 %v5499
    %v5686 = vunpack.c.l.b16 %v5500
    %v5687 = vunpack.c.h.b16 %v5500
    %v5688 = vunpack.c.l.b16 %v5501
    %v5689 = vunpack.c.h.b16 %v5501
    %v5690 = vunpack.c.l.b16 %v5502
    %v5691 = vunpack.c.h.b16 %v5502
    %v5692 = vunpack.c.l.b16 %v5503
    %v5693 = vunpack.c.h.b16 %v5503
    %v5694 = vunpack.c.l.b16 %v5504
    %v5695 = vunpack.c.h.b16 %v5504
    %v5696 = vunpack.c.l.b16 %v5505
    %v5697 = vunpack.c.h.b16 %v5505
    %v5698 = vunpack.c.l.b16 %v5506
    %v5699 = vunpack.c.h.b16 %v5506
    %v5700 = vunpack.c.l.b16 %v5507
    %v5701 = vunpack.c.h.b16 %v5507
    %v5702 = vunpack.c.l.b16 %v5508
    %v5703 = vunpack.c.h.b16 %v5508
    %v5704 = vunpack.c.l.b16 %v5509
    %v5705 = vunpack.c.h.b16 %v5509
    %v5706 = vunpack.c.l.b16 %v5510
    %v5707 = vunpack.c.h.b16 %v5510
    %v5708 = vunpack.c.l.b16 %v5511
    %v5709 = vunpack.c.h.b16 %v5511
    %v5710 = vunpack.c.l.b16 %v5512
    %v5711 = vunpack.c.h.b16 %v5512
    %v5712 = vunpack.c.l.b16 %v5513
    %v5713 = vunpack.c.h.b16 %v5513
    %v5714 = vunpack.c.l.b16 %v5514
    %v5715 = vunpack.c.h.b16 %v5514
    %v5716 = vunpack.c.l.b16 %v5515
    %v5717 = vunpack.c.h.b16 %v5515
    %v5718 = vunpack.c.l.b16 %v5516
    %v5719 = vunpack.c.h.b16 %v5516
    %v5720 = vunpack.c.l.b16 %v5517
    %v5721 = vunpack.c.h.b16 %v5517
    %v5722 = vunpack.c.l.b16 %v5518
    %v5723 = vunpack.c.h.b16 %v5518
    %v5724 = vunpack.c.l.b16 %v5519
    %v5725 = vunpack.c.h.b16 %v5519
    %v5726 = vunpack.c.l.b16 %v5520
    %v5727 = vunpack.c.h.b16 %v5520
    %v5728 = vunpack.c.l.b16 %v5521
    %v5729 = vunpack.c.h.b16 %v5521
    %v5730 = vunpack.c.l.b16 %v5522
    %v5731 = vunpack.c.h.b16 %v5522
    %v5732 = vunpack.c.l.b16 %v5523
    %v5733 = vunpack.c.h.b16 %v5523
    %v5734 = vunpack.c.l.b16 %v5524
    %v5735 = vunpack.c.h.b16 %v5524
    %v5736 = vunpack.c.l.b16 %v5525
    %v5737 = vunpack.c.h.b16 %v5525
    %v5738 = vunpack.c.l.b16 %v5526
    %v5739 = vunpack.c.h.b16 %v5526
    %v5740 = vunpack.c.l.b16 %v5527
    %v5741 = vunpack.c.h.b16 %v5527
    %v5742 = vpack.c.b16 %v5618, %v5614
    %v5743 = vpack.c.b16 %v5619, %v5615
    %v5744 = vpack.c.b16 %v5620, %v5616
    %v5745 = vpack.c.b16 %v5621, %v5617
    %v5746 = vpack.c.b16 %v5626, %v5622
    %v5747 = vpack.c.b16 %v5627, %v5623
    %v5748 = vpack.c.b16 %v5628, %v5624
    %v5749 = vpack.c.b16 %v5629, %v5625
    %v5750 = vpack.c.b16 %v5634, %v5630
    %v5751 = vpack.c.b16 %v5635, %v5631
    %v5752 = vpack.c.b16 %v5636, %v5632
    %v5753 = vpack.c.b16 %v5637, %v5633
    %v5754 = vpack.c.b16 %v5642, %v5638
    %v5755 = vpack.c.b16 %v5643, %v5639
    %v5756 = vpack.c.b16 %v5644, %v5640
    %v5757 = vpack.c.b16 %v5645, %v5641
    %v5758 = vpack.c.b16 %v5650, %v5646
    %v5759 = vpack.c.b16 %v5651, %v5647
    %v5760 = vpack.c.b16 %v5652, %v5648
    %v5761 = vpack.c.b16 %v5653, %v5649
    %v5762 = vpack.c.b16 %v5658, %v5654
    %v5763 = vpack.c.b16 %v5659, %v5655
    %v5764 = vpack.c.b16 %v5660, %v5656
    %v5765 = vpack.c.b16 %v5661, %v5657
    %v5766 = vpack.c.b16 %v5666, %v5662
    %v5767 = vpack.c.b16 %v5667, %v5663
    %v5768 = vpack.c.b16 %v5668, %v5664
    %v5769 = vpack.c.b16 %v5669, %v5665
    %v5770 = vpack.c.b16 %v5674, %v5670
    %v5771 = vpack.c.b16 %v5675, %v5671
    %v5772 = vpack.c.b16 %v5676, %v5672
    %v5773 = vpack.c.b16 %v5677, %v5673
    %v5774 = vpack.c.b16 %v5682, %v5678
    %v5775 = vpack.c.b16 %v5683, %v5679
    %v5776 = vpack.c.b16 %v5684, %v5680
    %v5777 = vpack.c.b16 %v5685, %v5681
    %v5778 = vpack.c.b16 %v5690, %v5686
    %v5779 = vpack.c.b16 %v5691, %v5687
    %v5780 = vpack.c.b16 %v5692, %v5688
    %v5781 = vpack.c.b16 %v5693, %v5689
    %v5782 = vpack.c.b16 %v5698, %v5694
    %v5783 = vpack.c.b16 %v5699, %v5695
    %v5784 = vpack.c.b16 %v5700, %v5696
    %v5785 = vpack.c.b16 %v5701, %v5697
    %v5786 = vpack.c.b16 %v5706, %v5702
    %v5787 = vpack.c.b16 %v5707, %v5703
    %v5788 = vpack.c.b16 %v5708, %v5704
    %v5789 = vpack.c.b16 %v5709, %v5705
    %v5790 = vpack.c.b16 %v5714, %v5710
    %v5791 = vpack.c.b16 %v5715, %v5711
    %v5792 = vpack.c.b16 %v5716, %v5712
    %v5793 = vpack.c.b16 %v5717, %v5713
    %v5794 = vpack.c.b16 %v5722, %v5718
    %v5795 = vpack.c.b16 %v5723, %v5719
    %v5796 = vpack.c.b16 %v5724, %v5720
    %v5797 = vpack.c.b16 %v5725, %v5721
    %v5798 = vpack.c.b16 %v5730, %v5726
    %v5799 = vpack.c.b16 %v5731, %v5727
    %v5800 = vpack.c.b16 %v5732, %v5728
    %v5801 = vpack.c.b16 %v5733, %v5729
    %v5802 = vpack.c.b16 %v5738, %v5734
    %v5803 = vpack.c.b16 %v5739, %v5735
    %v5804 = vpack.c.b16 %v5740, %v5736
    %v5805 = vpack.c.b16 %v5741, %v5737
    %5870 = vmatprep.subr.bf16.mxu0 %v5771
    %5871 = vmatpush1.bf16.msra.mxu0 %v5770
    %5872 = vmatprep.subr.bf16.mxu0 %v5767
    %5873 = vmatpush1.bf16.msra.mxu0 %v5766
    %5874 = vmatprep.subr.bf16.mxu0 %v5763
    %5875 = vmatpush1.bf16.msra.mxu0 %v5762
    %5876 = vmatprep.subr.bf16.mxu0 %v5759
    %5877 = vmatpush1.bf16.msra.mxu0 %v5758
    %5878 = vmatprep.subr.bf16.mxu0 %v5755
    %5879 = vmatpush1.bf16.msra.mxu0 %v5754
    %5880 = vmatprep.subr.bf16.mxu0 %v5751
    %5881 = vmatpush1.bf16.msra.mxu0 %v5750
    %5882 = vmatprep.subr.bf16.mxu0 %v5747
    %5883 = vmatpush1.bf16.msra.mxu0 %v5746
    %5884 = vmatprep.subr.bf16.mxu0 %v5743
    %5885 = vmatpush1.bf16.msra.mxu0 %v5742
    %5886 = vmatprep.subr.bf16.mxu0 %v5803
    %5887 = vmatpush2.bf16.msra.mxu0 %v5802
    %5888 = vmatprep.subr.bf16.mxu0 %v5799
    %5889 = vmatpush2.bf16.msra.mxu0 %v5798
    %5890 = vmatprep.subr.bf16.mxu0 %v5795
    %5891 = vmatpush2.bf16.msra.mxu0 %v5794
    %5892 = vmatprep.subr.bf16.mxu0 %v5791
    %5893 = vmatpush2.bf16.msra.mxu0 %v5790
    %5894 = vmatprep.subr.bf16.mxu0 %v5787
    %5895 = vmatpush2.bf16.msra.mxu0 %v5786
    %5896 = vmatprep.subr.bf16.mxu0 %v5783
    %5897 = vmatpush2.bf16.msra.mxu0 %v5782
    %5898 = vmatprep.subr.bf16.mxu0 %v5779
    %5899 = vmatpush2.bf16.msra.mxu0 %v5778
    %5900 = vmatprep.subr.bf16.mxu0 %v5775
    %5901 = vmatpush2.bf16.msra.mxu0 %v5774
    %5902 = vmatprep.mubr.bf16.mxu0 %v5463
    %5903 = vmatmul.mubr.bf16.gmra.mxu0 %v5462
    %v5904 = vpop.f32.mrf.mxu0
    %v5905 = vadd.f32 %v5533, %v5904
    %v5906 = vpop.f32.mrf.mxu0
    %v5907 = vadd.f32 %v5537, %v5906
    %v5908 = vpop.f32.mrf.mxu0
    %v5909 = vpop.f32.mrf.mxu0
    %5910 = vdwg.mxu0
    %5911 = vmatprep.subr.bf16.mxu0 %v5773
    %5912 = vmatpush1.bf16.msra.mxu0 %v5772
    %5913 = vmatprep.subr.bf16.mxu0 %v5769
    %5914 = vmatpush1.bf16.msra.mxu0 %v5768
    %5915 = vmatprep.subr.bf16.mxu0 %v5765
    %5916 = vmatpush1.bf16.msra.mxu0 %v5764
    %5917 = vmatprep.subr.bf16.mxu0 %v5761
    %5918 = vmatpush1.bf16.msra.mxu0 %v5760
    %5919 = vmatprep.subr.bf16.mxu0 %v5757
    %5920 = vmatpush1.bf16.msra.mxu0 %v5756
    %5921 = vmatprep.subr.bf16.mxu0 %v5753
    %5922 = vmatpush1.bf16.msra.mxu0 %v5752
    %5923 = vmatprep.subr.bf16.mxu0 %v5749
    %5924 = vmatpush1.bf16.msra.mxu0 %v5748
    %5925 = vmatprep.subr.bf16.mxu0 %v5745
    %5926 = vmatpush1.bf16.msra.mxu0 %v5744
    %5927 = vmatprep.subr.bf16.mxu0 %v5805
    %5928 = vmatpush2.bf16.msra.mxu0 %v5804
    %5929 = vmatprep.subr.bf16.mxu0 %v5801
    %5930 = vmatpush2.bf16.msra.mxu0 %v5800
    %5931 = vmatprep.subr.bf16.mxu0 %v5797
    %5932 = vmatpush2.bf16.msra.mxu0 %v5796
    %5933 = vmatprep.subr.bf16.mxu0 %v5793
    %5934 = vmatpush2.bf16.msra.mxu0 %v5792
    %5935 = vmatprep.subr.bf16.mxu0 %v5789
    %5936 = vmatpush2.bf16.msra.mxu0 %v5788
    %5937 = vmatprep.subr.bf16.mxu0 %v5785
    %5938 = vmatpush2.bf16.msra.mxu0 %v5784
    %5939 = vmatprep.subr.bf16.mxu0 %v5781
    %5940 = vmatpush2.bf16.msra.mxu0 %v5780
    %5941 = vmatprep.subr.bf16.mxu0 %v5777
    %5942 = vmatpush2.bf16.msra.mxu0 %v5776
    %5943 = vmatprep.mubr.bf16.mxu0 %v5463
    %5944 = vmatmul.mubr.bf16.gmra.mxu0 %v5462
    %v5945 = vpop.f32.mrf.mxu0
    %v5946 = vadd.f32 %v5541, %v5945
    %v5947 = vpop.f32.mrf.mxu0
    %v5948 = vadd.f32 %v5545, %v5947
    %v5949 = vpop.f32.mrf.mxu0
    %v5950 = vpop.f32.mrf.mxu0
    %5951 = vdwg.mxu0
    %v5952 = vxor.u32 %v5905, 2147483648
    %v5953 = vxor.u32 %v5907, 2147483648
    %v5954 = vxor.u32 %v5946, 2147483648
    %v5955 = vmul.f32 %v5952, 1.442695
    %v5956 = vpow.pop %v5955
    %v5957 = vmul.f32 %v5953, 1.442695
    %v5958 = vpow.pop %v5957
    %v5959 = vmul.f32 %v5954, 1.442695
    %v5960 = vpow.pop %v5959
    %v5961 = vadd.f32 %v5956, 1.0
    %v5962 = vadd.f32 %v5958, 1.0
    %v5963 = vadd.f32 %v5960, 1.0
    %v5964 = vrcp.pop %v5961
    %v5965 = vmul.f32 1.0, %v5964
    %v5966 = vrcp.pop %v5962
    %v5967 = vmul.f32 1.0, %v5966
    %v5968 = vrcp.pop %v5963
    %v5969 = vmul.f32 1.0, %v5968
    %v5970 = vtanh.pop %v5948
    %v5971 = vmul.f32 %v5967, %v4637
    %v5972 = vmul.f32 %v5965, %v5970
    %v5973 = vadd.f32 %v5971, %v5972
    %v5974 = vtanh.pop %v5973
    %v5975 = vmul.f32 %v5969, %v5974
    %s5976 = scalar_lea.vmem [#allocation14], 24
    %5977 = vst [vmem:[%s5976] sm:$0xff] %v5975
    %v5978 = vpack.c.bf16 %v5461, %v5461
    %v5979 = vld [vmem:[#allocation9] sm:$0xff]
    %v5980 = vld [vmem:[#allocation9 + $0x8] sm:$0xff]
    %v5981 = vld [vmem:[#allocation9 + $0x10] sm:$0xff]
    %v5982 = vld [vmem:[#allocation9 + $0x18] sm:$0xff]
    %v5983 = vld [vmem:[#allocation9 + $0x20] sm:$0xff]
    %v5984 = vld [vmem:[#allocation9 + $0x28] sm:$0xff]
    %v5985 = vld [vmem:[#allocation9 + $0x30] sm:$0xff]
    %v5986 = vld [vmem:[#allocation9 + $0x38] sm:$0xff]
    %v5987 = vld [vmem:[#allocation9 + $0x40] sm:$0xff]
    %v5988 = vld [vmem:[#allocation9 + $0x48] sm:$0xff]
    %v5989 = vld [vmem:[#allocation9 + $0x50] sm:$0xff]
    %v5990 = vld [vmem:[#allocation9 + $0x58] sm:$0xff]
    %v5991 = vld [vmem:[#allocation9 + $0x60] sm:$0xff]
    %v5992 = vld [vmem:[#allocation9 + $0x68] sm:$0xff]
    %v5993 = vld [vmem:[#allocation9 + $0x70] sm:$0xff]
    %v5994 = vld [vmem:[#allocation9 + $0x78] sm:$0xff]
    %v5995 = vld [vmem:[#allocation9 + $0x80] sm:$0xff]
    %v5996 = vld [vmem:[#allocation9 + $0x88] sm:$0xff]
    %v5997 = vld [vmem:[#allocation9 + $0x90] sm:$0xff]
    %v5998 = vld [vmem:[#allocation9 + $0x98] sm:$0xff]
    %v5999 = vld [vmem:[#allocation9 + $0xa0] sm:$0xff]
    %v6000 = vld [vmem:[#allocation9 + $0xa8] sm:$0xff]
    %v6001 = vld [vmem:[#allocation9 + $0xb0] sm:$0xff]
    %v6002 = vld [vmem:[#allocation9 + $0xb8] sm:$0xff]
    %v6003 = vld [vmem:[#allocation9 + $0xc0] sm:$0xff]
    %v6004 = vld [vmem:[#allocation9 + $0xc8] sm:$0xff]
    %v6005 = vld [vmem:[#allocation9 + $0xd0] sm:$0xff]
    %v6006 = vld [vmem:[#allocation9 + $0xd8] sm:$0xff]
    %v6007 = vld [vmem:[#allocation9 + $0xe0] sm:$0xff]
    %v6008 = vld [vmem:[#allocation9 + $0xe8] sm:$0xff]
    %v6009 = vld [vmem:[#allocation9 + $0xf0] sm:$0xff]
    %v6010 = vld [vmem:[#allocation9 + $0xf8] sm:$0xff]
    %v6011 = vld [vmem:[#allocation9 + $0x100] sm:$0xff]
    %v6012 = vld [vmem:[#allocation9 + $0x108] sm:$0xff]
    %v6013 = vld [vmem:[#allocation9 + $0x110] sm:$0xff]
    %v6014 = vld [vmem:[#allocation9 + $0x118] sm:$0xff]
    %v6015 = vld [vmem:[#allocation9 + $0x120] sm:$0xff]
    %v6016 = vld [vmem:[#allocation9 + $0x128] sm:$0xff]
    %v6017 = vld [vmem:[#allocation9 + $0x130] sm:$0xff]
    %v6018 = vld [vmem:[#allocation9 + $0x138] sm:$0xff]
    %v6019 = vld [vmem:[#allocation9 + $0x140] sm:$0xff]
    %v6020 = vld [vmem:[#allocation9 + $0x148] sm:$0xff]
    %v6021 = vld [vmem:[#allocation9 + $0x150] sm:$0xff]
    %v6022 = vld [vmem:[#allocation9 + $0x158] sm:$0xff]
    %v6023 = vld [vmem:[#allocation9 + $0x160] sm:$0xff]
    %v6024 = vld [vmem:[#allocation9 + $0x168] sm:$0xff]
    %v6025 = vld [vmem:[#allocation9 + $0x170] sm:$0xff]
    %v6026 = vld [vmem:[#allocation9 + $0x178] sm:$0xff]
    %v6027 = vld [vmem:[#allocation9 + $0x180] sm:$0xff]
    %v6028 = vld [vmem:[#allocation9 + $0x188] sm:$0xff]
    %v6029 = vld [vmem:[#allocation9 + $0x190] sm:$0xff]
    %v6030 = vld [vmem:[#allocation9 + $0x198] sm:$0xff]
    %v6031 = vld [vmem:[#allocation9 + $0x1a0] sm:$0xff]
    %v6032 = vld [vmem:[#allocation9 + $0x1a8] sm:$0xff]
    %v6033 = vld [vmem:[#allocation9 + $0x1b0] sm:$0xff]
    %v6034 = vld [vmem:[#allocation9 + $0x1b8] sm:$0xff]
    %v6035 = vld [vmem:[#allocation9 + $0x1c0] sm:$0xff]
    %v6036 = vld [vmem:[#allocation9 + $0x1c8] sm:$0xff]
    %v6037 = vld [vmem:[#allocation9 + $0x1d0] sm:$0xff]
    %v6038 = vld [vmem:[#allocation9 + $0x1d8] sm:$0xff]
    %v6039 = vld [vmem:[#allocation9 + $0x1e0] sm:$0xff]
    %v6040 = vld [vmem:[#allocation9 + $0x1e8] sm:$0xff]
    %v6041 = vld [vmem:[#allocation9 + $0x1f0] sm:$0xff]
    %v6042 = vld [vmem:[#allocation9 + $0x1f8] sm:$0xff]
    %v6043 = vld [vmem:[%s890] sm:$0xf]
    %v6045 = vlaneseq
    %v6046 = vshrl.u32 %v6045, 7
    %v6047 = vsub.s32 0, %v6046
    %v6048 = vrot.slane %v6043, %v6047
    %v6049 = vlaneseq
    %v6050 = vshrl.u32 %v6049, 7
    %v6051 = vsub.s32 1, %v6050
    %v6052 = vrot.slane %v6043, %v6051
    %v6053 = vlaneseq
    %v6054 = vshrl.u32 %v6053, 7
    %v6055 = vsub.s32 2, %v6054
    %v6056 = vrot.slane %v6043, %v6055
    %v6057 = vlaneseq
    %v6058 = vshrl.u32 %v6057, 7
    %v6059 = vsub.s32 3, %v6058
    %v6060 = vrot.slane %v6043, %v6059
    %v6129 = vunpack.c.l.b16 %v5979
    %v6130 = vunpack.c.h.b16 %v5979
    %v6131 = vunpack.c.l.b16 %v5980
    %v6132 = vunpack.c.h.b16 %v5980
    %v6133 = vunpack.c.l.b16 %v5981
    %v6134 = vunpack.c.h.b16 %v5981
    %v6135 = vunpack.c.l.b16 %v5982
    %v6136 = vunpack.c.h.b16 %v5982
    %v6137 = vunpack.c.l.b16 %v5983
    %v6138 = vunpack.c.h.b16 %v5983
    %v6139 = vunpack.c.l.b16 %v5984
    %v6140 = vunpack.c.h.b16 %v5984
    %v6141 = vunpack.c.l.b16 %v5985
    %v6142 = vunpack.c.h.b16 %v5985
    %v6143 = vunpack.c.l.b16 %v5986
    %v6144 = vunpack.c.h.b16 %v5986
    %v6145 = vunpack.c.l.b16 %v5987
    %v6146 = vunpack.c.h.b16 %v5987
    %v6147 = vunpack.c.l.b16 %v5988
    %v6148 = vunpack.c.h.b16 %v5988
    %v6149 = vunpack.c.l.b16 %v5989
    %v6150 = vunpack.c.h.b16 %v5989
    %v6151 = vunpack.c.l.b16 %v5990
    %v6152 = vunpack.c.h.b16 %v5990
    %v6153 = vunpack.c.l.b16 %v5991
    %v6154 = vunpack.c.h.b16 %v5991
    %v6155 = vunpack.c.l.b16 %v5992
    %v6156 = vunpack.c.h.b16 %v5992
    %v6157 = vunpack.c.l.b16 %v5993
    %v6158 = vunpack.c.h.b16 %v5993
    %v6159 = vunpack.c.l.b16 %v5994
    %v6160 = vunpack.c.h.b16 %v5994
    %v6161 = vunpack.c.l.b16 %v5995
    %v6162 = vunpack.c.h.b16 %v5995
    %v6163 = vunpack.c.l.b16 %v5996
    %v6164 = vunpack.c.h.b16 %v5996
    %v6165 = vunpack.c.l.b16 %v5997
    %v6166 = vunpack.c.h.b16 %v5997
    %v6167 = vunpack.c.l.b16 %v5998
    %v6168 = vunpack.c.h.b16 %v5998
    %v6169 = vunpack.c.l.b16 %v5999
    %v6170 = vunpack.c.h.b16 %v5999
    %v6171 = vunpack.c.l.b16 %v6000
    %v6172 = vunpack.c.h.b16 %v6000
    %v6173 = vunpack.c.l.b16 %v6001
    %v6174 = vunpack.c.h.b16 %v6001
    %v6175 = vunpack.c.l.b16 %v6002
    %v6176 = vunpack.c.h.b16 %v6002
    %v6177 = vunpack.c.l.b16 %v6003
    %v6178 = vunpack.c.h.b16 %v6003
    %v6179 = vunpack.c.l.b16 %v6004
    %v6180 = vunpack.c.h.b16 %v6004
    %v6181 = vunpack.c.l.b16 %v6005
    %v6182 = vunpack.c.h.b16 %v6005
    %v6183 = vunpack.c.l.b16 %v6006
    %v6184 = vunpack.c.h.b16 %v6006
    %v6185 = vunpack.c.l.b16 %v6007
    %v6186 = vunpack.c.h.b16 %v6007
    %v6187 = vunpack.c.l.b16 %v6008
    %v6188 = vunpack.c.h.b16 %v6008
    %v6189 = vunpack.c.l.b16 %v6009
    %v6190 = vunpack.c.h.b16 %v6009
    %v6191 = vunpack.c.l.b16 %v6010
    %v6192 = vunpack.c.h.b16 %v6010
    %v6193 = vunpack.c.l.b16 %v6011
    %v6194 = vunpack.c.h.b16 %v6011
    %v6195 = vunpack.c.l.b16 %v6012
    %v6196 = vunpack.c.h.b16 %v6012
    %v6197 = vunpack.c.l.b16 %v6013
    %v6198 = vunpack.c.h.b16 %v6013
    %v6199 = vunpack.c.l.b16 %v6014
    %v6200 = vunpack.c.h.b16 %v6014
    %v6201 = vunpack.c.l.b16 %v6015
    %v6202 = vunpack.c.h.b16 %v6015
    %v6203 = vunpack.c.l.b16 %v6016
    %v6204 = vunpack.c.h.b16 %v6016
    %v6205 = vunpack.c.l.b16 %v6017
    %v6206 = vunpack.c.h.b16 %v6017
    %v6207 = vunpack.c.l.b16 %v6018
    %v6208 = vunpack.c.h.b16 %v6018
    %v6209 = vunpack.c.l.b16 %v6019
    %v6210 = vunpack.c.h.b16 %v6019
    %v6211 = vunpack.c.l.b16 %v6020
    %v6212 = vunpack.c.h.b16 %v6020
    %v6213 = vunpack.c.l.b16 %v6021
    %v6214 = vunpack.c.h.b16 %v6021
    %v6215 = vunpack.c.l.b16 %v6022
    %v6216 = vunpack.c.h.b16 %v6022
    %v6217 = vunpack.c.l.b16 %v6023
    %v6218 = vunpack.c.h.b16 %v6023
    %v6219 = vunpack.c.l.b16 %v6024
    %v6220 = vunpack.c.h.b16 %v6024
    %v6221 = vunpack.c.l.b16 %v6025
    %v6222 = vunpack.c.h.b16 %v6025
    %v6223 = vunpack.c.l.b16 %v6026
    %v6224 = vunpack.c.h.b16 %v6026
    %v6225 = vunpack.c.l.b16 %v6027
    %v6226 = vunpack.c.h.b16 %v6027
    %v6227 = vunpack.c.l.b16 %v6028
    %v6228 = vunpack.c.h.b16 %v6028
    %v6229 = vunpack.c.l.b16 %v6029
    %v6230 = vunpack.c.h.b16 %v6029
    %v6231 = vunpack.c.l.b16 %v6030
    %v6232 = vunpack.c.h.b16 %v6030
    %v6233 = vunpack.c.l.b16 %v6031
    %v6234 = vunpack.c.h.b16 %v6031
    %v6235 = vunpack.c.l.b16 %v6032
    %v6236 = vunpack.c.h.b16 %v6032
    %v6237 = vunpack.c.l.b16 %v6033
    %v6238 = vunpack.c.h.b16 %v6033
    %v6239 = vunpack.c.l.b16 %v6034
    %v6240 = vunpack.c.h.b16 %v6034
    %v6241 = vunpack.c.l.b16 %v6035
    %v6242 = vunpack.c.h.b16 %v6035
    %v6243 = vunpack.c.l.b16 %v6036
    %v6244 = vunpack.c.h.b16 %v6036
    %v6245 = vunpack.c.l.b16 %v6037
    %v6246 = vunpack.c.h.b16 %v6037
    %v6247 = vunpack.c.l.b16 %v6038
    %v6248 = vunpack.c.h.b16 %v6038
    %v6249 = vunpack.c.l.b16 %v6039
    %v6250 = vunpack.c.h.b16 %v6039
    %v6251 = vunpack.c.l.b16 %v6040
    %v6252 = vunpack.c.h.b16 %v6040
    %v6253 = vunpack.c.l.b16 %v6041
    %v6254 = vunpack.c.h.b16 %v6041
    %v6255 = vunpack.c.l.b16 %v6042
    %v6256 = vunpack.c.h.b16 %v6042
    %v6257 = vpack.c.b16 %v6133, %v6129
    %v6258 = vpack.c.b16 %v6134, %v6130
    %v6259 = vpack.c.b16 %v6135, %v6131
    %v6260 = vpack.c.b16 %v6136, %v6132
    %v6261 = vpack.c.b16 %v6141, %v6137
    %v6262 = vpack.c.b16 %v6142, %v6138
    %v6263 = vpack.c.b16 %v6143, %v6139
    %v6264 = vpack.c.b16 %v6144, %v6140
    %v6265 = vpack.c.b16 %v6149, %v6145
    %v6266 = vpack.c.b16 %v6150, %v6146
    %v6267 = vpack.c.b16 %v6151, %v6147
    %v6268 = vpack.c.b16 %v6152, %v6148
    %v6269 = vpack.c.b16 %v6157, %v6153
    %v6270 = vpack.c.b16 %v6158, %v6154
    %v6271 = vpack.c.b16 %v6159, %v6155
    %v6272 = vpack.c.b16 %v6160, %v6156
    %v6273 = vpack.c.b16 %v6165, %v6161
    %v6274 = vpack.c.b16 %v6166, %v6162
    %v6275 = vpack.c.b16 %v6167, %v6163
    %v6276 = vpack.c.b16 %v6168, %v6164
    %v6277 = vpack.c.b16 %v6173, %v6169
    %v6278 = vpack.c.b16 %v6174, %v6170
    %v6279 = vpack.c.b16 %v6175, %v6171
    %v6280 = vpack.c.b16 %v6176, %v6172
    %v6281 = vpack.c.b16 %v6181, %v6177
    %v6282 = vpack.c.b16 %v6182, %v6178
    %v6283 = vpack.c.b16 %v6183, %v6179
    %v6284 = vpack.c.b16 %v6184, %v6180
    %v6285 = vpack.c.b16 %v6189, %v6185
    %v6286 = vpack.c.b16 %v6190, %v6186
    %v6287 = vpack.c.b16 %v6191, %v6187
    %v6288 = vpack.c.b16 %v6192, %v6188
    %v6289 = vpack.c.b16 %v6197, %v6193
    %v6290 = vpack.c.b16 %v6198, %v6194
    %v6291 = vpack.c.b16 %v6199, %v6195
    %v6292 = vpack.c.b16 %v6200, %v6196
    %v6293 = vpack.c.b16 %v6205, %v6201
    %v6294 = vpack.c.b16 %v6206, %v6202
    %v6295 = vpack.c.b16 %v6207, %v6203
    %v6296 = vpack.c.b16 %v6208, %v6204
    %v6297 = vpack.c.b16 %v6213, %v6209
    %v6298 = vpack.c.b16 %v6214, %v6210
    %v6299 = vpack.c.b16 %v6215, %v6211
    %v6300 = vpack.c.b16 %v6216, %v6212
    %v6301 = vpack.c.b16 %v6221, %v6217
    %v6302 = vpack.c.b16 %v6222, %v6218
    %v6303 = vpack.c.b16 %v6223, %v6219
    %v6304 = vpack.c.b16 %v6224, %v6220
    %v6305 = vpack.c.b16 %v6229, %v6225
    %v6306 = vpack.c.b16 %v6230, %v6226
    %v6307 = vpack.c.b16 %v6231, %v6227
    %v6308 = vpack.c.b16 %v6232, %v6228
    %v6309 = vpack.c.b16 %v6237, %v6233
    %v6310 = vpack.c.b16 %v6238, %v6234
    %v6311 = vpack.c.b16 %v6239, %v6235
    %v6312 = vpack.c.b16 %v6240, %v6236
    %v6313 = vpack.c.b16 %v6245, %v6241
    %v6314 = vpack.c.b16 %v6246, %v6242
    %v6315 = vpack.c.b16 %v6247, %v6243
    %v6316 = vpack.c.b16 %v6248, %v6244
    %v6317 = vpack.c.b16 %v6253, %v6249
    %v6318 = vpack.c.b16 %v6254, %v6250
    %v6319 = vpack.c.b16 %v6255, %v6251
    %v6320 = vpack.c.b16 %v6256, %v6252
    %6385 = vmatprep.subr.bf16.mxu0 %v6286
    %6386 = vmatpush1.bf16.msra.mxu0 %v6285
    %6387 = vmatprep.subr.bf16.mxu0 %v6282
    %6388 = vmatpush1.bf16.msra.mxu0 %v6281
    %6389 = vmatprep.subr.bf16.mxu0 %v6278
    %6390 = vmatpush1.bf16.msra.mxu0 %v6277
    %6391 = vmatprep.subr.bf16.mxu0 %v6274
    %6392 = vmatpush1.bf16.msra.mxu0 %v6273
    %6393 = vmatprep.subr.bf16.mxu0 %v6270
    %6394 = vmatpush1.bf16.msra.mxu0 %v6269
    %6395 = vmatprep.subr.bf16.mxu0 %v6266
    %6396 = vmatpush1.bf16.msra.mxu0 %v6265
    %6397 = vmatprep.subr.bf16.mxu0 %v6262
    %6398 = vmatpush1.bf16.msra.mxu0 %v6261
    %6399 = vmatprep.subr.bf16.mxu0 %v6258
    %6400 = vmatpush1.bf16.msra.mxu0 %v6257
    %6401 = vmatprep.subr.bf16.mxu0 %v6318
    %6402 = vmatpush2.bf16.msra.mxu0 %v6317
    %6403 = vmatprep.subr.bf16.mxu0 %v6314
    %6404 = vmatpush2.bf16.msra.mxu0 %v6313
    %6405 = vmatprep.subr.bf16.mxu0 %v6310
    %6406 = vmatpush2.bf16.msra.mxu0 %v6309
    %6407 = vmatprep.subr.bf16.mxu0 %v6306
    %6408 = vmatpush2.bf16.msra.mxu0 %v6305
    %6409 = vmatprep.subr.bf16.mxu0 %v6302
    %6410 = vmatpush2.bf16.msra.mxu0 %v6301
    %6411 = vmatprep.subr.bf16.mxu0 %v6298
    %6412 = vmatpush2.bf16.msra.mxu0 %v6297
    %6413 = vmatprep.subr.bf16.mxu0 %v6294
    %6414 = vmatpush2.bf16.msra.mxu0 %v6293
    %6415 = vmatprep.subr.bf16.mxu0 %v6290
    %6416 = vmatpush2.bf16.msra.mxu0 %v6289
    %6417 = vmatprep.mubr.bf16.mxu0 %v5462
    %6418 = vmatmul.mubr.bf16.gmra.mxu0 %v5978
    %v6419 = vpop.f32.mrf.mxu0
    %v6420 = vadd.f32 %v6048, %v6419
    %v6421 = vpop.f32.mrf.mxu0
    %v6422 = vadd.f32 %v6052, %v6421
    %v6423 = vpop.f32.mrf.mxu0
    %v6424 = vpop.f32.mrf.mxu0
    %6425 = vdwg.mxu0
    %6426 = vmatprep.subr.bf16.mxu0 %v6288
    %6427 = vmatpush1.bf16.msra.mxu0 %v6287
    %6428 = vmatprep.subr.bf16.mxu0 %v6284
    %6429 = vmatpush1.bf16.msra.mxu0 %v6283
    %6430 = vmatprep.subr.bf16.mxu0 %v6280
    %6431 = vmatpush1.bf16.msra.mxu0 %v6279
    %6432 = vmatprep.subr.bf16.mxu0 %v6276
    %6433 = vmatpush1.bf16.msra.mxu0 %v6275
    %6434 = vmatprep.subr.bf16.mxu0 %v6272
    %6435 = vmatpush1.bf16.msra.mxu0 %v6271
    %6436 = vmatprep.subr.bf16.mxu0 %v6268
    %6437 = vmatpush1.bf16.msra.mxu0 %v6267
    %6438 = vmatprep.subr.bf16.mxu0 %v6264
    %6439 = vmatpush1.bf16.msra.mxu0 %v6263
    %6440 = vmatprep.subr.bf16.mxu0 %v6260
    %6441 = vmatpush1.bf16.msra.mxu0 %v6259
    %6442 = vmatprep.subr.bf16.mxu0 %v6320
    %6443 = vmatpush2.bf16.msra.mxu0 %v6319
    %6444 = vmatprep.subr.bf16.mxu0 %v6316
    %6445 = vmatpush2.bf16.msra.mxu0 %v6315
    %6446 = vmatprep.subr.bf16.mxu0 %v6312
    %6447 = vmatpush2.bf16.msra.mxu0 %v6311
    %6448 = vmatprep.subr.bf16.mxu0 %v6308
    %6449 = vmatpush2.bf16.msra.mxu0 %v6307
    %6450 = vmatprep.subr.bf16.mxu0 %v6304
    %6451 = vmatpush2.bf16.msra.mxu0 %v6303
    %6452 = vmatprep.subr.bf16.mxu0 %v6300
    %6453 = vmatpush2.bf16.msra.mxu0 %v6299
    %6454 = vmatprep.subr.bf16.mxu0 %v6296
    %6455 = vmatpush2.bf16.msra.mxu0 %v6295
    %6456 = vmatprep.subr.bf16.mxu0 %v6292
    %6457 = vmatpush2.bf16.msra.mxu0 %v6291
    %6458 = vmatprep.mubr.bf16.mxu0 %v5462
    %6459 = vmatmul.mubr.bf16.gmra.mxu0 %v5978
    %v6460 = vpop.f32.mrf.mxu0
    %v6461 = vadd.f32 %v6056, %v6460
    %v6462 = vpop.f32.mrf.mxu0
    %v6463 = vadd.f32 %v6060, %v6462
    %v6464 = vpop.f32.mrf.mxu0
    %v6465 = vpop.f32.mrf.mxu0
    %6466 = vdwg.mxu0
    %v6467 = vxor.u32 %v6420, 2147483648
    %v6468 = vxor.u32 %v6422, 2147483648
    %v6469 = vxor.u32 %v6461, 2147483648
    %v6470 = vmul.f32 %v6467, 1.442695
    %v6471 = vpow.pop %v6470
    %v6472 = vmul.f32 %v6468, 1.442695
    %v6473 = vpow.pop %v6472
    %v6474 = vmul.f32 %v6469, 1.442695
    %v6475 = vpow.pop %v6474
    %v6476 = vadd.f32 %v6471, 1.0
    %v6477 = vadd.f32 %v6473, 1.0
    %v6478 = vadd.f32 %v6475, 1.0
    %v6479 = vrcp.pop %v6476
    %v6480 = vmul.f32 1.0, %v6479
    %v6481 = vrcp.pop %v6477
    %v6482 = vmul.f32 1.0, %v6481
    %v6483 = vrcp.pop %v6478
    %v6484 = vmul.f32 1.0, %v6483
    %v6485 = vtanh.pop %v6463
    %v6486 = vmul.f32 %v6482, %v5152
    %v6487 = vmul.f32 %v6480, %v6485
    %v6488 = vadd.f32 %v6486, %v6487
    %v6489 = vtanh.pop %v6488
    %v6490 = vmul.f32 %v6484, %v6489
    %s6491 = scalar_lea.vmem [#allocation2], 160
    %v6492 = vld [vmem:[%s6491] sm:$0xff]
    %v6493 = vld [vmem:[%s6491 + $0x8] sm:$0xff]
    %v6494 = vld [vmem:[%s6491 + $0x10] sm:$0xff]
    %v6495 = vld [vmem:[%s6491 + $0x18] sm:$0xff]
    %v6496 = vld [vmem:[#allocation8] sm:$0xff]
    %v6497 = vld [vmem:[#allocation8 + $0x8] sm:$0xff]
    %v6498 = vld [vmem:[#allocation8 + $0x10] sm:$0xff]
    %v6499 = vld [vmem:[#allocation8 + $0x18] sm:$0xff]
    %v6500 = vld [vmem:[#allocation8 + $0x20] sm:$0xff]
    %v6501 = vld [vmem:[#allocation8 + $0x28] sm:$0xff]
    %v6502 = vld [vmem:[#allocation8 + $0x30] sm:$0xff]
    %v6503 = vld [vmem:[#allocation8 + $0x38] sm:$0xff]
    %v6504 = vld [vmem:[#allocation8 + $0x40] sm:$0xff]
    %v6505 = vld [vmem:[#allocation8 + $0x48] sm:$0xff]
    %v6506 = vld [vmem:[#allocation8 + $0x50] sm:$0xff]
    %v6507 = vld [vmem:[#allocation8 + $0x58] sm:$0xff]
    %v6508 = vld [vmem:[#allocation8 + $0x60] sm:$0xff]
    %v6509 = vld [vmem:[#allocation8 + $0x68] sm:$0xff]
    %v6510 = vld [vmem:[#allocation8 + $0x70] sm:$0xff]
    %v6511 = vld [vmem:[#allocation8 + $0x78] sm:$0xff]
    %v6512 = vld [vmem:[#allocation8 + $0x80] sm:$0xff]
    %v6513 = vld [vmem:[#allocation8 + $0x88] sm:$0xff]
    %v6514 = vld [vmem:[#allocation8 + $0x90] sm:$0xff]
    %v6515 = vld [vmem:[#allocation8 + $0x98] sm:$0xff]
    %v6516 = vld [vmem:[#allocation8 + $0xa0] sm:$0xff]
    %v6517 = vld [vmem:[#allocation8 + $0xa8] sm:$0xff]
    %v6518 = vld [vmem:[#allocation8 + $0xb0] sm:$0xff]
    %v6519 = vld [vmem:[#allocation8 + $0xb8] sm:$0xff]
    %v6520 = vld [vmem:[#allocation8 + $0xc0] sm:$0xff]
    %v6521 = vld [vmem:[#allocation8 + $0xc8] sm:$0xff]
    %v6522 = vld [vmem:[#allocation8 + $0xd0] sm:$0xff]
    %v6523 = vld [vmem:[#allocation8 + $0xd8] sm:$0xff]
    %v6524 = vld [vmem:[#allocation8 + $0xe0] sm:$0xff]
    %v6525 = vld [vmem:[#allocation8 + $0xe8] sm:$0xff]
    %v6526 = vld [vmem:[#allocation8 + $0xf0] sm:$0xff]
    %v6527 = vld [vmem:[#allocation8 + $0xf8] sm:$0xff]
    %v6560 = vunpack.c.l.b16 %v6496
    %v6561 = vunpack.c.h.b16 %v6496
    %v6562 = vunpack.c.l.b16 %v6497
    %v6563 = vunpack.c.h.b16 %v6497
    %v6564 = vunpack.c.l.b16 %v6498
    %v6565 = vunpack.c.h.b16 %v6498
    %v6566 = vunpack.c.l.b16 %v6499
    %v6567 = vunpack.c.h.b16 %v6499
    %v6568 = vunpack.c.l.b16 %v6500
    %v6569 = vunpack.c.h.b16 %v6500
    %v6570 = vunpack.c.l.b16 %v6501
    %v6571 = vunpack.c.h.b16 %v6501
    %v6572 = vunpack.c.l.b16 %v6502
    %v6573 = vunpack.c.h.b16 %v6502
    %v6574 = vunpack.c.l.b16 %v6503
    %v6575 = vunpack.c.h.b16 %v6503
    %v6576 = vunpack.c.l.b16 %v6504
    %v6577 = vunpack.c.h.b16 %v6504
    %v6578 = vunpack.c.l.b16 %v6505
    %v6579 = vunpack.c.h.b16 %v6505
    %v6580 = vunpack.c.l.b16 %v6506
    %v6581 = vunpack.c.h.b16 %v6506
    %v6582 = vunpack.c.l.b16 %v6507
    %v6583 = vunpack.c.h.b16 %v6507
    %v6584 = vunpack.c.l.b16 %v6508
    %v6585 = vunpack.c.h.b16 %v6508
    %v6586 = vunpack.c.l.b16 %v6509
    %v6587 = vunpack.c.h.b16 %v6509
    %v6588 = vunpack.c.l.b16 %v6510
    %v6589 = vunpack.c.h.b16 %v6510
    %v6590 = vunpack.c.l.b16 %v6511
    %v6591 = vunpack.c.h.b16 %v6511
    %v6592 = vunpack.c.l.b16 %v6512
    %v6593 = vunpack.c.h.b16 %v6512
    %v6594 = vunpack.c.l.b16 %v6513
    %v6595 = vunpack.c.h.b16 %v6513
    %v6596 = vunpack.c.l.b16 %v6514
    %v6597 = vunpack.c.h.b16 %v6514
    %v6598 = vunpack.c.l.b16 %v6515
    %v6599 = vunpack.c.h.b16 %v6515
    %v6600 = vunpack.c.l.b16 %v6516
    %v6601 = vunpack.c.h.b16 %v6516
    %v6602 = vunpack.c.l.b16 %v6517
    %v6603 = vunpack.c.h.b16 %v6517
    %v6604 = vunpack.c.l.b16 %v6518
    %v6605 = vunpack.c.h.b16 %v6518
    %v6606 = vunpack.c.l.b16 %v6519
    %v6607 = vunpack.c.h.b16 %v6519
    %v6608 = vunpack.c.l.b16 %v6520
    %v6609 = vunpack.c.h.b16 %v6520
    %v6610 = vunpack.c.l.b16 %v6521
    %v6611 = vunpack.c.h.b16 %v6521
    %v6612 = vunpack.c.l.b16 %v6522
    %v6613 = vunpack.c.h.b16 %v6522
    %v6614 = vunpack.c.l.b16 %v6523
    %v6615 = vunpack.c.h.b16 %v6523
    %v6616 = vunpack.c.l.b16 %v6524
    %v6617 = vunpack.c.h.b16 %v6524
    %v6618 = vunpack.c.l.b16 %v6525
    %v6619 = vunpack.c.h.b16 %v6525
    %v6620 = vunpack.c.l.b16 %v6526
    %v6621 = vunpack.c.h.b16 %v6526
    %v6622 = vunpack.c.l.b16 %v6527
    %v6623 = vunpack.c.h.b16 %v6527
    %v6624 = vpack.c.b16 %v6564, %v6560
    %v6625 = vpack.c.b16 %v6565, %v6561
    %v6626 = vpack.c.b16 %v6566, %v6562
    %v6627 = vpack.c.b16 %v6567, %v6563
    %v6628 = vpack.c.b16 %v6572, %v6568
    %v6629 = vpack.c.b16 %v6573, %v6569
    %v6630 = vpack.c.b16 %v6574, %v6570
    %v6631 = vpack.c.b16 %v6575, %v6571
    %v6632 = vpack.c.b16 %v6580, %v6576
    %v6633 = vpack.c.b16 %v6581, %v6577
    %v6634 = vpack.c.b16 %v6582, %v6578
    %v6635 = vpack.c.b16 %v6583, %v6579
    %v6636 = vpack.c.b16 %v6588, %v6584
    %v6637 = vpack.c.b16 %v6589, %v6585
    %v6638 = vpack.c.b16 %v6590, %v6586
    %v6639 = vpack.c.b16 %v6591, %v6587
    %v6640 = vpack.c.b16 %v6596, %v6592
    %v6641 = vpack.c.b16 %v6597, %v6593
    %v6642 = vpack.c.b16 %v6598, %v6594
    %v6643 = vpack.c.b16 %v6599, %v6595
    %v6644 = vpack.c.b16 %v6604, %v6600
    %v6645 = vpack.c.b16 %v6605, %v6601
    %v6646 = vpack.c.b16 %v6606, %v6602
    %v6647 = vpack.c.b16 %v6607, %v6603
    %v6648 = vpack.c.b16 %v6612, %v6608
    %v6649 = vpack.c.b16 %v6613, %v6609
    %v6650 = vpack.c.b16 %v6614, %v6610
    %v6651 = vpack.c.b16 %v6615, %v6611
    %v6652 = vpack.c.b16 %v6620, %v6616
    %v6653 = vpack.c.b16 %v6621, %v6617
    %v6654 = vpack.c.b16 %v6622, %v6618
    %v6655 = vpack.c.b16 %v6623, %v6619
    %6688 = vmatprep.subr.bf16.mxu0 %v6653
    %6689 = vmatpush1.bf16.msra.mxu0 %v6652
    %6690 = vmatprep.subr.bf16.mxu0 %v6649
    %6691 = vmatpush1.bf16.msra.mxu0 %v6648
    %6692 = vmatprep.subr.bf16.mxu0 %v6645
    %6693 = vmatpush1.bf16.msra.mxu0 %v6644
    %6694 = vmatprep.subr.bf16.mxu0 %v6641
    %6695 = vmatpush1.bf16.msra.mxu0 %v6640
    %6696 = vmatprep.subr.bf16.mxu0 %v6637
    %6697 = vmatpush1.bf16.msra.mxu0 %v6636
    %6698 = vmatprep.subr.bf16.mxu0 %v6633
    %6699 = vmatpush1.bf16.msra.mxu0 %v6632
    %6700 = vmatprep.subr.bf16.mxu0 %v6629
    %6701 = vmatpush1.bf16.msra.mxu0 %v6628
    %6702 = vmatprep.subr.bf16.mxu0 %v6625
    %6703 = vmatpush1.bf16.msra.mxu0 %v6624
    %6704 = vmatprep.subr.bf16.mxu0 0
    %6705 = vmatpush2.bf16.msra.mxu0 0
    %6706 = vmatprep.subr.bf16.mxu0 0
    %6707 = vmatpush2.bf16.msra.mxu0 0
    %6708 = vmatprep.subr.bf16.mxu0 0
    %6709 = vmatpush2.bf16.msra.mxu0 0
    %6710 = vmatprep.subr.bf16.mxu0 0
    %6711 = vmatpush2.bf16.msra.mxu0 0
    %6712 = vmatprep.subr.bf16.mxu0 0
    %6713 = vmatpush2.bf16.msra.mxu0 0
    %6714 = vmatprep.subr.bf16.mxu0 0
    %6715 = vmatpush2.bf16.msra.mxu0 0
    %6716 = vmatprep.subr.bf16.mxu0 0
    %6717 = vmatpush2.bf16.msra.mxu0 0
    %6718 = vmatprep.subr.bf16.mxu0 0
    %6719 = vmatpush2.bf16.msra.mxu0 0
    %6720 = vmatprep.mubr.bf16.mxu0 0
    %6721 = vmatmul.mubr.bf16.gmra.mxu0 %v5978
    %v6722 = vpop.f32.mrf.mxu0
    %v6723 = vadd.f32 0.0, %v6722
    %v6724 = vpop.f32.mrf.mxu0
    %v6725 = vadd.f32 0.0, %v6724
    %v6726 = vpop.f32.mrf.mxu0
    %v6727 = vpop.f32.mrf.mxu0
    %6728 = vdwg.mxu0
    %6729 = vmatprep.subr.bf16.mxu0 %v6655
    %6730 = vmatpush1.bf16.msra.mxu0 %v6654
    %6731 = vmatprep.subr.bf16.mxu0 %v6651
    %6732 = vmatpush1.bf16.msra.mxu0 %v6650
    %6733 = vmatprep.subr.bf16.mxu0 %v6647
    %6734 = vmatpush1.bf16.msra.mxu0 %v6646
    %6735 = vmatprep.subr.bf16.mxu0 %v6643
    %6736 = vmatpush1.bf16.msra.mxu0 %v6642
    %6737 = vmatprep.subr.bf16.mxu0 %v6639
    %6738 = vmatpush1.bf16.msra.mxu0 %v6638
    %6739 = vmatprep.subr.bf16.mxu0 %v6635
    %6740 = vmatpush1.bf16.msra.mxu0 %v6634
    %6741 = vmatprep.subr.bf16.mxu0 %v6631
    %6742 = vmatpush1.bf16.msra.mxu0 %v6630
    %6743 = vmatprep.subr.bf16.mxu0 %v6627
    %6744 = vmatpush1.bf16.msra.mxu0 %v6626
    %6745 = vmatprep.subr.bf16.mxu0 0
    %6746 = vmatpush2.bf16.msra.mxu0 0
    %6747 = vmatprep.subr.bf16.mxu0 0
    %6748 = vmatpush2.bf16.msra.mxu0 0
    %6749 = vmatprep.subr.bf16.mxu0 0
    %6750 = vmatpush2.bf16.msra.mxu0 0
    %6751 = vmatprep.subr.bf16.mxu0 0
    %6752 = vmatpush2.bf16.msra.mxu0 0
    %6753 = vmatprep.subr.bf16.mxu0 0
    %6754 = vmatpush2.bf16.msra.mxu0 0
    %6755 = vmatprep.subr.bf16.mxu0 0
    %6756 = vmatpush2.bf16.msra.mxu0 0
    %6757 = vmatprep.subr.bf16.mxu0 0
    %6758 = vmatpush2.bf16.msra.mxu0 0
    %6759 = vmatprep.subr.bf16.mxu0 0
    %6760 = vmatpush2.bf16.msra.mxu0 0
    %6761 = vmatprep.mubr.bf16.mxu0 0
    %6762 = vmatmul.mubr.bf16.gmra.mxu0 %v5978
    %v6763 = vpop.f32.mrf.mxu0
    %v6764 = vadd.f32 0.0, %v6763
    %v6765 = vpop.f32.mrf.mxu0
    %v6766 = vadd.f32 0.0, %v6765
    %v6767 = vpop.f32.mrf.mxu0
    %v6768 = vpop.f32.mrf.mxu0
    %6769 = vdwg.mxu0
    %v6770 = vadd.f32 %v6492, %v6723
    %v6771 = vadd.f32 %v6493, %v6725
    %v6772 = vadd.f32 %v6494, %v6764
    %v6773 = vadd.f32 %v6495, %v6766
    %v6774 = vxor.u32 %v6770, 2147483648
    %v6775 = vxor.u32 %v6771, 2147483648
    %v6776 = vxor.u32 %v6772, 2147483648
    %v6777 = vmul.f32 %v6774, 1.442695
    %v6778 = vpow.pop %v6777
    %v6779 = vmul.f32 %v6775, 1.442695
    %v6780 = vpow.pop %v6779
    %v6781 = vmul.f32 %v6776, 1.442695
    %v6782 = vpow.pop %v6781
    %v6783 = vadd.f32 %v6778, 1.0
    %v6784 = vadd.f32 %v6780, 1.0
    %v6785 = vadd.f32 %v6782, 1.0
    %v6786 = vrcp.pop %v6783
    %v6787 = vmul.f32 1.0, %v6786
    %v6788 = vrcp.pop %v6784
    %v6789 = vmul.f32 1.0, %v6788
    %v6790 = vrcp.pop %v6785
    %v6791 = vmul.f32 1.0, %v6790
    %v6792 = vtanh.pop %v6773
    %v6793 = vmul.f32 %v6789, %v5459
    %v6794 = vmul.f32 %v6787, %v6792
    %v6795 = vadd.f32 %v6793, %v6794
    %v6796 = vtanh.pop %v6795
    %v6797 = vmul.f32 %v6791, %v6796
    %v6798 = vpack.c.bf16 %v6490, %v6490
    %v6799 = vpack.c.bf16 %v5975, %v5975
    %v6800 = vld [vmem:[%s1455] sm:$0xff]
    %v6801 = vld [vmem:[%s1455 + $0x8] sm:$0xff]
    %v6802 = vld [vmem:[%s1455 + $0x10] sm:$0xff]
    %v6803 = vld [vmem:[%s1455 + $0x18] sm:$0xff]
    %v6804 = vld [vmem:[%s1455 + $0x20] sm:$0xff]
    %v6805 = vld [vmem:[%s1455 + $0x28] sm:$0xff]
    %v6806 = vld [vmem:[%s1455 + $0x30] sm:$0xff]
    %v6807 = vld [vmem:[%s1455 + $0x38] sm:$0xff]
    %v6808 = vld [vmem:[%s1455 + $0x40] sm:$0xff]
    %v6809 = vld [vmem:[%s1455 + $0x48] sm:$0xff]
    %v6810 = vld [vmem:[%s1455 + $0x50] sm:$0xff]
    %v6811 = vld [vmem:[%s1455 + $0x58] sm:$0xff]
    %v6812 = vld [vmem:[%s1455 + $0x60] sm:$0xff]
    %v6813 = vld [vmem:[%s1455 + $0x68] sm:$0xff]
    %v6814 = vld [vmem:[%s1455 + $0x70] sm:$0xff]
    %v6815 = vld [vmem:[%s1455 + $0x78] sm:$0xff]
    %v6816 = vld [vmem:[%s1455 + $0x80] sm:$0xff]
    %v6817 = vld [vmem:[%s1455 + $0x88] sm:$0xff]
    %v6818 = vld [vmem:[%s1455 + $0x90] sm:$0xff]
    %v6819 = vld [vmem:[%s1455 + $0x98] sm:$0xff]
    %v6820 = vld [vmem:[%s1455 + $0xa0] sm:$0xff]
    %v6821 = vld [vmem:[%s1455 + $0xa8] sm:$0xff]
    %v6822 = vld [vmem:[%s1455 + $0xb0] sm:$0xff]
    %v6823 = vld [vmem:[%s1455 + $0xb8] sm:$0xff]
    %v6824 = vld [vmem:[%s1455 + $0xc0] sm:$0xff]
    %v6825 = vld [vmem:[%s1455 + $0xc8] sm:$0xff]
    %v6826 = vld [vmem:[%s1455 + $0xd0] sm:$0xff]
    %v6827 = vld [vmem:[%s1455 + $0xd8] sm:$0xff]
    %v6828 = vld [vmem:[%s1455 + $0xe0] sm:$0xff]
    %v6829 = vld [vmem:[%s1455 + $0xe8] sm:$0xff]
    %v6830 = vld [vmem:[%s1455 + $0xf0] sm:$0xff]
    %v6831 = vld [vmem:[%s1455 + $0xf8] sm:$0xff]
    %v6832 = vld [vmem:[%s1455 + $0x100] sm:$0xff]
    %v6833 = vld [vmem:[%s1455 + $0x108] sm:$0xff]
    %v6834 = vld [vmem:[%s1455 + $0x110] sm:$0xff]
    %v6835 = vld [vmem:[%s1455 + $0x118] sm:$0xff]
    %v6836 = vld [vmem:[%s1455 + $0x120] sm:$0xff]
    %v6837 = vld [vmem:[%s1455 + $0x128] sm:$0xff]
    %v6838 = vld [vmem:[%s1455 + $0x130] sm:$0xff]
    %v6839 = vld [vmem:[%s1455 + $0x138] sm:$0xff]
    %v6840 = vld [vmem:[%s1455 + $0x140] sm:$0xff]
    %v6841 = vld [vmem:[%s1455 + $0x148] sm:$0xff]
    %v6842 = vld [vmem:[%s1455 + $0x150] sm:$0xff]
    %v6843 = vld [vmem:[%s1455 + $0x158] sm:$0xff]
    %v6844 = vld [vmem:[%s1455 + $0x160] sm:$0xff]
    %v6845 = vld [vmem:[%s1455 + $0x168] sm:$0xff]
    %v6846 = vld [vmem:[%s1455 + $0x170] sm:$0xff]
    %v6847 = vld [vmem:[%s1455 + $0x178] sm:$0xff]
    %v6848 = vld [vmem:[%s1455 + $0x180] sm:$0xff]
    %v6849 = vld [vmem:[%s1455 + $0x188] sm:$0xff]
    %v6850 = vld [vmem:[%s1455 + $0x190] sm:$0xff]
    %v6851 = vld [vmem:[%s1455 + $0x198] sm:$0xff]
    %v6852 = vld [vmem:[%s1455 + $0x1a0] sm:$0xff]
    %v6853 = vld [vmem:[%s1455 + $0x1a8] sm:$0xff]
    %v6854 = vld [vmem:[%s1455 + $0x1b0] sm:$0xff]
    %v6855 = vld [vmem:[%s1455 + $0x1b8] sm:$0xff]
    %v6856 = vld [vmem:[%s1455 + $0x1c0] sm:$0xff]
    %v6857 = vld [vmem:[%s1455 + $0x1c8] sm:$0xff]
    %v6858 = vld [vmem:[%s1455 + $0x1d0] sm:$0xff]
    %v6859 = vld [vmem:[%s1455 + $0x1d8] sm:$0xff]
    %v6860 = vld [vmem:[%s1455 + $0x1e0] sm:$0xff]
    %v6861 = vld [vmem:[%s1455 + $0x1e8] sm:$0xff]
    %v6862 = vld [vmem:[%s1455 + $0x1f0] sm:$0xff]
    %v6863 = vld [vmem:[%s1455 + $0x1f8] sm:$0xff]
    %v6864 = vld [vmem:[%s1520] sm:$0xf]
    %v6866 = vlaneseq
    %v6867 = vshrl.u32 %v6866, 7
    %v6868 = vsub.s32 0, %v6867
    %v6869 = vrot.slane %v6864, %v6868
    %v6870 = vlaneseq
    %v6871 = vshrl.u32 %v6870, 7
    %v6872 = vsub.s32 1, %v6871
    %v6873 = vrot.slane %v6864, %v6872
    %v6874 = vlaneseq
    %v6875 = vshrl.u32 %v6874, 7
    %v6876 = vsub.s32 2, %v6875
    %v6877 = vrot.slane %v6864, %v6876
    %v6878 = vlaneseq
    %v6879 = vshrl.u32 %v6878, 7
    %v6880 = vsub.s32 3, %v6879
    %v6881 = vrot.slane %v6864, %v6880
    %v6950 = vunpack.c.l.b16 %v6800
    %v6951 = vunpack.c.h.b16 %v6800
    %v6952 = vunpack.c.l.b16 %v6801
    %v6953 = vunpack.c.h.b16 %v6801
    %v6954 = vunpack.c.l.b16 %v6802
    %v6955 = vunpack.c.h.b16 %v6802
    %v6956 = vunpack.c.l.b16 %v6803
    %v6957 = vunpack.c.h.b16 %v6803
    %v6958 = vunpack.c.l.b16 %v6804
    %v6959 = vunpack.c.h.b16 %v6804
    %v6960 = vunpack.c.l.b16 %v6805
    %v6961 = vunpack.c.h.b16 %v6805
    %v6962 = vunpack.c.l.b16 %v6806
    %v6963 = vunpack.c.h.b16 %v6806
    %v6964 = vunpack.c.l.b16 %v6807
    %v6965 = vunpack.c.h.b16 %v6807
    %v6966 = vunpack.c.l.b16 %v6808
    %v6967 = vunpack.c.h.b16 %v6808
    %v6968 = vunpack.c.l.b16 %v6809
    %v6969 = vunpack.c.h.b16 %v6809
    %v6970 = vunpack.c.l.b16 %v6810
    %v6971 = vunpack.c.h.b16 %v6810
    %v6972 = vunpack.c.l.b16 %v6811
    %v6973 = vunpack.c.h.b16 %v6811
    %v6974 = vunpack.c.l.b16 %v6812
    %v6975 = vunpack.c.h.b16 %v6812
    %v6976 = vunpack.c.l.b16 %v6813
    %v6977 = vunpack.c.h.b16 %v6813
    %v6978 = vunpack.c.l.b16 %v6814
    %v6979 = vunpack.c.h.b16 %v6814
    %v6980 = vunpack.c.l.b16 %v6815
    %v6981 = vunpack.c.h.b16 %v6815
    %v6982 = vunpack.c.l.b16 %v6816
    %v6983 = vunpack.c.h.b16 %v6816
    %v6984 = vunpack.c.l.b16 %v6817
    %v6985 = vunpack.c.h.b16 %v6817
    %v6986 = vunpack.c.l.b16 %v6818
    %v6987 = vunpack.c.h.b16 %v6818
    %v6988 = vunpack.c.l.b16 %v6819
    %v6989 = vunpack.c.h.b16 %v6819
    %v6990 = vunpack.c.l.b16 %v6820
    %v6991 = vunpack.c.h.b16 %v6820
    %v6992 = vunpack.c.l.b16 %v6821
    %v6993 = vunpack.c.h.b16 %v6821
    %v6994 = vunpack.c.l.b16 %v6822
    %v6995 = vunpack.c.h.b16 %v6822
    %v6996 = vunpack.c.l.b16 %v6823
    %v6997 = vunpack.c.h.b16 %v6823
    %v6998 = vunpack.c.l.b16 %v6824
    %v6999 = vunpack.c.h.b16 %v6824
    %v7000 = vunpack.c.l.b16 %v6825
    %v7001 = vunpack.c.h.b16 %v6825
    %v7002 = vunpack.c.l.b16 %v6826
    %v7003 = vunpack.c.h.b16 %v6826
    %v7004 = vunpack.c.l.b16 %v6827
    %v7005 = vunpack.c.h.b16 %v6827
    %v7006 = vunpack.c.l.b16 %v6828
    %v7007 = vunpack.c.h.b16 %v6828
    %v7008 = vunpack.c.l.b16 %v6829
    %v7009 = vunpack.c.h.b16 %v6829
    %v7010 = vunpack.c.l.b16 %v6830
    %v7011 = vunpack.c.h.b16 %v6830
    %v7012 = vunpack.c.l.b16 %v6831
    %v7013 = vunpack.c.h.b16 %v6831
    %v7014 = vunpack.c.l.b16 %v6832
    %v7015 = vunpack.c.h.b16 %v6832
    %v7016 = vunpack.c.l.b16 %v6833
    %v7017 = vunpack.c.h.b16 %v6833
    %v7018 = vunpack.c.l.b16 %v6834
    %v7019 = vunpack.c.h.b16 %v6834
    %v7020 = vunpack.c.l.b16 %v6835
    %v7021 = vunpack.c.h.b16 %v6835
    %v7022 = vunpack.c.l.b16 %v6836
    %v7023 = vunpack.c.h.b16 %v6836
    %v7024 = vunpack.c.l.b16 %v6837
    %v7025 = vunpack.c.h.b16 %v6837
    %v7026 = vunpack.c.l.b16 %v6838
    %v7027 = vunpack.c.h.b16 %v6838
    %v7028 = vunpack.c.l.b16 %v6839
    %v7029 = vunpack.c.h.b16 %v6839
    %v7030 = vunpack.c.l.b16 %v6840
    %v7031 = vunpack.c.h.b16 %v6840
    %v7032 = vunpack.c.l.b16 %v6841
    %v7033 = vunpack.c.h.b16 %v6841
    %v7034 = vunpack.c.l.b16 %v6842
    %v7035 = vunpack.c.h.b16 %v6842
    %v7036 = vunpack.c.l.b16 %v6843
    %v7037 = vunpack.c.h.b16 %v6843
    %v7038 = vunpack.c.l.b16 %v6844
    %v7039 = vunpack.c.h.b16 %v6844
    %v7040 = vunpack.c.l.b16 %v6845
    %v7041 = vunpack.c.h.b16 %v6845
    %v7042 = vunpack.c.l.b16 %v6846
    %v7043 = vunpack.c.h.b16 %v6846
    %v7044 = vunpack.c.l.b16 %v6847
    %v7045 = vunpack.c.h.b16 %v6847
    %v7046 = vunpack.c.l.b16 %v6848
    %v7047 = vunpack.c.h.b16 %v6848
    %v7048 = vunpack.c.l.b16 %v6849
    %v7049 = vunpack.c.h.b16 %v6849
    %v7050 = vunpack.c.l.b16 %v6850
    %v7051 = vunpack.c.h.b16 %v6850
    %v7052 = vunpack.c.l.b16 %v6851
    %v7053 = vunpack.c.h.b16 %v6851
    %v7054 = vunpack.c.l.b16 %v6852
    %v7055 = vunpack.c.h.b16 %v6852
    %v7056 = vunpack.c.l.b16 %v6853
    %v7057 = vunpack.c.h.b16 %v6853
    %v7058 = vunpack.c.l.b16 %v6854
    %v7059 = vunpack.c.h.b16 %v6854
    %v7060 = vunpack.c.l.b16 %v6855
    %v7061 = vunpack.c.h.b16 %v6855
    %v7062 = vunpack.c.l.b16 %v6856
    %v7063 = vunpack.c.h.b16 %v6856
    %v7064 = vunpack.c.l.b16 %v6857
    %v7065 = vunpack.c.h.b16 %v6857
    %v7066 = vunpack.c.l.b16 %v6858
    %v7067 = vunpack.c.h.b16 %v6858
    %v7068 = vunpack.c.l.b16 %v6859
    %v7069 = vunpack.c.h.b16 %v6859
    %v7070 = vunpack.c.l.b16 %v6860
    %v7071 = vunpack.c.h.b16 %v6860
    %v7072 = vunpack.c.l.b16 %v6861
    %v7073 = vunpack.c.h.b16 %v6861
    %v7074 = vunpack.c.l.b16 %v6862
    %v7075 = vunpack.c.h.b16 %v6862
    %v7076 = vunpack.c.l.b16 %v6863
    %v7077 = vunpack.c.h.b16 %v6863
    %v7078 = vpack.c.b16 %v6954, %v6950
    %v7079 = vpack.c.b16 %v6955, %v6951
    %v7080 = vpack.c.b16 %v6956, %v6952
    %v7081 = vpack.c.b16 %v6957, %v6953
    %v7082 = vpack.c.b16 %v6962, %v6958
    %v7083 = vpack.c.b16 %v6963, %v6959
    %v7084 = vpack.c.b16 %v6964, %v6960
    %v7085 = vpack.c.b16 %v6965, %v6961
    %v7086 = vpack.c.b16 %v6970, %v6966
    %v7087 = vpack.c.b16 %v6971, %v6967
    %v7088 = vpack.c.b16 %v6972, %v6968
    %v7089 = vpack.c.b16 %v6973, %v6969
    %v7090 = vpack.c.b16 %v6978, %v6974
    %v7091 = vpack.c.b16 %v6979, %v6975
    %v7092 = vpack.c.b16 %v6980, %v6976
    %v7093 = vpack.c.b16 %v6981, %v6977
    %v7094 = vpack.c.b16 %v6986, %v6982
    %v7095 = vpack.c.b16 %v6987, %v6983
    %v7096 = vpack.c.b16 %v6988, %v6984
    %v7097 = vpack.c.b16 %v6989, %v6985
    %v7098 = vpack.c.b16 %v6994, %v6990
    %v7099 = vpack.c.b16 %v6995, %v6991
    %v7100 = vpack.c.b16 %v6996, %v6992
    %v7101 = vpack.c.b16 %v6997, %v6993
    %v7102 = vpack.c.b16 %v7002, %v6998
    %v7103 = vpack.c.b16 %v7003, %v6999
    %v7104 = vpack.c.b16 %v7004, %v7000
    %v7105 = vpack.c.b16 %v7005, %v7001
    %v7106 = vpack.c.b16 %v7010, %v7006
    %v7107 = vpack.c.b16 %v7011, %v7007
    %v7108 = vpack.c.b16 %v7012, %v7008
    %v7109 = vpack.c.b16 %v7013, %v7009
    %v7110 = vpack.c.b16 %v7018, %v7014
    %v7111 = vpack.c.b16 %v7019, %v7015
    %v7112 = vpack.c.b16 %v7020, %v7016
    %v7113 = vpack.c.b16 %v7021, %v7017
    %v7114 = vpack.c.b16 %v7026, %v7022
    %v7115 = vpack.c.b16 %v7027, %v7023
    %v7116 = vpack.c.b16 %v7028, %v7024
    %v7117 = vpack.c.b16 %v7029, %v7025
    %v7118 = vpack.c.b16 %v7034, %v7030
    %v7119 = vpack.c.b16 %v7035, %v7031
    %v7120 = vpack.c.b16 %v7036, %v7032
    %v7121 = vpack.c.b16 %v7037, %v7033
    %v7122 = vpack.c.b16 %v7042, %v7038
    %v7123 = vpack.c.b16 %v7043, %v7039
    %v7124 = vpack.c.b16 %v7044, %v7040
    %v7125 = vpack.c.b16 %v7045, %v7041
    %v7126 = vpack.c.b16 %v7050, %v7046
    %v7127 = vpack.c.b16 %v7051, %v7047
    %v7128 = vpack.c.b16 %v7052, %v7048
    %v7129 = vpack.c.b16 %v7053, %v7049
    %v7130 = vpack.c.b16 %v7058, %v7054
    %v7131 = vpack.c.b16 %v7059, %v7055
    %v7132 = vpack.c.b16 %v7060, %v7056
    %v7133 = vpack.c.b16 %v7061, %v7057
    %v7134 = vpack.c.b16 %v7066, %v7062
    %v7135 = vpack.c.b16 %v7067, %v7063
    %v7136 = vpack.c.b16 %v7068, %v7064
    %v7137 = vpack.c.b16 %v7069, %v7065
    %v7138 = vpack.c.b16 %v7074, %v7070
    %v7139 = vpack.c.b16 %v7075, %v7071
    %v7140 = vpack.c.b16 %v7076, %v7072
    %v7141 = vpack.c.b16 %v7077, %v7073
    %7206 = vmatprep.subr.bf16.mxu0 %v7107
    %7207 = vmatpush1.bf16.msra.mxu0 %v7106
    %7208 = vmatprep.subr.bf16.mxu0 %v7103
    %7209 = vmatpush1.bf16.msra.mxu0 %v7102
    %7210 = vmatprep.subr.bf16.mxu0 %v7099
    %7211 = vmatpush1.bf16.msra.mxu0 %v7098
    %7212 = vmatprep.subr.bf16.mxu0 %v7095
    %7213 = vmatpush1.bf16.msra.mxu0 %v7094
    %7214 = vmatprep.subr.bf16.mxu0 %v7091
    %7215 = vmatpush1.bf16.msra.mxu0 %v7090
    %7216 = vmatprep.subr.bf16.mxu0 %v7087
    %7217 = vmatpush1.bf16.msra.mxu0 %v7086
    %7218 = vmatprep.subr.bf16.mxu0 %v7083
    %7219 = vmatpush1.bf16.msra.mxu0 %v7082
    %7220 = vmatprep.subr.bf16.mxu0 %v7079
    %7221 = vmatpush1.bf16.msra.mxu0 %v7078
    %7222 = vmatprep.subr.bf16.mxu0 %v7139
    %7223 = vmatpush2.bf16.msra.mxu0 %v7138
    %7224 = vmatprep.subr.bf16.mxu0 %v7135
    %7225 = vmatpush2.bf16.msra.mxu0 %v7134
    %7226 = vmatprep.subr.bf16.mxu0 %v7131
    %7227 = vmatpush2.bf16.msra.mxu0 %v7130
    %7228 = vmatprep.subr.bf16.mxu0 %v7127
    %7229 = vmatpush2.bf16.msra.mxu0 %v7126
    %7230 = vmatprep.subr.bf16.mxu0 %v7123
    %7231 = vmatpush2.bf16.msra.mxu0 %v7122
    %7232 = vmatprep.subr.bf16.mxu0 %v7119
    %7233 = vmatpush2.bf16.msra.mxu0 %v7118
    %7234 = vmatprep.subr.bf16.mxu0 %v7115
    %7235 = vmatpush2.bf16.msra.mxu0 %v7114
    %7236 = vmatprep.subr.bf16.mxu0 %v7111
    %7237 = vmatpush2.bf16.msra.mxu0 %v7110
    %7238 = vmatprep.mubr.bf16.mxu0 %v6799
    %7239 = vmatmul.mubr.bf16.gmra.mxu0 %v6798
    %v7240 = vpop.f32.mrf.mxu0
    %v7241 = vadd.f32 %v6869, %v7240
    %v7242 = vpop.f32.mrf.mxu0
    %v7243 = vadd.f32 %v6873, %v7242
    %v7244 = vpop.f32.mrf.mxu0
    %v7245 = vpop.f32.mrf.mxu0
    %7246 = vdwg.mxu0
    %7247 = vmatprep.subr.bf16.mxu0 %v7109
    %7248 = vmatpush1.bf16.msra.mxu0 %v7108
    %7249 = vmatprep.subr.bf16.mxu0 %v7105
    %7250 = vmatpush1.bf16.msra.mxu0 %v7104
    %7251 = vmatprep.subr.bf16.mxu0 %v7101
    %7252 = vmatpush1.bf16.msra.mxu0 %v7100
    %7253 = vmatprep.subr.bf16.mxu0 %v7097
    %7254 = vmatpush1.bf16.msra.mxu0 %v7096
    %7255 = vmatprep.subr.bf16.mxu0 %v7093
    %7256 = vmatpush1.bf16.msra.mxu0 %v7092
    %7257 = vmatprep.subr.bf16.mxu0 %v7089
    %7258 = vmatpush1.bf16.msra.mxu0 %v7088
    %7259 = vmatprep.subr.bf16.mxu0 %v7085
    %7260 = vmatpush1.bf16.msra.mxu0 %v7084
    %7261 = vmatprep.subr.bf16.mxu0 %v7081
    %7262 = vmatpush1.bf16.msra.mxu0 %v7080
    %7263 = vmatprep.subr.bf16.mxu0 %v7141
    %7264 = vmatpush2.bf16.msra.mxu0 %v7140
    %7265 = vmatprep.subr.bf16.mxu0 %v7137
    %7266 = vmatpush2.bf16.msra.mxu0 %v7136
    %7267 = vmatprep.subr.bf16.mxu0 %v7133
    %7268 = vmatpush2.bf16.msra.mxu0 %v7132
    %7269 = vmatprep.subr.bf16.mxu0 %v7129
    %7270 = vmatpush2.bf16.msra.mxu0 %v7128
    %7271 = vmatprep.subr.bf16.mxu0 %v7125
    %7272 = vmatpush2.bf16.msra.mxu0 %v7124
    %7273 = vmatprep.subr.bf16.mxu0 %v7121
    %7274 = vmatpush2.bf16.msra.mxu0 %v7120
    %7275 = vmatprep.subr.bf16.mxu0 %v7117
    %7276 = vmatpush2.bf16.msra.mxu0 %v7116
    %7277 = vmatprep.subr.bf16.mxu0 %v7113
    %7278 = vmatpush2.bf16.msra.mxu0 %v7112
    %7279 = vmatprep.mubr.bf16.mxu0 %v6799
    %7280 = vmatmul.mubr.bf16.gmra.mxu0 %v6798
    %v7281 = vpop.f32.mrf.mxu0
    %v7282 = vadd.f32 %v6877, %v7281
    %v7283 = vpop.f32.mrf.mxu0
    %v7284 = vadd.f32 %v6881, %v7283
    %v7285 = vpop.f32.mrf.mxu0
    %v7286 = vpop.f32.mrf.mxu0
    %7287 = vdwg.mxu0
    %v7288 = vxor.u32 %v7241, 2147483648
    %v7289 = vxor.u32 %v7243, 2147483648
    %v7290 = vxor.u32 %v7282, 2147483648
    %v7291 = vmul.f32 %v7288, 1.442695
    %v7292 = vpow.pop %v7291
    %v7293 = vmul.f32 %v7289, 1.442695
    %v7294 = vpow.pop %v7293
    %v7295 = vmul.f32 %v7290, 1.442695
    %v7296 = vpow.pop %v7295
    %v7297 = vadd.f32 %v7292, 1.0
    %v7298 = vadd.f32 %v7294, 1.0
    %v7299 = vadd.f32 %v7296, 1.0
    %v7300 = vrcp.pop %v7297
    %v7301 = vmul.f32 1.0, %v7300
    %v7302 = vrcp.pop %v7298
    %v7303 = vmul.f32 1.0, %v7302
    %v7304 = vrcp.pop %v7299
    %v7305 = vmul.f32 1.0, %v7304
    %v7306 = vtanh.pop %v7284
    %v7307 = vmul.f32 %v7303, %v5973
    %v7308 = vmul.f32 %v7301, %v7306
    %v7309 = vadd.f32 %v7307, %v7308
    %v7310 = vtanh.pop %v7309
    %v7311 = vmul.f32 %v7305, %v7310
    %s7312 = scalar_lea.vmem [#allocation14], 32
    %7313 = vst [vmem:[%s7312] sm:$0xff] %v7311
    %v7314 = vpack.c.bf16 %v6797, %v6797
    %v7315 = vld [vmem:[#allocation9] sm:$0xff]
    %v7316 = vld [vmem:[#allocation9 + $0x8] sm:$0xff]
    %v7317 = vld [vmem:[#allocation9 + $0x10] sm:$0xff]
    %v7318 = vld [vmem:[#allocation9 + $0x18] sm:$0xff]
    %v7319 = vld [vmem:[#allocation9 + $0x20] sm:$0xff]
    %v7320 = vld [vmem:[#allocation9 + $0x28] sm:$0xff]
    %v7321 = vld [vmem:[#allocation9 + $0x30] sm:$0xff]
    %v7322 = vld [vmem:[#allocation9 + $0x38] sm:$0xff]
    %v7323 = vld [vmem:[#allocation9 + $0x40] sm:$0xff]
    %v7324 = vld [vmem:[#allocation9 + $0x48] sm:$0xff]
    %v7325 = vld [vmem:[#allocation9 + $0x50] sm:$0xff]
    %v7326 = vld [vmem:[#allocation9 + $0x58] sm:$0xff]
    %v7327 = vld [vmem:[#allocation9 + $0x60] sm:$0xff]
    %v7328 = vld [vmem:[#allocation9 + $0x68] sm:$0xff]
    %v7329 = vld [vmem:[#allocation9 + $0x70] sm:$0xff]
    %v7330 = vld [vmem:[#allocation9 + $0x78] sm:$0xff]
    %v7331 = vld [vmem:[#allocation9 + $0x80] sm:$0xff]
    %v7332 = vld [vmem:[#allocation9 + $0x88] sm:$0xff]
    %v7333 = vld [vmem:[#allocation9 + $0x90] sm:$0xff]
    %v7334 = vld [vmem:[#allocation9 + $0x98] sm:$0xff]
    %v7335 = vld [vmem:[#allocation9 + $0xa0] sm:$0xff]
    %v7336 = vld [vmem:[#allocation9 + $0xa8] sm:$0xff]
    %v7337 = vld [vmem:[#allocation9 + $0xb0] sm:$0xff]
    %v7338 = vld [vmem:[#allocation9 + $0xb8] sm:$0xff]
    %v7339 = vld [vmem:[#allocation9 + $0xc0] sm:$0xff]
    %v7340 = vld [vmem:[#allocation9 + $0xc8] sm:$0xff]
    %v7341 = vld [vmem:[#allocation9 + $0xd0] sm:$0xff]
    %v7342 = vld [vmem:[#allocation9 + $0xd8] sm:$0xff]
    %v7343 = vld [vmem:[#allocation9 + $0xe0] sm:$0xff]
    %v7344 = vld [vmem:[#allocation9 + $0xe8] sm:$0xff]
    %v7345 = vld [vmem:[#allocation9 + $0xf0] sm:$0xff]
    %v7346 = vld [vmem:[#allocation9 + $0xf8] sm:$0xff]
    %v7347 = vld [vmem:[#allocation9 + $0x100] sm:$0xff]
    %v7348 = vld [vmem:[#allocation9 + $0x108] sm:$0xff]
    %v7349 = vld [vmem:[#allocation9 + $0x110] sm:$0xff]
    %v7350 = vld [vmem:[#allocation9 + $0x118] sm:$0xff]
    %v7351 = vld [vmem:[#allocation9 + $0x120] sm:$0xff]
    %v7352 = vld [vmem:[#allocation9 + $0x128] sm:$0xff]
    %v7353 = vld [vmem:[#allocation9 + $0x130] sm:$0xff]
    %v7354 = vld [vmem:[#allocation9 + $0x138] sm:$0xff]
    %v7355 = vld [vmem:[#allocation9 + $0x140] sm:$0xff]
    %v7356 = vld [vmem:[#allocation9 + $0x148] sm:$0xff]
    %v7357 = vld [vmem:[#allocation9 + $0x150] sm:$0xff]
    %v7358 = vld [vmem:[#allocation9 + $0x158] sm:$0xff]
    %v7359 = vld [vmem:[#allocation9 + $0x160] sm:$0xff]
    %v7360 = vld [vmem:[#allocation9 + $0x168] sm:$0xff]
    %v7361 = vld [vmem:[#allocation9 + $0x170] sm:$0xff]
    %v7362 = vld [vmem:[#allocation9 + $0x178] sm:$0xff]
    %v7363 = vld [vmem:[#allocation9 + $0x180] sm:$0xff]
    %v7364 = vld [vmem:[#allocation9 + $0x188] sm:$0xff]
    %v7365 = vld [vmem:[#allocation9 + $0x190] sm:$0xff]
    %v7366 = vld [vmem:[#allocation9 + $0x198] sm:$0xff]
    %v7367 = vld [vmem:[#allocation9 + $0x1a0] sm:$0xff]
    %v7368 = vld [vmem:[#allocation9 + $0x1a8] sm:$0xff]
    %v7369 = vld [vmem:[#allocation9 + $0x1b0] sm:$0xff]
    %v7370 = vld [vmem:[#allocation9 + $0x1b8] sm:$0xff]
    %v7371 = vld [vmem:[#allocation9 + $0x1c0] sm:$0xff]
    %v7372 = vld [vmem:[#allocation9 + $0x1c8] sm:$0xff]
    %v7373 = vld [vmem:[#allocation9 + $0x1d0] sm:$0xff]
    %v7374 = vld [vmem:[#allocation9 + $0x1d8] sm:$0xff]
    %v7375 = vld [vmem:[#allocation9 + $0x1e0] sm:$0xff]
    %v7376 = vld [vmem:[#allocation9 + $0x1e8] sm:$0xff]
    %v7377 = vld [vmem:[#allocation9 + $0x1f0] sm:$0xff]
    %v7378 = vld [vmem:[#allocation9 + $0x1f8] sm:$0xff]
    %v7379 = vld [vmem:[%s890] sm:$0xf]
    %v7381 = vlaneseq
    %v7382 = vshrl.u32 %v7381, 7
    %v7383 = vsub.s32 0, %v7382
    %v7384 = vrot.slane %v7379, %v7383
    %v7385 = vlaneseq
    %v7386 = vshrl.u32 %v7385, 7
    %v7387 = vsub.s32 1, %v7386
    %v7388 = vrot.slane %v7379, %v7387
    %v7389 = vlaneseq
    %v7390 = vshrl.u32 %v7389, 7
    %v7391 = vsub.s32 2, %v7390
    %v7392 = vrot.slane %v7379, %v7391
    %v7393 = vlaneseq
    %v7394 = vshrl.u32 %v7393, 7
    %v7395 = vsub.s32 3, %v7394
    %v7396 = vrot.slane %v7379, %v7395
    %v7465 = vunpack.c.l.b16 %v7315
    %v7466 = vunpack.c.h.b16 %v7315
    %v7467 = vunpack.c.l.b16 %v7316
    %v7468 = vunpack.c.h.b16 %v7316
    %v7469 = vunpack.c.l.b16 %v7317
    %v7470 = vunpack.c.h.b16 %v7317
    %v7471 = vunpack.c.l.b16 %v7318
    %v7472 = vunpack.c.h.b16 %v7318
    %v7473 = vunpack.c.l.b16 %v7319
    %v7474 = vunpack.c.h.b16 %v7319
    %v7475 = vunpack.c.l.b16 %v7320
    %v7476 = vunpack.c.h.b16 %v7320
    %v7477 = vunpack.c.l.b16 %v7321
    %v7478 = vunpack.c.h.b16 %v7321
    %v7479 = vunpack.c.l.b16 %v7322
    %v7480 = vunpack.c.h.b16 %v7322
    %v7481 = vunpack.c.l.b16 %v7323
    %v7482 = vunpack.c.h.b16 %v7323
    %v7483 = vunpack.c.l.b16 %v7324
    %v7484 = vunpack.c.h.b16 %v7324
    %v7485 = vunpack.c.l.b16 %v7325
    %v7486 = vunpack.c.h.b16 %v7325
    %v7487 = vunpack.c.l.b16 %v7326
    %v7488 = vunpack.c.h.b16 %v7326
    %v7489 = vunpack.c.l.b16 %v7327
    %v7490 = vunpack.c.h.b16 %v7327
    %v7491 = vunpack.c.l.b16 %v7328
    %v7492 = vunpack.c.h.b16 %v7328
    %v7493 = vunpack.c.l.b16 %v7329
    %v7494 = vunpack.c.h.b16 %v7329
    %v7495 = vunpack.c.l.b16 %v7330
    %v7496 = vunpack.c.h.b16 %v7330
    %v7497 = vunpack.c.l.b16 %v7331
    %v7498 = vunpack.c.h.b16 %v7331
    %v7499 = vunpack.c.l.b16 %v7332
    %v7500 = vunpack.c.h.b16 %v7332
    %v7501 = vunpack.c.l.b16 %v7333
    %v7502 = vunpack.c.h.b16 %v7333
    %v7503 = vunpack.c.l.b16 %v7334
    %v7504 = vunpack.c.h.b16 %v7334
    %v7505 = vunpack.c.l.b16 %v7335
    %v7506 = vunpack.c.h.b16 %v7335
    %v7507 = vunpack.c.l.b16 %v7336
    %v7508 = vunpack.c.h.b16 %v7336
    %v7509 = vunpack.c.l.b16 %v7337
    %v7510 = vunpack.c.h.b16 %v7337
    %v7511 = vunpack.c.l.b16 %v7338
    %v7512 = vunpack.c.h.b16 %v7338
    %v7513 = vunpack.c.l.b16 %v7339
    %v7514 = vunpack.c.h.b16 %v7339
    %v7515 = vunpack.c.l.b16 %v7340
    %v7516 = vunpack.c.h.b16 %v7340
    %v7517 = vunpack.c.l.b16 %v7341
    %v7518 = vunpack.c.h.b16 %v7341
    %v7519 = vunpack.c.l.b16 %v7342
    %v7520 = vunpack.c.h.b16 %v7342
    %v7521 = vunpack.c.l.b16 %v7343
    %v7522 = vunpack.c.h.b16 %v7343
    %v7523 = vunpack.c.l.b16 %v7344
    %v7524 = vunpack.c.h.b16 %v7344
    %v7525 = vunpack.c.l.b16 %v7345
    %v7526 = vunpack.c.h.b16 %v7345
    %v7527 = vunpack.c.l.b16 %v7346
    %v7528 = vunpack.c.h.b16 %v7346
    %v7529 = vunpack.c.l.b16 %v7347
    %v7530 = vunpack.c.h.b16 %v7347
    %v7531 = vunpack.c.l.b16 %v7348
    %v7532 = vunpack.c.h.b16 %v7348
    %v7533 = vunpack.c.l.b16 %v7349
    %v7534 = vunpack.c.h.b16 %v7349
    %v7535 = vunpack.c.l.b16 %v7350
    %v7536 = vunpack.c.h.b16 %v7350
    %v7537 = vunpack.c.l.b16 %v7351
    %v7538 = vunpack.c.h.b16 %v7351
    %v7539 = vunpack.c.l.b16 %v7352
    %v7540 = vunpack.c.h.b16 %v7352
    %v7541 = vunpack.c.l.b16 %v7353
    %v7542 = vunpack.c.h.b16 %v7353
    %v7543 = vunpack.c.l.b16 %v7354
    %v7544 = vunpack.c.h.b16 %v7354
    %v7545 = vunpack.c.l.b16 %v7355
    %v7546 = vunpack.c.h.b16 %v7355
    %v7547 = vunpack.c.l.b16 %v7356
    %v7548 = vunpack.c.h.b16 %v7356
    %v7549 = vunpack.c.l.b16 %v7357
    %v7550 = vunpack.c.h.b16 %v7357
    %v7551 = vunpack.c.l.b16 %v7358
    %v7552 = vunpack.c.h.b16 %v7358
    %v7553 = vunpack.c.l.b16 %v7359
    %v7554 = vunpack.c.h.b16 %v7359
    %v7555 = vunpack.c.l.b16 %v7360
    %v7556 = vunpack.c.h.b16 %v7360
    %v7557 = vunpack.c.l.b16 %v7361
    %v7558 = vunpack.c.h.b16 %v7361
    %v7559 = vunpack.c.l.b16 %v7362
    %v7560 = vunpack.c.h.b16 %v7362
    %v7561 = vunpack.c.l.b16 %v7363
    %v7562 = vunpack.c.h.b16 %v7363
    %v7563 = vunpack.c.l.b16 %v7364
    %v7564 = vunpack.c.h.b16 %v7364
    %v7565 = vunpack.c.l.b16 %v7365
    %v7566 = vunpack.c.h.b16 %v7365
    %v7567 = vunpack.c.l.b16 %v7366
    %v7568 = vunpack.c.h.b16 %v7366
    %v7569 = vunpack.c.l.b16 %v7367
    %v7570 = vunpack.c.h.b16 %v7367
    %v7571 = vunpack.c.l.b16 %v7368
    %v7572 = vunpack.c.h.b16 %v7368
    %v7573 = vunpack.c.l.b16 %v7369
    %v7574 = vunpack.c.h.b16 %v7369
    %v7575 = vunpack.c.l.b16 %v7370
    %v7576 = vunpack.c.h.b16 %v7370
    %v7577 = vunpack.c.l.b16 %v7371
    %v7578 = vunpack.c.h.b16 %v7371
    %v7579 = vunpack.c.l.b16 %v7372
    %v7580 = vunpack.c.h.b16 %v7372
    %v7581 = vunpack.c.l.b16 %v7373
    %v7582 = vunpack.c.h.b16 %v7373
    %v7583 = vunpack.c.l.b16 %v7374
    %v7584 = vunpack.c.h.b16 %v7374
    %v7585 = vunpack.c.l.b16 %v7375
    %v7586 = vunpack.c.h.b16 %v7375
    %v7587 = vunpack.c.l.b16 %v7376
    %v7588 = vunpack.c.h.b16 %v7376
    %v7589 = vunpack.c.l.b16 %v7377
    %v7590 = vunpack.c.h.b16 %v7377
    %v7591 = vunpack.c.l.b16 %v7378
    %v7592 = vunpack.c.h.b16 %v7378
    %v7593 = vpack.c.b16 %v7469, %v7465
    %v7594 = vpack.c.b16 %v7470, %v7466
    %v7595 = vpack.c.b16 %v7471, %v7467
    %v7596 = vpack.c.b16 %v7472, %v7468
    %v7597 = vpack.c.b16 %v7477, %v7473
    %v7598 = vpack.c.b16 %v7478, %v7474
    %v7599 = vpack.c.b16 %v7479, %v7475
    %v7600 = vpack.c.b16 %v7480, %v7476
    %v7601 = vpack.c.b16 %v7485, %v7481
    %v7602 = vpack.c.b16 %v7486, %v7482
    %v7603 = vpack.c.b16 %v7487, %v7483
    %v7604 = vpack.c.b16 %v7488, %v7484
    %v7605 = vpack.c.b16 %v7493, %v7489
    %v7606 = vpack.c.b16 %v7494, %v7490
    %v7607 = vpack.c.b16 %v7495, %v7491
    %v7608 = vpack.c.b16 %v7496, %v7492
    %v7609 = vpack.c.b16 %v7501, %v7497
    %v7610 = vpack.c.b16 %v7502, %v7498
    %v7611 = vpack.c.b16 %v7503, %v7499
    %v7612 = vpack.c.b16 %v7504, %v7500
    %v7613 = vpack.c.b16 %v7509, %v7505
    %v7614 = vpack.c.b16 %v7510, %v7506
    %v7615 = vpack.c.b16 %v7511, %v7507
    %v7616 = vpack.c.b16 %v7512, %v7508
    %v7617 = vpack.c.b16 %v7517, %v7513
    %v7618 = vpack.c.b16 %v7518, %v7514
    %v7619 = vpack.c.b16 %v7519, %v7515
    %v7620 = vpack.c.b16 %v7520, %v7516
    %v7621 = vpack.c.b16 %v7525, %v7521
    %v7622 = vpack.c.b16 %v7526, %v7522
    %v7623 = vpack.c.b16 %v7527, %v7523
    %v7624 = vpack.c.b16 %v7528, %v7524
    %v7625 = vpack.c.b16 %v7533, %v7529
    %v7626 = vpack.c.b16 %v7534, %v7530
    %v7627 = vpack.c.b16 %v7535, %v7531
    %v7628 = vpack.c.b16 %v7536, %v7532
    %v7629 = vpack.c.b16 %v7541, %v7537
    %v7630 = vpack.c.b16 %v7542, %v7538
    %v7631 = vpack.c.b16 %v7543, %v7539
    %v7632 = vpack.c.b16 %v7544, %v7540
    %v7633 = vpack.c.b16 %v7549, %v7545
    %v7634 = vpack.c.b16 %v7550, %v7546
    %v7635 = vpack.c.b16 %v7551, %v7547
    %v7636 = vpack.c.b16 %v7552, %v7548
    %v7637 = vpack.c.b16 %v7557, %v7553
    %v7638 = vpack.c.b16 %v7558, %v7554
    %v7639 = vpack.c.b16 %v7559, %v7555
    %v7640 = vpack.c.b16 %v7560, %v7556
    %v7641 = vpack.c.b16 %v7565, %v7561
    %v7642 = vpack.c.b16 %v7566, %v7562
    %v7643 = vpack.c.b16 %v7567, %v7563
    %v7644 = vpack.c.b16 %v7568, %v7564
    %v7645 = vpack.c.b16 %v7573, %v7569
    %v7646 = vpack.c.b16 %v7574, %v7570
    %v7647 = vpack.c.b16 %v7575, %v7571
    %v7648 = vpack.c.b16 %v7576, %v7572
    %v7649 = vpack.c.b16 %v7581, %v7577
    %v7650 = vpack.c.b16 %v7582, %v7578
    %v7651 = vpack.c.b16 %v7583, %v7579
    %v7652 = vpack.c.b16 %v7584, %v7580
    %v7653 = vpack.c.b16 %v7589, %v7585
    %v7654 = vpack.c.b16 %v7590, %v7586
    %v7655 = vpack.c.b16 %v7591, %v7587
    %v7656 = vpack.c.b16 %v7592, %v7588
    %7721 = vmatprep.subr.bf16.mxu0 %v7622
    %7722 = vmatpush1.bf16.msra.mxu0 %v7621
    %7723 = vmatprep.subr.bf16.mxu0 %v7618
    %7724 = vmatpush1.bf16.msra.mxu0 %v7617
    %7725 = vmatprep.subr.bf16.mxu0 %v7614
    %7726 = vmatpush1.bf16.msra.mxu0 %v7613
    %7727 = vmatprep.subr.bf16.mxu0 %v7610
    %7728 = vmatpush1.bf16.msra.mxu0 %v7609
    %7729 = vmatprep.subr.bf16.mxu0 %v7606
    %7730 = vmatpush1.bf16.msra.mxu0 %v7605
    %7731 = vmatprep.subr.bf16.mxu0 %v7602
    %7732 = vmatpush1.bf16.msra.mxu0 %v7601
    %7733 = vmatprep.subr.bf16.mxu0 %v7598
    %7734 = vmatpush1.bf16.msra.mxu0 %v7597
    %7735 = vmatprep.subr.bf16.mxu0 %v7594
    %7736 = vmatpush1.bf16.msra.mxu0 %v7593
    %7737 = vmatprep.subr.bf16.mxu0 %v7654
    %7738 = vmatpush2.bf16.msra.mxu0 %v7653
    %7739 = vmatprep.subr.bf16.mxu0 %v7650
    %7740 = vmatpush2.bf16.msra.mxu0 %v7649
    %7741 = vmatprep.subr.bf16.mxu0 %v7646
    %7742 = vmatpush2.bf16.msra.mxu0 %v7645
    %7743 = vmatprep.subr.bf16.mxu0 %v7642
    %7744 = vmatpush2.bf16.msra.mxu0 %v7641
    %7745 = vmatprep.subr.bf16.mxu0 %v7638
    %7746 = vmatpush2.bf16.msra.mxu0 %v7637
    %7747 = vmatprep.subr.bf16.mxu0 %v7634
    %7748 = vmatpush2.bf16.msra.mxu0 %v7633
    %7749 = vmatprep.subr.bf16.mxu0 %v7630
    %7750 = vmatpush2.bf16.msra.mxu0 %v7629
    %7751 = vmatprep.subr.bf16.mxu0 %v7626
    %7752 = vmatpush2.bf16.msra.mxu0 %v7625
    %7753 = vmatprep.mubr.bf16.mxu0 %v6798
    %7754 = vmatmul.mubr.bf16.gmra.mxu0 %v7314
    %v7755 = vpop.f32.mrf.mxu0
    %v7756 = vadd.f32 %v7384, %v7755
    %v7757 = vpop.f32.mrf.mxu0
    %v7758 = vadd.f32 %v7388, %v7757
    %v7759 = vpop.f32.mrf.mxu0
    %v7760 = vpop.f32.mrf.mxu0
    %7761 = vdwg.mxu0
    %7762 = vmatprep.subr.bf16.mxu0 %v7624
    %7763 = vmatpush1.bf16.msra.mxu0 %v7623
    %7764 = vmatprep.subr.bf16.mxu0 %v7620
    %7765 = vmatpush1.bf16.msra.mxu0 %v7619
    %7766 = vmatprep.subr.bf16.mxu0 %v7616
    %7767 = vmatpush1.bf16.msra.mxu0 %v7615
    %7768 = vmatprep.subr.bf16.mxu0 %v7612
    %7769 = vmatpush1.bf16.msra.mxu0 %v7611
    %7770 = vmatprep.subr.bf16.mxu0 %v7608
    %7771 = vmatpush1.bf16.msra.mxu0 %v7607
    %7772 = vmatprep.subr.bf16.mxu0 %v7604
    %7773 = vmatpush1.bf16.msra.mxu0 %v7603
    %7774 = vmatprep.subr.bf16.mxu0 %v7600
    %7775 = vmatpush1.bf16.msra.mxu0 %v7599
    %7776 = vmatprep.subr.bf16.mxu0 %v7596
    %7777 = vmatpush1.bf16.msra.mxu0 %v7595
    %7778 = vmatprep.subr.bf16.mxu0 %v7656
    %7779 = vmatpush2.bf16.msra.mxu0 %v7655
    %7780 = vmatprep.subr.bf16.mxu0 %v7652
    %7781 = vmatpush2.bf16.msra.mxu0 %v7651
    %7782 = vmatprep.subr.bf16.mxu0 %v7648
    %7783 = vmatpush2.bf16.msra.mxu0 %v7647
    %7784 = vmatprep.subr.bf16.mxu0 %v7644
    %7785 = vmatpush2.bf16.msra.mxu0 %v7643
    %7786 = vmatprep.subr.bf16.mxu0 %v7640
    %7787 = vmatpush2.bf16.msra.mxu0 %v7639
    %7788 = vmatprep.subr.bf16.mxu0 %v7636
    %7789 = vmatpush2.bf16.msra.mxu0 %v7635
    %7790 = vmatprep.subr.bf16.mxu0 %v7632
    %7791 = vmatpush2.bf16.msra.mxu0 %v7631
    %7792 = vmatprep.subr.bf16.mxu0 %v7628
    %7793 = vmatpush2.bf16.msra.mxu0 %v7627
    %7794 = vmatprep.mubr.bf16.mxu0 %v6798
    %7795 = vmatmul.mubr.bf16.gmra.mxu0 %v7314
    %v7796 = vpop.f32.mrf.mxu0
    %v7797 = vadd.f32 %v7392, %v7796
    %v7798 = vpop.f32.mrf.mxu0
    %v7799 = vadd.f32 %v7396, %v7798
    %v7800 = vpop.f32.mrf.mxu0
    %v7801 = vpop.f32.mrf.mxu0
    %7802 = vdwg.mxu0
    %v7803 = vxor.u32 %v7756, 2147483648
    %v7804 = vxor.u32 %v7758, 2147483648
    %v7805 = vxor.u32 %v7797, 2147483648
    %v7806 = vmul.f32 %v7803, 1.442695
    %v7807 = vpow.pop %v7806
    %v7808 = vmul.f32 %v7804, 1.442695
    %v7809 = vpow.pop %v7808
    %v7810 = vmul.f32 %v7805, 1.442695
    %v7811 = vpow.pop %v7810
    %v7812 = vadd.f32 %v7807, 1.0
    %v7813 = vadd.f32 %v7809, 1.0
    %v7814 = vadd.f32 %v7811, 1.0
    %v7815 = vrcp.pop %v7812
    %v7816 = vmul.f32 1.0, %v7815
    %v7817 = vrcp.pop %v7813
    %v7818 = vmul.f32 1.0, %v7817
    %v7819 = vrcp.pop %v7814
    %v7820 = vmul.f32 1.0, %v7819
    %v7821 = vtanh.pop %v7799
    %v7822 = vmul.f32 %v7818, %v6488
    %v7823 = vmul.f32 %v7816, %v7821
    %v7824 = vadd.f32 %v7822, %v7823
    %v7825 = vtanh.pop %v7824
    %v7826 = vmul.f32 %v7820, %v7825
    %s7827 = scalar_lea.vmem [#allocation2], 192
    %v7828 = vld [vmem:[%s7827] sm:$0xff]
    %v7829 = vld [vmem:[%s7827 + $0x8] sm:$0xff]
    %v7830 = vld [vmem:[%s7827 + $0x10] sm:$0xff]
    %v7831 = vld [vmem:[%s7827 + $0x18] sm:$0xff]
    %v7832 = vld [vmem:[#allocation8] sm:$0xff]
    %v7833 = vld [vmem:[#allocation8 + $0x8] sm:$0xff]
    %v7834 = vld [vmem:[#allocation8 + $0x10] sm:$0xff]
    %v7835 = vld [vmem:[#allocation8 + $0x18] sm:$0xff]
    %v7836 = vld [vmem:[#allocation8 + $0x20] sm:$0xff]
    %v7837 = vld [vmem:[#allocation8 + $0x28] sm:$0xff]
    %v7838 = vld [vmem:[#allocation8 + $0x30] sm:$0xff]
    %v7839 = vld [vmem:[#allocation8 + $0x38] sm:$0xff]
    %v7840 = vld [vmem:[#allocation8 + $0x40] sm:$0xff]
    %v7841 = vld [vmem:[#allocation8 + $0x48] sm:$0xff]
    %v7842 = vld [vmem:[#allocation8 + $0x50] sm:$0xff]
    %v7843 = vld [vmem:[#allocation8 + $0x58] sm:$0xff]
    %v7844 = vld [vmem:[#allocation8 + $0x60] sm:$0xff]
    %v7845 = vld [vmem:[#allocation8 + $0x68] sm:$0xff]
    %v7846 = vld [vmem:[#allocation8 + $0x70] sm:$0xff]
    %v7847 = vld [vmem:[#allocation8 + $0x78] sm:$0xff]
    %v7848 = vld [vmem:[#allocation8 + $0x80] sm:$0xff]
    %v7849 = vld [vmem:[#allocation8 + $0x88] sm:$0xff]
    %v7850 = vld [vmem:[#allocation8 + $0x90] sm:$0xff]
    %v7851 = vld [vmem:[#allocation8 + $0x98] sm:$0xff]
    %v7852 = vld [vmem:[#allocation8 + $0xa0] sm:$0xff]
    %v7853 = vld [vmem:[#allocation8 + $0xa8] sm:$0xff]
    %v7854 = vld [vmem:[#allocation8 + $0xb0] sm:$0xff]
    %v7855 = vld [vmem:[#allocation8 + $0xb8] sm:$0xff]
    %v7856 = vld [vmem:[#allocation8 + $0xc0] sm:$0xff]
    %v7857 = vld [vmem:[#allocation8 + $0xc8] sm:$0xff]
    %v7858 = vld [vmem:[#allocation8 + $0xd0] sm:$0xff]
    %v7859 = vld [vmem:[#allocation8 + $0xd8] sm:$0xff]
    %v7860 = vld [vmem:[#allocation8 + $0xe0] sm:$0xff]
    %v7861 = vld [vmem:[#allocation8 + $0xe8] sm:$0xff]
    %v7862 = vld [vmem:[#allocation8 + $0xf0] sm:$0xff]
    %v7863 = vld [vmem:[#allocation8 + $0xf8] sm:$0xff]
    %v7896 = vunpack.c.l.b16 %v7832
    %v7897 = vunpack.c.h.b16 %v7832
    %v7898 = vunpack.c.l.b16 %v7833
    %v7899 = vunpack.c.h.b16 %v7833
    %v7900 = vunpack.c.l.b16 %v7834
    %v7901 = vunpack.c.h.b16 %v7834
    %v7902 = vunpack.c.l.b16 %v7835
    %v7903 = vunpack.c.h.b16 %v7835
    %v7904 = vunpack.c.l.b16 %v7836
    %v7905 = vunpack.c.h.b16 %v7836
    %v7906 = vunpack.c.l.b16 %v7837
    %v7907 = vunpack.c.h.b16 %v7837
    %v7908 = vunpack.c.l.b16 %v7838
    %v7909 = vunpack.c.h.b16 %v7838
    %v7910 = vunpack.c.l.b16 %v7839
    %v7911 = vunpack.c.h.b16 %v7839
    %v7912 = vunpack.c.l.b16 %v7840
    %v7913 = vunpack.c.h.b16 %v7840
    %v7914 = vunpack.c.l.b16 %v7841
    %v7915 = vunpack.c.h.b16 %v7841
    %v7916 = vunpack.c.l.b16 %v7842
    %v7917 = vunpack.c.h.b16 %v7842
    %v7918 = vunpack.c.l.b16 %v7843
    %v7919 = vunpack.c.h.b16 %v7843
    %v7920 = vunpack.c.l.b16 %v7844
    %v7921 = vunpack.c.h.b16 %v7844
    %v7922 = vunpack.c.l.b16 %v7845
    %v7923 = vunpack.c.h.b16 %v7845
    %v7924 = vunpack.c.l.b16 %v7846
    %v7925 = vunpack.c.h.b16 %v7846
    %v7926 = vunpack.c.l.b16 %v7847
    %v7927 = vunpack.c.h.b16 %v7847
    %v7928 = vunpack.c.l.b16 %v7848
    %v7929 = vunpack.c.h.b16 %v7848
    %v7930 = vunpack.c.l.b16 %v7849
    %v7931 = vunpack.c.h.b16 %v7849
    %v7932 = vunpack.c.l.b16 %v7850
    %v7933 = vunpack.c.h.b16 %v7850
    %v7934 = vunpack.c.l.b16 %v7851
    %v7935 = vunpack.c.h.b16 %v7851
    %v7936 = vunpack.c.l.b16 %v7852
    %v7937 = vunpack.c.h.b16 %v7852
    %v7938 = vunpack.c.l.b16 %v7853
    %v7939 = vunpack.c.h.b16 %v7853
    %v7940 = vunpack.c.l.b16 %v7854
    %v7941 = vunpack.c.h.b16 %v7854
    %v7942 = vunpack.c.l.b16 %v7855
    %v7943 = vunpack.c.h.b16 %v7855
    %v7944 = vunpack.c.l.b16 %v7856
    %v7945 = vunpack.c.h.b16 %v7856
    %v7946 = vunpack.c.l.b16 %v7857
    %v7947 = vunpack.c.h.b16 %v7857
    %v7948 = vunpack.c.l.b16 %v7858
    %v7949 = vunpack.c.h.b16 %v7858
    %v7950 = vunpack.c.l.b16 %v7859
    %v7951 = vunpack.c.h.b16 %v7859
    %v7952 = vunpack.c.l.b16 %v7860
    %v7953 = vunpack.c.h.b16 %v7860
    %v7954 = vunpack.c.l.b16 %v7861
    %v7955 = vunpack.c.h.b16 %v7861
    %v7956 = vunpack.c.l.b16 %v7862
    %v7957 = vunpack.c.h.b16 %v7862
    %v7958 = vunpack.c.l.b16 %v7863
    %v7959 = vunpack.c.h.b16 %v7863
    %v7960 = vpack.c.b16 %v7900, %v7896
    %v7961 = vpack.c.b16 %v7901, %v7897
    %v7962 = vpack.c.b16 %v7902, %v7898
    %v7963 = vpack.c.b16 %v7903, %v7899
    %v7964 = vpack.c.b16 %v7908, %v7904
    %v7965 = vpack.c.b16 %v7909, %v7905
    %v7966 = vpack.c.b16 %v7910, %v7906
    %v7967 = vpack.c.b16 %v7911, %v7907
    %v7968 = vpack.c.b16 %v7916, %v7912
    %v7969 = vpack.c.b16 %v7917, %v7913
    %v7970 = vpack.c.b16 %v7918, %v7914
    %v7971 = vpack.c.b16 %v7919, %v7915
    %v7972 = vpack.c.b16 %v7924, %v7920
    %v7973 = vpack.c.b16 %v7925, %v7921
    %v7974 = vpack.c.b16 %v7926, %v7922
    %v7975 = vpack.c.b16 %v7927, %v7923
    %v7976 = vpack.c.b16 %v7932, %v7928
    %v7977 = vpack.c.b16 %v7933, %v7929
    %v7978 = vpack.c.b16 %v7934, %v7930
    %v7979 = vpack.c.b16 %v7935, %v7931
    %v7980 = vpack.c.b16 %v7940, %v7936
    %v7981 = vpack.c.b16 %v7941, %v7937
    %v7982 = vpack.c.b16 %v7942, %v7938
    %v7983 = vpack.c.b16 %v7943, %v7939
    %v7984 = vpack.c.b16 %v7948, %v7944
    %v7985 = vpack.c.b16 %v7949, %v7945
    %v7986 = vpack.c.b16 %v7950, %v7946
    %v7987 = vpack.c.b16 %v7951, %v7947
    %v7988 = vpack.c.b16 %v7956, %v7952
    %v7989 = vpack.c.b16 %v7957, %v7953
    %v7990 = vpack.c.b16 %v7958, %v7954
    %v7991 = vpack.c.b16 %v7959, %v7955
    %8024 = vmatprep.subr.bf16.mxu0 %v7989
    %8025 = vmatpush1.bf16.msra.mxu0 %v7988
    %8026 = vmatprep.subr.bf16.mxu0 %v7985
    %8027 = vmatpush1.bf16.msra.mxu0 %v7984
    %8028 = vmatprep.subr.bf16.mxu0 %v7981
    %8029 = vmatpush1.bf16.msra.mxu0 %v7980
    %8030 = vmatprep.subr.bf16.mxu0 %v7977
    %8031 = vmatpush1.bf16.msra.mxu0 %v7976
    %8032 = vmatprep.subr.bf16.mxu0 %v7973
    %8033 = vmatpush1.bf16.msra.mxu0 %v7972
    %8034 = vmatprep.subr.bf16.mxu0 %v7969
    %8035 = vmatpush1.bf16.msra.mxu0 %v7968
    %8036 = vmatprep.subr.bf16.mxu0 %v7965
    %8037 = vmatpush1.bf16.msra.mxu0 %v7964
    %8038 = vmatprep.subr.bf16.mxu0 %v7961
    %8039 = vmatpush1.bf16.msra.mxu0 %v7960
    %8040 = vmatprep.subr.bf16.mxu0 0
    %8041 = vmatpush2.bf16.msra.mxu0 0
    %8042 = vmatprep.subr.bf16.mxu0 0
    %8043 = vmatpush2.bf16.msra.mxu0 0
    %8044 = vmatprep.subr.bf16.mxu0 0
    %8045 = vmatpush2.bf16.msra.mxu0 0
    %8046 = vmatprep.subr.bf16.mxu0 0
    %8047 = vmatpush2.bf16.msra.mxu0 0
    %8048 = vmatprep.subr.bf16.mxu0 0
    %8049 = vmatpush2.bf16.msra.mxu0 0
    %8050 = vmatprep.subr.bf16.mxu0 0
    %8051 = vmatpush2.bf16.msra.mxu0 0
    %8052 = vmatprep.subr.bf16.mxu0 0
    %8053 = vmatpush2.bf16.msra.mxu0 0
    %8054 = vmatprep.subr.bf16.mxu0 0
    %8055 = vmatpush2.bf16.msra.mxu0 0
    %8056 = vmatprep.mubr.bf16.mxu0 0
    %8057 = vmatmul.mubr.bf16.gmra.mxu0 %v7314
    %v8058 = vpop.f32.mrf.mxu0
    %v8059 = vadd.f32 0.0, %v8058
    %v8060 = vpop.f32.mrf.mxu0
    %v8061 = vadd.f32 0.0, %v8060
    %v8062 = vpop.f32.mrf.mxu0
    %v8063 = vpop.f32.mrf.mxu0
    %8064 = vdwg.mxu0
    %8065 = vmatprep.subr.bf16.mxu0 %v7991
    %8066 = vmatpush1.bf16.msra.mxu0 %v7990
    %8067 = vmatprep.subr.bf16.mxu0 %v7987
    %8068 = vmatpush1.bf16.msra.mxu0 %v7986
    %8069 = vmatprep.subr.bf16.mxu0 %v7983
    %8070 = vmatpush1.bf16.msra.mxu0 %v7982
    %8071 = vmatprep.subr.bf16.mxu0 %v7979
    %8072 = vmatpush1.bf16.msra.mxu0 %v7978
    %8073 = vmatprep.subr.bf16.mxu0 %v7975
    %8074 = vmatpush1.bf16.msra.mxu0 %v7974
    %8075 = vmatprep.subr.bf16.mxu0 %v7971
    %8076 = vmatpush1.bf16.msra.mxu0 %v7970
    %8077 = vmatprep.subr.bf16.mxu0 %v7967
    %8078 = vmatpush1.bf16.msra.mxu0 %v7966
    %8079 = vmatprep.subr.bf16.mxu0 %v7963
    %8080 = vmatpush1.bf16.msra.mxu0 %v7962
    %8081 = vmatprep.subr.bf16.mxu0 0
    %8082 = vmatpush2.bf16.msra.mxu0 0
    %8083 = vmatprep.subr.bf16.mxu0 0
    %8084 = vmatpush2.bf16.msra.mxu0 0
    %8085 = vmatprep.subr.bf16.mxu0 0
    %8086 = vmatpush2.bf16.msra.mxu0 0
    %8087 = vmatprep.subr.bf16.mxu0 0
    %8088 = vmatpush2.bf16.msra.mxu0 0
    %8089 = vmatprep.subr.bf16.mxu0 0
    %8090 = vmatpush2.bf16.msra.mxu0 0
    %8091 = vmatprep.subr.bf16.mxu0 0
    %8092 = vmatpush2.bf16.msra.mxu0 0
    %8093 = vmatprep.subr.bf16.mxu0 0
    %8094 = vmatpush2.bf16.msra.mxu0 0
    %8095 = vmatprep.subr.bf16.mxu0 0
    %8096 = vmatpush2.bf16.msra.mxu0 0
    %8097 = vmatprep.mubr.bf16.mxu0 0
    %8098 = vmatmul.mubr.bf16.gmra.mxu0 %v7314
    %v8099 = vpop.f32.mrf.mxu0
    %v8100 = vadd.f32 0.0, %v8099
    %v8101 = vpop.f32.mrf.mxu0
    %v8102 = vadd.f32 0.0, %v8101
    %v8103 = vpop.f32.mrf.mxu0
    %v8104 = vpop.f32.mrf.mxu0
    %8105 = vdwg.mxu0
    %v8106 = vadd.f32 %v7828, %v8059
    %v8107 = vadd.f32 %v7829, %v8061
    %v8108 = vadd.f32 %v7830, %v8100
    %v8109 = vadd.f32 %v7831, %v8102
    %v8110 = vxor.u32 %v8106, 2147483648
    %v8111 = vxor.u32 %v8107, 2147483648
    %v8112 = vxor.u32 %v8108, 2147483648
    %v8113 = vmul.f32 %v8110, 1.442695
    %v8114 = vpow.pop %v8113
    %v8115 = vmul.f32 %v8111, 1.442695
    %v8116 = vpow.pop %v8115
    %v8117 = vmul.f32 %v8112, 1.442695
    %v8118 = vpow.pop %v8117
    %v8119 = vadd.f32 %v8114, 1.0
    %v8120 = vadd.f32 %v8116, 1.0
    %v8121 = vadd.f32 %v8118, 1.0
    %v8122 = vrcp.pop %v8119
    %v8123 = vmul.f32 1.0, %v8122
    %v8124 = vrcp.pop %v8120
    %v8125 = vmul.f32 1.0, %v8124
    %v8126 = vrcp.pop %v8121
    %v8127 = vmul.f32 1.0, %v8126
    %v8128 = vtanh.pop %v8109
    %v8129 = vmul.f32 %v8125, %v6795
    %v8130 = vmul.f32 %v8123, %v8128
    %v8131 = vadd.f32 %v8129, %v8130
    %v8132 = vtanh.pop %v8131
    %v8133 = vmul.f32 %v8127, %v8132
    %v8134 = vpack.c.bf16 %v7826, %v7826
    %v8135 = vpack.c.bf16 %v7311, %v7311
    %v8136 = vld [vmem:[%s1455] sm:$0xff]
    %v8137 = vld [vmem:[%s1455 + $0x8] sm:$0xff]
    %v8138 = vld [vmem:[%s1455 + $0x10] sm:$0xff]
    %v8139 = vld [vmem:[%s1455 + $0x18] sm:$0xff]
    %v8140 = vld [vmem:[%s1455 + $0x20] sm:$0xff]
    %v8141 = vld [vmem:[%s1455 + $0x28] sm:$0xff]
    %v8142 = vld [vmem:[%s1455 + $0x30] sm:$0xff]
    %v8143 = vld [vmem:[%s1455 + $0x38] sm:$0xff]
    %v8144 = vld [vmem:[%s1455 + $0x40] sm:$0xff]
    %v8145 = vld [vmem:[%s1455 + $0x48] sm:$0xff]
    %v8146 = vld [vmem:[%s1455 + $0x50] sm:$0xff]
    %v8147 = vld [vmem:[%s1455 + $0x58] sm:$0xff]
    %v8148 = vld [vmem:[%s1455 + $0x60] sm:$0xff]
    %v8149 = vld [vmem:[%s1455 + $0x68] sm:$0xff]
    %v8150 = vld [vmem:[%s1455 + $0x70] sm:$0xff]
    %v8151 = vld [vmem:[%s1455 + $0x78] sm:$0xff]
    %v8152 = vld [vmem:[%s1455 + $0x80] sm:$0xff]
    %v8153 = vld [vmem:[%s1455 + $0x88] sm:$0xff]
    %v8154 = vld [vmem:[%s1455 + $0x90] sm:$0xff]
    %v8155 = vld [vmem:[%s1455 + $0x98] sm:$0xff]
    %v8156 = vld [vmem:[%s1455 + $0xa0] sm:$0xff]
    %v8157 = vld [vmem:[%s1455 + $0xa8] sm:$0xff]
    %v8158 = vld [vmem:[%s1455 + $0xb0] sm:$0xff]
    %v8159 = vld [vmem:[%s1455 + $0xb8] sm:$0xff]
    %v8160 = vld [vmem:[%s1455 + $0xc0] sm:$0xff]
    %v8161 = vld [vmem:[%s1455 + $0xc8] sm:$0xff]
    %v8162 = vld [vmem:[%s1455 + $0xd0] sm:$0xff]
    %v8163 = vld [vmem:[%s1455 + $0xd8] sm:$0xff]
    %v8164 = vld [vmem:[%s1455 + $0xe0] sm:$0xff]
    %v8165 = vld [vmem:[%s1455 + $0xe8] sm:$0xff]
    %v8166 = vld [vmem:[%s1455 + $0xf0] sm:$0xff]
    %v8167 = vld [vmem:[%s1455 + $0xf8] sm:$0xff]
    %v8168 = vld [vmem:[%s1455 + $0x100] sm:$0xff]
    %v8169 = vld [vmem:[%s1455 + $0x108] sm:$0xff]
    %v8170 = vld [vmem:[%s1455 + $0x110] sm:$0xff]
    %v8171 = vld [vmem:[%s1455 + $0x118] sm:$0xff]
    %v8172 = vld [vmem:[%s1455 + $0x120] sm:$0xff]
    %v8173 = vld [vmem:[%s1455 + $0x128] sm:$0xff]
    %v8174 = vld [vmem:[%s1455 + $0x130] sm:$0xff]
    %v8175 = vld [vmem:[%s1455 + $0x138] sm:$0xff]
    %v8176 = vld [vmem:[%s1455 + $0x140] sm:$0xff]
    %v8177 = vld [vmem:[%s1455 + $0x148] sm:$0xff]
    %v8178 = vld [vmem:[%s1455 + $0x150] sm:$0xff]
    %v8179 = vld [vmem:[%s1455 + $0x158] sm:$0xff]
    %v8180 = vld [vmem:[%s1455 + $0x160] sm:$0xff]
    %v8181 = vld [vmem:[%s1455 + $0x168] sm:$0xff]
    %v8182 = vld [vmem:[%s1455 + $0x170] sm:$0xff]
    %v8183 = vld [vmem:[%s1455 + $0x178] sm:$0xff]
    %v8184 = vld [vmem:[%s1455 + $0x180] sm:$0xff]
    %v8185 = vld [vmem:[%s1455 + $0x188] sm:$0xff]
    %v8186 = vld [vmem:[%s1455 + $0x190] sm:$0xff]
    %v8187 = vld [vmem:[%s1455 + $0x198] sm:$0xff]
    %v8188 = vld [vmem:[%s1455 + $0x1a0] sm:$0xff]
    %v8189 = vld [vmem:[%s1455 + $0x1a8] sm:$0xff]
    %v8190 = vld [vmem:[%s1455 + $0x1b0] sm:$0xff]
    %v8191 = vld [vmem:[%s1455 + $0x1b8] sm:$0xff]
    %v8192 = vld [vmem:[%s1455 + $0x1c0] sm:$0xff]
    %v8193 = vld [vmem:[%s1455 + $0x1c8] sm:$0xff]
    %v8194 = vld [vmem:[%s1455 + $0x1d0] sm:$0xff]
    %v8195 = vld [vmem:[%s1455 + $0x1d8] sm:$0xff]
    %v8196 = vld [vmem:[%s1455 + $0x1e0] sm:$0xff]
    %v8197 = vld [vmem:[%s1455 + $0x1e8] sm:$0xff]
    %v8198 = vld [vmem:[%s1455 + $0x1f0] sm:$0xff]
    %v8199 = vld [vmem:[%s1455 + $0x1f8] sm:$0xff]
    %v8200 = vld [vmem:[%s1520] sm:$0xf]
    %v8202 = vlaneseq
    %v8203 = vshrl.u32 %v8202, 7
    %v8204 = vsub.s32 0, %v8203
    %v8205 = vrot.slane %v8200, %v8204
    %v8206 = vlaneseq
    %v8207 = vshrl.u32 %v8206, 7
    %v8208 = vsub.s32 1, %v8207
    %v8209 = vrot.slane %v8200, %v8208
    %v8210 = vlaneseq
    %v8211 = vshrl.u32 %v8210, 7
    %v8212 = vsub.s32 2, %v8211
    %v8213 = vrot.slane %v8200, %v8212
    %v8214 = vlaneseq
    %v8215 = vshrl.u32 %v8214, 7
    %v8216 = vsub.s32 3, %v8215
    %v8217 = vrot.slane %v8200, %v8216
    %v8286 = vunpack.c.l.b16 %v8136
    %v8287 = vunpack.c.h.b16 %v8136
    %v8288 = vunpack.c.l.b16 %v8137
    %v8289 = vunpack.c.h.b16 %v8137
    %v8290 = vunpack.c.l.b16 %v8138
    %v8291 = vunpack.c.h.b16 %v8138
    %v8292 = vunpack.c.l.b16 %v8139
    %v8293 = vunpack.c.h.b16 %v8139
    %v8294 = vunpack.c.l.b16 %v8140
    %v8295 = vunpack.c.h.b16 %v8140
    %v8296 = vunpack.c.l.b16 %v8141
    %v8297 = vunpack.c.h.b16 %v8141
    %v8298 = vunpack.c.l.b16 %v8142
    %v8299 = vunpack.c.h.b16 %v8142
    %v8300 = vunpack.c.l.b16 %v8143
    %v8301 = vunpack.c.h.b16 %v8143
    %v8302 = vunpack.c.l.b16 %v8144
    %v8303 = vunpack.c.h.b16 %v8144
    %v8304 = vunpack.c.l.b16 %v8145
    %v8305 = vunpack.c.h.b16 %v8145
    %v8306 = vunpack.c.l.b16 %v8146
    %v8307 = vunpack.c.h.b16 %v8146
    %v8308 = vunpack.c.l.b16 %v8147
    %v8309 = vunpack.c.h.b16 %v8147
    %v8310 = vunpack.c.l.b16 %v8148
    %v8311 = vunpack.c.h.b16 %v8148
    %v8312 = vunpack.c.l.b16 %v8149
    %v8313 = vunpack.c.h.b16 %v8149
    %v8314 = vunpack.c.l.b16 %v8150
    %v8315 = vunpack.c.h.b16 %v8150
    %v8316 = vunpack.c.l.b16 %v8151
    %v8317 = vunpack.c.h.b16 %v8151
    %v8318 = vunpack.c.l.b16 %v8152
    %v8319 = vunpack.c.h.b16 %v8152
    %v8320 = vunpack.c.l.b16 %v8153
    %v8321 = vunpack.c.h.b16 %v8153
    %v8322 = vunpack.c.l.b16 %v8154
    %v8323 = vunpack.c.h.b16 %v8154
    %v8324 = vunpack.c.l.b16 %v8155
    %v8325 = vunpack.c.h.b16 %v8155
    %v8326 = vunpack.c.l.b16 %v8156
    %v8327 = vunpack.c.h.b16 %v8156
    %v8328 = vunpack.c.l.b16 %v8157
    %v8329 = vunpack.c.h.b16 %v8157
    %v8330 = vunpack.c.l.b16 %v8158
    %v8331 = vunpack.c.h.b16 %v8158
    %v8332 = vunpack.c.l.b16 %v8159
    %v8333 = vunpack.c.h.b16 %v8159
    %v8334 = vunpack.c.l.b16 %v8160
    %v8335 = vunpack.c.h.b16 %v8160
    %v8336 = vunpack.c.l.b16 %v8161
    %v8337 = vunpack.c.h.b16 %v8161
    %v8338 = vunpack.c.l.b16 %v8162
    %v8339 = vunpack.c.h.b16 %v8162
    %v8340 = vunpack.c.l.b16 %v8163
    %v8341 = vunpack.c.h.b16 %v8163
    %v8342 = vunpack.c.l.b16 %v8164
    %v8343 = vunpack.c.h.b16 %v8164
    %v8344 = vunpack.c.l.b16 %v8165
    %v8345 = vunpack.c.h.b16 %v8165
    %v8346 = vunpack.c.l.b16 %v8166
    %v8347 = vunpack.c.h.b16 %v8166
    %v8348 = vunpack.c.l.b16 %v8167
    %v8349 = vunpack.c.h.b16 %v8167
    %v8350 = vunpack.c.l.b16 %v8168
    %v8351 = vunpack.c.h.b16 %v8168
    %v8352 = vunpack.c.l.b16 %v8169
    %v8353 = vunpack.c.h.b16 %v8169
    %v8354 = vunpack.c.l.b16 %v8170
    %v8355 = vunpack.c.h.b16 %v8170
    %v8356 = vunpack.c.l.b16 %v8171
    %v8357 = vunpack.c.h.b16 %v8171
    %v8358 = vunpack.c.l.b16 %v8172
    %v8359 = vunpack.c.h.b16 %v8172
    %v8360 = vunpack.c.l.b16 %v8173
    %v8361 = vunpack.c.h.b16 %v8173
    %v8362 = vunpack.c.l.b16 %v8174
    %v8363 = vunpack.c.h.b16 %v8174
    %v8364 = vunpack.c.l.b16 %v8175
    %v8365 = vunpack.c.h.b16 %v8175
    %v8366 = vunpack.c.l.b16 %v8176
    %v8367 = vunpack.c.h.b16 %v8176
    %v8368 = vunpack.c.l.b16 %v8177
    %v8369 = vunpack.c.h.b16 %v8177
    %v8370 = vunpack.c.l.b16 %v8178
    %v8371 = vunpack.c.h.b16 %v8178
    %v8372 = vunpack.c.l.b16 %v8179
    %v8373 = vunpack.c.h.b16 %v8179
    %v8374 = vunpack.c.l.b16 %v8180
    %v8375 = vunpack.c.h.b16 %v8180
    %v8376 = vunpack.c.l.b16 %v8181
    %v8377 = vunpack.c.h.b16 %v8181
    %v8378 = vunpack.c.l.b16 %v8182
    %v8379 = vunpack.c.h.b16 %v8182
    %v8380 = vunpack.c.l.b16 %v8183
    %v8381 = vunpack.c.h.b16 %v8183
    %v8382 = vunpack.c.l.b16 %v8184
    %v8383 = vunpack.c.h.b16 %v8184
    %v8384 = vunpack.c.l.b16 %v8185
    %v8385 = vunpack.c.h.b16 %v8185
    %v8386 = vunpack.c.l.b16 %v8186
    %v8387 = vunpack.c.h.b16 %v8186
    %v8388 = vunpack.c.l.b16 %v8187
    %v8389 = vunpack.c.h.b16 %v8187
    %v8390 = vunpack.c.l.b16 %v8188
    %v8391 = vunpack.c.h.b16 %v8188
    %v8392 = vunpack.c.l.b16 %v8189
    %v8393 = vunpack.c.h.b16 %v8189
    %v8394 = vunpack.c.l.b16 %v8190
    %v8395 = vunpack.c.h.b16 %v8190
    %v8396 = vunpack.c.l.b16 %v8191
    %v8397 = vunpack.c.h.b16 %v8191
    %v8398 = vunpack.c.l.b16 %v8192
    %v8399 = vunpack.c.h.b16 %v8192
    %v8400 = vunpack.c.l.b16 %v8193
    %v8401 = vunpack.c.h.b16 %v8193
    %v8402 = vunpack.c.l.b16 %v8194
    %v8403 = vunpack.c.h.b16 %v8194
    %v8404 = vunpack.c.l.b16 %v8195
    %v8405 = vunpack.c.h.b16 %v8195
    %v8406 = vunpack.c.l.b16 %v8196
    %v8407 = vunpack.c.h.b16 %v8196
    %v8408 = vunpack.c.l.b16 %v8197
    %v8409 = vunpack.c.h.b16 %v8197
    %v8410 = vunpack.c.l.b16 %v8198
    %v8411 = vunpack.c.h.b16 %v8198
    %v8412 = vunpack.c.l.b16 %v8199
    %v8413 = vunpack.c.h.b16 %v8199
    %v8414 = vpack.c.b16 %v8290, %v8286
    %v8415 = vpack.c.b16 %v8291, %v8287
    %v8416 = vpack.c.b16 %v8292, %v8288
    %v8417 = vpack.c.b16 %v8293, %v8289
    %v8418 = vpack.c.b16 %v8298, %v8294
    %v8419 = vpack.c.b16 %v8299, %v8295
    %v8420 = vpack.c.b16 %v8300, %v8296
    %v8421 = vpack.c.b16 %v8301, %v8297
    %v8422 = vpack.c.b16 %v8306, %v8302
    %v8423 = vpack.c.b16 %v8307, %v8303
    %v8424 = vpack.c.b16 %v8308, %v8304
    %v8425 = vpack.c.b16 %v8309, %v8305
    %v8426 = vpack.c.b16 %v8314, %v8310
    %v8427 = vpack.c.b16 %v8315, %v8311
    %v8428 = vpack.c.b16 %v8316, %v8312
    %v8429 = vpack.c.b16 %v8317, %v8313
    %v8430 = vpack.c.b16 %v8322, %v8318
    %v8431 = vpack.c.b16 %v8323, %v8319
    %v8432 = vpack.c.b16 %v8324, %v8320
    %v8433 = vpack.c.b16 %v8325, %v8321
    %v8434 = vpack.c.b16 %v8330, %v8326
    %v8435 = vpack.c.b16 %v8331, %v8327
    %v8436 = vpack.c.b16 %v8332, %v8328
    %v8437 = vpack.c.b16 %v8333, %v8329
    %v8438 = vpack.c.b16 %v8338, %v8334
    %v8439 = vpack.c.b16 %v8339, %v8335
    %v8440 = vpack.c.b16 %v8340, %v8336
    %v8441 = vpack.c.b16 %v8341, %v8337
    %v8442 = vpack.c.b16 %v8346, %v8342
    %v8443 = vpack.c.b16 %v8347, %v8343
    %v8444 = vpack.c.b16 %v8348, %v8344
    %v8445 = vpack.c.b16 %v8349, %v8345
    %v8446 = vpack.c.b16 %v8354, %v8350
    %v8447 = vpack.c.b16 %v8355, %v8351
    %v8448 = vpack.c.b16 %v8356, %v8352
    %v8449 = vpack.c.b16 %v8357, %v8353
    %v8450 = vpack.c.b16 %v8362, %v8358
    %v8451 = vpack.c.b16 %v8363, %v8359
    %v8452 = vpack.c.b16 %v8364, %v8360
    %v8453 = vpack.c.b16 %v8365, %v8361
    %v8454 = vpack.c.b16 %v8370, %v8366
    %v8455 = vpack.c.b16 %v8371, %v8367
    %v8456 = vpack.c.b16 %v8372, %v8368
    %v8457 = vpack.c.b16 %v8373, %v8369
    %v8458 = vpack.c.b16 %v8378, %v8374
    %v8459 = vpack.c.b16 %v8379, %v8375
    %v8460 = vpack.c.b16 %v8380, %v8376
    %v8461 = vpack.c.b16 %v8381, %v8377
    %v8462 = vpack.c.b16 %v8386, %v8382
    %v8463 = vpack.c.b16 %v8387, %v8383
    %v8464 = vpack.c.b16 %v8388, %v8384
    %v8465 = vpack.c.b16 %v8389, %v8385
    %v8466 = vpack.c.b16 %v8394, %v8390
    %v8467 = vpack.c.b16 %v8395, %v8391
    %v8468 = vpack.c.b16 %v8396, %v8392
    %v8469 = vpack.c.b16 %v8397, %v8393
    %v8470 = vpack.c.b16 %v8402, %v8398
    %v8471 = vpack.c.b16 %v8403, %v8399
    %v8472 = vpack.c.b16 %v8404, %v8400
    %v8473 = vpack.c.b16 %v8405, %v8401
    %v8474 = vpack.c.b16 %v8410, %v8406
    %v8475 = vpack.c.b16 %v8411, %v8407
    %v8476 = vpack.c.b16 %v8412, %v8408
    %v8477 = vpack.c.b16 %v8413, %v8409
    %8542 = vmatprep.subr.bf16.mxu0 %v8443
    %8543 = vmatpush1.bf16.msra.mxu0 %v8442
    %8544 = vmatprep.subr.bf16.mxu0 %v8439
    %8545 = vmatpush1.bf16.msra.mxu0 %v8438
    %8546 = vmatprep.subr.bf16.mxu0 %v8435
    %8547 = vmatpush1.bf16.msra.mxu0 %v8434
    %8548 = vmatprep.subr.bf16.mxu0 %v8431
    %8549 = vmatpush1.bf16.msra.mxu0 %v8430
    %8550 = vmatprep.subr.bf16.mxu0 %v8427
    %8551 = vmatpush1.bf16.msra.mxu0 %v8426
    %8552 = vmatprep.subr.bf16.mxu0 %v8423
    %8553 = vmatpush1.bf16.msra.mxu0 %v8422
    %8554 = vmatprep.subr.bf16.mxu0 %v8419
    %8555 = vmatpush1.bf16.msra.mxu0 %v8418
    %8556 = vmatprep.subr.bf16.mxu0 %v8415
    %8557 = vmatpush1.bf16.msra.mxu0 %v8414
    %8558 = vmatprep.subr.bf16.mxu0 %v8475
    %8559 = vmatpush2.bf16.msra.mxu0 %v8474
    %8560 = vmatprep.subr.bf16.mxu0 %v8471
    %8561 = vmatpush2.bf16.msra.mxu0 %v8470
    %8562 = vmatprep.subr.bf16.mxu0 %v8467
    %8563 = vmatpush2.bf16.msra.mxu0 %v8466
    %8564 = vmatprep.subr.bf16.mxu0 %v8463
    %8565 = vmatpush2.bf16.msra.mxu0 %v8462
    %8566 = vmatprep.subr.bf16.mxu0 %v8459
    %8567 = vmatpush2.bf16.msra.mxu0 %v8458
    %8568 = vmatprep.subr.bf16.mxu0 %v8455
    %8569 = vmatpush2.bf16.msra.mxu0 %v8454
    %8570 = vmatprep.subr.bf16.mxu0 %v8451
    %8571 = vmatpush2.bf16.msra.mxu0 %v8450
    %8572 = vmatprep.subr.bf16.mxu0 %v8447
    %8573 = vmatpush2.bf16.msra.mxu0 %v8446
    %8574 = vmatprep.mubr.bf16.mxu0 %v8135
    %8575 = vmatmul.mubr.bf16.gmra.mxu0 %v8134
    %v8576 = vpop.f32.mrf.mxu0
    %v8577 = vadd.f32 %v8205, %v8576
    %v8578 = vpop.f32.mrf.mxu0
    %v8579 = vadd.f32 %v8209, %v8578
    %v8580 = vpop.f32.mrf.mxu0
    %v8581 = vpop.f32.mrf.mxu0
    %8582 = vdwg.mxu0
    %8583 = vmatprep.subr.bf16.mxu0 %v8445
    %8584 = vmatpush1.bf16.msra.mxu0 %v8444
    %8585 = vmatprep.subr.bf16.mxu0 %v8441
    %8586 = vmatpush1.bf16.msra.mxu0 %v8440
    %8587 = vmatprep.subr.bf16.mxu0 %v8437
    %8588 = vmatpush1.bf16.msra.mxu0 %v8436
    %8589 = vmatprep.subr.bf16.mxu0 %v8433
    %8590 = vmatpush1.bf16.msra.mxu0 %v8432
    %8591 = vmatprep.subr.bf16.mxu0 %v8429
    %8592 = vmatpush1.bf16.msra.mxu0 %v8428
    %8593 = vmatprep.subr.bf16.mxu0 %v8425
    %8594 = vmatpush1.bf16.msra.mxu0 %v8424
    %8595 = vmatprep.subr.bf16.mxu0 %v8421
    %8596 = vmatpush1.bf16.msra.mxu0 %v8420
    %8597 = vmatprep.subr.bf16.mxu0 %v8417
    %8598 = vmatpush1.bf16.msra.mxu0 %v8416
    %8599 = vmatprep.subr.bf16.mxu0 %v8477
    %8600 = vmatpush2.bf16.msra.mxu0 %v8476
    %8601 = vmatprep.subr.bf16.mxu0 %v8473
    %8602 = vmatpush2.bf16.msra.mxu0 %v8472
    %8603 = vmatprep.subr.bf16.mxu0 %v8469
    %8604 = vmatpush2.bf16.msra.mxu0 %v8468
    %8605 = vmatprep.subr.bf16.mxu0 %v8465
    %8606 = vmatpush2.bf16.msra.mxu0 %v8464
    %8607 = vmatprep.subr.bf16.mxu0 %v8461
    %8608 = vmatpush2.bf16.msra.mxu0 %v8460
    %8609 = vmatprep.subr.bf16.mxu0 %v8457
    %8610 = vmatpush2.bf16.msra.mxu0 %v8456
    %8611 = vmatprep.subr.bf16.mxu0 %v8453
    %8612 = vmatpush2.bf16.msra.mxu0 %v8452
    %8613 = vmatprep.subr.bf16.mxu0 %v8449
    %8614 = vmatpush2.bf16.msra.mxu0 %v8448
    %8615 = vmatprep.mubr.bf16.mxu0 %v8135
    %8616 = vmatmul.mubr.bf16.gmra.mxu0 %v8134
    %v8617 = vpop.f32.mrf.mxu0
    %v8618 = vadd.f32 %v8213, %v8617
    %v8619 = vpop.f32.mrf.mxu0
    %v8620 = vadd.f32 %v8217, %v8619
    %v8621 = vpop.f32.mrf.mxu0
    %v8622 = vpop.f32.mrf.mxu0
    %8623 = vdwg.mxu0
    %v8624 = vxor.u32 %v8577, 2147483648
    %v8625 = vxor.u32 %v8579, 2147483648
    %v8626 = vxor.u32 %v8618, 2147483648
    %v8627 = vmul.f32 %v8624, 1.442695
    %v8628 = vpow.pop %v8627
    %v8629 = vmul.f32 %v8625, 1.442695
    %v8630 = vpow.pop %v8629
    %v8631 = vmul.f32 %v8626, 1.442695
    %v8632 = vpow.pop %v8631
    %v8633 = vadd.f32 %v8628, 1.0
    %v8634 = vadd.f32 %v8630, 1.0
    %v8635 = vadd.f32 %v8632, 1.0
    %v8636 = vrcp.pop %v8633
    %v8637 = vmul.f32 1.0, %v8636
    %v8638 = vrcp.pop %v8634
    %v8639 = vmul.f32 1.0, %v8638
    %v8640 = vrcp.pop %v8635
    %v8641 = vmul.f32 1.0, %v8640
    %v8642 = vtanh.pop %v8620
    %v8643 = vmul.f32 %v8639, %v7309
    %v8644 = vmul.f32 %v8637, %v8642
    %v8645 = vadd.f32 %v8643, %v8644
    %v8646 = vtanh.pop %v8645
    %v8647 = vmul.f32 %v8641, %v8646
    %s8648 = scalar_lea.vmem [#allocation14], 40
    %8649 = vst [vmem:[%s8648] sm:$0xff] %v8647
    %v8650 = vpack.c.bf16 %v8133, %v8133
    %v8651 = vld [vmem:[#allocation9] sm:$0xff]
    %v8652 = vld [vmem:[#allocation9 + $0x8] sm:$0xff]
    %v8653 = vld [vmem:[#allocation9 + $0x10] sm:$0xff]
    %v8654 = vld [vmem:[#allocation9 + $0x18] sm:$0xff]
    %v8655 = vld [vmem:[#allocation9 + $0x20] sm:$0xff]
    %v8656 = vld [vmem:[#allocation9 + $0x28] sm:$0xff]
    %v8657 = vld [vmem:[#allocation9 + $0x30] sm:$0xff]
    %v8658 = vld [vmem:[#allocation9 + $0x38] sm:$0xff]
    %v8659 = vld [vmem:[#allocation9 + $0x40] sm:$0xff]
    %v8660 = vld [vmem:[#allocation9 + $0x48] sm:$0xff]
    %v8661 = vld [vmem:[#allocation9 + $0x50] sm:$0xff]
    %v8662 = vld [vmem:[#allocation9 + $0x58] sm:$0xff]
    %v8663 = vld [vmem:[#allocation9 + $0x60] sm:$0xff]
    %v8664 = vld [vmem:[#allocation9 + $0x68] sm:$0xff]
    %v8665 = vld [vmem:[#allocation9 + $0x70] sm:$0xff]
    %v8666 = vld [vmem:[#allocation9 + $0x78] sm:$0xff]
    %v8667 = vld [vmem:[#allocation9 + $0x80] sm:$0xff]
    %v8668 = vld [vmem:[#allocation9 + $0x88] sm:$0xff]
    %v8669 = vld [vmem:[#allocation9 + $0x90] sm:$0xff]
    %v8670 = vld [vmem:[#allocation9 + $0x98] sm:$0xff]
    %v8671 = vld [vmem:[#allocation9 + $0xa0] sm:$0xff]
    %v8672 = vld [vmem:[#allocation9 + $0xa8] sm:$0xff]
    %v8673 = vld [vmem:[#allocation9 + $0xb0] sm:$0xff]
    %v8674 = vld [vmem:[#allocation9 + $0xb8] sm:$0xff]
    %v8675 = vld [vmem:[#allocation9 + $0xc0] sm:$0xff]
    %v8676 = vld [vmem:[#allocation9 + $0xc8] sm:$0xff]
    %v8677 = vld [vmem:[#allocation9 + $0xd0] sm:$0xff]
    %v8678 = vld [vmem:[#allocation9 + $0xd8] sm:$0xff]
    %v8679 = vld [vmem:[#allocation9 + $0xe0] sm:$0xff]
    %v8680 = vld [vmem:[#allocation9 + $0xe8] sm:$0xff]
    %v8681 = vld [vmem:[#allocation9 + $0xf0] sm:$0xff]
    %v8682 = vld [vmem:[#allocation9 + $0xf8] sm:$0xff]
    %v8683 = vld [vmem:[#allocation9 + $0x100] sm:$0xff]
    %v8684 = vld [vmem:[#allocation9 + $0x108] sm:$0xff]
    %v8685 = vld [vmem:[#allocation9 + $0x110] sm:$0xff]
    %v8686 = vld [vmem:[#allocation9 + $0x118] sm:$0xff]
    %v8687 = vld [vmem:[#allocation9 + $0x120] sm:$0xff]
    %v8688 = vld [vmem:[#allocation9 + $0x128] sm:$0xff]
    %v8689 = vld [vmem:[#allocation9 + $0x130] sm:$0xff]
    %v8690 = vld [vmem:[#allocation9 + $0x138] sm:$0xff]
    %v8691 = vld [vmem:[#allocation9 + $0x140] sm:$0xff]
    %v8692 = vld [vmem:[#allocation9 + $0x148] sm:$0xff]
    %v8693 = vld [vmem:[#allocation9 + $0x150] sm:$0xff]
    %v8694 = vld [vmem:[#allocation9 + $0x158] sm:$0xff]
    %v8695 = vld [vmem:[#allocation9 + $0x160] sm:$0xff]
    %v8696 = vld [vmem:[#allocation9 + $0x168] sm:$0xff]
    %v8697 = vld [vmem:[#allocation9 + $0x170] sm:$0xff]
    %v8698 = vld [vmem:[#allocation9 + $0x178] sm:$0xff]
    %v8699 = vld [vmem:[#allocation9 + $0x180] sm:$0xff]
    %v8700 = vld [vmem:[#allocation9 + $0x188] sm:$0xff]
    %v8701 = vld [vmem:[#allocation9 + $0x190] sm:$0xff]
    %v8702 = vld [vmem:[#allocation9 + $0x198] sm:$0xff]
    %v8703 = vld [vmem:[#allocation9 + $0x1a0] sm:$0xff]
    %v8704 = vld [vmem:[#allocation9 + $0x1a8] sm:$0xff]
    %v8705 = vld [vmem:[#allocation9 + $0x1b0] sm:$0xff]
    %v8706 = vld [vmem:[#allocation9 + $0x1b8] sm:$0xff]
    %v8707 = vld [vmem:[#allocation9 + $0x1c0] sm:$0xff]
    %v8708 = vld [vmem:[#allocation9 + $0x1c8] sm:$0xff]
    %v8709 = vld [vmem:[#allocation9 + $0x1d0] sm:$0xff]
    %v8710 = vld [vmem:[#allocation9 + $0x1d8] sm:$0xff]
    %v8711 = vld [vmem:[#allocation9 + $0x1e0] sm:$0xff]
    %v8712 = vld [vmem:[#allocation9 + $0x1e8] sm:$0xff]
    %v8713 = vld [vmem:[#allocation9 + $0x1f0] sm:$0xff]
    %v8714 = vld [vmem:[#allocation9 + $0x1f8] sm:$0xff]
    %v8715 = vld [vmem:[%s890] sm:$0xf]
    %v8717 = vlaneseq
    %v8718 = vshrl.u32 %v8717, 7
    %v8719 = vsub.s32 0, %v8718
    %v8720 = vrot.slane %v8715, %v8719
    %v8721 = vlaneseq
    %v8722 = vshrl.u32 %v8721, 7
    %v8723 = vsub.s32 1, %v8722
    %v8724 = vrot.slane %v8715, %v8723
    %v8725 = vlaneseq
    %v8726 = vshrl.u32 %v8725, 7
    %v8727 = vsub.s32 2, %v8726
    %v8728 = vrot.slane %v8715, %v8727
    %v8729 = vlaneseq
    %v8730 = vshrl.u32 %v8729, 7
    %v8731 = vsub.s32 3, %v8730
    %v8732 = vrot.slane %v8715, %v8731
    %v8801 = vunpack.c.l.b16 %v8651
    %v8802 = vunpack.c.h.b16 %v8651
    %v8803 = vunpack.c.l.b16 %v8652
    %v8804 = vunpack.c.h.b16 %v8652
    %v8805 = vunpack.c.l.b16 %v8653
    %v8806 = vunpack.c.h.b16 %v8653
    %v8807 = vunpack.c.l.b16 %v8654
    %v8808 = vunpack.c.h.b16 %v8654
    %v8809 = vunpack.c.l.b16 %v8655
    %v8810 = vunpack.c.h.b16 %v8655
    %v8811 = vunpack.c.l.b16 %v8656
    %v8812 = vunpack.c.h.b16 %v8656
    %v8813 = vunpack.c.l.b16 %v8657
    %v8814 = vunpack.c.h.b16 %v8657
    %v8815 = vunpack.c.l.b16 %v8658
    %v8816 = vunpack.c.h.b16 %v8658
    %v8817 = vunpack.c.l.b16 %v8659
    %v8818 = vunpack.c.h.b16 %v8659
    %v8819 = vunpack.c.l.b16 %v8660
    %v8820 = vunpack.c.h.b16 %v8660
    %v8821 = vunpack.c.l.b16 %v8661
    %v8822 = vunpack.c.h.b16 %v8661
    %v8823 = vunpack.c.l.b16 %v8662
    %v8824 = vunpack.c.h.b16 %v8662
    %v8825 = vunpack.c.l.b16 %v8663
    %v8826 = vunpack.c.h.b16 %v8663
    %v8827 = vunpack.c.l.b16 %v8664
    %v8828 = vunpack.c.h.b16 %v8664
    %v8829 = vunpack.c.l.b16 %v8665
    %v8830 = vunpack.c.h.b16 %v8665
    %v8831 = vunpack.c.l.b16 %v8666
    %v8832 = vunpack.c.h.b16 %v8666
    %v8833 = vunpack.c.l.b16 %v8667
    %v8834 = vunpack.c.h.b16 %v8667
    %v8835 = vunpack.c.l.b16 %v8668
    %v8836 = vunpack.c.h.b16 %v8668
    %v8837 = vunpack.c.l.b16 %v8669
    %v8838 = vunpack.c.h.b16 %v8669
    %v8839 = vunpack.c.l.b16 %v8670
    %v8840 = vunpack.c.h.b16 %v8670
    %v8841 = vunpack.c.l.b16 %v8671
    %v8842 = vunpack.c.h.b16 %v8671
    %v8843 = vunpack.c.l.b16 %v8672
    %v8844 = vunpack.c.h.b16 %v8672
    %v8845 = vunpack.c.l.b16 %v8673
    %v8846 = vunpack.c.h.b16 %v8673
    %v8847 = vunpack.c.l.b16 %v8674
    %v8848 = vunpack.c.h.b16 %v8674
    %v8849 = vunpack.c.l.b16 %v8675
    %v8850 = vunpack.c.h.b16 %v8675
    %v8851 = vunpack.c.l.b16 %v8676
    %v8852 = vunpack.c.h.b16 %v8676
    %v8853 = vunpack.c.l.b16 %v8677
    %v8854 = vunpack.c.h.b16 %v8677
    %v8855 = vunpack.c.l.b16 %v8678
    %v8856 = vunpack.c.h.b16 %v8678
    %v8857 = vunpack.c.l.b16 %v8679
    %v8858 = vunpack.c.h.b16 %v8679
    %v8859 = vunpack.c.l.b16 %v8680
    %v8860 = vunpack.c.h.b16 %v8680
    %v8861 = vunpack.c.l.b16 %v8681
    %v8862 = vunpack.c.h.b16 %v8681
    %v8863 = vunpack.c.l.b16 %v8682
    %v8864 = vunpack.c.h.b16 %v8682
    %v8865 = vunpack.c.l.b16 %v8683
    %v8866 = vunpack.c.h.b16 %v8683
    %v8867 = vunpack.c.l.b16 %v8684
    %v8868 = vunpack.c.h.b16 %v8684
    %v8869 = vunpack.c.l.b16 %v8685
    %v8870 = vunpack.c.h.b16 %v8685
    %v8871 = vunpack.c.l.b16 %v8686
    %v8872 = vunpack.c.h.b16 %v8686
    %v8873 = vunpack.c.l.b16 %v8687
    %v8874 = vunpack.c.h.b16 %v8687
    %v8875 = vunpack.c.l.b16 %v8688
    %v8876 = vunpack.c.h.b16 %v8688
    %v8877 = vunpack.c.l.b16 %v8689
    %v8878 = vunpack.c.h.b16 %v8689
    %v8879 = vunpack.c.l.b16 %v8690
    %v8880 = vunpack.c.h.b16 %v8690
    %v8881 = vunpack.c.l.b16 %v8691
    %v8882 = vunpack.c.h.b16 %v8691
    %v8883 = vunpack.c.l.b16 %v8692
    %v8884 = vunpack.c.h.b16 %v8692
    %v8885 = vunpack.c.l.b16 %v8693
    %v8886 = vunpack.c.h.b16 %v8693
    %v8887 = vunpack.c.l.b16 %v8694
    %v8888 = vunpack.c.h.b16 %v8694
    %v8889 = vunpack.c.l.b16 %v8695
    %v8890 = vunpack.c.h.b16 %v8695
    %v8891 = vunpack.c.l.b16 %v8696
    %v8892 = vunpack.c.h.b16 %v8696
    %v8893 = vunpack.c.l.b16 %v8697
    %v8894 = vunpack.c.h.b16 %v8697
    %v8895 = vunpack.c.l.b16 %v8698
    %v8896 = vunpack.c.h.b16 %v8698
    %v8897 = vunpack.c.l.b16 %v8699
    %v8898 = vunpack.c.h.b16 %v8699
    %v8899 = vunpack.c.l.b16 %v8700
    %v8900 = vunpack.c.h.b16 %v8700
    %v8901 = vunpack.c.l.b16 %v8701
    %v8902 = vunpack.c.h.b16 %v8701
    %v8903 = vunpack.c.l.b16 %v8702
    %v8904 = vunpack.c.h.b16 %v8702
    %v8905 = vunpack.c.l.b16 %v8703
    %v8906 = vunpack.c.h.b16 %v8703
    %v8907 = vunpack.c.l.b16 %v8704
    %v8908 = vunpack.c.h.b16 %v8704
    %v8909 = vunpack.c.l.b16 %v8705
    %v8910 = vunpack.c.h.b16 %v8705
    %v8911 = vunpack.c.l.b16 %v8706
    %v8912 = vunpack.c.h.b16 %v8706
    %v8913 = vunpack.c.l.b16 %v8707
    %v8914 = vunpack.c.h.b16 %v8707
    %v8915 = vunpack.c.l.b16 %v8708
    %v8916 = vunpack.c.h.b16 %v8708
    %v8917 = vunpack.c.l.b16 %v8709
    %v8918 = vunpack.c.h.b16 %v8709
    %v8919 = vunpack.c.l.b16 %v8710
    %v8920 = vunpack.c.h.b16 %v8710
    %v8921 = vunpack.c.l.b16 %v8711
    %v8922 = vunpack.c.h.b16 %v8711
    %v8923 = vunpack.c.l.b16 %v8712
    %v8924 = vunpack.c.h.b16 %v8712
    %v8925 = vunpack.c.l.b16 %v8713
    %v8926 = vunpack.c.h.b16 %v8713
    %v8927 = vunpack.c.l.b16 %v8714
    %v8928 = vunpack.c.h.b16 %v8714
    %v8929 = vpack.c.b16 %v8805, %v8801
    %v8930 = vpack.c.b16 %v8806, %v8802
    %v8931 = vpack.c.b16 %v8807, %v8803
    %v8932 = vpack.c.b16 %v8808, %v8804
    %v8933 = vpack.c.b16 %v8813, %v8809
    %v8934 = vpack.c.b16 %v8814, %v8810
    %v8935 = vpack.c.b16 %v8815, %v8811
    %v8936 = vpack.c.b16 %v8816, %v8812
    %v8937 = vpack.c.b16 %v8821, %v8817
    %v8938 = vpack.c.b16 %v8822, %v8818
    %v8939 = vpack.c.b16 %v8823, %v8819
    %v8940 = vpack.c.b16 %v8824, %v8820
    %v8941 = vpack.c.b16 %v8829, %v8825
    %v8942 = vpack.c.b16 %v8830, %v8826
    %v8943 = vpack.c.b16 %v8831, %v8827
    %v8944 = vpack.c.b16 %v8832, %v8828
    %v8945 = vpack.c.b16 %v8837, %v8833
    %v8946 = vpack.c.b16 %v8838, %v8834
    %v8947 = vpack.c.b16 %v8839, %v8835
    %v8948 = vpack.c.b16 %v8840, %v8836
    %v8949 = vpack.c.b16 %v8845, %v8841
    %v8950 = vpack.c.b16 %v8846, %v8842
    %v8951 = vpack.c.b16 %v8847, %v8843
    %v8952 = vpack.c.b16 %v8848, %v8844
    %v8953 = vpack.c.b16 %v8853, %v8849
    %v8954 = vpack.c.b16 %v8854, %v8850
    %v8955 = vpack.c.b16 %v8855, %v8851
    %v8956 = vpack.c.b16 %v8856, %v8852
    %v8957 = vpack.c.b16 %v8861, %v8857
    %v8958 = vpack.c.b16 %v8862, %v8858
    %v8959 = vpack.c.b16 %v8863, %v8859
    %v8960 = vpack.c.b16 %v8864, %v8860
    %v8961 = vpack.c.b16 %v8869, %v8865
    %v8962 = vpack.c.b16 %v8870, %v8866
    %v8963 = vpack.c.b16 %v8871, %v8867
    %v8964 = vpack.c.b16 %v8872, %v8868
    %v8965 = vpack.c.b16 %v8877, %v8873
    %v8966 = vpack.c.b16 %v8878, %v8874
    %v8967 = vpack.c.b16 %v8879, %v8875
    %v8968 = vpack.c.b16 %v8880, %v8876
    %v8969 = vpack.c.b16 %v8885, %v8881
    %v8970 = vpack.c.b16 %v8886, %v8882
    %v8971 = vpack.c.b16 %v8887, %v8883
    %v8972 = vpack.c.b16 %v8888, %v8884
    %v8973 = vpack.c.b16 %v8893, %v8889
    %v8974 = vpack.c.b16 %v8894, %v8890
    %v8975 = vpack.c.b16 %v8895, %v8891
    %v8976 = vpack.c.b16 %v8896, %v8892
    %v8977 = vpack.c.b16 %v8901, %v8897
    %v8978 = vpack.c.b16 %v8902, %v8898
    %v8979 = vpack.c.b16 %v8903, %v8899
    %v8980 = vpack.c.b16 %v8904, %v8900
    %v8981 = vpack.c.b16 %v8909, %v8905
    %v8982 = vpack.c.b16 %v8910, %v8906
    %v8983 = vpack.c.b16 %v8911, %v8907
    %v8984 = vpack.c.b16 %v8912, %v8908
    %v8985 = vpack.c.b16 %v8917, %v8913
    %v8986 = vpack.c.b16 %v8918, %v8914
    %v8987 = vpack.c.b16 %v8919, %v8915
    %v8988 = vpack.c.b16 %v8920, %v8916
    %v8989 = vpack.c.b16 %v8925, %v8921
    %v8990 = vpack.c.b16 %v8926, %v8922
    %v8991 = vpack.c.b16 %v8927, %v8923
    %v8992 = vpack.c.b16 %v8928, %v8924
    %9057 = vmatprep.subr.bf16.mxu0 %v8958
    %9058 = vmatpush1.bf16.msra.mxu0 %v8957
    %9059 = vmatprep.subr.bf16.mxu0 %v8954
    %9060 = vmatpush1.bf16.msra.mxu0 %v8953
    %9061 = vmatprep.subr.bf16.mxu0 %v8950
    %9062 = vmatpush1.bf16.msra.mxu0 %v8949
    %9063 = vmatprep.subr.bf16.mxu0 %v8946
    %9064 = vmatpush1.bf16.msra.mxu0 %v8945
    %9065 = vmatprep.subr.bf16.mxu0 %v8942
    %9066 = vmatpush1.bf16.msra.mxu0 %v8941
    %9067 = vmatprep.subr.bf16.mxu0 %v8938
    %9068 = vmatpush1.bf16.msra.mxu0 %v8937
    %9069 = vmatprep.subr.bf16.mxu0 %v8934
    %9070 = vmatpush1.bf16.msra.mxu0 %v8933
    %9071 = vmatprep.subr.bf16.mxu0 %v8930
    %9072 = vmatpush1.bf16.msra.mxu0 %v8929
    %9073 = vmatprep.subr.bf16.mxu0 %v8990
    %9074 = vmatpush2.bf16.msra.mxu0 %v8989
    %9075 = vmatprep.subr.bf16.mxu0 %v8986
    %9076 = vmatpush2.bf16.msra.mxu0 %v8985
    %9077 = vmatprep.subr.bf16.mxu0 %v8982
    %9078 = vmatpush2.bf16.msra.mxu0 %v8981
    %9079 = vmatprep.subr.bf16.mxu0 %v8978
    %9080 = vmatpush2.bf16.msra.mxu0 %v8977
    %9081 = vmatprep.subr.bf16.mxu0 %v8974
    %9082 = vmatpush2.bf16.msra.mxu0 %v8973
    %9083 = vmatprep.subr.bf16.mxu0 %v8970
    %9084 = vmatpush2.bf16.msra.mxu0 %v8969
    %9085 = vmatprep.subr.bf16.mxu0 %v8966
    %9086 = vmatpush2.bf16.msra.mxu0 %v8965
    %9087 = vmatprep.subr.bf16.mxu0 %v8962
    %9088 = vmatpush2.bf16.msra.mxu0 %v8961
    %9089 = vmatprep.mubr.bf16.mxu0 %v8134
    %9090 = vmatmul.mubr.bf16.gmra.mxu0 %v8650
    %v9091 = vpop.f32.mrf.mxu0
    %v9092 = vadd.f32 %v8720, %v9091
    %v9093 = vpop.f32.mrf.mxu0
    %v9094 = vadd.f32 %v8724, %v9093
    %v9095 = vpop.f32.mrf.mxu0
    %v9096 = vpop.f32.mrf.mxu0
    %9097 = vdwg.mxu0
    %9098 = vmatprep.subr.bf16.mxu0 %v8960
    %9099 = vmatpush1.bf16.msra.mxu0 %v8959
    %9100 = vmatprep.subr.bf16.mxu0 %v8956
    %9101 = vmatpush1.bf16.msra.mxu0 %v8955
    %9102 = vmatprep.subr.bf16.mxu0 %v8952
    %9103 = vmatpush1.bf16.msra.mxu0 %v8951
    %9104 = vmatprep.subr.bf16.mxu0 %v8948
    %9105 = vmatpush1.bf16.msra.mxu0 %v8947
    %9106 = vmatprep.subr.bf16.mxu0 %v8944
    %9107 = vmatpush1.bf16.msra.mxu0 %v8943
    %9108 = vmatprep.subr.bf16.mxu0 %v8940
    %9109 = vmatpush1.bf16.msra.mxu0 %v8939
    %9110 = vmatprep.subr.bf16.mxu0 %v8936
    %9111 = vmatpush1.bf16.msra.mxu0 %v8935
    %9112 = vmatprep.subr.bf16.mxu0 %v8932
    %9113 = vmatpush1.bf16.msra.mxu0 %v8931
    %9114 = vmatprep.subr.bf16.mxu0 %v8992
    %9115 = vmatpush2.bf16.msra.mxu0 %v8991
    %9116 = vmatprep.subr.bf16.mxu0 %v8988
    %9117 = vmatpush2.bf16.msra.mxu0 %v8987
    %9118 = vmatprep.subr.bf16.mxu0 %v8984
    %9119 = vmatpush2.bf16.msra.mxu0 %v8983
    %9120 = vmatprep.subr.bf16.mxu0 %v8980
    %9121 = vmatpush2.bf16.msra.mxu0 %v8979
    %9122 = vmatprep.subr.bf16.mxu0 %v8976
    %9123 = vmatpush2.bf16.msra.mxu0 %v8975
    %9124 = vmatprep.subr.bf16.mxu0 %v8972
    %9125 = vmatpush2.bf16.msra.mxu0 %v8971
    %9126 = vmatprep.subr.bf16.mxu0 %v8968
    %9127 = vmatpush2.bf16.msra.mxu0 %v8967
    %9128 = vmatprep.subr.bf16.mxu0 %v8964
    %9129 = vmatpush2.bf16.msra.mxu0 %v8963
    %9130 = vmatprep.mubr.bf16.mxu0 %v8134
    %9131 = vmatmul.mubr.bf16.gmra.mxu0 %v8650
    %v9132 = vpop.f32.mrf.mxu0
    %v9133 = vadd.f32 %v8728, %v9132
    %v9134 = vpop.f32.mrf.mxu0
    %v9135 = vadd.f32 %v8732, %v9134
    %v9136 = vpop.f32.mrf.mxu0
    %v9137 = vpop.f32.mrf.mxu0
    %9138 = vdwg.mxu0
    %v9139 = vxor.u32 %v9092, 2147483648
    %v9140 = vxor.u32 %v9094, 2147483648
    %v9141 = vxor.u32 %v9133, 2147483648
    %v9142 = vmul.f32 %v9139, 1.442695
    %v9143 = vpow.pop %v9142
    %v9144 = vmul.f32 %v9140, 1.442695
    %v9145 = vpow.pop %v9144
    %v9146 = vmul.f32 %v9141, 1.442695
    %v9147 = vpow.pop %v9146
    %v9148 = vadd.f32 %v9143, 1.0
    %v9149 = vadd.f32 %v9145, 1.0
    %v9150 = vadd.f32 %v9147, 1.0
    %v9151 = vrcp.pop %v9148
    %v9152 = vmul.f32 1.0, %v9151
    %v9153 = vrcp.pop %v9149
    %v9154 = vmul.f32 1.0, %v9153
    %v9155 = vrcp.pop %v9150
    %v9156 = vmul.f32 1.0, %v9155
    %v9157 = vtanh.pop %v9135
    %v9158 = vmul.f32 %v9154, %v7824
    %v9159 = vmul.f32 %v9152, %v9157
    %v9160 = vadd.f32 %v9158, %v9159
    %v9161 = vtanh.pop %v9160
    %v9162 = vmul.f32 %v9156, %v9161
    %s9163 = scalar_lea.vmem [#allocation2], 224
    %v9164 = vld [vmem:[%s9163] sm:$0xff]
    %v9165 = vld [vmem:[%s9163 + $0x8] sm:$0xff]
    %v9166 = vld [vmem:[%s9163 + $0x10] sm:$0xff]
    %v9167 = vld [vmem:[%s9163 + $0x18] sm:$0xff]
    %v9168 = vld [vmem:[#allocation8] sm:$0xff]
    %v9169 = vld [vmem:[#allocation8 + $0x8] sm:$0xff]
    %v9170 = vld [vmem:[#allocation8 + $0x10] sm:$0xff]
    %v9171 = vld [vmem:[#allocation8 + $0x18] sm:$0xff]
    %v9172 = vld [vmem:[#allocation8 + $0x20] sm:$0xff]
    %v9173 = vld [vmem:[#allocation8 + $0x28] sm:$0xff]
    %v9174 = vld [vmem:[#allocation8 + $0x30] sm:$0xff]
    %v9175 = vld [vmem:[#allocation8 + $0x38] sm:$0xff]
    %v9176 = vld [vmem:[#allocation8 + $0x40] sm:$0xff]
    %v9177 = vld [vmem:[#allocation8 + $0x48] sm:$0xff]
    %v9178 = vld [vmem:[#allocation8 + $0x50] sm:$0xff]
    %v9179 = vld [vmem:[#allocation8 + $0x58] sm:$0xff]
    %v9180 = vld [vmem:[#allocation8 + $0x60] sm:$0xff]
    %v9181 = vld [vmem:[#allocation8 + $0x68] sm:$0xff]
    %v9182 = vld [vmem:[#allocation8 + $0x70] sm:$0xff]
    %v9183 = vld [vmem:[#allocation8 + $0x78] sm:$0xff]
    %v9184 = vld [vmem:[#allocation8 + $0x80] sm:$0xff]
    %v9185 = vld [vmem:[#allocation8 + $0x88] sm:$0xff]
    %v9186 = vld [vmem:[#allocation8 + $0x90] sm:$0xff]
    %v9187 = vld [vmem:[#allocation8 + $0x98] sm:$0xff]
    %v9188 = vld [vmem:[#allocation8 + $0xa0] sm:$0xff]
    %v9189 = vld [vmem:[#allocation8 + $0xa8] sm:$0xff]
    %v9190 = vld [vmem:[#allocation8 + $0xb0] sm:$0xff]
    %v9191 = vld [vmem:[#allocation8 + $0xb8] sm:$0xff]
    %v9192 = vld [vmem:[#allocation8 + $0xc0] sm:$0xff]
    %v9193 = vld [vmem:[#allocation8 + $0xc8] sm:$0xff]
    %v9194 = vld [vmem:[#allocation8 + $0xd0] sm:$0xff]
    %v9195 = vld [vmem:[#allocation8 + $0xd8] sm:$0xff]
    %v9196 = vld [vmem:[#allocation8 + $0xe0] sm:$0xff]
    %v9197 = vld [vmem:[#allocation8 + $0xe8] sm:$0xff]
    %v9198 = vld [vmem:[#allocation8 + $0xf0] sm:$0xff]
    %v9199 = vld [vmem:[#allocation8 + $0xf8] sm:$0xff]
    %v9232 = vunpack.c.l.b16 %v9168
    %v9233 = vunpack.c.h.b16 %v9168
    %v9234 = vunpack.c.l.b16 %v9169
    %v9235 = vunpack.c.h.b16 %v9169
    %v9236 = vunpack.c.l.b16 %v9170
    %v9237 = vunpack.c.h.b16 %v9170
    %v9238 = vunpack.c.l.b16 %v9171
    %v9239 = vunpack.c.h.b16 %v9171
    %v9240 = vunpack.c.l.b16 %v9172
    %v9241 = vunpack.c.h.b16 %v9172
    %v9242 = vunpack.c.l.b16 %v9173
    %v9243 = vunpack.c.h.b16 %v9173
    %v9244 = vunpack.c.l.b16 %v9174
    %v9245 = vunpack.c.h.b16 %v9174
    %v9246 = vunpack.c.l.b16 %v9175
    %v9247 = vunpack.c.h.b16 %v9175
    %v9248 = vunpack.c.l.b16 %v9176
    %v9249 = vunpack.c.h.b16 %v9176
    %v9250 = vunpack.c.l.b16 %v9177
    %v9251 = vunpack.c.h.b16 %v9177
    %v9252 = vunpack.c.l.b16 %v9178
    %v9253 = vunpack.c.h.b16 %v9178
    %v9254 = vunpack.c.l.b16 %v9179
    %v9255 = vunpack.c.h.b16 %v9179
    %v9256 = vunpack.c.l.b16 %v9180
    %v9257 = vunpack.c.h.b16 %v9180
    %v9258 = vunpack.c.l.b16 %v9181
    %v9259 = vunpack.c.h.b16 %v9181
    %v9260 = vunpack.c.l.b16 %v9182
    %v9261 = vunpack.c.h.b16 %v9182
    %v9262 = vunpack.c.l.b16 %v9183
    %v9263 = vunpack.c.h.b16 %v9183
    %v9264 = vunpack.c.l.b16 %v9184
    %v9265 = vunpack.c.h.b16 %v9184
    %v9266 = vunpack.c.l.b16 %v9185
    %v9267 = vunpack.c.h.b16 %v9185
    %v9268 = vunpack.c.l.b16 %v9186
    %v9269 = vunpack.c.h.b16 %v9186
    %v9270 = vunpack.c.l.b16 %v9187
    %v9271 = vunpack.c.h.b16 %v9187
    %v9272 = vunpack.c.l.b16 %v9188
    %v9273 = vunpack.c.h.b16 %v9188
    %v9274 = vunpack.c.l.b16 %v9189
    %v9275 = vunpack.c.h.b16 %v9189
    %v9276 = vunpack.c.l.b16 %v9190
    %v9277 = vunpack.c.h.b16 %v9190
    %v9278 = vunpack.c.l.b16 %v9191
    %v9279 = vunpack.c.h.b16 %v9191
    %v9280 = vunpack.c.l.b16 %v9192
    %v9281 = vunpack.c.h.b16 %v9192
    %v9282 = vunpack.c.l.b16 %v9193
    %v9283 = vunpack.c.h.b16 %v9193
    %v9284 = vunpack.c.l.b16 %v9194
    %v9285 = vunpack.c.h.b16 %v9194
    %v9286 = vunpack.c.l.b16 %v9195
    %v9287 = vunpack.c.h.b16 %v9195
    %v9288 = vunpack.c.l.b16 %v9196
    %v9289 = vunpack.c.h.b16 %v9196
    %v9290 = vunpack.c.l.b16 %v9197
    %v9291 = vunpack.c.h.b16 %v9197
    %v9292 = vunpack.c.l.b16 %v9198
    %v9293 = vunpack.c.h.b16 %v9198
    %v9294 = vunpack.c.l.b16 %v9199
    %v9295 = vunpack.c.h.b16 %v9199
    %v9296 = vpack.c.b16 %v9236, %v9232
    %v9297 = vpack.c.b16 %v9237, %v9233
    %v9298 = vpack.c.b16 %v9238, %v9234
    %v9299 = vpack.c.b16 %v9239, %v9235
    %v9300 = vpack.c.b16 %v9244, %v9240
    %v9301 = vpack.c.b16 %v9245, %v9241
    %v9302 = vpack.c.b16 %v9246, %v9242
    %v9303 = vpack.c.b16 %v9247, %v9243
    %v9304 = vpack.c.b16 %v9252, %v9248
    %v9305 = vpack.c.b16 %v9253, %v9249
    %v9306 = vpack.c.b16 %v9254, %v9250
    %v9307 = vpack.c.b16 %v9255, %v9251
    %v9308 = vpack.c.b16 %v9260, %v9256
    %v9309 = vpack.c.b16 %v9261, %v9257
    %v9310 = vpack.c.b16 %v9262, %v9258
    %v9311 = vpack.c.b16 %v9263, %v9259
    %v9312 = vpack.c.b16 %v9268, %v9264
    %v9313 = vpack.c.b16 %v9269, %v9265
    %v9314 = vpack.c.b16 %v9270, %v9266
    %v9315 = vpack.c.b16 %v9271, %v9267
    %v9316 = vpack.c.b16 %v9276, %v9272
    %v9317 = vpack.c.b16 %v9277, %v9273
    %v9318 = vpack.c.b16 %v9278, %v9274
    %v9319 = vpack.c.b16 %v9279, %v9275
    %v9320 = vpack.c.b16 %v9284, %v9280
    %v9321 = vpack.c.b16 %v9285, %v9281
    %v9322 = vpack.c.b16 %v9286, %v9282
    %v9323 = vpack.c.b16 %v9287, %v9283
    %v9324 = vpack.c.b16 %v9292, %v9288
    %v9325 = vpack.c.b16 %v9293, %v9289
    %v9326 = vpack.c.b16 %v9294, %v9290
    %v9327 = vpack.c.b16 %v9295, %v9291
    %9360 = vmatprep.subr.bf16.mxu0 %v9325
    %9361 = vmatpush1.bf16.msra.mxu0 %v9324
    %9362 = vmatprep.subr.bf16.mxu0 %v9321
    %9363 = vmatpush1.bf16.msra.mxu0 %v9320
    %9364 = vmatprep.subr.bf16.mxu0 %v9317
    %9365 = vmatpush1.bf16.msra.mxu0 %v9316
    %9366 = vmatprep.subr.bf16.mxu0 %v9313
    %9367 = vmatpush1.bf16.msra.mxu0 %v9312
    %9368 = vmatprep.subr.bf16.mxu0 %v9309
    %9369 = vmatpush1.bf16.msra.mxu0 %v9308
    %9370 = vmatprep.subr.bf16.mxu0 %v9305
    %9371 = vmatpush1.bf16.msra.mxu0 %v9304
    %9372 = vmatprep.subr.bf16.mxu0 %v9301
    %9373 = vmatpush1.bf16.msra.mxu0 %v9300
    %9374 = vmatprep.subr.bf16.mxu0 %v9297
    %9375 = vmatpush1.bf16.msra.mxu0 %v9296
    %9376 = vmatprep.subr.bf16.mxu0 0
    %9377 = vmatpush2.bf16.msra.mxu0 0
    %9378 = vmatprep.subr.bf16.mxu0 0
    %9379 = vmatpush2.bf16.msra.mxu0 0
    %9380 = vmatprep.subr.bf16.mxu0 0
    %9381 = vmatpush2.bf16.msra.mxu0 0
    %9382 = vmatprep.subr.bf16.mxu0 0
    %9383 = vmatpush2.bf16.msra.mxu0 0
    %9384 = vmatprep.subr.bf16.mxu0 0
    %9385 = vmatpush2.bf16.msra.mxu0 0
    %9386 = vmatprep.subr.bf16.mxu0 0
    %9387 = vmatpush2.bf16.msra.mxu0 0
    %9388 = vmatprep.subr.bf16.mxu0 0
    %9389 = vmatpush2.bf16.msra.mxu0 0
    %9390 = vmatprep.subr.bf16.mxu0 0
    %9391 = vmatpush2.bf16.msra.mxu0 0
    %9392 = vmatprep.mubr.bf16.mxu0 0
    %9393 = vmatmul.mubr.bf16.gmra.mxu0 %v8650
    %v9394 = vpop.f32.mrf.mxu0
    %v9395 = vadd.f32 0.0, %v9394
    %v9396 = vpop.f32.mrf.mxu0
    %v9397 = vadd.f32 0.0, %v9396
    %v9398 = vpop.f32.mrf.mxu0
    %v9399 = vpop.f32.mrf.mxu0
    %9400 = vdwg.mxu0
    %9401 = vmatprep.subr.bf16.mxu0 %v9327
    %9402 = vmatpush1.bf16.msra.mxu0 %v9326
    %9403 = vmatprep.subr.bf16.mxu0 %v9323
    %9404 = vmatpush1.bf16.msra.mxu0 %v9322
    %9405 = vmatprep.subr.bf16.mxu0 %v9319
    %9406 = vmatpush1.bf16.msra.mxu0 %v9318
    %9407 = vmatprep.subr.bf16.mxu0 %v9315
    %9408 = vmatpush1.bf16.msra.mxu0 %v9314
    %9409 = vmatprep.subr.bf16.mxu0 %v9311
    %9410 = vmatpush1.bf16.msra.mxu0 %v9310
    %9411 = vmatprep.subr.bf16.mxu0 %v9307
    %9412 = vmatpush1.bf16.msra.mxu0 %v9306
    %9413 = vmatprep.subr.bf16.mxu0 %v9303
    %9414 = vmatpush1.bf16.msra.mxu0 %v9302
    %9415 = vmatprep.subr.bf16.mxu0 %v9299
    %9416 = vmatpush1.bf16.msra.mxu0 %v9298
    %9417 = vmatprep.subr.bf16.mxu0 0
    %9418 = vmatpush2.bf16.msra.mxu0 0
    %9419 = vmatprep.subr.bf16.mxu0 0
    %9420 = vmatpush2.bf16.msra.mxu0 0
    %9421 = vmatprep.subr.bf16.mxu0 0
    %9422 = vmatpush2.bf16.msra.mxu0 0
    %9423 = vmatprep.subr.bf16.mxu0 0
    %9424 = vmatpush2.bf16.msra.mxu0 0
    %9425 = vmatprep.subr.bf16.mxu0 0
    %9426 = vmatpush2.bf16.msra.mxu0 0
    %9427 = vmatprep.subr.bf16.mxu0 0
    %9428 = vmatpush2.bf16.msra.mxu0 0
    %9429 = vmatprep.subr.bf16.mxu0 0
    %9430 = vmatpush2.bf16.msra.mxu0 0
    %9431 = vmatprep.subr.bf16.mxu0 0
    %9432 = vmatpush2.bf16.msra.mxu0 0
    %9433 = vmatprep.mubr.bf16.mxu0 0
    %9434 = vmatmul.mubr.bf16.gmra.mxu0 %v8650
    %v9435 = vpop.f32.mrf.mxu0
    %v9436 = vadd.f32 0.0, %v9435
    %v9437 = vpop.f32.mrf.mxu0
    %v9438 = vadd.f32 0.0, %v9437
    %v9439 = vpop.f32.mrf.mxu0
    %v9440 = vpop.f32.mrf.mxu0
    %9441 = vdwg.mxu0
    %v9442 = vadd.f32 %v9164, %v9395
    %v9443 = vadd.f32 %v9165, %v9397
    %v9444 = vadd.f32 %v9166, %v9436
    %v9445 = vadd.f32 %v9167, %v9438
    %v9446 = vxor.u32 %v9442, 2147483648
    %v9447 = vxor.u32 %v9443, 2147483648
    %v9448 = vxor.u32 %v9444, 2147483648
    %v9449 = vmul.f32 %v9446, 1.442695
    %v9450 = vpow.pop %v9449
    %v9451 = vmul.f32 %v9447, 1.442695
    %v9452 = vpow.pop %v9451
    %v9453 = vmul.f32 %v9448, 1.442695
    %v9454 = vpow.pop %v9453
    %v9455 = vadd.f32 %v9450, 1.0
    %v9456 = vadd.f32 %v9452, 1.0
    %v9457 = vadd.f32 %v9454, 1.0
    %v9458 = vrcp.pop %v9455
    %v9459 = vmul.f32 1.0, %v9458
    %v9460 = vrcp.pop %v9456
    %v9461 = vmul.f32 1.0, %v9460
    %v9462 = vrcp.pop %v9457
    %v9463 = vmul.f32 1.0, %v9462
    %v9464 = vtanh.pop %v9445
    %v9465 = vmul.f32 %v9461, %v8131
    %v9466 = vmul.f32 %v9459, %v9464
    %v9467 = vadd.f32 %v9465, %v9466
    %v9468 = vtanh.pop %v9467
    %v9469 = vmul.f32 %v9463, %v9468
    %v9470 = vpack.c.bf16 %v9162, %v9162
    %v9471 = vpack.c.bf16 %v8647, %v8647
    %v9472 = vld [vmem:[%s1455] sm:$0xff]
    %v9473 = vld [vmem:[%s1455 + $0x8] sm:$0xff]
    %v9474 = vld [vmem:[%s1455 + $0x10] sm:$0xff]
    %v9475 = vld [vmem:[%s1455 + $0x18] sm:$0xff]
    %v9476 = vld [vmem:[%s1455 + $0x20] sm:$0xff]
    %v9477 = vld [vmem:[%s1455 + $0x28] sm:$0xff]
    %v9478 = vld [vmem:[%s1455 + $0x30] sm:$0xff]
    %v9479 = vld [vmem:[%s1455 + $0x38] sm:$0xff]
    %v9480 = vld [vmem:[%s1455 + $0x40] sm:$0xff]
    %v9481 = vld [vmem:[%s1455 + $0x48] sm:$0xff]
    %v9482 = vld [vmem:[%s1455 + $0x50] sm:$0xff]
    %v9483 = vld [vmem:[%s1455 + $0x58] sm:$0xff]
    %v9484 = vld [vmem:[%s1455 + $0x60] sm:$0xff]
    %v9485 = vld [vmem:[%s1455 + $0x68] sm:$0xff]
    %v9486 = vld [vmem:[%s1455 + $0x70] sm:$0xff]
    %v9487 = vld [vmem:[%s1455 + $0x78] sm:$0xff]
    %v9488 = vld [vmem:[%s1455 + $0x80] sm:$0xff]
    %v9489 = vld [vmem:[%s1455 + $0x88] sm:$0xff]
    %v9490 = vld [vmem:[%s1455 + $0x90] sm:$0xff]
    %v9491 = vld [vmem:[%s1455 + $0x98] sm:$0xff]
    %v9492 = vld [vmem:[%s1455 + $0xa0] sm:$0xff]
    %v9493 = vld [vmem:[%s1455 + $0xa8] sm:$0xff]
    %v9494 = vld [vmem:[%s1455 + $0xb0] sm:$0xff]
    %v9495 = vld [vmem:[%s1455 + $0xb8] sm:$0xff]
    %v9496 = vld [vmem:[%s1455 + $0xc0] sm:$0xff]
    %v9497 = vld [vmem:[%s1455 + $0xc8] sm:$0xff]
    %v9498 = vld [vmem:[%s1455 + $0xd0] sm:$0xff]
    %v9499 = vld [vmem:[%s1455 + $0xd8] sm:$0xff]
    %v9500 = vld [vmem:[%s1455 + $0xe0] sm:$0xff]
    %v9501 = vld [vmem:[%s1455 + $0xe8] sm:$0xff]
    %v9502 = vld [vmem:[%s1455 + $0xf0] sm:$0xff]
    %v9503 = vld [vmem:[%s1455 + $0xf8] sm:$0xff]
    %v9504 = vld [vmem:[%s1455 + $0x100] sm:$0xff]
    %v9505 = vld [vmem:[%s1455 + $0x108] sm:$0xff]
    %v9506 = vld [vmem:[%s1455 + $0x110] sm:$0xff]
    %v9507 = vld [vmem:[%s1455 + $0x118] sm:$0xff]
    %v9508 = vld [vmem:[%s1455 + $0x120] sm:$0xff]
    %v9509 = vld [vmem:[%s1455 + $0x128] sm:$0xff]
    %v9510 = vld [vmem:[%s1455 + $0x130] sm:$0xff]
    %v9511 = vld [vmem:[%s1455 + $0x138] sm:$0xff]
    %v9512 = vld [vmem:[%s1455 + $0x140] sm:$0xff]
    %v9513 = vld [vmem:[%s1455 + $0x148] sm:$0xff]
    %v9514 = vld [vmem:[%s1455 + $0x150] sm:$0xff]
    %v9515 = vld [vmem:[%s1455 + $0x158] sm:$0xff]
    %v9516 = vld [vmem:[%s1455 + $0x160] sm:$0xff]
    %v9517 = vld [vmem:[%s1455 + $0x168] sm:$0xff]
    %v9518 = vld [vmem:[%s1455 + $0x170] sm:$0xff]
    %v9519 = vld [vmem:[%s1455 + $0x178] sm:$0xff]
    %v9520 = vld [vmem:[%s1455 + $0x180] sm:$0xff]
    %v9521 = vld [vmem:[%s1455 + $0x188] sm:$0xff]
    %v9522 = vld [vmem:[%s1455 + $0x190] sm:$0xff]
    %v9523 = vld [vmem:[%s1455 + $0x198] sm:$0xff]
    %v9524 = vld [vmem:[%s1455 + $0x1a0] sm:$0xff]
    %v9525 = vld [vmem:[%s1455 + $0x1a8] sm:$0xff]
    %v9526 = vld [vmem:[%s1455 + $0x1b0] sm:$0xff]
    %v9527 = vld [vmem:[%s1455 + $0x1b8] sm:$0xff]
    %v9528 = vld [vmem:[%s1455 + $0x1c0] sm:$0xff]
    %v9529 = vld [vmem:[%s1455 + $0x1c8] sm:$0xff]
    %v9530 = vld [vmem:[%s1455 + $0x1d0] sm:$0xff]
    %v9531 = vld [vmem:[%s1455 + $0x1d8] sm:$0xff]
    %v9532 = vld [vmem:[%s1455 + $0x1e0] sm:$0xff]
    %v9533 = vld [vmem:[%s1455 + $0x1e8] sm:$0xff]
    %v9534 = vld [vmem:[%s1455 + $0x1f0] sm:$0xff]
    %v9535 = vld [vmem:[%s1455 + $0x1f8] sm:$0xff]
    %v9536 = vld [vmem:[%s1520] sm:$0xf]
    %v9538 = vlaneseq
    %v9539 = vshrl.u32 %v9538, 7
    %v9540 = vsub.s32 0, %v9539
    %v9541 = vrot.slane %v9536, %v9540
    %v9542 = vlaneseq
    %v9543 = vshrl.u32 %v9542, 7
    %v9544 = vsub.s32 1, %v9543
    %v9545 = vrot.slane %v9536, %v9544
    %v9546 = vlaneseq
    %v9547 = vshrl.u32 %v9546, 7
    %v9548 = vsub.s32 2, %v9547
    %v9549 = vrot.slane %v9536, %v9548
    %v9550 = vlaneseq
    %v9551 = vshrl.u32 %v9550, 7
    %v9552 = vsub.s32 3, %v9551
    %v9553 = vrot.slane %v9536, %v9552
    %v9622 = vunpack.c.l.b16 %v9472
    %v9623 = vunpack.c.h.b16 %v9472
    %v9624 = vunpack.c.l.b16 %v9473
    %v9625 = vunpack.c.h.b16 %v9473
    %v9626 = vunpack.c.l.b16 %v9474
    %v9627 = vunpack.c.h.b16 %v9474
    %v9628 = vunpack.c.l.b16 %v9475
    %v9629 = vunpack.c.h.b16 %v9475
    %v9630 = vunpack.c.l.b16 %v9476
    %v9631 = vunpack.c.h.b16 %v9476
    %v9632 = vunpack.c.l.b16 %v9477
    %v9633 = vunpack.c.h.b16 %v9477
    %v9634 = vunpack.c.l.b16 %v9478
    %v9635 = vunpack.c.h.b16 %v9478
    %v9636 = vunpack.c.l.b16 %v9479
    %v9637 = vunpack.c.h.b16 %v9479
    %v9638 = vunpack.c.l.b16 %v9480
    %v9639 = vunpack.c.h.b16 %v9480
    %v9640 = vunpack.c.l.b16 %v9481
    %v9641 = vunpack.c.h.b16 %v9481
    %v9642 = vunpack.c.l.b16 %v9482
    %v9643 = vunpack.c.h.b16 %v9482
    %v9644 = vunpack.c.l.b16 %v9483
    %v9645 = vunpack.c.h.b16 %v9483
    %v9646 = vunpack.c.l.b16 %v9484
    %v9647 = vunpack.c.h.b16 %v9484
    %v9648 = vunpack.c.l.b16 %v9485
    %v9649 = vunpack.c.h.b16 %v9485
    %v9650 = vunpack.c.l.b16 %v9486
    %v9651 = vunpack.c.h.b16 %v9486
    %v9652 = vunpack.c.l.b16 %v9487
    %v9653 = vunpack.c.h.b16 %v9487
    %v9654 = vunpack.c.l.b16 %v9488
    %v9655 = vunpack.c.h.b16 %v9488
    %v9656 = vunpack.c.l.b16 %v9489
    %v9657 = vunpack.c.h.b16 %v9489
    %v9658 = vunpack.c.l.b16 %v9490
    %v9659 = vunpack.c.h.b16 %v9490
    %v9660 = vunpack.c.l.b16 %v9491
    %v9661 = vunpack.c.h.b16 %v9491
    %v9662 = vunpack.c.l.b16 %v9492
    %v9663 = vunpack.c.h.b16 %v9492
    %v9664 = vunpack.c.l.b16 %v9493
    %v9665 = vunpack.c.h.b16 %v9493
    %v9666 = vunpack.c.l.b16 %v9494
    %v9667 = vunpack.c.h.b16 %v9494
    %v9668 = vunpack.c.l.b16 %v9495
    %v9669 = vunpack.c.h.b16 %v9495
    %v9670 = vunpack.c.l.b16 %v9496
    %v9671 = vunpack.c.h.b16 %v9496
    %v9672 = vunpack.c.l.b16 %v9497
    %v9673 = vunpack.c.h.b16 %v9497
    %v9674 = vunpack.c.l.b16 %v9498
    %v9675 = vunpack.c.h.b16 %v9498
    %v9676 = vunpack.c.l.b16 %v9499
    %v9677 = vunpack.c.h.b16 %v9499
    %v9678 = vunpack.c.l.b16 %v9500
    %v9679 = vunpack.c.h.b16 %v9500
    %v9680 = vunpack.c.l.b16 %v9501
    %v9681 = vunpack.c.h.b16 %v9501
    %v9682 = vunpack.c.l.b16 %v9502
    %v9683 = vunpack.c.h.b16 %v9502
    %v9684 = vunpack.c.l.b16 %v9503
    %v9685 = vunpack.c.h.b16 %v9503
    %v9686 = vunpack.c.l.b16 %v9504
    %v9687 = vunpack.c.h.b16 %v9504
    %v9688 = vunpack.c.l.b16 %v9505
    %v9689 = vunpack.c.h.b16 %v9505
    %v9690 = vunpack.c.l.b16 %v9506
    %v9691 = vunpack.c.h.b16 %v9506
    %v9692 = vunpack.c.l.b16 %v9507
    %v9693 = vunpack.c.h.b16 %v9507
    %v9694 = vunpack.c.l.b16 %v9508
    %v9695 = vunpack.c.h.b16 %v9508
    %v9696 = vunpack.c.l.b16 %v9509
    %v9697 = vunpack.c.h.b16 %v9509
    %v9698 = vunpack.c.l.b16 %v9510
    %v9699 = vunpack.c.h.b16 %v9510
    %v9700 = vunpack.c.l.b16 %v9511
    %v9701 = vunpack.c.h.b16 %v9511
    %v9702 = vunpack.c.l.b16 %v9512
    %v9703 = vunpack.c.h.b16 %v9512
    %v9704 = vunpack.c.l.b16 %v9513
    %v9705 = vunpack.c.h.b16 %v9513
    %v9706 = vunpack.c.l.b16 %v9514
    %v9707 = vunpack.c.h.b16 %v9514
    %v9708 = vunpack.c.l.b16 %v9515
    %v9709 = vunpack.c.h.b16 %v9515
    %v9710 = vunpack.c.l.b16 %v9516
    %v9711 = vunpack.c.h.b16 %v9516
    %v9712 = vunpack.c.l.b16 %v9517
    %v9713 = vunpack.c.h.b16 %v9517
    %v9714 = vunpack.c.l.b16 %v9518
    %v9715 = vunpack.c.h.b16 %v9518
    %v9716 = vunpack.c.l.b16 %v9519
    %v9717 = vunpack.c.h.b16 %v9519
    %v9718 = vunpack.c.l.b16 %v9520
    %v9719 = vunpack.c.h.b16 %v9520
    %v9720 = vunpack.c.l.b16 %v9521
    %v9721 = vunpack.c.h.b16 %v9521
    %v9722 = vunpack.c.l.b16 %v9522
    %v9723 = vunpack.c.h.b16 %v9522
    %v9724 = vunpack.c.l.b16 %v9523
    %v9725 = vunpack.c.h.b16 %v9523
    %v9726 = vunpack.c.l.b16 %v9524
    %v9727 = vunpack.c.h.b16 %v9524
    %v9728 = vunpack.c.l.b16 %v9525
    %v9729 = vunpack.c.h.b16 %v9525
    %v9730 = vunpack.c.l.b16 %v9526
    %v9731 = vunpack.c.h.b16 %v9526
    %v9732 = vunpack.c.l.b16 %v9527
    %v9733 = vunpack.c.h.b16 %v9527
    %v9734 = vunpack.c.l.b16 %v9528
    %v9735 = vunpack.c.h.b16 %v9528
    %v9736 = vunpack.c.l.b16 %v9529
    %v9737 = vunpack.c.h.b16 %v9529
    %v9738 = vunpack.c.l.b16 %v9530
    %v9739 = vunpack.c.h.b16 %v9530
    %v9740 = vunpack.c.l.b16 %v9531
    %v9741 = vunpack.c.h.b16 %v9531
    %v9742 = vunpack.c.l.b16 %v9532
    %v9743 = vunpack.c.h.b16 %v9532
    %v9744 = vunpack.c.l.b16 %v9533
    %v9745 = vunpack.c.h.b16 %v9533
    %v9746 = vunpack.c.l.b16 %v9534
    %v9747 = vunpack.c.h.b16 %v9534
    %v9748 = vunpack.c.l.b16 %v9535
    %v9749 = vunpack.c.h.b16 %v9535
    %v9750 = vpack.c.b16 %v9626, %v9622
    %v9751 = vpack.c.b16 %v9627, %v9623
    %v9752 = vpack.c.b16 %v9628, %v9624
    %v9753 = vpack.c.b16 %v9629, %v9625
    %v9754 = vpack.c.b16 %v9634, %v9630
    %v9755 = vpack.c.b16 %v9635, %v9631
    %v9756 = vpack.c.b16 %v9636, %v9632
    %v9757 = vpack.c.b16 %v9637, %v9633
    %v9758 = vpack.c.b16 %v9642, %v9638
    %v9759 = vpack.c.b16 %v9643, %v9639
    %v9760 = vpack.c.b16 %v9644, %v9640
    %v9761 = vpack.c.b16 %v9645, %v9641
    %v9762 = vpack.c.b16 %v9650, %v9646
    %v9763 = vpack.c.b16 %v9651, %v9647
    %v9764 = vpack.c.b16 %v9652, %v9648
    %v9765 = vpack.c.b16 %v9653, %v9649
    %v9766 = vpack.c.b16 %v9658, %v9654
    %v9767 = vpack.c.b16 %v9659, %v9655
    %v9768 = vpack.c.b16 %v9660, %v9656
    %v9769 = vpack.c.b16 %v9661, %v9657
    %v9770 = vpack.c.b16 %v9666, %v9662
    %v9771 = vpack.c.b16 %v9667, %v9663
    %v9772 = vpack.c.b16 %v9668, %v9664
    %v9773 = vpack.c.b16 %v9669, %v9665
    %v9774 = vpack.c.b16 %v9674, %v9670
    %v9775 = vpack.c.b16 %v9675, %v9671
    %v9776 = vpack.c.b16 %v9676, %v9672
    %v9777 = vpack.c.b16 %v9677, %v9673
    %v9778 = vpack.c.b16 %v9682, %v9678
    %v9779 = vpack.c.b16 %v9683, %v9679
    %v9780 = vpack.c.b16 %v9684, %v9680
    %v9781 = vpack.c.b16 %v9685, %v9681
    %v9782 = vpack.c.b16 %v9690, %v9686
    %v9783 = vpack.c.b16 %v9691, %v9687
    %v9784 = vpack.c.b16 %v9692, %v9688
    %v9785 = vpack.c.b16 %v9693, %v9689
    %v9786 = vpack.c.b16 %v9698, %v9694
    %v9787 = vpack.c.b16 %v9699, %v9695
    %v9788 = vpack.c.b16 %v9700, %v9696
    %v9789 = vpack.c.b16 %v9701, %v9697
    %v9790 = vpack.c.b16 %v9706, %v9702
    %v9791 = vpack.c.b16 %v9707, %v9703
    %v9792 = vpack.c.b16 %v9708, %v9704
    %v9793 = vpack.c.b16 %v9709, %v9705
    %v9794 = vpack.c.b16 %v9714, %v9710
    %v9795 = vpack.c.b16 %v9715, %v9711
    %v9796 = vpack.c.b16 %v9716, %v9712
    %v9797 = vpack.c.b16 %v9717, %v9713
    %v9798 = vpack.c.b16 %v9722, %v9718
    %v9799 = vpack.c.b16 %v9723, %v9719
    %v9800 = vpack.c.b16 %v9724, %v9720
    %v9801 = vpack.c.b16 %v9725, %v9721
    %v9802 = vpack.c.b16 %v9730, %v9726
    %v9803 = vpack.c.b16 %v9731, %v9727
    %v9804 = vpack.c.b16 %v9732, %v9728
    %v9805 = vpack.c.b16 %v9733, %v9729
    %v9806 = vpack.c.b16 %v9738, %v9734
    %v9807 = vpack.c.b16 %v9739, %v9735
    %v9808 = vpack.c.b16 %v9740, %v9736
    %v9809 = vpack.c.b16 %v9741, %v9737
    %v9810 = vpack.c.b16 %v9746, %v9742
    %v9811 = vpack.c.b16 %v9747, %v9743
    %v9812 = vpack.c.b16 %v9748, %v9744
    %v9813 = vpack.c.b16 %v9749, %v9745
    %9878 = vmatprep.subr.bf16.mxu0 %v9779
    %9879 = vmatpush1.bf16.msra.mxu0 %v9778
    %9880 = vmatprep.subr.bf16.mxu0 %v9775
    %9881 = vmatpush1.bf16.msra.mxu0 %v9774
    %9882 = vmatprep.subr.bf16.mxu0 %v9771
    %9883 = vmatpush1.bf16.msra.mxu0 %v9770
    %9884 = vmatprep.subr.bf16.mxu0 %v9767
    %9885 = vmatpush1.bf16.msra.mxu0 %v9766
    %9886 = vmatprep.subr.bf16.mxu0 %v9763
    %9887 = vmatpush1.bf16.msra.mxu0 %v9762
    %9888 = vmatprep.subr.bf16.mxu0 %v9759
    %9889 = vmatpush1.bf16.msra.mxu0 %v9758
    %9890 = vmatprep.subr.bf16.mxu0 %v9755
    %9891 = vmatpush1.bf16.msra.mxu0 %v9754
    %9892 = vmatprep.subr.bf16.mxu0 %v9751
    %9893 = vmatpush1.bf16.msra.mxu0 %v9750
    %9894 = vmatprep.subr.bf16.mxu0 %v9811
    %9895 = vmatpush2.bf16.msra.mxu0 %v9810
    %9896 = vmatprep.subr.bf16.mxu0 %v9807
    %9897 = vmatpush2.bf16.msra.mxu0 %v9806
    %9898 = vmatprep.subr.bf16.mxu0 %v9803
    %9899 = vmatpush2.bf16.msra.mxu0 %v9802
    %9900 = vmatprep.subr.bf16.mxu0 %v9799
    %9901 = vmatpush2.bf16.msra.mxu0 %v9798
    %9902 = vmatprep.subr.bf16.mxu0 %v9795
    %9903 = vmatpush2.bf16.msra.mxu0 %v9794
    %9904 = vmatprep.subr.bf16.mxu0 %v9791
    %9905 = vmatpush2.bf16.msra.mxu0 %v9790
    %9906 = vmatprep.subr.bf16.mxu0 %v9787
    %9907 = vmatpush2.bf16.msra.mxu0 %v9786
    %9908 = vmatprep.subr.bf16.mxu0 %v9783
    %9909 = vmatpush2.bf16.msra.mxu0 %v9782
    %9910 = vmatprep.mubr.bf16.mxu0 %v9471
    %9911 = vmatmul.mubr.bf16.gmra.mxu0 %v9470
    %v9912 = vpop.f32.mrf.mxu0
    %v9913 = vadd.f32 %v9541, %v9912
    %v9914 = vpop.f32.mrf.mxu0
    %v9915 = vadd.f32 %v9545, %v9914
    %v9916 = vpop.f32.mrf.mxu0
    %v9917 = vpop.f32.mrf.mxu0
    %9918 = vdwg.mxu0
    %9919 = vmatprep.subr.bf16.mxu0 %v9781
    %9920 = vmatpush1.bf16.msra.mxu0 %v9780
    %9921 = vmatprep.subr.bf16.mxu0 %v9777
    %9922 = vmatpush1.bf16.msra.mxu0 %v9776
    %9923 = vmatprep.subr.bf16.mxu0 %v9773
    %9924 = vmatpush1.bf16.msra.mxu0 %v9772
    %9925 = vmatprep.subr.bf16.mxu0 %v9769
    %9926 = vmatpush1.bf16.msra.mxu0 %v9768
    %9927 = vmatprep.subr.bf16.mxu0 %v9765
    %9928 = vmatpush1.bf16.msra.mxu0 %v9764
    %9929 = vmatprep.subr.bf16.mxu0 %v9761
    %9930 = vmatpush1.bf16.msra.mxu0 %v9760
    %9931 = vmatprep.subr.bf16.mxu0 %v9757
    %9932 = vmatpush1.bf16.msra.mxu0 %v9756
    %9933 = vmatprep.subr.bf16.mxu0 %v9753
    %9934 = vmatpush1.bf16.msra.mxu0 %v9752
    %9935 = vmatprep.subr.bf16.mxu0 %v9813
    %9936 = vmatpush2.bf16.msra.mxu0 %v9812
    %9937 = vmatprep.subr.bf16.mxu0 %v9809
    %9938 = vmatpush2.bf16.msra.mxu0 %v9808
    %9939 = vmatprep.subr.bf16.mxu0 %v9805
    %9940 = vmatpush2.bf16.msra.mxu0 %v9804
    %9941 = vmatprep.subr.bf16.mxu0 %v9801
    %9942 = vmatpush2.bf16.msra.mxu0 %v9800
    %9943 = vmatprep.subr.bf16.mxu0 %v9797
    %9944 = vmatpush2.bf16.msra.mxu0 %v9796
    %9945 = vmatprep.subr.bf16.mxu0 %v9793
    %9946 = vmatpush2.bf16.msra.mxu0 %v9792
    %9947 = vmatprep.subr.bf16.mxu0 %v9789
    %9948 = vmatpush2.bf16.msra.mxu0 %v9788
    %9949 = vmatprep.subr.bf16.mxu0 %v9785
    %9950 = vmatpush2.bf16.msra.mxu0 %v9784
    %9951 = vmatprep.mubr.bf16.mxu0 %v9471
    %9952 = vmatmul.mubr.bf16.gmra.mxu0 %v9470
    %v9953 = vpop.f32.mrf.mxu0
    %v9954 = vadd.f32 %v9549, %v9953
    %v9955 = vpop.f32.mrf.mxu0
    %v9956 = vadd.f32 %v9553, %v9955
    %v9957 = vpop.f32.mrf.mxu0
    %v9958 = vpop.f32.mrf.mxu0
    %9959 = vdwg.mxu0
    %v9960 = vxor.u32 %v9913, 2147483648
    %v9961 = vxor.u32 %v9915, 2147483648
    %v9962 = vxor.u32 %v9954, 2147483648
    %v9963 = vmul.f32 %v9960, 1.442695
    %v9964 = vpow.pop %v9963
    %v9965 = vmul.f32 %v9961, 1.442695
    %v9966 = vpow.pop %v9965
    %v9967 = vmul.f32 %v9962, 1.442695
    %v9968 = vpow.pop %v9967
    %v9969 = vadd.f32 %v9964, 1.0
    %v9970 = vadd.f32 %v9966, 1.0
    %v9971 = vadd.f32 %v9968, 1.0
    %v9972 = vrcp.pop %v9969
    %v9973 = vmul.f32 1.0, %v9972
    %v9974 = vrcp.pop %v9970
    %v9975 = vmul.f32 1.0, %v9974
    %v9976 = vrcp.pop %v9971
    %v9977 = vmul.f32 1.0, %v9976
    %v9978 = vtanh.pop %v9956
    %v9979 = vmul.f32 %v9975, %v8645
    %v9980 = vmul.f32 %v9973, %v9978
    %v9981 = vadd.f32 %v9979, %v9980
    %v9982 = vtanh.pop %v9981
    %v9983 = vmul.f32 %v9977, %v9982
    %s9984 = scalar_lea.vmem [#allocation14], 48
    %9985 = vst [vmem:[%s9984] sm:$0xff] %v9983
    %v9986 = vpack.c.bf16 %v9469, %v9469
    %v9987 = vld [vmem:[#allocation9] sm:$0xff]
    %v9988 = vld [vmem:[#allocation9 + $0x8] sm:$0xff]
    %v9989 = vld [vmem:[#allocation9 + $0x10] sm:$0xff]
    %v9990 = vld [vmem:[#allocation9 + $0x18] sm:$0xff]
    %v9991 = vld [vmem:[#allocation9 + $0x20] sm:$0xff]
    %v9992 = vld [vmem:[#allocation9 + $0x28] sm:$0xff]
    %v9993 = vld [vmem:[#allocation9 + $0x30] sm:$0xff]
    %v9994 = vld [vmem:[#allocation9 + $0x38] sm:$0xff]
    %v9995 = vld [vmem:[#allocation9 + $0x40] sm:$0xff]
    %v9996 = vld [vmem:[#allocation9 + $0x48] sm:$0xff]
    %v9997 = vld [vmem:[#allocation9 + $0x50] sm:$0xff]
    %v9998 = vld [vmem:[#allocation9 + $0x58] sm:$0xff]
    %v9999 = vld [vmem:[#allocation9 + $0x60] sm:$0xff]
    %v10000 = vld [vmem:[#allocation9 + $0x68] sm:$0xff]
    %v10001 = vld [vmem:[#allocation9 + $0x70] sm:$0xff]
    %v10002 = vld [vmem:[#allocation9 + $0x78] sm:$0xff]
    %v10003 = vld [vmem:[#allocation9 + $0x80] sm:$0xff]
    %v10004 = vld [vmem:[#allocation9 + $0x88] sm:$0xff]
    %v10005 = vld [vmem:[#allocation9 + $0x90] sm:$0xff]
    %v10006 = vld [vmem:[#allocation9 + $0x98] sm:$0xff]
    %v10007 = vld [vmem:[#allocation9 + $0xa0] sm:$0xff]
    %v10008 = vld [vmem:[#allocation9 + $0xa8] sm:$0xff]
    %v10009 = vld [vmem:[#allocation9 + $0xb0] sm:$0xff]
    %v10010 = vld [vmem:[#allocation9 + $0xb8] sm:$0xff]
    %v10011 = vld [vmem:[#allocation9 + $0xc0] sm:$0xff]
    %v10012 = vld [vmem:[#allocation9 + $0xc8] sm:$0xff]
    %v10013 = vld [vmem:[#allocation9 + $0xd0] sm:$0xff]
    %v10014 = vld [vmem:[#allocation9 + $0xd8] sm:$0xff]
    %v10015 = vld [vmem:[#allocation9 + $0xe0] sm:$0xff]
    %v10016 = vld [vmem:[#allocation9 + $0xe8] sm:$0xff]
    %v10017 = vld [vmem:[#allocation9 + $0xf0] sm:$0xff]
    %v10018 = vld [vmem:[#allocation9 + $0xf8] sm:$0xff]
    %v10019 = vld [vmem:[#allocation9 + $0x100] sm:$0xff]
    %v10020 = vld [vmem:[#allocation9 + $0x108] sm:$0xff]
    %v10021 = vld [vmem:[#allocation9 + $0x110] sm:$0xff]
    %v10022 = vld [vmem:[#allocation9 + $0x118] sm:$0xff]
    %v10023 = vld [vmem:[#allocation9 + $0x120] sm:$0xff]
    %v10024 = vld [vmem:[#allocation9 + $0x128] sm:$0xff]
    %v10025 = vld [vmem:[#allocation9 + $0x130] sm:$0xff]
    %v10026 = vld [vmem:[#allocation9 + $0x138] sm:$0xff]
    %v10027 = vld [vmem:[#allocation9 + $0x140] sm:$0xff]
    %v10028 = vld [vmem:[#allocation9 + $0x148] sm:$0xff]
    %v10029 = vld [vmem:[#allocation9 + $0x150] sm:$0xff]
    %v10030 = vld [vmem:[#allocation9 + $0x158] sm:$0xff]
    %v10031 = vld [vmem:[#allocation9 + $0x160] sm:$0xff]
    %v10032 = vld [vmem:[#allocation9 + $0x168] sm:$0xff]
    %v10033 = vld [vmem:[#allocation9 + $0x170] sm:$0xff]
    %v10034 = vld [vmem:[#allocation9 + $0x178] sm:$0xff]
    %v10035 = vld [vmem:[#allocation9 + $0x180] sm:$0xff]
    %v10036 = vld [vmem:[#allocation9 + $0x188] sm:$0xff]
    %v10037 = vld [vmem:[#allocation9 + $0x190] sm:$0xff]
    %v10038 = vld [vmem:[#allocation9 + $0x198] sm:$0xff]
    %v10039 = vld [vmem:[#allocation9 + $0x1a0] sm:$0xff]
    %v10040 = vld [vmem:[#allocation9 + $0x1a8] sm:$0xff]
    %v10041 = vld [vmem:[#allocation9 + $0x1b0] sm:$0xff]
    %v10042 = vld [vmem:[#allocation9 + $0x1b8] sm:$0xff]
    %v10043 = vld [vmem:[#allocation9 + $0x1c0] sm:$0xff]
    %v10044 = vld [vmem:[#allocation9 + $0x1c8] sm:$0xff]
    %v10045 = vld [vmem:[#allocation9 + $0x1d0] sm:$0xff]
    %v10046 = vld [vmem:[#allocation9 + $0x1d8] sm:$0xff]
    %v10047 = vld [vmem:[#allocation9 + $0x1e0] sm:$0xff]
    %v10048 = vld [vmem:[#allocation9 + $0x1e8] sm:$0xff]
    %v10049 = vld [vmem:[#allocation9 + $0x1f0] sm:$0xff]
    %v10050 = vld [vmem:[#allocation9 + $0x1f8] sm:$0xff]
    %v10051 = vld [vmem:[%s890] sm:$0xf]
    %v10053 = vlaneseq
    %v10054 = vshrl.u32 %v10053, 7
    %v10055 = vsub.s32 0, %v10054
    %v10056 = vrot.slane %v10051, %v10055
    %v10057 = vlaneseq
    %v10058 = vshrl.u32 %v10057, 7
    %v10059 = vsub.s32 1, %v10058
    %v10060 = vrot.slane %v10051, %v10059
    %v10061 = vlaneseq
    %v10062 = vshrl.u32 %v10061, 7
    %v10063 = vsub.s32 2, %v10062
    %v10064 = vrot.slane %v10051, %v10063
    %v10065 = vlaneseq
    %v10066 = vshrl.u32 %v10065, 7
    %v10067 = vsub.s32 3, %v10066
    %v10068 = vrot.slane %v10051, %v10067
    %v10137 = vunpack.c.l.b16 %v9987
    %v10138 = vunpack.c.h.b16 %v9987
    %v10139 = vunpack.c.l.b16 %v9988
    %v10140 = vunpack.c.h.b16 %v9988
    %v10141 = vunpack.c.l.b16 %v9989
    %v10142 = vunpack.c.h.b16 %v9989
    %v10143 = vunpack.c.l.b16 %v9990
    %v10144 = vunpack.c.h.b16 %v9990
    %v10145 = vunpack.c.l.b16 %v9991
    %v10146 = vunpack.c.h.b16 %v9991
    %v10147 = vunpack.c.l.b16 %v9992
    %v10148 = vunpack.c.h.b16 %v9992
    %v10149 = vunpack.c.l.b16 %v9993
    %v10150 = vunpack.c.h.b16 %v9993
    %v10151 = vunpack.c.l.b16 %v9994
    %v10152 = vunpack.c.h.b16 %v9994
    %v10153 = vunpack.c.l.b16 %v9995
    %v10154 = vunpack.c.h.b16 %v9995
    %v10155 = vunpack.c.l.b16 %v9996
    %v10156 = vunpack.c.h.b16 %v9996
    %v10157 = vunpack.c.l.b16 %v9997
    %v10158 = vunpack.c.h.b16 %v9997
    %v10159 = vunpack.c.l.b16 %v9998
    %v10160 = vunpack.c.h.b16 %v9998
    %v10161 = vunpack.c.l.b16 %v9999
    %v10162 = vunpack.c.h.b16 %v9999
    %v10163 = vunpack.c.l.b16 %v10000
    %v10164 = vunpack.c.h.b16 %v10000
    %v10165 = vunpack.c.l.b16 %v10001
    %v10166 = vunpack.c.h.b16 %v10001
    %v10167 = vunpack.c.l.b16 %v10002
    %v10168 = vunpack.c.h.b16 %v10002
    %v10169 = vunpack.c.l.b16 %v10003
    %v10170 = vunpack.c.h.b16 %v10003
    %v10171 = vunpack.c.l.b16 %v10004
    %v10172 = vunpack.c.h.b16 %v10004
    %v10173 = vunpack.c.l.b16 %v10005
    %v10174 = vunpack.c.h.b16 %v10005
    %v10175 = vunpack.c.l.b16 %v10006
    %v10176 = vunpack.c.h.b16 %v10006
    %v10177 = vunpack.c.l.b16 %v10007
    %v10178 = vunpack.c.h.b16 %v10007
    %v10179 = vunpack.c.l.b16 %v10008
    %v10180 = vunpack.c.h.b16 %v10008
    %v10181 = vunpack.c.l.b16 %v10009
    %v10182 = vunpack.c.h.b16 %v10009
    %v10183 = vunpack.c.l.b16 %v10010
    %v10184 = vunpack.c.h.b16 %v10010
    %v10185 = vunpack.c.l.b16 %v10011
    %v10186 = vunpack.c.h.b16 %v10011
    %v10187 = vunpack.c.l.b16 %v10012
    %v10188 = vunpack.c.h.b16 %v10012
    %v10189 = vunpack.c.l.b16 %v10013
    %v10190 = vunpack.c.h.b16 %v10013
    %v10191 = vunpack.c.l.b16 %v10014
    %v10192 = vunpack.c.h.b16 %v10014
    %v10193 = vunpack.c.l.b16 %v10015
    %v10194 = vunpack.c.h.b16 %v10015
    %v10195 = vunpack.c.l.b16 %v10016
    %v10196 = vunpack.c.h.b16 %v10016
    %v10197 = vunpack.c.l.b16 %v10017
    %v10198 = vunpack.c.h.b16 %v10017
    %v10199 = vunpack.c.l.b16 %v10018
    %v10200 = vunpack.c.h.b16 %v10018
    %v10201 = vunpack.c.l.b16 %v10019
    %v10202 = vunpack.c.h.b16 %v10019
    %v10203 = vunpack.c.l.b16 %v10020
    %v10204 = vunpack.c.h.b16 %v10020
    %v10205 = vunpack.c.l.b16 %v10021
    %v10206 = vunpack.c.h.b16 %v10021
    %v10207 = vunpack.c.l.b16 %v10022
    %v10208 = vunpack.c.h.b16 %v10022
    %v10209 = vunpack.c.l.b16 %v10023
    %v10210 = vunpack.c.h.b16 %v10023
    %v10211 = vunpack.c.l.b16 %v10024
    %v10212 = vunpack.c.h.b16 %v10024
    %v10213 = vunpack.c.l.b16 %v10025
    %v10214 = vunpack.c.h.b16 %v10025
    %v10215 = vunpack.c.l.b16 %v10026
    %v10216 = vunpack.c.h.b16 %v10026
    %v10217 = vunpack.c.l.b16 %v10027
    %v10218 = vunpack.c.h.b16 %v10027
    %v10219 = vunpack.c.l.b16 %v10028
    %v10220 = vunpack.c.h.b16 %v10028
    %v10221 = vunpack.c.l.b16 %v10029
    %v10222 = vunpack.c.h.b16 %v10029
    %v10223 = vunpack.c.l.b16 %v10030
    %v10224 = vunpack.c.h.b16 %v10030
    %v10225 = vunpack.c.l.b16 %v10031
    %v10226 = vunpack.c.h.b16 %v10031
    %v10227 = vunpack.c.l.b16 %v10032
    %v10228 = vunpack.c.h.b16 %v10032
    %v10229 = vunpack.c.l.b16 %v10033
    %v10230 = vunpack.c.h.b16 %v10033
    %v10231 = vunpack.c.l.b16 %v10034
    %v10232 = vunpack.c.h.b16 %v10034
    %v10233 = vunpack.c.l.b16 %v10035
    %v10234 = vunpack.c.h.b16 %v10035
    %v10235 = vunpack.c.l.b16 %v10036
    %v10236 = vunpack.c.h.b16 %v10036
    %v10237 = vunpack.c.l.b16 %v10037
    %v10238 = vunpack.c.h.b16 %v10037
    %v10239 = vunpack.c.l.b16 %v10038
    %v10240 = vunpack.c.h.b16 %v10038
    %v10241 = vunpack.c.l.b16 %v10039
    %v10242 = vunpack.c.h.b16 %v10039
    %v10243 = vunpack.c.l.b16 %v10040
    %v10244 = vunpack.c.h.b16 %v10040
    %v10245 = vunpack.c.l.b16 %v10041
    %v10246 = vunpack.c.h.b16 %v10041
    %v10247 = vunpack.c.l.b16 %v10042
    %v10248 = vunpack.c.h.b16 %v10042
    %v10249 = vunpack.c.l.b16 %v10043
    %v10250 = vunpack.c.h.b16 %v10043
    %v10251 = vunpack.c.l.b16 %v10044
    %v10252 = vunpack.c.h.b16 %v10044
    %v10253 = vunpack.c.l.b16 %v10045
    %v10254 = vunpack.c.h.b16 %v10045
    %v10255 = vunpack.c.l.b16 %v10046
    %v10256 = vunpack.c.h.b16 %v10046
    %v10257 = vunpack.c.l.b16 %v10047
    %v10258 = vunpack.c.h.b16 %v10047
    %v10259 = vunpack.c.l.b16 %v10048
    %v10260 = vunpack.c.h.b16 %v10048
    %v10261 = vunpack.c.l.b16 %v10049
    %v10262 = vunpack.c.h.b16 %v10049
    %v10263 = vunpack.c.l.b16 %v10050
    %v10264 = vunpack.c.h.b16 %v10050
    %v10265 = vpack.c.b16 %v10141, %v10137
    %v10266 = vpack.c.b16 %v10142, %v10138
    %v10267 = vpack.c.b16 %v10143, %v10139
    %v10268 = vpack.c.b16 %v10144, %v10140
    %v10269 = vpack.c.b16 %v10149, %v10145
    %v10270 = vpack.c.b16 %v10150, %v10146
    %v10271 = vpack.c.b16 %v10151, %v10147
    %v10272 = vpack.c.b16 %v10152, %v10148
    %v10273 = vpack.c.b16 %v10157, %v10153
    %v10274 = vpack.c.b16 %v10158, %v10154
    %v10275 = vpack.c.b16 %v10159, %v10155
    %v10276 = vpack.c.b16 %v10160, %v10156
    %v10277 = vpack.c.b16 %v10165, %v10161
    %v10278 = vpack.c.b16 %v10166, %v10162
    %v10279 = vpack.c.b16 %v10167, %v10163
    %v10280 = vpack.c.b16 %v10168, %v10164
    %v10281 = vpack.c.b16 %v10173, %v10169
    %v10282 = vpack.c.b16 %v10174, %v10170
    %v10283 = vpack.c.b16 %v10175, %v10171
    %v10284 = vpack.c.b16 %v10176, %v10172
    %v10285 = vpack.c.b16 %v10181, %v10177
    %v10286 = vpack.c.b16 %v10182, %v10178
    %v10287 = vpack.c.b16 %v10183, %v10179
    %v10288 = vpack.c.b16 %v10184, %v10180
    %v10289 = vpack.c.b16 %v10189, %v10185
    %v10290 = vpack.c.b16 %v10190, %v10186
    %v10291 = vpack.c.b16 %v10191, %v10187
    %v10292 = vpack.c.b16 %v10192, %v10188
    %v10293 = vpack.c.b16 %v10197, %v10193
    %v10294 = vpack.c.b16 %v10198, %v10194
    %v10295 = vpack.c.b16 %v10199, %v10195
    %v10296 = vpack.c.b16 %v10200, %v10196
    %v10297 = vpack.c.b16 %v10205, %v10201
    %v10298 = vpack.c.b16 %v10206, %v10202
    %v10299 = vpack.c.b16 %v10207, %v10203
    %v10300 = vpack.c.b16 %v10208, %v10204
    %v10301 = vpack.c.b16 %v10213, %v10209
    %v10302 = vpack.c.b16 %v10214, %v10210
    %v10303 = vpack.c.b16 %v10215, %v10211
    %v10304 = vpack.c.b16 %v10216, %v10212
    %v10305 = vpack.c.b16 %v10221, %v10217
    %v10306 = vpack.c.b16 %v10222, %v10218
    %v10307 = vpack.c.b16 %v10223, %v10219
    %v10308 = vpack.c.b16 %v10224, %v10220
    %v10309 = vpack.c.b16 %v10229, %v10225
    %v10310 = vpack.c.b16 %v10230, %v10226
    %v10311 = vpack.c.b16 %v10231, %v10227
    %v10312 = vpack.c.b16 %v10232, %v10228
    %v10313 = vpack.c.b16 %v10237, %v10233
    %v10314 = vpack.c.b16 %v10238, %v10234
    %v10315 = vpack.c.b16 %v10239, %v10235
    %v10316 = vpack.c.b16 %v10240, %v10236
    %v10317 = vpack.c.b16 %v10245, %v10241
    %v10318 = vpack.c.b16 %v10246, %v10242
    %v10319 = vpack.c.b16 %v10247, %v10243
    %v10320 = vpack.c.b16 %v10248, %v10244
    %v10321 = vpack.c.b16 %v10253, %v10249
    %v10322 = vpack.c.b16 %v10254, %v10250
    %v10323 = vpack.c.b16 %v10255, %v10251
    %v10324 = vpack.c.b16 %v10256, %v10252
    %v10325 = vpack.c.b16 %v10261, %v10257
    %v10326 = vpack.c.b16 %v10262, %v10258
    %v10327 = vpack.c.b16 %v10263, %v10259
    %v10328 = vpack.c.b16 %v10264, %v10260
    %10393 = vmatprep.subr.bf16.mxu0 %v10294
    %10394 = vmatpush1.bf16.msra.mxu0 %v10293
    %10395 = vmatprep.subr.bf16.mxu0 %v10290
    %10396 = vmatpush1.bf16.msra.mxu0 %v10289
    %10397 = vmatprep.subr.bf16.mxu0 %v10286
    %10398 = vmatpush1.bf16.msra.mxu0 %v10285
    %10399 = vmatprep.subr.bf16.mxu0 %v10282
    %10400 = vmatpush1.bf16.msra.mxu0 %v10281
    %10401 = vmatprep.subr.bf16.mxu0 %v10278
    %10402 = vmatpush1.bf16.msra.mxu0 %v10277
    %10403 = vmatprep.subr.bf16.mxu0 %v10274
    %10404 = vmatpush1.bf16.msra.mxu0 %v10273
    %10405 = vmatprep.subr.bf16.mxu0 %v10270
    %10406 = vmatpush1.bf16.msra.mxu0 %v10269
    %10407 = vmatprep.subr.bf16.mxu0 %v10266
    %10408 = vmatpush1.bf16.msra.mxu0 %v10265
    %10409 = vmatprep.subr.bf16.mxu0 %v10326
    %10410 = vmatpush2.bf16.msra.mxu0 %v10325
    %10411 = vmatprep.subr.bf16.mxu0 %v10322
    %10412 = vmatpush2.bf16.msra.mxu0 %v10321
    %10413 = vmatprep.subr.bf16.mxu0 %v10318
    %10414 = vmatpush2.bf16.msra.mxu0 %v10317
    %10415 = vmatprep.subr.bf16.mxu0 %v10314
    %10416 = vmatpush2.bf16.msra.mxu0 %v10313
    %10417 = vmatprep.subr.bf16.mxu0 %v10310
    %10418 = vmatpush2.bf16.msra.mxu0 %v10309
    %10419 = vmatprep.subr.bf16.mxu0 %v10306
    %10420 = vmatpush2.bf16.msra.mxu0 %v10305
    %10421 = vmatprep.subr.bf16.mxu0 %v10302
    %10422 = vmatpush2.bf16.msra.mxu0 %v10301
    %10423 = vmatprep.subr.bf16.mxu0 %v10298
    %10424 = vmatpush2.bf16.msra.mxu0 %v10297
    %10425 = vmatprep.mubr.bf16.mxu0 %v9470
    %10426 = vmatmul.mubr.bf16.gmra.mxu0 %v9986
    %v10427 = vpop.f32.mrf.mxu0
    %v10428 = vadd.f32 %v10056, %v10427
    %v10429 = vpop.f32.mrf.mxu0
    %v10430 = vadd.f32 %v10060, %v10429
    %v10431 = vpop.f32.mrf.mxu0
    %v10432 = vpop.f32.mrf.mxu0
    %10433 = vdwg.mxu0
    %10434 = vmatprep.subr.bf16.mxu0 %v10296
    %10435 = vmatpush1.bf16.msra.mxu0 %v10295
    %10436 = vmatprep.subr.bf16.mxu0 %v10292
    %10437 = vmatpush1.bf16.msra.mxu0 %v10291
    %10438 = vmatprep.subr.bf16.mxu0 %v10288
    %10439 = vmatpush1.bf16.msra.mxu0 %v10287
    %10440 = vmatprep.subr.bf16.mxu0 %v10284
    %10441 = vmatpush1.bf16.msra.mxu0 %v10283
    %10442 = vmatprep.subr.bf16.mxu0 %v10280
    %10443 = vmatpush1.bf16.msra.mxu0 %v10279
    %10444 = vmatprep.subr.bf16.mxu0 %v10276
    %10445 = vmatpush1.bf16.msra.mxu0 %v10275
    %10446 = vmatprep.subr.bf16.mxu0 %v10272
    %10447 = vmatpush1.bf16.msra.mxu0 %v10271
    %10448 = vmatprep.subr.bf16.mxu0 %v10268
    %10449 = vmatpush1.bf16.msra.mxu0 %v10267
    %10450 = vmatprep.subr.bf16.mxu0 %v10328
    %10451 = vmatpush2.bf16.msra.mxu0 %v10327
    %10452 = vmatprep.subr.bf16.mxu0 %v10324
    %10453 = vmatpush2.bf16.msra.mxu0 %v10323
    %10454 = vmatprep.subr.bf16.mxu0 %v10320
    %10455 = vmatpush2.bf16.msra.mxu0 %v10319
    %10456 = vmatprep.subr.bf16.mxu0 %v10316
    %10457 = vmatpush2.bf16.msra.mxu0 %v10315
    %10458 = vmatprep.subr.bf16.mxu0 %v10312
    %10459 = vmatpush2.bf16.msra.mxu0 %v10311
    %10460 = vmatprep.subr.bf16.mxu0 %v10308
    %10461 = vmatpush2.bf16.msra.mxu0 %v10307
    %10462 = vmatprep.subr.bf16.mxu0 %v10304
    %10463 = vmatpush2.bf16.msra.mxu0 %v10303
    %10464 = vmatprep.subr.bf16.mxu0 %v10300
    %10465 = vmatpush2.bf16.msra.mxu0 %v10299
    %10466 = vmatprep.mubr.bf16.mxu0 %v9470
    %10467 = vmatmul.mubr.bf16.gmra.mxu0 %v9986
    %v10468 = vpop.f32.mrf.mxu0
    %v10469 = vadd.f32 %v10064, %v10468
    %v10470 = vpop.f32.mrf.mxu0
    %v10471 = vadd.f32 %v10068, %v10470
    %v10472 = vpop.f32.mrf.mxu0
    %v10473 = vpop.f32.mrf.mxu0
    %10474 = vdwg.mxu0
    %v10475 = vxor.u32 %v10428, 2147483648
    %v10476 = vxor.u32 %v10430, 2147483648
    %v10477 = vxor.u32 %v10469, 2147483648
    %v10478 = vmul.f32 %v10475, 1.442695
    %v10479 = vpow.pop %v10478
    %v10480 = vmul.f32 %v10476, 1.442695
    %v10481 = vpow.pop %v10480
    %v10482 = vmul.f32 %v10477, 1.442695
    %v10483 = vpow.pop %v10482
    %v10484 = vadd.f32 %v10479, 1.0
    %v10485 = vadd.f32 %v10481, 1.0
    %v10486 = vadd.f32 %v10483, 1.0
    %v10487 = vrcp.pop %v10484
    %v10488 = vmul.f32 1.0, %v10487
    %v10489 = vrcp.pop %v10485
    %v10490 = vmul.f32 1.0, %v10489
    %v10491 = vrcp.pop %v10486
    %v10492 = vmul.f32 1.0, %v10491
    %v10493 = vtanh.pop %v10471
    %v10494 = vmul.f32 %v10490, %v9160
    %v10495 = vmul.f32 %v10488, %v10493
    %v10496 = vadd.f32 %v10494, %v10495
    %v10497 = vtanh.pop %v10496
    %v10498 = vmul.f32 %v10492, %v10497
    %v10499 = vpack.c.bf16 %v10498, %v10498
    %v10500 = vpack.c.bf16 %v9983, %v9983
    %v10501 = vld [vmem:[%s1455] sm:$0xff]
    %v10502 = vld [vmem:[%s1455 + $0x8] sm:$0xff]
    %v10503 = vld [vmem:[%s1455 + $0x10] sm:$0xff]
    %v10504 = vld [vmem:[%s1455 + $0x18] sm:$0xff]
    %v10505 = vld [vmem:[%s1455 + $0x20] sm:$0xff]
    %v10506 = vld [vmem:[%s1455 + $0x28] sm:$0xff]
    %v10507 = vld [vmem:[%s1455 + $0x30] sm:$0xff]
    %v10508 = vld [vmem:[%s1455 + $0x38] sm:$0xff]
    %v10509 = vld [vmem:[%s1455 + $0x40] sm:$0xff]
    %v10510 = vld [vmem:[%s1455 + $0x48] sm:$0xff]
    %v10511 = vld [vmem:[%s1455 + $0x50] sm:$0xff]
    %v10512 = vld [vmem:[%s1455 + $0x58] sm:$0xff]
    %v10513 = vld [vmem:[%s1455 + $0x60] sm:$0xff]
    %v10514 = vld [vmem:[%s1455 + $0x68] sm:$0xff]
    %v10515 = vld [vmem:[%s1455 + $0x70] sm:$0xff]
    %v10516 = vld [vmem:[%s1455 + $0x78] sm:$0xff]
    %v10517 = vld [vmem:[%s1455 + $0x80] sm:$0xff]
    %v10518 = vld [vmem:[%s1455 + $0x88] sm:$0xff]
    %v10519 = vld [vmem:[%s1455 + $0x90] sm:$0xff]
    %v10520 = vld [vmem:[%s1455 + $0x98] sm:$0xff]
    %v10521 = vld [vmem:[%s1455 + $0xa0] sm:$0xff]
    %v10522 = vld [vmem:[%s1455 + $0xa8] sm:$0xff]
    %v10523 = vld [vmem:[%s1455 + $0xb0] sm:$0xff]
    %v10524 = vld [vmem:[%s1455 + $0xb8] sm:$0xff]
    %v10525 = vld [vmem:[%s1455 + $0xc0] sm:$0xff]
    %v10526 = vld [vmem:[%s1455 + $0xc8] sm:$0xff]
    %v10527 = vld [vmem:[%s1455 + $0xd0] sm:$0xff]
    %v10528 = vld [vmem:[%s1455 + $0xd8] sm:$0xff]
    %v10529 = vld [vmem:[%s1455 + $0xe0] sm:$0xff]
    %v10530 = vld [vmem:[%s1455 + $0xe8] sm:$0xff]
    %v10531 = vld [vmem:[%s1455 + $0xf0] sm:$0xff]
    %v10532 = vld [vmem:[%s1455 + $0xf8] sm:$0xff]
    %v10533 = vld [vmem:[%s1455 + $0x100] sm:$0xff]
    %v10534 = vld [vmem:[%s1455 + $0x108] sm:$0xff]
    %v10535 = vld [vmem:[%s1455 + $0x110] sm:$0xff]
    %v10536 = vld [vmem:[%s1455 + $0x118] sm:$0xff]
    %v10537 = vld [vmem:[%s1455 + $0x120] sm:$0xff]
    %v10538 = vld [vmem:[%s1455 + $0x128] sm:$0xff]
    %v10539 = vld [vmem:[%s1455 + $0x130] sm:$0xff]
    %v10540 = vld [vmem:[%s1455 + $0x138] sm:$0xff]
    %v10541 = vld [vmem:[%s1455 + $0x140] sm:$0xff]
    %v10542 = vld [vmem:[%s1455 + $0x148] sm:$0xff]
    %v10543 = vld [vmem:[%s1455 + $0x150] sm:$0xff]
    %v10544 = vld [vmem:[%s1455 + $0x158] sm:$0xff]
    %v10545 = vld [vmem:[%s1455 + $0x160] sm:$0xff]
    %v10546 = vld [vmem:[%s1455 + $0x168] sm:$0xff]
    %v10547 = vld [vmem:[%s1455 + $0x170] sm:$0xff]
    %v10548 = vld [vmem:[%s1455 + $0x178] sm:$0xff]
    %v10549 = vld [vmem:[%s1455 + $0x180] sm:$0xff]
    %v10550 = vld [vmem:[%s1455 + $0x188] sm:$0xff]
    %v10551 = vld [vmem:[%s1455 + $0x190] sm:$0xff]
    %v10552 = vld [vmem:[%s1455 + $0x198] sm:$0xff]
    %v10553 = vld [vmem:[%s1455 + $0x1a0] sm:$0xff]
    %v10554 = vld [vmem:[%s1455 + $0x1a8] sm:$0xff]
    %v10555 = vld [vmem:[%s1455 + $0x1b0] sm:$0xff]
    %v10556 = vld [vmem:[%s1455 + $0x1b8] sm:$0xff]
    %v10557 = vld [vmem:[%s1455 + $0x1c0] sm:$0xff]
    %v10558 = vld [vmem:[%s1455 + $0x1c8] sm:$0xff]
    %v10559 = vld [vmem:[%s1455 + $0x1d0] sm:$0xff]
    %v10560 = vld [vmem:[%s1455 + $0x1d8] sm:$0xff]
    %v10561 = vld [vmem:[%s1455 + $0x1e0] sm:$0xff]
    %v10562 = vld [vmem:[%s1455 + $0x1e8] sm:$0xff]
    %v10563 = vld [vmem:[%s1455 + $0x1f0] sm:$0xff]
    %v10564 = vld [vmem:[%s1455 + $0x1f8] sm:$0xff]
    %v10565 = vld [vmem:[%s1520] sm:$0xf]
    %v10567 = vlaneseq
    %v10568 = vshrl.u32 %v10567, 7
    %v10569 = vsub.s32 0, %v10568
    %v10570 = vrot.slane %v10565, %v10569
    %v10571 = vlaneseq
    %v10572 = vshrl.u32 %v10571, 7
    %v10573 = vsub.s32 1, %v10572
    %v10574 = vrot.slane %v10565, %v10573
    %v10575 = vlaneseq
    %v10576 = vshrl.u32 %v10575, 7
    %v10577 = vsub.s32 2, %v10576
    %v10578 = vrot.slane %v10565, %v10577
    %v10579 = vlaneseq
    %v10580 = vshrl.u32 %v10579, 7
    %v10581 = vsub.s32 3, %v10580
    %v10582 = vrot.slane %v10565, %v10581
    %v10651 = vunpack.c.l.b16 %v10501
    %v10652 = vunpack.c.h.b16 %v10501
    %v10653 = vunpack.c.l.b16 %v10502
    %v10654 = vunpack.c.h.b16 %v10502
    %v10655 = vunpack.c.l.b16 %v10503
    %v10656 = vunpack.c.h.b16 %v10503
    %v10657 = vunpack.c.l.b16 %v10504
    %v10658 = vunpack.c.h.b16 %v10504
    %v10659 = vunpack.c.l.b16 %v10505
    %v10660 = vunpack.c.h.b16 %v10505
    %v10661 = vunpack.c.l.b16 %v10506
    %v10662 = vunpack.c.h.b16 %v10506
    %v10663 = vunpack.c.l.b16 %v10507
    %v10664 = vunpack.c.h.b16 %v10507
    %v10665 = vunpack.c.l.b16 %v10508
    %v10666 = vunpack.c.h.b16 %v10508
    %v10667 = vunpack.c.l.b16 %v10509
    %v10668 = vunpack.c.h.b16 %v10509
    %v10669 = vunpack.c.l.b16 %v10510
    %v10670 = vunpack.c.h.b16 %v10510
    %v10671 = vunpack.c.l.b16 %v10511
    %v10672 = vunpack.c.h.b16 %v10511
    %v10673 = vunpack.c.l.b16 %v10512
    %v10674 = vunpack.c.h.b16 %v10512
    %v10675 = vunpack.c.l.b16 %v10513
    %v10676 = vunpack.c.h.b16 %v10513
    %v10677 = vunpack.c.l.b16 %v10514
    %v10678 = vunpack.c.h.b16 %v10514
    %v10679 = vunpack.c.l.b16 %v10515
    %v10680 = vunpack.c.h.b16 %v10515
    %v10681 = vunpack.c.l.b16 %v10516
    %v10682 = vunpack.c.h.b16 %v10516
    %v10683 = vunpack.c.l.b16 %v10517
    %v10684 = vunpack.c.h.b16 %v10517
    %v10685 = vunpack.c.l.b16 %v10518
    %v10686 = vunpack.c.h.b16 %v10518
    %v10687 = vunpack.c.l.b16 %v10519
    %v10688 = vunpack.c.h.b16 %v10519
    %v10689 = vunpack.c.l.b16 %v10520
    %v10690 = vunpack.c.h.b16 %v10520
    %v10691 = vunpack.c.l.b16 %v10521
    %v10692 = vunpack.c.h.b16 %v10521
    %v10693 = vunpack.c.l.b16 %v10522
    %v10694 = vunpack.c.h.b16 %v10522
    %v10695 = vunpack.c.l.b16 %v10523
    %v10696 = vunpack.c.h.b16 %v10523
    %v10697 = vunpack.c.l.b16 %v10524
    %v10698 = vunpack.c.h.b16 %v10524
    %v10699 = vunpack.c.l.b16 %v10525
    %v10700 = vunpack.c.h.b16 %v10525
    %v10701 = vunpack.c.l.b16 %v10526
    %v10702 = vunpack.c.h.b16 %v10526
    %v10703 = vunpack.c.l.b16 %v10527
    %v10704 = vunpack.c.h.b16 %v10527
    %v10705 = vunpack.c.l.b16 %v10528
    %v10706 = vunpack.c.h.b16 %v10528
    %v10707 = vunpack.c.l.b16 %v10529
    %v10708 = vunpack.c.h.b16 %v10529
    %v10709 = vunpack.c.l.b16 %v10530
    %v10710 = vunpack.c.h.b16 %v10530
    %v10711 = vunpack.c.l.b16 %v10531
    %v10712 = vunpack.c.h.b16 %v10531
    %v10713 = vunpack.c.l.b16 %v10532
    %v10714 = vunpack.c.h.b16 %v10532
    %v10715 = vunpack.c.l.b16 %v10533
    %v10716 = vunpack.c.h.b16 %v10533
    %v10717 = vunpack.c.l.b16 %v10534
    %v10718 = vunpack.c.h.b16 %v10534
    %v10719 = vunpack.c.l.b16 %v10535
    %v10720 = vunpack.c.h.b16 %v10535
    %v10721 = vunpack.c.l.b16 %v10536
    %v10722 = vunpack.c.h.b16 %v10536
    %v10723 = vunpack.c.l.b16 %v10537
    %v10724 = vunpack.c.h.b16 %v10537
    %v10725 = vunpack.c.l.b16 %v10538
    %v10726 = vunpack.c.h.b16 %v10538
    %v10727 = vunpack.c.l.b16 %v10539
    %v10728 = vunpack.c.h.b16 %v10539
    %v10729 = vunpack.c.l.b16 %v10540
    %v10730 = vunpack.c.h.b16 %v10540
    %v10731 = vunpack.c.l.b16 %v10541
    %v10732 = vunpack.c.h.b16 %v10541
    %v10733 = vunpack.c.l.b16 %v10542
    %v10734 = vunpack.c.h.b16 %v10542
    %v10735 = vunpack.c.l.b16 %v10543
    %v10736 = vunpack.c.h.b16 %v10543
    %v10737 = vunpack.c.l.b16 %v10544
    %v10738 = vunpack.c.h.b16 %v10544
    %v10739 = vunpack.c.l.b16 %v10545
    %v10740 = vunpack.c.h.b16 %v10545
    %v10741 = vunpack.c.l.b16 %v10546
    %v10742 = vunpack.c.h.b16 %v10546
    %v10743 = vunpack.c.l.b16 %v10547
    %v10744 = vunpack.c.h.b16 %v10547
    %v10745 = vunpack.c.l.b16 %v10548
    %v10746 = vunpack.c.h.b16 %v10548
    %v10747 = vunpack.c.l.b16 %v10549
    %v10748 = vunpack.c.h.b16 %v10549
    %v10749 = vunpack.c.l.b16 %v10550
    %v10750 = vunpack.c.h.b16 %v10550
    %v10751 = vunpack.c.l.b16 %v10551
    %v10752 = vunpack.c.h.b16 %v10551
    %v10753 = vunpack.c.l.b16 %v10552
    %v10754 = vunpack.c.h.b16 %v10552
    %v10755 = vunpack.c.l.b16 %v10553
    %v10756 = vunpack.c.h.b16 %v10553
    %v10757 = vunpack.c.l.b16 %v10554
    %v10758 = vunpack.c.h.b16 %v10554
    %v10759 = vunpack.c.l.b16 %v10555
    %v10760 = vunpack.c.h.b16 %v10555
    %v10761 = vunpack.c.l.b16 %v10556
    %v10762 = vunpack.c.h.b16 %v10556
    %v10763 = vunpack.c.l.b16 %v10557
    %v10764 = vunpack.c.h.b16 %v10557
    %v10765 = vunpack.c.l.b16 %v10558
    %v10766 = vunpack.c.h.b16 %v10558
    %v10767 = vunpack.c.l.b16 %v10559
    %v10768 = vunpack.c.h.b16 %v10559
    %v10769 = vunpack.c.l.b16 %v10560
    %v10770 = vunpack.c.h.b16 %v10560
    %v10771 = vunpack.c.l.b16 %v10561
    %v10772 = vunpack.c.h.b16 %v10561
    %v10773 = vunpack.c.l.b16 %v10562
    %v10774 = vunpack.c.h.b16 %v10562
    %v10775 = vunpack.c.l.b16 %v10563
    %v10776 = vunpack.c.h.b16 %v10563
    %v10777 = vunpack.c.l.b16 %v10564
    %v10778 = vunpack.c.h.b16 %v10564
    %v10779 = vpack.c.b16 %v10655, %v10651
    %v10780 = vpack.c.b16 %v10656, %v10652
    %v10781 = vpack.c.b16 %v10657, %v10653
    %v10782 = vpack.c.b16 %v10658, %v10654
    %v10783 = vpack.c.b16 %v10663, %v10659
    %v10784 = vpack.c.b16 %v10664, %v10660
    %v10785 = vpack.c.b16 %v10665, %v10661
    %v10786 = vpack.c.b16 %v10666, %v10662
    %v10787 = vpack.c.b16 %v10671, %v10667
    %v10788 = vpack.c.b16 %v10672, %v10668
    %v10789 = vpack.c.b16 %v10673, %v10669
    %v10790 = vpack.c.b16 %v10674, %v10670
    %v10791 = vpack.c.b16 %v10679, %v10675
    %v10792 = vpack.c.b16 %v10680, %v10676
    %v10793 = vpack.c.b16 %v10681, %v10677
    %v10794 = vpack.c.b16 %v10682, %v10678
    %v10795 = vpack.c.b16 %v10687, %v10683
    %v10796 = vpack.c.b16 %v10688, %v10684
    %v10797 = vpack.c.b16 %v10689, %v10685
    %v10798 = vpack.c.b16 %v10690, %v10686
    %v10799 = vpack.c.b16 %v10695, %v10691
    %v10800 = vpack.c.b16 %v10696, %v10692
    %v10801 = vpack.c.b16 %v10697, %v10693
    %v10802 = vpack.c.b16 %v10698, %v10694
    %v10803 = vpack.c.b16 %v10703, %v10699
    %v10804 = vpack.c.b16 %v10704, %v10700
    %v10805 = vpack.c.b16 %v10705, %v10701
    %v10806 = vpack.c.b16 %v10706, %v10702
    %v10807 = vpack.c.b16 %v10711, %v10707
    %v10808 = vpack.c.b16 %v10712, %v10708
    %v10809 = vpack.c.b16 %v10713, %v10709
    %v10810 = vpack.c.b16 %v10714, %v10710
    %v10811 = vpack.c.b16 %v10719, %v10715
    %v10812 = vpack.c.b16 %v10720, %v10716
    %v10813 = vpack.c.b16 %v10721, %v10717
    %v10814 = vpack.c.b16 %v10722, %v10718
    %v10815 = vpack.c.b16 %v10727, %v10723
    %v10816 = vpack.c.b16 %v10728, %v10724
    %v10817 = vpack.c.b16 %v10729, %v10725
    %v10818 = vpack.c.b16 %v10730, %v10726
    %v10819 = vpack.c.b16 %v10735, %v10731
    %v10820 = vpack.c.b16 %v10736, %v10732
    %v10821 = vpack.c.b16 %v10737, %v10733
    %v10822 = vpack.c.b16 %v10738, %v10734
    %v10823 = vpack.c.b16 %v10743, %v10739
    %v10824 = vpack.c.b16 %v10744, %v10740
    %v10825 = vpack.c.b16 %v10745, %v10741
    %v10826 = vpack.c.b16 %v10746, %v10742
    %v10827 = vpack.c.b16 %v10751, %v10747
    %v10828 = vpack.c.b16 %v10752, %v10748
    %v10829 = vpack.c.b16 %v10753, %v10749
    %v10830 = vpack.c.b16 %v10754, %v10750
    %v10831 = vpack.c.b16 %v10759, %v10755
    %v10832 = vpack.c.b16 %v10760, %v10756
    %v10833 = vpack.c.b16 %v10761, %v10757
    %v10834 = vpack.c.b16 %v10762, %v10758
    %v10835 = vpack.c.b16 %v10767, %v10763
    %v10836 = vpack.c.b16 %v10768, %v10764
    %v10837 = vpack.c.b16 %v10769, %v10765
    %v10838 = vpack.c.b16 %v10770, %v10766
    %v10839 = vpack.c.b16 %v10775, %v10771
    %v10840 = vpack.c.b16 %v10776, %v10772
    %v10841 = vpack.c.b16 %v10777, %v10773
    %v10842 = vpack.c.b16 %v10778, %v10774
    %10907 = vmatprep.subr.bf16.mxu0 %v10808
    %10908 = vmatpush1.bf16.msra.mxu0 %v10807
    %10909 = vmatprep.subr.bf16.mxu0 %v10804
    %10910 = vmatpush1.bf16.msra.mxu0 %v10803
    %10911 = vmatprep.subr.bf16.mxu0 %v10800
    %10912 = vmatpush1.bf16.msra.mxu0 %v10799
    %10913 = vmatprep.subr.bf16.mxu0 %v10796
    %10914 = vmatpush1.bf16.msra.mxu0 %v10795
    %10915 = vmatprep.subr.bf16.mxu0 %v10792
    %10916 = vmatpush1.bf16.msra.mxu0 %v10791
    %10917 = vmatprep.subr.bf16.mxu0 %v10788
    %10918 = vmatpush1.bf16.msra.mxu0 %v10787
    %10919 = vmatprep.subr.bf16.mxu0 %v10784
    %10920 = vmatpush1.bf16.msra.mxu0 %v10783
    %10921 = vmatprep.subr.bf16.mxu0 %v10780
    %10922 = vmatpush1.bf16.msra.mxu0 %v10779
    %10923 = vmatprep.subr.bf16.mxu0 %v10840
    %10924 = vmatpush2.bf16.msra.mxu0 %v10839
    %10925 = vmatprep.subr.bf16.mxu0 %v10836
    %10926 = vmatpush2.bf16.msra.mxu0 %v10835
    %10927 = vmatprep.subr.bf16.mxu0 %v10832
    %10928 = vmatpush2.bf16.msra.mxu0 %v10831
    %10929 = vmatprep.subr.bf16.mxu0 %v10828
    %10930 = vmatpush2.bf16.msra.mxu0 %v10827
    %10931 = vmatprep.subr.bf16.mxu0 %v10824
    %10932 = vmatpush2.bf16.msra.mxu0 %v10823
    %10933 = vmatprep.subr.bf16.mxu0 %v10820
    %10934 = vmatpush2.bf16.msra.mxu0 %v10819
    %10935 = vmatprep.subr.bf16.mxu0 %v10816
    %10936 = vmatpush2.bf16.msra.mxu0 %v10815
    %10937 = vmatprep.subr.bf16.mxu0 %v10812
    %10938 = vmatpush2.bf16.msra.mxu0 %v10811
    %10939 = vmatprep.mubr.bf16.mxu0 %v10500
    %10940 = vmatmul.mubr.bf16.gmra.mxu0 %v10499
    %v10941 = vpop.f32.mrf.mxu0
    %v10942 = vadd.f32 %v10570, %v10941
    %v10943 = vpop.f32.mrf.mxu0
    %v10944 = vadd.f32 %v10574, %v10943
    %v10945 = vpop.f32.mrf.mxu0
    %v10946 = vpop.f32.mrf.mxu0
    %10947 = vdwg.mxu0
    %10948 = vmatprep.subr.bf16.mxu0 %v10810
    %10949 = vmatpush1.bf16.msra.mxu0 %v10809
    %10950 = vmatprep.subr.bf16.mxu0 %v10806
    %10951 = vmatpush1.bf16.msra.mxu0 %v10805
    %10952 = vmatprep.subr.bf16.mxu0 %v10802
    %10953 = vmatpush1.bf16.msra.mxu0 %v10801
    %10954 = vmatprep.subr.bf16.mxu0 %v10798
    %10955 = vmatpush1.bf16.msra.mxu0 %v10797
    %10956 = vmatprep.subr.bf16.mxu0 %v10794
    %10957 = vmatpush1.bf16.msra.mxu0 %v10793
    %10958 = vmatprep.subr.bf16.mxu0 %v10790
    %10959 = vmatpush1.bf16.msra.mxu0 %v10789
    %10960 = vmatprep.subr.bf16.mxu0 %v10786
    %10961 = vmatpush1.bf16.msra.mxu0 %v10785
    %10962 = vmatprep.subr.bf16.mxu0 %v10782
    %10963 = vmatpush1.bf16.msra.mxu0 %v10781
    %10964 = vmatprep.subr.bf16.mxu0 %v10842
    %10965 = vmatpush2.bf16.msra.mxu0 %v10841
    %10966 = vmatprep.subr.bf16.mxu0 %v10838
    %10967 = vmatpush2.bf16.msra.mxu0 %v10837
    %10968 = vmatprep.subr.bf16.mxu0 %v10834
    %10969 = vmatpush2.bf16.msra.mxu0 %v10833
    %10970 = vmatprep.subr.bf16.mxu0 %v10830
    %10971 = vmatpush2.bf16.msra.mxu0 %v10829
    %10972 = vmatprep.subr.bf16.mxu0 %v10826
    %10973 = vmatpush2.bf16.msra.mxu0 %v10825
    %10974 = vmatprep.subr.bf16.mxu0 %v10822
    %10975 = vmatpush2.bf16.msra.mxu0 %v10821
    %10976 = vmatprep.subr.bf16.mxu0 %v10818
    %10977 = vmatpush2.bf16.msra.mxu0 %v10817
    %10978 = vmatprep.subr.bf16.mxu0 %v10814
    %10979 = vmatpush2.bf16.msra.mxu0 %v10813
    %10980 = vmatprep.mubr.bf16.mxu0 %v10500
    %10981 = vmatmul.mubr.bf16.gmra.mxu0 %v10499
    %v10982 = vpop.f32.mrf.mxu0
    %v10983 = vadd.f32 %v10578, %v10982
    %v10984 = vpop.f32.mrf.mxu0
    %v10985 = vadd.f32 %v10582, %v10984
    %v10986 = vpop.f32.mrf.mxu0
    %v10987 = vpop.f32.mrf.mxu0
    %10988 = vdwg.mxu0
    %v10989 = vxor.u32 %v10942, 2147483648
    %v10990 = vxor.u32 %v10944, 2147483648
    %v10991 = vxor.u32 %v10983, 2147483648
    %v10992 = vmul.f32 %v10989, 1.442695
    %v10993 = vpow.pop %v10992
    %v10994 = vmul.f32 %v10990, 1.442695
    %v10995 = vpow.pop %v10994
    %v10996 = vmul.f32 %v10991, 1.442695
    %v10997 = vpow.pop %v10996
    %v10998 = vadd.f32 %v10993, 1.0
    %v10999 = vadd.f32 %v10995, 1.0
    %v11000 = vadd.f32 %v10997, 1.0
    %v11001 = vrcp.pop %v10998
    %v11002 = vmul.f32 1.0, %v11001
    %v11003 = vrcp.pop %v10999
    %v11004 = vmul.f32 1.0, %v11003
    %v11005 = vrcp.pop %v11000
    %v11006 = vmul.f32 1.0, %v11005
    %v11007 = vtanh.pop %v10985
    %v11008 = vmul.f32 %v11004, %v9981
    %v11009 = vmul.f32 %v11002, %v11007
    %v11010 = vadd.f32 %v11008, %v11009
    %v11011 = vtanh.pop %v11010
    %v11012 = vmul.f32 %v11006, %v11011
    %s11013 = scalar_lea.vmem [#allocation14], 56
    %11014 = vst [vmem:[%s11013] sm:$0xff] %v11012
    %v11015 = vld [vmem:[#allocation14] sm:$0xff]
    %v11016 = vld [vmem:[#allocation14 + $0x8] sm:$0xff]
    %v11017 = vld [vmem:[#allocation14 + $0x10] sm:$0xff]
    %v11018 = vld [vmem:[#allocation14 + $0x18] sm:$0xff]
    %v11019 = vld [vmem:[#allocation14 + $0x20] sm:$0xff]
    %v11020 = vld [vmem:[#allocation14 + $0x28] sm:$0xff]
    %v11021 = vld [vmem:[#allocation14 + $0x30] sm:$0xff]
    %v11022 = vld [vmem:[#allocation14 + $0x38] sm:$0xff]
    %v11024 = vrot.slane %v11015, 3
    %v11027 = vrot.slane %v11016, 2
    %v11030 = vrot.slane %v11017, 1
    %v11033 = vrot.slane %v11019, 7
    %v11036 = vrot.slane %v11020, 6
    %v11039 = vrot.slane %v11021, 5
    %v11042 = vrot.slane %v11022, 4
    %vm11044 = vcmask 1040384
    %v11045 = vsel %vm11044, %v11024, %v11027
    %vm11046 = vcmask 1041408
    %v11047 = vsel %vm11046, %v11045, %v11030
    %vm11048 = vcmask 1042432
    %v11049 = vsel %vm11048, %v11047, %v11018
    %vm11050 = vcmask 1043456
    %v11051 = vsel %vm11050, %v11049, %v11033
    %vm11052 = vcmask 1044480
    %v11053 = vsel %vm11052, %v11051, %v11036
    %vm11054 = vcmask 1045504
    %v11055 = vsel %vm11054, %v11053, %v11039
    %vm11056 = vcmask 1046528
    %v11057 = vsel %vm11056, %v11055, %v11042
    %v11058 = vld [vmem:[%s6] sm:$0x1]
    %v11059 = vld [vmem:[%s6 + $0x1] sm:$0x1]
    %v11060 = vld [vmem:[%s6 + $0x2] sm:$0x1]
    %v11061 = vld [vmem:[%s6 + $0x3] sm:$0x1]
    %v11062 = vld [vmem:[%s6 + $0x4] sm:$0x1]
    %v11063 = vld [vmem:[%s6 + $0x5] sm:$0x1]
    %v11064 = vld [vmem:[%s6 + $0x6] sm:$0x1]
    %v11065 = vld [vmem:[%s6 + $0x7] sm:$0x1]
    %v11066 = vpack.c.bf16 %v11057, %v11057
    %v11067 = vld [vmem:[#allocation12] sm:$0xf]
    %v11068 = vld [vmem:[#allocation12 + $0x4] sm:$0xf]
    %v11069 = vld [vmem:[#allocation12 + $0x8] sm:$0xf]
    %v11070 = vld [vmem:[#allocation12 + $0xc] sm:$0xf]
    %v11071 = vld [vmem:[#allocation12 + $0x10] sm:$0xf]
    %v11072 = vld [vmem:[#allocation12 + $0x14] sm:$0xf]
    %v11073 = vld [vmem:[#allocation12 + $0x18] sm:$0xf]
    %v11074 = vld [vmem:[#allocation12 + $0x1c] sm:$0xf]
    %v11075 = vld [vmem:[#allocation12 + $0x20] sm:$0xf]
    %v11076 = vld [vmem:[#allocation12 + $0x24] sm:$0xf]
    %v11077 = vld [vmem:[#allocation12 + $0x28] sm:$0xf]
    %v11078 = vld [vmem:[#allocation12 + $0x2c] sm:$0xf]
    %v11079 = vld [vmem:[#allocation12 + $0x30] sm:$0xf]
    %v11080 = vld [vmem:[#allocation12 + $0x34] sm:$0xf]
    %v11081 = vld [vmem:[#allocation12 + $0x38] sm:$0xf]
    %v11082 = vld [vmem:[#allocation12 + $0x3c] sm:$0xf]
    %v11083 = vlaneseq
    %v11084 = vshrl.u32 %v11083, 7
    %v11085 = vsub.s32 0, %v11084
    %v11086 = vrot.slane %v11058, %v11085
    %v11103 = vunpack.c.l.b16 %v11067
    %v11104 = vunpack.c.l.b16 %v11068
    %v11105 = vunpack.c.l.b16 %v11069
    %v11106 = vunpack.c.l.b16 %v11070
    %v11107 = vunpack.c.l.b16 %v11071
    %v11108 = vunpack.c.l.b16 %v11072
    %v11109 = vunpack.c.l.b16 %v11073
    %v11110 = vunpack.c.l.b16 %v11074
    %v11111 = vunpack.c.l.b16 %v11075
    %v11112 = vunpack.c.l.b16 %v11076
    %v11113 = vunpack.c.l.b16 %v11077
    %v11114 = vunpack.c.l.b16 %v11078
    %v11115 = vunpack.c.l.b16 %v11079
    %v11116 = vunpack.c.l.b16 %v11080
    %v11117 = vunpack.c.l.b16 %v11081
    %v11118 = vunpack.c.l.b16 %v11082
    %v11119 = vpack.c.b16 %v11104, %v11103
    %v11120 = vpack.c.b16 %v11106, %v11105
    %v11121 = vpack.c.b16 %v11108, %v11107
    %v11122 = vpack.c.b16 %v11110, %v11109
    %v11123 = vpack.c.b16 %v11112, %v11111
    %v11124 = vpack.c.b16 %v11114, %v11113
    %v11125 = vpack.c.b16 %v11116, %v11115
    %v11126 = vpack.c.b16 %v11118, %v11117
    %11135 = vmatprep.subr.bf16.mxu0 0
    %11136 = vmatpush1.bf16.msra.mxu0 %v11126
    %11137 = vmatprep.subr.bf16.mxu0 0
    %11138 = vmatpush1.bf16.msra.mxu0 %v11125
    %11139 = vmatprep.subr.bf16.mxu0 0
    %11140 = vmatpush1.bf16.msra.mxu0 %v11124
    %11141 = vmatprep.subr.bf16.mxu0 0
    %11142 = vmatpush1.bf16.msra.mxu0 %v11123
    %11143 = vmatprep.subr.bf16.mxu0 0
    %11144 = vmatpush1.bf16.msra.mxu0 %v11122
    %11145 = vmatprep.subr.bf16.mxu0 0
    %11146 = vmatpush1.bf16.msra.mxu0 %v11121
    %11147 = vmatprep.subr.bf16.mxu0 0
    %11148 = vmatpush1.bf16.msra.mxu0 %v11120
    %11149 = vmatprep.subr.bf16.mxu0 0
    %11150 = vmatpush1.bf16.msra.mxu0 %v11119
    %11151 = vmatprep.subr.bf16.mxu0 0
    %11152 = vmatpush2.bf16.msra.mxu0 0
    %11153 = vmatprep.subr.bf16.mxu0 0
    %11154 = vmatpush2.bf16.msra.mxu0 0
    %11155 = vmatprep.subr.bf16.mxu0 0
    %11156 = vmatpush2.bf16.msra.mxu0 0
    %11157 = vmatprep.subr.bf16.mxu0 0
    %11158 = vmatpush2.bf16.msra.mxu0 0
    %11159 = vmatprep.subr.bf16.mxu0 0
    %11160 = vmatpush2.bf16.msra.mxu0 0
    %11161 = vmatprep.subr.bf16.mxu0 0
    %11162 = vmatpush2.bf16.msra.mxu0 0
    %11163 = vmatprep.subr.bf16.mxu0 0
    %11164 = vmatpush2.bf16.msra.mxu0 0
    %11165 = vmatprep.subr.bf16.mxu0 0
    %11166 = vmatpush2.bf16.msra.mxu0 0
    %11167 = vmatprep.mubr.bf16.mxu0 0
    %11168 = vmatmul.mubr.bf16.gmra.mxu0 %v11066
    %v11169 = vpop.f32.mrf.mxu0
    %v11170 = vadd.f32 %v11086, %v11169
    %v11171 = vpop.f32.mrf.mxu0
    %v11172 = vpop.f32.mrf.mxu0
    %v11173 = vpop.f32.mrf.mxu0
    %11174 = vdwg.mxu0
    %v11175 = vrot.slane %v11170, 4
    %v11176 = vadd.f32 %v11170, %v11175
    %v11177 = vrot.slane %v11176, 2
    %v11178 = vadd.f32 %v11176, %v11177
    %v11179 = vrot.slane %v11178, 1
    %v11180 = vadd.f32 %v11178, %v11179
    %v11181 = vrcp.pop 8.0
    %v11182 = vmul.f32 %v11180, %v11181
    %v11183 = vsub.f32 %v11170, %v11182
    %v11184 = vmul.f32 %v11183, %v11183
    %v11185 = vrot.slane %v11184, 4
    %v11186 = vadd.f32 %v11184, %v11185
    %v11187 = vrot.slane %v11186, 2
    %v11188 = vadd.f32 %v11186, %v11187
    %v11189 = vrot.slane %v11188, 1
    %v11190 = vadd.f32 %v11188, %v11189
    %v11191 = vmul.f32 %v11190, %v11181
    %v11192 = vadd.f32 %v11191, 1e-05
    %v11193 = vrsqrt.pop %v11192
    %v11194 = vmul.f32 %v11183, %v11193
    %v11195 = vlaneseq
    %v11196 = vshrl.u32 %v11195, 7
    %v11197 = vsub.s32 0, %v11196
    %v11198 = vrot.slane %v11059, %v11197
    %v11199 = vmul.f32 %v11194, %v11198
    %v11200 = vlaneseq
    %v11201 = vshrl.u32 %v11200, 7
    %v11202 = vsub.s32 0, %v11201
    %v11203 = vrot.slane %v11060, %v11202
    %v11204 = vadd.f32 %v11199, %v11203
    %v11205 = vmax.f32 %v11204, 0.0
    %v11206 = vpack.c.bf16 %v11205, %v11205
    %s11207 = scalar_lea.vmem [#allocation12], 64
    %v11208 = vld [vmem:[%s11207] sm:$0xf]
    %v11209 = vld [vmem:[%s11207 + $0x4] sm:$0xf]
    %v11210 = vld [vmem:[%s11207 + $0x8] sm:$0xf]
    %v11211 = vld [vmem:[%s11207 + $0xc] sm:$0xf]
    %v11212 = vld [vmem:[%s11207 + $0x10] sm:$0xf]
    %v11213 = vld [vmem:[%s11207 + $0x14] sm:$0xf]
    %v11214 = vld [vmem:[%s11207 + $0x18] sm:$0xf]
    %v11215 = vld [vmem:[%s11207 + $0x1c] sm:$0xf]
    %v11216 = vld [vmem:[%s11207 + $0x20] sm:$0xf]
    %v11217 = vld [vmem:[%s11207 + $0x24] sm:$0xf]
    %v11218 = vld [vmem:[%s11207 + $0x28] sm:$0xf]
    %v11219 = vld [vmem:[%s11207 + $0x2c] sm:$0xf]
    %v11220 = vld [vmem:[%s11207 + $0x30] sm:$0xf]
    %v11221 = vld [vmem:[%s11207 + $0x34] sm:$0xf]
    %v11222 = vld [vmem:[%s11207 + $0x38] sm:$0xf]
    %v11223 = vld [vmem:[%s11207 + $0x3c] sm:$0xf]
    %v11224 = vlaneseq
    %v11225 = vshrl.u32 %v11224, 7
    %v11226 = vsub.s32 0, %v11225
    %v11227 = vrot.slane %v11061, %v11226
    %v11244 = vunpack.c.l.b16 %v11208
    %v11245 = vunpack.c.l.b16 %v11209
    %v11246 = vunpack.c.l.b16 %v11210
    %v11247 = vunpack.c.l.b16 %v11211
    %v11248 = vunpack.c.l.b16 %v11212
    %v11249 = vunpack.c.l.b16 %v11213
    %v11250 = vunpack.c.l.b16 %v11214
    %v11251 = vunpack.c.l.b16 %v11215
    %v11252 = vunpack.c.l.b16 %v11216
    %v11253 = vunpack.c.l.b16 %v11217
    %v11254 = vunpack.c.l.b16 %v11218
    %v11255 = vunpack.c.l.b16 %v11219
    %v11256 = vunpack.c.l.b16 %v11220
    %v11257 = vunpack.c.l.b16 %v11221
    %v11258 = vunpack.c.l.b16 %v11222
    %v11259 = vunpack.c.l.b16 %v11223
    %v11260 = vpack.c.b16 %v11245, %v11244
    %v11261 = vpack.c.b16 %v11247, %v11246
    %v11262 = vpack.c.b16 %v11249, %v11248
    %v11263 = vpack.c.b16 %v11251, %v11250
    %v11264 = vpack.c.b16 %v11253, %v11252
    %v11265 = vpack.c.b16 %v11255, %v11254
    %v11266 = vpack.c.b16 %v11257, %v11256
    %v11267 = vpack.c.b16 %v11259, %v11258
    %11276 = vmatprep.subr.bf16.mxu0 0
    %11277 = vmatpush1.bf16.msra.mxu0 %v11267
    %11278 = vmatprep.subr.bf16.mxu0 0
    %11279 = vmatpush1.bf16.msra.mxu0 %v11266
    %11280 = vmatprep.subr.bf16.mxu0 0
    %11281 = vmatpush1.bf16.msra.mxu0 %v11265
    %11282 = vmatprep.subr.bf16.mxu0 0
    %11283 = vmatpush1.bf16.msra.mxu0 %v11264
    %11284 = vmatprep.subr.bf16.mxu0 0
    %11285 = vmatpush1.bf16.msra.mxu0 %v11263
    %11286 = vmatprep.subr.bf16.mxu0 0
    %11287 = vmatpush1.bf16.msra.mxu0 %v11262
    %11288 = vmatprep.subr.bf16.mxu0 0
    %11289 = vmatpush1.bf16.msra.mxu0 %v11261
    %11290 = vmatprep.subr.bf16.mxu0 0
    %11291 = vmatpush1.bf16.msra.mxu0 %v11260
    %11292 = vmatprep.subr.bf16.mxu0 0
    %11293 = vmatpush2.bf16.msra.mxu0 0
    %11294 = vmatprep.subr.bf16.mxu0 0
    %11295 = vmatpush2.bf16.msra.mxu0 0
    %11296 = vmatprep.subr.bf16.mxu0 0
    %11297 = vmatpush2.bf16.msra.mxu0 0
    %11298 = vmatprep.subr.bf16.mxu0 0
    %11299 = vmatpush2.bf16.msra.mxu0 0
    %11300 = vmatprep.subr.bf16.mxu0 0
    %11301 = vmatpush2.bf16.msra.mxu0 0
    %11302 = vmatprep.subr.bf16.mxu0 0
    %11303 = vmatpush2.bf16.msra.mxu0 0
    %11304 = vmatprep.subr.bf16.mxu0 0
    %11305 = vmatpush2.bf16.msra.mxu0 0
    %11306 = vmatprep.subr.bf16.mxu0 0
    %11307 = vmatpush2.bf16.msra.mxu0 0
    %11308 = vmatprep.mubr.bf16.mxu0 0
    %11309 = vmatmul.mubr.bf16.gmra.mxu0 %v11206
    %v11310 = vpop.f32.mrf.mxu0
    %v11311 = vadd.f32 %v11227, %v11310
    %v11312 = vpop.f32.mrf.mxu0
    %v11313 = vpop.f32.mrf.mxu0
    %v11314 = vpop.f32.mrf.mxu0
    %11315 = vdwg.mxu0
    %v11316 = vrot.slane %v11311, 4
    %v11317 = vadd.f32 %v11311, %v11316
    %v11318 = vrot.slane %v11317, 2
    %v11319 = vadd.f32 %v11317, %v11318
    %v11320 = vrot.slane %v11319, 1
    %v11321 = vadd.f32 %v11319, %v11320
    %v11322 = vmul.f32 %v11321, %v11181
    %v11323 = vsub.f32 %v11311, %v11322
    %v11324 = vmul.f32 %v11323, %v11323
    %v11325 = vrot.slane %v11324, 4
    %v11326 = vadd.f32 %v11324, %v11325
    %v11327 = vrot.slane %v11326, 2
    %v11328 = vadd.f32 %v11326, %v11327
    %v11329 = vrot.slane %v11328, 1
    %v11330 = vadd.f32 %v11328, %v11329
    %v11331 = vmul.f32 %v11330, %v11181
    %v11332 = vadd.f32 %v11331, 1e-05
    %v11333 = vrsqrt.pop %v11332
    %v11334 = vmul.f32 %v11323, %v11333
    %v11335 = vlaneseq
    %v11336 = vshrl.u32 %v11335, 7
    %v11337 = vsub.s32 0, %v11336
    %v11338 = vrot.slane %v11062, %v11337
    %v11339 = vmul.f32 %v11334, %v11338
    %v11340 = vlaneseq
    %v11341 = vshrl.u32 %v11340, 7
    %v11342 = vsub.s32 0, %v11341
    %v11343 = vrot.slane %v11063, %v11342
    %v11344 = vadd.f32 %v11339, %v11343
    %v11345 = vmax.f32 %v11344, 0.0
    %11346 = vst [vmem:[#allocation15] sm:$0xff] %v11345
    %v11347 = vpack.c.bf16 %v11345, %v11345
    %s11348 = scalar_lea.vmem [#allocation12], 128
    %v11349 = vld [vmem:[%s11348] sm:$0xf]
    %v11350 = vld [vmem:[%s11348 + $0x4] sm:$0xf]
    %v11351 = vld [vmem:[%s11348 + $0x8] sm:$0xf]
    %v11352 = vld [vmem:[%s11348 + $0xc] sm:$0xf]
    %v11353 = vld [vmem:[%s11348 + $0x10] sm:$0xf]
    %v11354 = vld [vmem:[%s11348 + $0x14] sm:$0xf]
    %v11355 = vld [vmem:[%s11348 + $0x18] sm:$0xf]
    %v11356 = vld [vmem:[%s11348 + $0x1c] sm:$0xf]
    %v11357 = vld [vmem:[%s11348 + $0x20] sm:$0xf]
    %v11358 = vld [vmem:[%s11348 + $0x24] sm:$0xf]
    %v11359 = vld [vmem:[%s11348 + $0x28] sm:$0xf]
    %v11360 = vld [vmem:[%s11348 + $0x2c] sm:$0xf]
    %v11361 = vld [vmem:[%s11348 + $0x30] sm:$0xf]
    %v11362 = vld [vmem:[%s11348 + $0x34] sm:$0xf]
    %v11363 = vld [vmem:[%s11348 + $0x38] sm:$0xf]
    %v11364 = vld [vmem:[%s11348 + $0x3c] sm:$0xf]
    %v11381 = vunpack.c.l.b16 %v11349
    %v11382 = vunpack.c.l.b16 %v11350
    %v11383 = vunpack.c.l.b16 %v11351
    %v11384 = vunpack.c.l.b16 %v11352
    %v11385 = vunpack.c.l.b16 %v11353
    %v11386 = vunpack.c.l.b16 %v11354
    %v11387 = vunpack.c.l.b16 %v11355
    %v11388 = vunpack.c.l.b16 %v11356
    %v11389 = vunpack.c.l.b16 %v11357
    %v11390 = vunpack.c.l.b16 %v11358
    %v11391 = vunpack.c.l.b16 %v11359
    %v11392 = vunpack.c.l.b16 %v11360
    %v11393 = vunpack.c.l.b16 %v11361
    %v11394 = vunpack.c.l.b16 %v11362
    %v11395 = vunpack.c.l.b16 %v11363
    %v11396 = vunpack.c.l.b16 %v11364
    %v11397 = vpack.c.b16 %v11382, %v11381
    %v11398 = vpack.c.b16 %v11384, %v11383
    %v11399 = vpack.c.b16 %v11386, %v11385
    %v11400 = vpack.c.b16 %v11388, %v11387
    %v11401 = vpack.c.b16 %v11390, %v11389
    %v11402 = vpack.c.b16 %v11392, %v11391
    %v11403 = vpack.c.b16 %v11394, %v11393
    %v11404 = vpack.c.b16 %v11396, %v11395
    %11413 = vmatprep.subr.bf16.mxu0 0
    %11414 = vmatpush1.bf16.msra.mxu0 %v11404
    %11415 = vmatprep.subr.bf16.mxu0 0
    %11416 = vmatpush1.bf16.msra.mxu0 %v11403
    %11417 = vmatprep.subr.bf16.mxu0 0
    %11418 = vmatpush1.bf16.msra.mxu0 %v11402
    %11419 = vmatprep.subr.bf16.mxu0 0
    %11420 = vmatpush1.bf16.msra.mxu0 %v11401
    %11421 = vmatprep.subr.bf16.mxu0 0
    %11422 = vmatpush1.bf16.msra.mxu0 %v11400
    %11423 = vmatprep.subr.bf16.mxu0 0
    %11424 = vmatpush1.bf16.msra.mxu0 %v11399
    %11425 = vmatprep.subr.bf16.mxu0 0
    %11426 = vmatpush1.bf16.msra.mxu0 %v11398
    %11427 = vmatprep.subr.bf16.mxu0 0
    %11428 = vmatpush1.bf16.msra.mxu0 %v11397
    %11429 = vmatprep.subr.bf16.mxu0 0
    %11430 = vmatpush2.bf16.msra.mxu0 0
    %11431 = vmatprep.subr.bf16.mxu0 0
    %11432 = vmatpush2.bf16.msra.mxu0 0
    %11433 = vmatprep.subr.bf16.mxu0 0
    %11434 = vmatpush2.bf16.msra.mxu0 0
    %11435 = vmatprep.subr.bf16.mxu0 0
    %11436 = vmatpush2.bf16.msra.mxu0 0
    %11437 = vmatprep.subr.bf16.mxu0 0
    %11438 = vmatpush2.bf16.msra.mxu0 0
    %11439 = vmatprep.subr.bf16.mxu0 0
    %11440 = vmatpush2.bf16.msra.mxu0 0
    %11441 = vmatprep.subr.bf16.mxu0 0
    %11442 = vmatpush2.bf16.msra.mxu0 0
    %11443 = vmatprep.subr.bf16.mxu0 0
    %11444 = vmatpush2.bf16.msra.mxu0 0
    %11445 = vmatprep.mubr.bf16.mxu0 0
    %11446 = vmatmul.mubr.bf16.gmra.mxu0 %v11347
    %v11447 = vpop.f32.mrf.mxu0
    %v11448 = vadd.f32 0.0, %v11447
    %v11449 = vpop.f32.mrf.mxu0
    %v11450 = vpop.f32.mrf.mxu0
    %v11451 = vpop.f32.mrf.mxu0
    %11452 = vdwg.mxu0
    %v11453 = vlaneseq
    %v11454 = vshrl.u32 %v11453, 7
    %v11455 = vsub.s32 0, %v11454
    %v11456 = vrot.slane %v11065, %v11455
    %v11457 = vmul.f32 %v11448, %v11456
    %v11458 = vlaneseq
    %v11459 = vshrl.u32 %v11458, 7
    %v11460 = vsub.s32 0, %v11459
    %v11461 = vrot.slane %v11064, %v11460
    %v11462 = vadd.f32 %v11457, %v11461
    %11463 = vst [vmem:[#allocation17] sm:$0xff] %v11462
    // Predicated region
    $region54: #{tpu_custom_call.1} parent=1 // pred_check
      _
    $region55: #{tpu_custom_call.1} parent=1 // pred_check_branch
      %11465 = sbr.rel (0) target = $region57
    $region56: #{tpu_custom_call.1} parent=1 // pred_region
      %s11467 = ssub.s32 1024, 1024
      %11468 = vsyncadd [#allocation5], %s11467
      %s11469 = sshll.u32 [#allocation14], 4
      %s11470 = int_to_ptr.vmem [resolvable:$true] %s11469
      %11475 = dma.vmem_to_hbm [thread:$0]  %s11470, 1024, %s7, [#allocation5], 128, 128, 8
    $region57: #{tpu_custom_call.1} parent=1 // pred_fallthru
      _
    // Predicated region
    $region58: #{tpu_custom_call.1} parent=1 // pred_check
      _
    $region59: #{tpu_custom_call.1} parent=1 // pred_check_branch
      %11477 = sbr.rel (0) target = $region61
    $region60: #{tpu_custom_call.1} parent=1 // pred_region
      %s11479 = ssub.s32 128, 128
      %11480 = vsyncadd [#allocation16], %s11479
      %s11482 = sshll.u32 [#allocation15], 4
      %s11483 = int_to_ptr.vmem [resolvable:$true] %s11482
      %11485 = dma.vmem_to_hbm [thread:$0]  %s11483, 128, %s8, [#allocation16]
    $region61: #{tpu_custom_call.1} parent=1 // pred_fallthru
      _
    // Predicated region
    $region62: #{tpu_custom_call.1} parent=1 // pred_check
      _
    $region63: #{tpu_custom_call.1} parent=1 // pred_check_branch
      %11487 = sbr.rel (0) target = $region65
    $region64: #{tpu_custom_call.1} parent=1 // pred_region
      %s11489 = ssub.s32 128, 128
      %11490 = vsyncadd [#allocation16], %s11489
      %s11492 = sshll.u32 [#allocation17], 4
      %s11493 = int_to_ptr.vmem [resolvable:$true] %s11492
      %11495 = dma.vmem_to_hbm [thread:$0]  %s11493, 128, %s9, [#allocation16]
    $region65: #{tpu_custom_call.1} parent=1 // pred_fallthru
      _
    // Predicated region
    $region66: #{tpu_custom_call.1} parent=1 // pred_check
      _
    $region67: #{tpu_custom_call.1} parent=1 // pred_check_branch
      %11497 = sbr.rel (0) target = $region69
    $region68: #{tpu_custom_call.1} parent=1 // pred_region
      %11498 = dma.done [#allocation5], 1024
    $region69: #{tpu_custom_call.1} parent=1 // pred_fallthru
      _
    // Predicated region
    $region70: #{tpu_custom_call.1} parent=1 // pred_check
      _
    $region71: #{tpu_custom_call.1} parent=1 // pred_check_branch
      %11500 = sbr.rel (0) target = $region73
    $region72: #{tpu_custom_call.1} parent=1 // pred_region
      %11501 = dma.done [#allocation16], 128
    $region73: #{tpu_custom_call.1} parent=1 // pred_fallthru
      _
    // Predicated region
    $region74: #{tpu_custom_call.1} parent=1 // pred_check
      _
    $region75: #{tpu_custom_call.1} parent=1 // pred_check_branch
      %11503 = sbr.rel (0) target = $region77
    $region76: #{tpu_custom_call.1} parent=1 // pred_region
      %11504 = dma.done [#allocation16], 128
    $region77: #{tpu_custom_call.1} parent=1 // pred_fallthru
      _
    %11505 = vsyncpa [#allocation4], 1
    %11506 = vsyncpa [#allocation7], 1
    %11507 = vsyncpa [#allocation10], 1
    %11508 = vsyncpa [#allocation13], 1
    %11509 = vsyncpa [#allocation5], 1
    %11510 = vsyncpa [#allocation16], 1

</llo_original>
